<compile_context>
chip_gen: v7x
topology: tpu7x:2x2x1
jax: 0.10.0
libtpu: 0.0.40
codegen_flags: <defaults>
</compile_context>

<pallas_src>
import functools

import jax
import jax.numpy as jnp
from jax import lax
from jax.experimental import pallas as pl
from jax.experimental.pallas import tpu as pltpu

BN_EPS = 1e-5  # torch.nn.BatchNorm2d default


def _conv_bias(x_ref, w_ref, b_ref, *, h, w, c_in, cp):
    """3x3 'same' conv for one image as 9 accumulated MXU matmuls.

    x_ref: (1, h+2, w+2, c_in) bf16 (spatially pre-padded)
    w_ref: (9, c_in, cp)       bf16 (tap-major), cp = Cout padded to 128*
    b_ref: (1, cp)             f32
    returns (h*w, cp) f32 = conv output + bias, rows in (h, w) row-major order.
    """
    acc = None
    for kh in range(3):
        for kw in range(3):
            tap = x_ref[0, kh:kh + h, kw:kw + w, :]          # (h, w, c_in) bf16
            tap2d = tap.reshape(h * w, c_in)                 # layout-preserving merge
            contrib = jnp.dot(tap2d, w_ref[kh * 3 + kw],
                              preferred_element_type=jnp.float32)
            acc = contrib if acc is None else acc + contrib
    return acc + b_ref[...]


def _stats_kernel(x_ref, w_ref, b_ref, stat_ref, *, h, w, c_in, cp):
    """Pass 1: per-image per-channel sum and sum-of-squares of conv+bias."""
    acc = _conv_bias(x_ref, w_ref, b_ref, h=h, w=w, c_in=c_in, cp=cp)
    stat_ref[0, 0:1, :] = jnp.sum(acc, axis=0, keepdims=True)
    stat_ref[0, 1:2, :] = jnp.sum(acc * acc, axis=0, keepdims=True)


def _finalize_kernel(x_ref, w_ref, b_ref, scale_ref, shift_ref, o_ref, hbuf,
                     *, h, w, c_in, cp):
    """Pass 2: conv (recompute) + BN(scale,shift) + ReLU + MaxPool2d(2,2)."""
    ho, wo = h // 2, w // 2
    acc = _conv_bias(x_ref, w_ref, b_ref, h=h, w=w, c_in=c_in, cp=cp)

    # BatchNorm (precomputed scale/shift) + ReLU, all f32.
    y = jnp.maximum(acc * scale_ref[...] + shift_ref[...], 0.0)     # (h*w, cp)

    # MaxPool 2x2, H direction: rows are h-major, so splitting h into (ho, 2)
    # is a layout-preserving reshape; max over the pair axis is pure VPU.
    yh = jnp.max(y.reshape(ho, 2, w, cp), axis=1)                   # (ho, w, cp)

    # MaxPool 2x2, W direction: pairs are adjacent sublanes -> small VMEM
    # scratch + two stride-2 reads (value-level sublane gather avoided).
    hbuf[...] = yh.reshape(ho * w, cp)
    pooled = jnp.maximum(hbuf[pl.ds(0, ho * wo, stride=2), :],
                         hbuf[pl.ds(1, ho * wo, stride=2), :])      # (ho*wo, cp)
    o_ref[0] = pooled.reshape(ho, wo, cp)


@jax.jit
def model_section_forward(x_nchw, conv_w, conv_b, bn_gamma, bn_beta):
    """x_nchw: (N, Cin, H, W) f32 -> (N, Cout, H//2, W//2) f32 (NCHW)."""
    n, c_in, h, w = x_nchw.shape
    c_out = conv_w.shape[0]
    assert h % 2 == 0 and w % 2 == 0
    ho, wo = h // 2, w // 2
    cp = ((c_out + 127) // 128) * 128            # lane-dense padded Cout

    # Glue: NCHW -> NHWC, spatial zero-pad by 1, cast to bf16 for the MXU.
    x = jnp.transpose(x_nchw, (0, 2, 3, 1))
    xp = jnp.pad(x, ((0, 0), (1, 1), (1, 1), (0, 0))).astype(jnp.bfloat16)

    # Glue: torch conv weight (Cout, Cin, 3, 3) -> (9, Cin, Cp), tap-major.
    wt = jnp.transpose(conv_w, (2, 3, 1, 0))                      # (3,3,Cin,Cout)
    wt = jnp.pad(wt, ((0, 0), (0, 0), (0, 0), (0, cp - c_out)))
    wt = wt.reshape(9, c_in, cp).astype(jnp.bfloat16)

    bias = jnp.pad(conv_b, (0, cp - c_out)).reshape(1, cp).astype(jnp.float32)
    gamma = jnp.pad(bn_gamma, (0, cp - c_out)).astype(jnp.float32)   # pad=0 -> scale=0
    beta = jnp.pad(bn_beta, (0, cp - c_out)).astype(jnp.float32)

    cparams = pltpu.CompilerParams(
        dimension_semantics=("parallel",),
        vmem_limit_bytes=32 * 1024 * 1024,
    )

    # ---------------- pass 1: conv + per-image partial BN statistics --------
    stats = pl.pallas_call(
        functools.partial(_stats_kernel, h=h, w=w, c_in=c_in, cp=cp),
        out_shape=jax.ShapeDtypeStruct((n, 2, cp), jnp.float32),
        grid=(n,),
        in_specs=[
            pl.BlockSpec((1, h + 2, w + 2, c_in), lambda i: (i, 0, 0, 0)),
            pl.BlockSpec((9, c_in, cp), lambda i: (0, 0, 0)),
            pl.BlockSpec((1, cp), lambda i: (0, 0)),
        ],
        out_specs=pl.BlockSpec((1, 2, cp), lambda i: (i, 0, 0)),
        compiler_params=cparams,
    )(xp, wt, bias)

    # Tiny cross-image reduction + BN scale/shift (E[x^2] - E[x]^2, f32).
    inv_count = 1.0 / float(n * h * w)
    ssum = jnp.sum(stats[:, 0, :], axis=0)
    ssq = jnp.sum(stats[:, 1, :], axis=0)
    mean = ssum * inv_count
    var = jnp.maximum(ssq * inv_count - mean * mean, 0.0)
    scale_v = gamma * lax.rsqrt(var + BN_EPS)
    shift_v = beta - mean * scale_v
    scale = scale_v.reshape(1, cp)
    shift = shift_v.reshape(1, cp)

    # ---------------- pass 2: conv + BN + ReLU + MaxPool2d(2,2) -------------
    out_p = pl.pallas_call(
        functools.partial(_finalize_kernel, h=h, w=w, c_in=c_in, cp=cp),
        out_shape=jax.ShapeDtypeStruct((n, ho, wo, cp), jnp.float32),
        grid=(n,),
        in_specs=[
            pl.BlockSpec((1, h + 2, w + 2, c_in), lambda i: (i, 0, 0, 0)),
            pl.BlockSpec((9, c_in, cp), lambda i: (0, 0, 0)),
            pl.BlockSpec((1, cp), lambda i: (0, 0)),
            pl.BlockSpec((1, cp), lambda i: (0, 0)),
            pl.BlockSpec((1, cp), lambda i: (0, 0)),
        ],
        out_specs=pl.BlockSpec((1, ho, wo, cp), lambda i: (i, 0, 0, 0)),
        scratch_shapes=[pltpu.VMEM((ho * w, cp), jnp.float32)],
        compiler_params=cparams,
    )(xp, wt, bias, scale, shift)

    out = out_p[..., :c_out]                      # drop Cout padding
    return jnp.transpose(out, (0, 3, 1, 2))       # NHWC -> NCHW


def reference_forward(x_nchw, conv_w, conv_b, bn_gamma, bn_beta):
    """Pure-JAX reference (NCHW).  Conv inputs are rounded to bf16 to mirror
    the kernel's native-bf16 MXU inputs (accumulation stays f32)."""
    xq = x_nchw.astype(jnp.bfloat16).astype(jnp.float32)
    wq = conv_w.astype(jnp.bfloat16).astype(jnp.float32)
    y = lax.conv_general_dilated(
        xq, wq, window_strides=(1, 1), padding=((1, 1), (1, 1)),
        dimension_numbers=('NCHW', 'OIHW', 'NCHW'),
        precision=lax.Precision.HIGHEST)
    y = y + conv_b.reshape(1, -1, 1, 1)
    mean = jnp.mean(y, axis=(0, 2, 3), keepdims=True)
    var = jnp.mean((y - mean) ** 2, axis=(0, 2, 3), keepdims=True)
    y = (y - mean) * lax.rsqrt(var + BN_EPS) * bn_gamma.reshape(1, -1, 1, 1) \
        + bn_beta.reshape(1, -1, 1, 1)
    y = jnp.maximum(y, 0.0)
    return lax.reduce_window(y, -jnp.inf, lax.max,
                             (1, 1, 2, 2), (1, 1, 2, 2), 'VALID')


if __name__ == "__main__":
    N, C_IN, H, W = 2, 4, 16, 16
    C_OUT = 8

    key = jax.random.PRNGKey(0)
    kx, kwt, kb, kg, kbeta = jax.random.split(key, 5)

    x = jax.random.normal(kx, (N, C_IN, H, W), dtype=jnp.float32)
    conv_w = 0.1 * jax.random.normal(kwt, (C_OUT, C_IN, 3, 3), dtype=jnp.float32)
    conv_b = 0.1 * jax.random.normal(kb, (C_OUT,), dtype=jnp.float32)
    bn_gamma = 1.0 + 0.1 * jax.random.normal(kg, (C_OUT,), dtype=jnp.float32)
    bn_beta = 0.1 * jax.random.normal(kbeta, (C_OUT,), dtype=jnp.float32)

    out = model_section_forward(x, conv_w, conv_b, bn_gamma, bn_beta)
    out = jax.block_until_ready(out)

    ref = reference_forward(x, conv_w, conv_b, bn_gamma, bn_beta)
    ref = jax.block_until_ready(ref)

    assert out.shape == (N, C_OUT, H // 2, W // 2), out.shape
    assert jnp.allclose(out, ref, atol=2e-3, rtol=2e-3), \
        f"max abs diff {jnp.max(jnp.abs(out - ref))}"

    print("KERNEL_OK")
</pallas_src>

<mosaic_0001>
module attributes {stable_mosaic.version = 11 : i64} {
  func.func @_stats_kernel(%arg0: i32, %arg1: memref<1x18x18x4xbf16, #tpu.memory_space<vmem>>, %arg2: memref<9x4x128xbf16, #tpu.memory_space<vmem>>, %arg3: memref<1x128xf32, #tpu.memory_space<vmem>>, %arg4: memref<1x2x128xf32, #tpu.memory_space<vmem>>) attributes {dimension_semantics = [#tpu.dimension_semantics<parallel>], iteration_bounds = array<i64: 2>, scalar_prefetch = 0 : i64, scratch_operands = 0 : i64, tpu.core_type = #tpu.core_type<tc>, window_params = [{transform_indices = @transform_0, window_bounds = array<i64: 1, 18, 18, 4>}, {pipeline_mode = #tpu.pipeline_mode<synchronous>, transform_indices = @transform_1, window_bounds = array<i64: 9, 4, 128>}, {pipeline_mode = #tpu.pipeline_mode<synchronous>, transform_indices = @transform_2, window_bounds = array<i64: 1, 128>}, {transform_indices = @transform_3, window_bounds = array<i64: 1, 2, 128>}]} {
    %c0 = arith.constant 0 : index
    %c0_0 = arith.constant 0 : index
    %c0_1 = arith.constant 0 : index
    %c0_2 = arith.constant 0 : index
    %0 = vector.load %arg1[%c0, %c0_0, %c0_1, %c0_2] : memref<1x18x18x4xbf16, #tpu.memory_space<vmem>>, vector<1x16x16x4xbf16>
    %1 = vector.shape_cast %0 : vector<1x16x16x4xbf16> to vector<16x16x4xbf16>
    %2 = vector.shape_cast %1 : vector<16x16x4xbf16> to vector<256x4xbf16>
    %c0_3 = arith.constant 0 : index
    %c0_4 = arith.constant 0 : index
    %c0_5 = arith.constant 0 : index
    %3 = vector.load %arg2[%c0_3, %c0_4, %c0_5] : memref<9x4x128xbf16, #tpu.memory_space<vmem>>, vector<1x4x128xbf16>
    %4 = vector.shape_cast %3 : vector<1x4x128xbf16> to vector<4x128xbf16>
    %cst = arith.constant dense<0.000000e+00> : vector<256x128xf32>
    %5 = tpu.matmul %2, %4, %cst {dimension_numbers = #tpu.dot_dimension_numbers<[1], [0], [0], [1], [0, 0, 1, 1], [], []>} : vector<256x4xbf16>, vector<4x128xbf16>, vector<256x128xf32> -> vector<256x128xf32>
    %c0_6 = arith.constant 0 : index
    %c0_7 = arith.constant 0 : index
    %c1 = arith.constant 1 : index
    %c0_8 = arith.constant 0 : index
    %6 = vector.load %arg1[%c0_6, %c0_7, %c1, %c0_8] : memref<1x18x18x4xbf16, #tpu.memory_space<vmem>>, vector<1x16x16x4xbf16>
    %7 = vector.shape_cast %6 : vector<1x16x16x4xbf16> to vector<16x16x4xbf16>
    %8 = vector.shape_cast %7 : vector<16x16x4xbf16> to vector<256x4xbf16>
    %c1_9 = arith.constant 1 : index
    %c0_10 = arith.constant 0 : index
    %c0_11 = arith.constant 0 : index
    %9 = vector.load %arg2[%c1_9, %c0_10, %c0_11] : memref<9x4x128xbf16, #tpu.memory_space<vmem>>, vector<1x4x128xbf16>
    %10 = vector.shape_cast %9 : vector<1x4x128xbf16> to vector<4x128xbf16>
    %cst_12 = arith.constant dense<0.000000e+00> : vector<256x128xf32>
    %11 = tpu.matmul %8, %10, %cst_12 {dimension_numbers = #tpu.dot_dimension_numbers<[1], [0], [0], [1], [0, 0, 1, 1], [], []>} : vector<256x4xbf16>, vector<4x128xbf16>, vector<256x128xf32> -> vector<256x128xf32>
    %12 = arith.addf %5, %11 : vector<256x128xf32>
    %c0_13 = arith.constant 0 : index
    %c0_14 = arith.constant 0 : index
    %c2 = arith.constant 2 : index
    %c0_15 = arith.constant 0 : index
    %13 = vector.load %arg1[%c0_13, %c0_14, %c2, %c0_15] : memref<1x18x18x4xbf16, #tpu.memory_space<vmem>>, vector<1x16x16x4xbf16>
    %14 = vector.shape_cast %13 : vector<1x16x16x4xbf16> to vector<16x16x4xbf16>
    %15 = vector.shape_cast %14 : vector<16x16x4xbf16> to vector<256x4xbf16>
    %c2_16 = arith.constant 2 : index
    %c0_17 = arith.constant 0 : index
    %c0_18 = arith.constant 0 : index
    %16 = vector.load %arg2[%c2_16, %c0_17, %c0_18] : memref<9x4x128xbf16, #tpu.memory_space<vmem>>, vector<1x4x128xbf16>
    %17 = vector.shape_cast %16 : vector<1x4x128xbf16> to vector<4x128xbf16>
    %cst_19 = arith.constant dense<0.000000e+00> : vector<256x128xf32>
    %18 = tpu.matmul %15, %17, %cst_19 {dimension_numbers = #tpu.dot_dimension_numbers<[1], [0], [0], [1], [0, 0, 1, 1], [], []>} : vector<256x4xbf16>, vector<4x128xbf16>, vector<256x128xf32> -> vector<256x128xf32>
    %19 = arith.addf %12, %18 : vector<256x128xf32>
    %c0_20 = arith.constant 0 : index
    %c1_21 = arith.constant 1 : index
    %c0_22 = arith.constant 0 : index
    %c0_23 = arith.constant 0 : index
    %20 = vector.load %arg1[%c0_20, %c1_21, %c0_22, %c0_23] : memref<1x18x18x4xbf16, #tpu.memory_space<vmem>>, vector<1x16x16x4xbf16>
    %21 = vector.shape_cast %20 : vector<1x16x16x4xbf16> to vector<16x16x4xbf16>
    %22 = vector.shape_cast %21 : vector<16x16x4xbf16> to vector<256x4xbf16>
    %c3 = arith.constant 3 : index
    %c0_24 = arith.constant 0 : index
    %c0_25 = arith.constant 0 : index
    %23 = vector.load %arg2[%c3, %c0_24, %c0_25] : memref<9x4x128xbf16, #tpu.memory_space<vmem>>, vector<1x4x128xbf16>
    %24 = vector.shape_cast %23 : vector<1x4x128xbf16> to vector<4x128xbf16>
    %cst_26 = arith.constant dense<0.000000e+00> : vector<256x128xf32>
    %25 = tpu.matmul %22, %24, %cst_26 {dimension_numbers = #tpu.dot_dimension_numbers<[1], [0], [0], [1], [0, 0, 1, 1], [], []>} : vector<256x4xbf16>, vector<4x128xbf16>, vector<256x128xf32> -> vector<256x128xf32>
    %26 = arith.addf %19, %25 : vector<256x128xf32>
    %c0_27 = arith.constant 0 : index
    %c1_28 = arith.constant 1 : index
    %c1_29 = arith.constant 1 : index
    %c0_30 = arith.constant 0 : index
    %27 = vector.load %arg1[%c0_27, %c1_28, %c1_29, %c0_30] : memref<1x18x18x4xbf16, #tpu.memory_space<vmem>>, vector<1x16x16x4xbf16>
    %28 = vector.shape_cast %27 : vector<1x16x16x4xbf16> to vector<16x16x4xbf16>
    %29 = vector.shape_cast %28 : vector<16x16x4xbf16> to vector<256x4xbf16>
    %c4 = arith.constant 4 : index
    %c0_31 = arith.constant 0 : index
    %c0_32 = arith.constant 0 : index
    %30 = vector.load %arg2[%c4, %c0_31, %c0_32] : memref<9x4x128xbf16, #tpu.memory_space<vmem>>, vector<1x4x128xbf16>
    %31 = vector.shape_cast %30 : vector<1x4x128xbf16> to vector<4x128xbf16>
    %cst_33 = arith.constant dense<0.000000e+00> : vector<256x128xf32>
    %32 = tpu.matmul %29, %31, %cst_33 {dimension_numbers = #tpu.dot_dimension_numbers<[1], [0], [0], [1], [0, 0, 1, 1], [], []>} : vector<256x4xbf16>, vector<4x128xbf16>, vector<256x128xf32> -> vector<256x128xf32>
    %33 = arith.addf %26, %32 : vector<256x128xf32>
    %c0_34 = arith.constant 0 : index
    %c1_35 = arith.constant 1 : index
    %c2_36 = arith.constant 2 : index
    %c0_37 = arith.constant 0 : index
    %34 = vector.load %arg1[%c0_34, %c1_35, %c2_36, %c0_37] : memref<1x18x18x4xbf16, #tpu.memory_space<vmem>>, vector<1x16x16x4xbf16>
    %35 = vector.shape_cast %34 : vector<1x16x16x4xbf16> to vector<16x16x4xbf16>
    %36 = vector.shape_cast %35 : vector<16x16x4xbf16> to vector<256x4xbf16>
    %c5 = arith.constant 5 : index
    %c0_38 = arith.constant 0 : index
    %c0_39 = arith.constant 0 : index
    %37 = vector.load %arg2[%c5, %c0_38, %c0_39] : memref<9x4x128xbf16, #tpu.memory_space<vmem>>, vector<1x4x128xbf16>
    %38 = vector.shape_cast %37 : vector<1x4x128xbf16> to vector<4x128xbf16>
    %cst_40 = arith.constant dense<0.000000e+00> : vector<256x128xf32>
    %39 = tpu.matmul %36, %38, %cst_40 {dimension_numbers = #tpu.dot_dimension_numbers<[1], [0], [0], [1], [0, 0, 1, 1], [], []>} : vector<256x4xbf16>, vector<4x128xbf16>, vector<256x128xf32> -> vector<256x128xf32>
    %40 = arith.addf %33, %39 : vector<256x128xf32>
    %c0_41 = arith.constant 0 : index
    %c2_42 = arith.constant 2 : index
    %c0_43 = arith.constant 0 : index
    %c0_44 = arith.constant 0 : index
    %41 = vector.load %arg1[%c0_41, %c2_42, %c0_43, %c0_44] : memref<1x18x18x4xbf16, #tpu.memory_space<vmem>>, vector<1x16x16x4xbf16>
    %42 = vector.shape_cast %41 : vector<1x16x16x4xbf16> to vector<16x16x4xbf16>
    %43 = vector.shape_cast %42 : vector<16x16x4xbf16> to vector<256x4xbf16>
    %c6 = arith.constant 6 : index
    %c0_45 = arith.constant 0 : index
    %c0_46 = arith.constant 0 : index
    %44 = vector.load %arg2[%c6, %c0_45, %c0_46] : memref<9x4x128xbf16, #tpu.memory_space<vmem>>, vector<1x4x128xbf16>
    %45 = vector.shape_cast %44 : vector<1x4x128xbf16> to vector<4x128xbf16>
    %cst_47 = arith.constant dense<0.000000e+00> : vector<256x128xf32>
    %46 = tpu.matmul %43, %45, %cst_47 {dimension_numbers = #tpu.dot_dimension_numbers<[1], [0], [0], [1], [0, 0, 1, 1], [], []>} : vector<256x4xbf16>, vector<4x128xbf16>, vector<256x128xf32> -> vector<256x128xf32>
    %47 = arith.addf %40, %46 : vector<256x128xf32>
    %c0_48 = arith.constant 0 : index
    %c2_49 = arith.constant 2 : index
    %c1_50 = arith.constant 1 : index
    %c0_51 = arith.constant 0 : index
    %48 = vector.load %arg1[%c0_48, %c2_49, %c1_50, %c0_51] : memref<1x18x18x4xbf16, #tpu.memory_space<vmem>>, vector<1x16x16x4xbf16>
    %49 = vector.shape_cast %48 : vector<1x16x16x4xbf16> to vector<16x16x4xbf16>
    %50 = vector.shape_cast %49 : vector<16x16x4xbf16> to vector<256x4xbf16>
    %c7 = arith.constant 7 : index
    %c0_52 = arith.constant 0 : index
    %c0_53 = arith.constant 0 : index
    %51 = vector.load %arg2[%c7, %c0_52, %c0_53] : memref<9x4x128xbf16, #tpu.memory_space<vmem>>, vector<1x4x128xbf16>
    %52 = vector.shape_cast %51 : vector<1x4x128xbf16> to vector<4x128xbf16>
    %cst_54 = arith.constant dense<0.000000e+00> : vector<256x128xf32>
    %53 = tpu.matmul %50, %52, %cst_54 {dimension_numbers = #tpu.dot_dimension_numbers<[1], [0], [0], [1], [0, 0, 1, 1], [], []>} : vector<256x4xbf16>, vector<4x128xbf16>, vector<256x128xf32> -> vector<256x128xf32>
    %54 = arith.addf %47, %53 : vector<256x128xf32>
    %c0_55 = arith.constant 0 : index
    %c2_56 = arith.constant 2 : index
    %c2_57 = arith.constant 2 : index
    %c0_58 = arith.constant 0 : index
    %55 = vector.load %arg1[%c0_55, %c2_56, %c2_57, %c0_58] : memref<1x18x18x4xbf16, #tpu.memory_space<vmem>>, vector<1x16x16x4xbf16>
    %56 = vector.shape_cast %55 : vector<1x16x16x4xbf16> to vector<16x16x4xbf16>
    %57 = vector.shape_cast %56 : vector<16x16x4xbf16> to vector<256x4xbf16>
    %c8 = arith.constant 8 : index
    %c0_59 = arith.constant 0 : index
    %c0_60 = arith.constant 0 : index
    %58 = vector.load %arg2[%c8, %c0_59, %c0_60] : memref<9x4x128xbf16, #tpu.memory_space<vmem>>, vector<1x4x128xbf16>
    %59 = vector.shape_cast %58 : vector<1x4x128xbf16> to vector<4x128xbf16>
    %cst_61 = arith.constant dense<0.000000e+00> : vector<256x128xf32>
    %60 = tpu.matmul %57, %59, %cst_61 {dimension_numbers = #tpu.dot_dimension_numbers<[1], [0], [0], [1], [0, 0, 1, 1], [], []>} : vector<256x4xbf16>, vector<4x128xbf16>, vector<256x128xf32> -> vector<256x128xf32>
    %61 = arith.addf %54, %60 : vector<256x128xf32>
    %c0_62 = arith.constant 0 : index
    %c0_63 = arith.constant 0 : index
    %62 = vector.load %arg3[%c0_62, %c0_63] : memref<1x128xf32, #tpu.memory_space<vmem>>, vector<1x128xf32>
    %63 = vector.broadcast %62 : vector<1x128xf32> to vector<256x128xf32>
    %64 = arith.addf %61, %63 : vector<256x128xf32>
    %cst_64 = arith.constant dense<0.000000e+00> : vector<128xf32>
    %65 = vector.multi_reduction <add>, %64, %cst_64 [0] : vector<256x128xf32> to vector<128xf32>
    %66 = vector.shape_cast %65 : vector<128xf32> to vector<1x128xf32>
    %c0_65 = arith.constant 0 : index
    %c0_66 = arith.constant 0 : index
    %c0_67 = arith.constant 0 : index
    %67 = vector.load %arg4[%c0_65, %c0_66, %c0_67] : memref<1x2x128xf32, #tpu.memory_space<vmem>>, vector<1x1x128xf32>
    %68 = vector.shape_cast %67 : vector<1x1x128xf32> to vector<1x128xf32>
    %69 = vector.shape_cast %66 : vector<1x128xf32> to vector<1x1x128xf32>
    tpu.vector_store %arg4[%c0_65, %c0_66, %c0_67], %69 {strides = array<i32>} : memref<1x2x128xf32, #tpu.memory_space<vmem>>, vector<1x1x128xf32>,
    %70 = arith.mulf %64, %64 : vector<256x128xf32>
    %cst_68 = arith.constant dense<0.000000e+00> : vector<128xf32>
    %71 = vector.multi_reduction <add>, %70, %cst_68 [0] : vector<256x128xf32> to vector<128xf32>
    %72 = vector.shape_cast %71 : vector<128xf32> to vector<1x128xf32>
    %c0_69 = arith.constant 0 : index
    %c1_70 = arith.constant 1 : index
    %c0_71 = arith.constant 0 : index
    %73 = vector.load %arg4[%c0_69, %c1_70, %c0_71] : memref<1x2x128xf32, #tpu.memory_space<vmem>>, vector<1x1x128xf32>
    %74 = vector.shape_cast %73 : vector<1x1x128xf32> to vector<1x128xf32>
    %75 = vector.shape_cast %72 : vector<1x128xf32> to vector<1x1x128xf32>
    tpu.vector_store %arg4[%c0_69, %c1_70, %c0_71], %75 {strides = array<i32>} : memref<1x2x128xf32, #tpu.memory_space<vmem>>, vector<1x1x128xf32>,
    return
  }
  func.func @transform_0(%arg0: i32) -> (i32, i32, i32, i32) {
    %c0_i32 = arith.constant 0 : i32
    %c0_i32_0 = arith.constant 0 : i32
    %c0_i32_1 = arith.constant 0 : i32
    %c0_i32_2 = arith.constant 0 : i32
    return %arg0, %c0_i32, %c0_i32_0, %c0_i32_1 : i32, i32, i32, i32
  }
  func.func @transform_1(%arg0: i32) -> (i32, i32, i32) {
    %c0_i32 = arith.constant 0 : i32
    %c0_i32_0 = arith.constant 0 : i32
    %c0_i32_1 = arith.constant 0 : i32
    %c0_i32_2 = arith.constant 0 : i32
    return %c0_i32, %c0_i32_0, %c0_i32_1 : i32, i32, i32
  }
  func.func @transform_2(%arg0: i32) -> (i32, i32) {
    %c0_i32 = arith.constant 0 : i32
    %c0_i32_0 = arith.constant 0 : i32
    %c0_i32_1 = arith.constant 0 : i32
    return %c0_i32, %c0_i32_0 : i32, i32
  }
  func.func @transform_3(%arg0: i32) -> (i32, i32, i32) {
    %c0_i32 = arith.constant 0 : i32
    %c0_i32_0 = arith.constant 0 : i32
    %c0_i32_1 = arith.constant 0 : i32
    return %arg0, %c0_i32, %c0_i32_0 : i32, i32, i32
  }
}

module attributes {stable_mosaic.version = 11 : i64} {
  func.func @_finalize_kernel(%arg0: i32, %arg1: memref<1x18x18x4xbf16, #tpu.memory_space<vmem>>, %arg2: memref<9x4x128xbf16, #tpu.memory_space<vmem>>, %arg3: memref<1x128xf32, #tpu.memory_space<vmem>>, %arg4: memref<1x128xf32, #tpu.memory_space<vmem>>, %arg5: memref<1x128xf32, #tpu.memory_space<vmem>>, %arg6: memref<1x8x8x128xf32, #tpu.memory_space<vmem>>, %arg7: memref<128x128xf32, #tpu.memory_space<vmem>>) attributes {dimension_semantics = [#tpu.dimension_semantics<parallel>], iteration_bounds = array<i64: 2>, scalar_prefetch = 0 : i64, scratch_operands = 1 : i64, tpu.core_type = #tpu.core_type<tc>, window_params = [{transform_indices = @transform_0, window_bounds = array<i64: 1, 18, 18, 4>}, {pipeline_mode = #tpu.pipeline_mode<synchronous>, transform_indices = @transform_1, window_bounds = array<i64: 9, 4, 128>}, {pipeline_mode = #tpu.pipeline_mode<synchronous>, transform_indices = @transform_2, window_bounds = array<i64: 1, 128>}, {pipeline_mode = #tpu.pipeline_mode<synchronous>, transform_indices = @transform_3, window_bounds = array<i64: 1, 128>}, {pipeline_mode = #tpu.pipeline_mode<synchronous>, transform_indices = @transform_4, window_bounds = array<i64: 1, 128>}, {transform_indices = @transform_5, window_bounds = array<i64: 1, 8, 8, 128>}]} {
    %c0 = arith.constant 0 : index
    %c0_0 = arith.constant 0 : index
    %c0_1 = arith.constant 0 : index
    %c0_2 = arith.constant 0 : index
    %0 = vector.load %arg1[%c0, %c0_0, %c0_1, %c0_2] : memref<1x18x18x4xbf16, #tpu.memory_space<vmem>>, vector<1x16x16x4xbf16>
    %1 = vector.shape_cast %0 : vector<1x16x16x4xbf16> to vector<16x16x4xbf16>
    %2 = vector.shape_cast %1 : vector<16x16x4xbf16> to vector<256x4xbf16>
    %c0_3 = arith.constant 0 : index
    %c0_4 = arith.constant 0 : index
    %c0_5 = arith.constant 0 : index
    %3 = vector.load %arg2[%c0_3, %c0_4, %c0_5] : memref<9x4x128xbf16, #tpu.memory_space<vmem>>, vector<1x4x128xbf16>
    %4 = vector.shape_cast %3 : vector<1x4x128xbf16> to vector<4x128xbf16>
    %cst = arith.constant dense<0.000000e+00> : vector<256x128xf32>
    %5 = tpu.matmul %2, %4, %cst {dimension_numbers = #tpu.dot_dimension_numbers<[1], [0], [0], [1], [0, 0, 1, 1], [], []>} : vector<256x4xbf16>, vector<4x128xbf16>, vector<256x128xf32> -> vector<256x128xf32>
    %c0_6 = arith.constant 0 : index
    %c0_7 = arith.constant 0 : index
    %c1 = arith.constant 1 : index
    %c0_8 = arith.constant 0 : index
    %6 = vector.load %arg1[%c0_6, %c0_7, %c1, %c0_8] : memref<1x18x18x4xbf16, #tpu.memory_space<vmem>>, vector<1x16x16x4xbf16>
    %7 = vector.shape_cast %6 : vector<1x16x16x4xbf16> to vector<16x16x4xbf16>
    %8 = vector.shape_cast %7 : vector<16x16x4xbf16> to vector<256x4xbf16>
    %c1_9 = arith.constant 1 : index
    %c0_10 = arith.constant 0 : index
    %c0_11 = arith.constant 0 : index
    %9 = vector.load %arg2[%c1_9, %c0_10, %c0_11] : memref<9x4x128xbf16, #tpu.memory_space<vmem>>, vector<1x4x128xbf16>
    %10 = vector.shape_cast %9 : vector<1x4x128xbf16> to vector<4x128xbf16>
    %cst_12 = arith.constant dense<0.000000e+00> : vector<256x128xf32>
    %11 = tpu.matmul %8, %10, %cst_12 {dimension_numbers = #tpu.dot_dimension_numbers<[1], [0], [0], [1], [0, 0, 1, 1], [], []>} : vector<256x4xbf16>, vector<4x128xbf16>, vector<256x128xf32> -> vector<256x128xf32>
    %12 = arith.addf %5, %11 : vector<256x128xf32>
    %c0_13 = arith.constant 0 : index
    %c0_14 = arith.constant 0 : index
    %c2 = arith.constant 2 : index
    %c0_15 = arith.constant 0 : index
    %13 = vector.load %arg1[%c0_13, %c0_14, %c2, %c0_15] : memref<1x18x18x4xbf16, #tpu.memory_space<vmem>>, vector<1x16x16x4xbf16>
    %14 = vector.shape_cast %13 : vector<1x16x16x4xbf16> to vector<16x16x4xbf16>
    %15 = vector.shape_cast %14 : vector<16x16x4xbf16> to vector<256x4xbf16>
    %c2_16 = arith.constant 2 : index
    %c0_17 = arith.constant 0 : index
    %c0_18 = arith.constant 0 : index
    %16 = vector.load %arg2[%c2_16, %c0_17, %c0_18] : memref<9x4x128xbf16, #tpu.memory_space<vmem>>, vector<1x4x128xbf16>
    %17 = vector.shape_cast %16 : vector<1x4x128xbf16> to vector<4x128xbf16>
    %cst_19 = arith.constant dense<0.000000e+00> : vector<256x128xf32>
    %18 = tpu.matmul %15, %17, %cst_19 {dimension_numbers = #tpu.dot_dimension_numbers<[1], [0], [0], [1], [0, 0, 1, 1], [], []>} : vector<256x4xbf16>, vector<4x128xbf16>, vector<256x128xf32> -> vector<256x128xf32>
    %19 = arith.addf %12, %18 : vector<256x128xf32>
    %c0_20 = arith.constant 0 : index
    %c1_21 = arith.constant 1 : index
    %c0_22 = arith.constant 0 : index
    %c0_23 = arith.constant 0 : index
    %20 = vector.load %arg1[%c0_20, %c1_21, %c0_22, %c0_23] : memref<1x18x18x4xbf16, #tpu.memory_space<vmem>>, vector<1x16x16x4xbf16>
    %21 = vector.shape_cast %20 : vector<1x16x16x4xbf16> to vector<16x16x4xbf16>
    %22 = vector.shape_cast %21 : vector<16x16x4xbf16> to vector<256x4xbf16>
    %c3 = arith.constant 3 : index
    %c0_24 = arith.constant 0 : index
    %c0_25 = arith.constant 0 : index
    %23 = vector.load %arg2[%c3, %c0_24, %c0_25] : memref<9x4x128xbf16, #tpu.memory_space<vmem>>, vector<1x4x128xbf16>
    %24 = vector.shape_cast %23 : vector<1x4x128xbf16> to vector<4x128xbf16>
    %cst_26 = arith.constant dense<0.000000e+00> : vector<256x128xf32>
    %25 = tpu.matmul %22, %24, %cst_26 {dimension_numbers = #tpu.dot_dimension_numbers<[1], [0], [0], [1], [0, 0, 1, 1], [], []>} : vector<256x4xbf16>, vector<4x128xbf16>, vector<256x128xf32> -> vector<256x128xf32>
    %26 = arith.addf %19, %25 : vector<256x128xf32>
    %c0_27 = arith.constant 0 : index
    %c1_28 = arith.constant 1 : index
    %c1_29 = arith.constant 1 : index
    %c0_30 = arith.constant 0 : index
    %27 = vector.load %arg1[%c0_27, %c1_28, %c1_29, %c0_30] : memref<1x18x18x4xbf16, #tpu.memory_space<vmem>>, vector<1x16x16x4xbf16>
    %28 = vector.shape_cast %27 : vector<1x16x16x4xbf16> to vector<16x16x4xbf16>
    %29 = vector.shape_cast %28 : vector<16x16x4xbf16> to vector<256x4xbf16>
    %c4 = arith.constant 4 : index
    %c0_31 = arith.constant 0 : index
    %c0_32 = arith.constant 0 : index
    %30 = vector.load %arg2[%c4, %c0_31, %c0_32] : memref<9x4x128xbf16, #tpu.memory_space<vmem>>, vector<1x4x128xbf16>
    %31 = vector.shape_cast %30 : vector<1x4x128xbf16> to vector<4x128xbf16>
    %cst_33 = arith.constant dense<0.000000e+00> : vector<256x128xf32>
    %32 = tpu.matmul %29, %31, %cst_33 {dimension_numbers = #tpu.dot_dimension_numbers<[1], [0], [0], [1], [0, 0, 1, 1], [], []>} : vector<256x4xbf16>, vector<4x128xbf16>, vector<256x128xf32> -> vector<256x128xf32>
    %33 = arith.addf %26, %32 : vector<256x128xf32>
    %c0_34 = arith.constant 0 : index
    %c1_35 = arith.constant 1 : index
    %c2_36 = arith.constant 2 : index
    %c0_37 = arith.constant 0 : index
    %34 = vector.load %arg1[%c0_34, %c1_35, %c2_36, %c0_37] : memref<1x18x18x4xbf16, #tpu.memory_space<vmem>>, vector<1x16x16x4xbf16>
    %35 = vector.shape_cast %34 : vector<1x16x16x4xbf16> to vector<16x16x4xbf16>
    %36 = vector.shape_cast %35 : vector<16x16x4xbf16> to vector<256x4xbf16>
    %c5 = arith.constant 5 : index
    %c0_38 = arith.constant 0 : index
    %c0_39 = arith.constant 0 : index
    %37 = vector.load %arg2[%c5, %c0_38, %c0_39] : memref<9x4x128xbf16, #tpu.memory_space<vmem>>, vector<1x4x128xbf16>
    %38 = vector.shape_cast %37 : vector<1x4x128xbf16> to vector<4x128xbf16>
    %cst_40 = arith.constant dense<0.000000e+00> : vector<256x128xf32>
    %39 = tpu.matmul %36, %38, %cst_40 {dimension_numbers = #tpu.dot_dimension_numbers<[1], [0], [0], [1], [0, 0, 1, 1], [], []>} : vector<256x4xbf16>, vector<4x128xbf16>, vector<256x128xf32> -> vector<256x128xf32>
    %40 = arith.addf %33, %39 : vector<256x128xf32>
    %c0_41 = arith.constant 0 : index
    %c2_42 = arith.constant 2 : index
    %c0_43 = arith.constant 0 : index
    %c0_44 = arith.constant 0 : index
    %41 = vector.load %arg1[%c0_41, %c2_42, %c0_43, %c0_44] : memref<1x18x18x4xbf16, #tpu.memory_space<vmem>>, vector<1x16x16x4xbf16>
    %42 = vector.shape_cast %41 : vector<1x16x16x4xbf16> to vector<16x16x4xbf16>
    %43 = vector.shape_cast %42 : vector<16x16x4xbf16> to vector<256x4xbf16>
    %c6 = arith.constant 6 : index
    %c0_45 = arith.constant 0 : index
    %c0_46 = arith.constant 0 : index
    %44 = vector.load %arg2[%c6, %c0_45, %c0_46] : memref<9x4x128xbf16, #tpu.memory_space<vmem>>, vector<1x4x128xbf16>
    %45 = vector.shape_cast %44 : vector<1x4x128xbf16> to vector<4x128xbf16>
    %cst_47 = arith.constant dense<0.000000e+00> : vector<256x128xf32>
    %46 = tpu.matmul %43, %45, %cst_47 {dimension_numbers = #tpu.dot_dimension_numbers<[1], [0], [0], [1], [0, 0, 1, 1], [], []>} : vector<256x4xbf16>, vector<4x128xbf16>, vector<256x128xf32> -> vector<256x128xf32>
    %47 = arith.addf %40, %46 : vector<256x128xf32>
    %c0_48 = arith.constant 0 : index
    %c2_49 = arith.constant 2 : index
    %c1_50 = arith.constant 1 : index
    %c0_51 = arith.constant 0 : index
    %48 = vector.load %arg1[%c0_48, %c2_49, %c1_50, %c0_51] : memref<1x18x18x4xbf16, #tpu.memory_space<vmem>>, vector<1x16x16x4xbf16>
    %49 = vector.shape_cast %48 : vector<1x16x16x4xbf16> to vector<16x16x4xbf16>
    %50 = vector.shape_cast %49 : vector<16x16x4xbf16> to vector<256x4xbf16>
    %c7 = arith.constant 7 : index
    %c0_52 = arith.constant 0 : index
    %c0_53 = arith.constant 0 : index
    %51 = vector.load %arg2[%c7, %c0_52, %c0_53] : memref<9x4x128xbf16, #tpu.memory_space<vmem>>, vector<1x4x128xbf16>
    %52 = vector.shape_cast %51 : vector<1x4x128xbf16> to vector<4x128xbf16>
    %cst_54 = arith.constant dense<0.000000e+00> : vector<256x128xf32>
    %53 = tpu.matmul %50, %52, %cst_54 {dimension_numbers = #tpu.dot_dimension_numbers<[1], [0], [0], [1], [0, 0, 1, 1], [], []>} : vector<256x4xbf16>, vector<4x128xbf16>, vector<256x128xf32> -> vector<256x128xf32>
    %54 = arith.addf %47, %53 : vector<256x128xf32>
    %c0_55 = arith.constant 0 : index
    %c2_56 = arith.constant 2 : index
    %c2_57 = arith.constant 2 : index
    %c0_58 = arith.constant 0 : index
    %55 = vector.load %arg1[%c0_55, %c2_56, %c2_57, %c0_58] : memref<1x18x18x4xbf16, #tpu.memory_space<vmem>>, vector<1x16x16x4xbf16>
    %56 = vector.shape_cast %55 : vector<1x16x16x4xbf16> to vector<16x16x4xbf16>
    %57 = vector.shape_cast %56 : vector<16x16x4xbf16> to vector<256x4xbf16>
    %c8 = arith.constant 8 : index
    %c0_59 = arith.constant 0 : index
    %c0_60 = arith.constant 0 : index
    %58 = vector.load %arg2[%c8, %c0_59, %c0_60] : memref<9x4x128xbf16, #tpu.memory_space<vmem>>, vector<1x4x128xbf16>
    %59 = vector.shape_cast %58 : vector<1x4x128xbf16> to vector<4x128xbf16>
    %cst_61 = arith.constant dense<0.000000e+00> : vector<256x128xf32>
    %60 = tpu.matmul %57, %59, %cst_61 {dimension_numbers = #tpu.dot_dimension_numbers<[1], [0], [0], [1], [0, 0, 1, 1], [], []>} : vector<256x4xbf16>, vector<4x128xbf16>, vector<256x128xf32> -> vector<256x128xf32>
    %61 = arith.addf %54, %60 : vector<256x128xf32>
    %c0_62 = arith.constant 0 : index
    %c0_63 = arith.constant 0 : index
    %62 = vector.load %arg3[%c0_62, %c0_63] : memref<1x128xf32, #tpu.memory_space<vmem>>, vector<1x128xf32>
    %63 = vector.broadcast %62 : vector<1x128xf32> to vector<256x128xf32>
    %64 = arith.addf %61, %63 : vector<256x128xf32>
    %c0_64 = arith.constant 0 : index
    %c0_65 = arith.constant 0 : index
    %65 = vector.load %arg4[%c0_64, %c0_65] : memref<1x128xf32, #tpu.memory_space<vmem>>, vector<1x128xf32>
    %66 = vector.broadcast %65 : vector<1x128xf32> to vector<256x128xf32>
    %67 = arith.mulf %64, %66 : vector<256x128xf32>
    %c0_66 = arith.constant 0 : index
    %c0_67 = arith.constant 0 : index
    %68 = vector.load %arg5[%c0_66, %c0_67] : memref<1x128xf32, #tpu.memory_space<vmem>>, vector<1x128xf32>
    %69 = vector.broadcast %68 : vector<1x128xf32> to vector<256x128xf32>
    %70 = arith.addf %67, %69 : vector<256x128xf32>
    %cst_68 = arith.constant 0.000000e+00 : f32
    %71 = vector.broadcast %cst_68 : f32 to vector<256x128xf32>
    %72 = arith.maximumf %70, %71 : vector<256x128xf32>
    %73 = vector.shape_cast %72 : vector<256x128xf32> to vector<8x2x16x128xf32>
    %cst_69 = arith.constant dense<0xFF800000> : vector<8x16x128xf32>
    %74 = vector.multi_reduction <maximumf>, %73, %cst_69 [1] : vector<8x2x16x128xf32> to vector<8x16x128xf32>
    %75 = vector.shape_cast %74 : vector<8x16x128xf32> to vector<128x128xf32>
    %c0_70 = arith.constant 0 : index
    %c0_71 = arith.constant 0 : index
    %76 = vector.load %arg7[%c0_70, %c0_71] : memref<128x128xf32, #tpu.memory_space<vmem>>, vector<128x128xf32>
    tpu.vector_store %arg7[%c0_70, %c0_71], %75 {strides = array<i32>} : memref<128x128xf32, #tpu.memory_space<vmem>>, vector<128x128xf32>,
    %c0_72 = arith.constant 0 : index
    %c0_73 = arith.constant 0 : index
    %77 = tpu.strided_load %arg7[%c0_72, %c0_73] {strides = array<i32: 2, 1>} : memref<128x128xf32, #tpu.memory_space<vmem>>, vector<64x128xf32>
    %c1_74 = arith.constant 1 : index
    %c0_75 = arith.constant 0 : index
    %78 = tpu.strided_load %arg7[%c1_74, %c0_75] {strides = array<i32: 2, 1>} : memref<128x128xf32, #tpu.memory_space<vmem>>, vector<64x128xf32>
    %79 = arith.maximumf %77, %78 : vector<64x128xf32>
    %80 = vector.shape_cast %79 : vector<64x128xf32> to vector<8x8x128xf32>
    %c0_76 = arith.constant 0 : index
    %c0_77 = arith.constant 0 : index
    %c0_78 = arith.constant 0 : index
    %c0_79 = arith.constant 0 : index
    %81 = vector.load %arg6[%c0_76, %c0_77, %c0_78, %c0_79] : memref<1x8x8x128xf32, #tpu.memory_space<vmem>>, vector<1x8x8x128xf32>
    %82 = vector.shape_cast %81 : vector<1x8x8x128xf32> to vector<8x8x128xf32>
    %83 = vector.shape_cast %80 : vector<8x8x128xf32> to vector<1x8x8x128xf32>
    tpu.vector_store %arg6[%c0_76, %c0_77, %c0_78, %c0_79], %83 {strides = array<i32>} : memref<1x8x8x128xf32, #tpu.memory_space<vmem>>, vector<1x8x8x128xf32>,
    return
  }
  func.func @transform_0(%arg0: i32) -> (i32, i32, i32, i32) {
    %c0_i32 = arith.constant 0 : i32
    %c0_i32_0 = arith.constant 0 : i32
    %c0_i32_1 = arith.constant 0 : i32
    %c0_i32_2 = arith.constant 0 : i32
    return %arg0, %c0_i32, %c0_i32_0, %c0_i32_1 : i32, i32, i32, i32
  }
  func.func @transform_1(%arg0: i32) -> (i32, i32, i32) {
    %c0_i32 = arith.constant 0 : i32
    %c0_i32_0 = arith.constant 0 : i32
    %c0_i32_1 = arith.constant 0 : i32
    %c0_i32_2 = arith.constant 0 : i32
    return %c0_i32, %c0_i32_0, %c0_i32_1 : i32, i32, i32
  }
  func.func @transform_2(%arg0: i32) -> (i32, i32) {
    %c0_i32 = arith.constant 0 : i32
    %c0_i32_0 = arith.constant 0 : i32
    %c0_i32_1 = arith.constant 0 : i32
    return %c0_i32, %c0_i32_0 : i32, i32
  }
  func.func @transform_3(%arg0: i32) -> (i32, i32) {
    %c0_i32 = arith.constant 0 : i32
    %c0_i32_0 = arith.constant 0 : i32
    %c0_i32_1 = arith.constant 0 : i32
    return %c0_i32, %c0_i32_0 : i32, i32
  }
  func.func @transform_4(%arg0: i32) -> (i32, i32) {
    %c0_i32 = arith.constant 0 : i32
    %c0_i32_0 = arith.constant 0 : i32
    %c0_i32_1 = arith.constant 0 : i32
    return %c0_i32, %c0_i32_0 : i32, i32
  }
  func.func @transform_5(%arg0: i32) -> (i32, i32, i32, i32) {
    %c0_i32 = arith.constant 0 : i32
    %c0_i32_0 = arith.constant 0 : i32
    %c0_i32_1 = arith.constant 0 : i32
    %c0_i32_2 = arith.constant 0 : i32
    return %arg0, %c0_i32, %c0_i32_0, %c0_i32_1 : i32, i32, i32, i32
  }
}

</mosaic_0001>

<llo_original>
// kernel: model_section_forward.2
$region0: #{model_section_forward.2}
  #allocation0 [shape = 'u32[]', space=smem, size = 0x4, offset = 0x4, fixed_abs, tag = 'smem constant byte address 0x4 - core index']
  #allocation1 [shape = 'u32[144,128]{1,0:T(1,128)}', space=vmem, size = 0x12000, scoped, tag = 'internal scratch']
  %s0 = inlined_call_operand.vmem [shape: bf16[2,18,18,4], index: 0, kind: input, shape index: {}]
  %s1 = inlined_call_operand.vmem [shape: bf16[9,4,128], index: 1, kind: input, shape index: {}]
  %s2 = inlined_call_operand.vmem [shape: f32[1,128], index: 2, kind: input, shape index: {}]
  %s3 = inlined_call_operand.vmem [shape: f32[2,2,128], index: 3, kind: output, shape index: {}]
  %s4 = sld [smem:[#allocation0]]
  $region45: #{model_section_forward.2} parent=0
    _
  %s6 = ssub.s32 1, %s4
  %s7 = scalar_select 0, %s6, %s4
  loop: start=0, step=1, limit=4
  $region2: #{model_section_forward.2} parent=0 // loop_pre_header
    _
  $region3: #{model_section_forward.2} parent=0 // loop_header
    %s9 = sphi 0, %s13
    %p10 = scmp.ge.s32.totalorder %s9, 4
    %s19 = sphi 0, %s21
    %s22 = sphi 0, %s19
    %s23 = sphi 0, %s22
    %s39 = sphi 0, %s23
    %s43 = sphi 0, %s43
    %s45 = sphi 0, %s43
    %s46 = sphi 0, %s45
    %s60 = sphi 0, %s46
    %s64 = sphi 0, %s64
    %s66 = sphi 0, %s64
    %s67 = sphi 0, %s66
    %s81 = sphi 0, %s67
    %s87 = sphi 0, %s89
    %s90 = sphi 0, %s87
    %s91 = sphi 0, %s90
    %s107 = sphi 0, %s91
  $region4: #{model_section_forward.2} parent=0 // loop_header_branch
    %12 = sbr.rel (%p10) target = $region8
  $region5: #{model_section_forward.2} parent=0 // loop_body
    %s14 = ssub.s32 %s9, 1
    %s15 = ssub.s32 %s9, 2
    %s16 = sadd.s32 %s9, 1
    %s17 = ssub.s32 %s9, %s16
    %p18 = scmp.eq.s32.totalorder %s17, 0
    %s20 = sadd.s32 %s19, 1
    %s21 = scalar_select %p18, %s19, %s20
    %p24 = pneg %p18
    %p25 = scmp.eq.s32.totalorder %s9, 1
    %p26 = por %p24, %p25
    %p27 = scmp.ne.s32.totalorder %s19, %s22
    %p28 = scmp.eq.s32.totalorder %s9, 0
    %p29 = por %p27, %p28
    %p30 = scmp.ne.s32.totalorder %s19, %s22
    %p31 = scmp.eq.s32.totalorder %s14, 1
    %p32 = por %p30, %p31
    %p33 = scmp.ne.s32.totalorder %s22, %s23
    %p34 = scmp.eq.s32.totalorder %s14, 0
    %p35 = por %p33, %p34
    %p36 = scmp.ne.s32.totalorder %s22, %s23
    %p37 = scmp.eq.s32.totalorder %s15, 1
    %p38 = por %p36, %p37
    %p40 = scmp.ne.s32.totalorder %s23, %s39
    %p41 = scmp.eq.s32.totalorder %s15, 0
    %p42 = por %p40, %p41
    %s44 = sadd.s32 %s43, 1
    %p47 = scmp.eq.s32.totalorder %s9, 1
    %p48 = scmp.ne.s32.totalorder %s43, %s45
    %p49 = scmp.eq.s32.totalorder %s9, 0
    %p50 = por %p48, %p49
    %p51 = scmp.ne.s32.totalorder %s43, %s45
    %p52 = scmp.eq.s32.totalorder %s14, 1
    %p53 = por %p51, %p52
    %p54 = scmp.ne.s32.totalorder %s45, %s46
    %p55 = scmp.eq.s32.totalorder %s14, 0
    %p56 = por %p54, %p55
    %p57 = scmp.ne.s32.totalorder %s45, %s46
    %p58 = scmp.eq.s32.totalorder %s15, 1
    %p59 = por %p57, %p58
    %p61 = scmp.ne.s32.totalorder %s46, %s60
    %p62 = scmp.eq.s32.totalorder %s15, 0
    %p63 = por %p61, %p62
    %s65 = sadd.s32 %s64, 1
    %p68 = scmp.eq.s32.totalorder %s9, 1
    %p69 = scmp.ne.s32.totalorder %s64, %s66
    %p70 = scmp.eq.s32.totalorder %s9, 0
    %p71 = por %p69, %p70
    %p72 = scmp.ne.s32.totalorder %s64, %s66
    %p73 = scmp.eq.s32.totalorder %s14, 1
    %p74 = por %p72, %p73
    %p75 = scmp.ne.s32.totalorder %s66, %s67
    %p76 = scmp.eq.s32.totalorder %s14, 0
    %p77 = por %p75, %p76
    %p78 = scmp.ne.s32.totalorder %s66, %s67
    %p79 = scmp.eq.s32.totalorder %s15, 1
    %p80 = por %p78, %p79
    %p82 = scmp.ne.s32.totalorder %s67, %s81
    %p83 = scmp.eq.s32.totalorder %s15, 0
    %p84 = por %p82, %p83
    %s85 = ssub.s32 %s9, %s16
    %p86 = scmp.eq.s32.totalorder %s85, 0
    %s88 = sadd.s32 %s87, 1
    %s89 = scalar_select %p86, %s87, %s88
    %p92 = pneg %p86
    %p93 = scmp.eq.s32.totalorder %s9, 1
    %p94 = por %p92, %p93
    %p95 = scmp.ne.s32.totalorder %s87, %s90
    %p96 = scmp.eq.s32.totalorder %s9, 0
    %p97 = por %p95, %p96
    %p98 = scmp.ne.s32.totalorder %s87, %s90
    %p99 = scmp.eq.s32.totalorder %s14, 1
    %p100 = por %p98, %p99
    %p101 = scmp.ne.s32.totalorder %s90, %s91
    %p102 = scmp.eq.s32.totalorder %s14, 0
    %p103 = por %p101, %p102
    %p104 = scmp.ne.s32.totalorder %s90, %s91
    %p105 = scmp.eq.s32.totalorder %s15, 1
    %p106 = por %p104, %p105
    %p108 = scmp.ne.s32.totalorder %s91, %s107
    %p109 = scmp.eq.s32.totalorder %s15, 0
    %p110 = por %p108, %p109
    %p111 = scmp.le.s32.totalorder 1, %s9
    %p112 = scmp.lt.s32.totalorder %s9, 3
    %p113 = pnand %p111, %p112
    %p114 = pneg %p113
    // Predicated region
    $region9: #{model_section_forward.2} parent=5 // pred_check
      _
    $region10: #{model_section_forward.2} parent=5 // pred_check_branch
      %116 = sbr.rel (%p113) target = $region12
    $region11: #{model_section_forward.2} parent=5 // pred_region
      %s117 = ssub.s32 %s9, 1
      // Predicated region
      $region13: #{model_section_forward.2} parent=11 // pred_check
        %p118 = pneg %p56
      $region14: #{model_section_forward.2} parent=11 // pred_check_branch
        %120 = sbr.rel (%p118) target = $region16
      $region15: #{model_section_forward.2} parent=11 // pred_region
        _
      $region16: #{model_section_forward.2} parent=11 // pred_fallthru
        _
      // Predicated region
      $region17: #{model_section_forward.2} parent=11 // pred_check
        %p121 = pneg %p77
      $region18: #{model_section_forward.2} parent=11 // pred_check_branch
        %123 = sbr.rel (%p121) target = $region20
      $region19: #{model_section_forward.2} parent=11 // pred_region
        _
      $region20: #{model_section_forward.2} parent=11 // pred_fallthru
        _
    $region12: #{model_section_forward.2} parent=5 // pred_fallthru
      _
    %p124 = scmp.lt.s32.totalorder %s9, 2
    // Predicated region
    $region21: #{model_section_forward.2} parent=5 // pred_check
      %p125 = pneg %p124
    $region22: #{model_section_forward.2} parent=5 // pred_check_branch
      %127 = sbr.rel (%p125) target = $region24
    $region23: #{model_section_forward.2} parent=5 // pred_region
      // Predicated region
      $region25: #{model_section_forward.2} parent=23 // pred_check
        %p128 = pneg %p29
      $region26: #{model_section_forward.2} parent=23 // pred_check_branch
        %130 = sbr.rel (%p128) target = $region28
      $region27: #{model_section_forward.2} parent=23 // pred_region
        %p131 = scmp.lt.s32.totalorder %s9, 1
        %s132 = scalar_select %p131, %s9, 1
        %s133 = smul.addr %s132, 54
        %s134 = smul.addr %s133, 4
        %s135 = scalar_lea.vmem %s0, %s134
      $region28: #{model_section_forward.2} parent=23 // pred_fallthru
        _
    $region24: #{model_section_forward.2} parent=5 // pred_fallthru
      _
    %p136 = scmp.le.s32.totalorder 1, %s9
    %p137 = scmp.lt.s32.totalorder %s9, 3
    %p138 = pnand %p136, %p137
    %p139 = pneg %p138
    // Predicated region
    $region29: #{model_section_forward.2} parent=5 // pred_check
      _
    $region30: #{model_section_forward.2} parent=5 // pred_check_branch
      %141 = sbr.rel (%p138) target = $region32
    $region31: #{model_section_forward.2} parent=5 // pred_region
      %s142 = ssub.s32 %s9, 1
      %p143 = scmp.lt.s32.totalorder %s14, 1
      %s144 = scalar_select %p143, %s14, 1
      %s145 = smul.addr %s144, 54
      %s146 = smul.addr %s145, 4
      %s147 = scalar_lea.vmem %s0, %s146
      %p148 = pneg %p35
      %p149 = pneg %p32
      %p150 = pneg %p56
      %p151 = pneg %p53
      %p152 = pneg %p77
      %p153 = pneg %p74
      %p154 = pneg %p103
      %p155 = pneg %p100
      %p156 = scmp.lt.s32.totalorder %s14, 1
      %s157 = scalar_select %p156, %s14, 1
      %s158 = smul.addr %s157, 2
      %s159 = scalar_lea.vmem %s3, %s158
      %p160 = scmp.lt.s32.totalorder %s14, 1
      %s161 = scalar_select %p160, %s14, 1
      %s162 = smul.addr %s161, 54
      %s163 = smul.addr %s162, 4
      %s164 = scalar_lea.vmem %s0, %s163
      %p165 = scmp.lt.s32.totalorder %s14, 1
      %s166 = scalar_select %p165, %s14, 1
      %s167 = smul.addr %s166, 2
      %s168 = scalar_lea.vmem %s3, %s167
      %v170 = vld [vmem:[%s164] sm:$0xf]
      %v171 = vld [vmem:[%s164 + $0x4] sm:$0xf]
      %v172 = vld [vmem:[%s164 + $0xc] sm:$0xf]
      %v173 = vld [vmem:[%s164 + $0x10] sm:$0xf]
      %v174 = vld [vmem:[%s164 + $0x18] sm:$0xf]
      %v175 = vld [vmem:[%s164 + $0x1c] sm:$0xf]
      %v176 = vld [vmem:[%s164 + $0x24] sm:$0xf]
      %v177 = vld [vmem:[%s164 + $0x28] sm:$0xf]
      %v178 = vld [vmem:[%s164 + $0x30] sm:$0xf]
      %v179 = vld [vmem:[%s164 + $0x34] sm:$0xf]
      %v180 = vld [vmem:[%s164 + $0x3c] sm:$0xf]
      %v181 = vld [vmem:[%s164 + $0x40] sm:$0xf]
      %v182 = vld [vmem:[%s164 + $0x48] sm:$0xf]
      %v183 = vld [vmem:[%s164 + $0x4c] sm:$0xf]
      %v184 = vld [vmem:[%s164 + $0x54] sm:$0xf]
      %v185 = vld [vmem:[%s164 + $0x58] sm:$0xf]
      %v186 = vld [vmem:[%s164 + $0x60] sm:$0xf]
      %v187 = vld [vmem:[%s164 + $0x64] sm:$0xf]
      %v188 = vld [vmem:[%s164 + $0x6c] sm:$0xf]
      %v189 = vld [vmem:[%s164 + $0x70] sm:$0xf]
      %v190 = vld [vmem:[%s164 + $0x78] sm:$0xf]
      %v191 = vld [vmem:[%s164 + $0x7c] sm:$0xf]
      %v192 = vld [vmem:[%s164 + $0x84] sm:$0xf]
      %v193 = vld [vmem:[%s164 + $0x88] sm:$0xf]
      %v194 = vld [vmem:[%s164 + $0x90] sm:$0xf]
      %v195 = vld [vmem:[%s164 + $0x94] sm:$0xf]
      %v196 = vld [vmem:[%s164 + $0x9c] sm:$0xf]
      %v197 = vld [vmem:[%s164 + $0xa0] sm:$0xf]
      %v198 = vld [vmem:[%s164 + $0xa8] sm:$0xf]
      %v199 = vld [vmem:[%s164 + $0xac] sm:$0xf]
      %v200 = vld [vmem:[%s164 + $0xb4] sm:$0xf]
      %v201 = vld [vmem:[%s164 + $0xb8] sm:$0xf]
      %v202 = vld [vmem:[%s1] sm:$0x3]
      %v203 = vld [vmem:[%s164 + $0x8] sm:$0x1]
      %v204 = vld [vmem:[%s164 + $0x14] sm:$0x1]
      %v205 = vld [vmem:[%s164 + $0x20] sm:$0x1]
      %v206 = vld [vmem:[%s164 + $0x2c] sm:$0x1]
      %v207 = vld [vmem:[%s164 + $0x38] sm:$0x1]
      %v208 = vld [vmem:[%s164 + $0x44] sm:$0x1]
      %v209 = vld [vmem:[%s164 + $0x50] sm:$0x1]
      %v210 = vld [vmem:[%s164 + $0x5c] sm:$0x1]
      %v211 = vld [vmem:[%s164 + $0x68] sm:$0x1]
      %v212 = vld [vmem:[%s164 + $0x74] sm:$0x1]
      %v213 = vld [vmem:[%s164 + $0x80] sm:$0x1]
      %v214 = vld [vmem:[%s164 + $0x8c] sm:$0x1]
      %v215 = vld [vmem:[%s164 + $0x98] sm:$0x1]
      %v216 = vld [vmem:[%s164 + $0xa4] sm:$0x1]
      %v217 = vld [vmem:[%s164 + $0xb0] sm:$0x1]
      %v218 = vld [vmem:[%s164 + $0xbc] sm:$0x1]
      %vm219 = vsmask.f32 3328
      %vm220 = vsmask.f32 7440
      %vm221 = vmor %vm219, %vm220
      %v223 = vshrl.u32 %v170, 16
      %v225 = vrot.slane %v223, 4
      %v226 = vshll.u32 %v170, 16
      %v228 = vrot.slane %v226, 5
      %v229 = vor.u32 %v225, %v228
      %v230 = vrot.slane %v229, 4
      %v232 = vshll.u32 %v171, 16
      %v234 = vrot.slane %v232, 5
      %v235 = vsel %vm221, %v230, %v234
      %v236 = vshrl.u32 %v171, 16
      %v238 = vrot.slane %v236, 4
      %v239 = vor.u32 %v238, %v234
      %v240 = vrot.slane %v239, 4
      %v242 = vshll.u32 %v203, 16
      %v244 = vrot.slane %v242, 5
      %v245 = vsel %vm221, %v240, %v244
      %v247 = vshrl.u32 %v172, 16
      %v249 = vrot.slane %v247, 4
      %v250 = vshll.u32 %v172, 16
      %v252 = vrot.slane %v250, 5
      %v253 = vor.u32 %v249, %v252
      %v254 = vrot.slane %v253, 4
      %v256 = vshll.u32 %v173, 16
      %v258 = vrot.slane %v256, 5
      %v259 = vsel %vm221, %v254, %v258
      %v260 = vshrl.u32 %v173, 16
      %v262 = vrot.slane %v260, 4
      %v263 = vor.u32 %v262, %v258
      %v264 = vrot.slane %v263, 4
      %v266 = vshll.u32 %v204, 16
      %v268 = vrot.slane %v266, 5
      %v269 = vsel %vm221, %v264, %v268
      %v271 = vshrl.u32 %v174, 16
      %v273 = vrot.slane %v271, 4
      %v274 = vshll.u32 %v174, 16
      %v276 = vrot.slane %v274, 5
      %v277 = vor.u32 %v273, %v276
      %v278 = vrot.slane %v277, 4
      %v280 = vshll.u32 %v175, 16
      %v282 = vrot.slane %v280, 5
      %v283 = vsel %vm221, %v278, %v282
      %v284 = vshrl.u32 %v175, 16
      %v286 = vrot.slane %v284, 4
      %v287 = vor.u32 %v286, %v282
      %v288 = vrot.slane %v287, 4
      %v290 = vshll.u32 %v205, 16
      %v292 = vrot.slane %v290, 5
      %v293 = vsel %vm221, %v288, %v292
      %v295 = vshrl.u32 %v176, 16
      %v297 = vrot.slane %v295, 4
      %v298 = vshll.u32 %v176, 16
      %v300 = vrot.slane %v298, 5
      %v301 = vor.u32 %v297, %v300
      %v302 = vrot.slane %v301, 4
      %v304 = vshll.u32 %v177, 16
      %v306 = vrot.slane %v304, 5
      %v307 = vsel %vm221, %v302, %v306
      %v308 = vshrl.u32 %v177, 16
      %v310 = vrot.slane %v308, 4
      %v311 = vor.u32 %v310, %v306
      %v312 = vrot.slane %v311, 4
      %v314 = vshll.u32 %v206, 16
      %v316 = vrot.slane %v314, 5
      %v317 = vsel %vm221, %v312, %v316
      %v319 = vshrl.u32 %v178, 16
      %v321 = vrot.slane %v319, 4
      %v322 = vshll.u32 %v178, 16
      %v324 = vrot.slane %v322, 5
      %v325 = vor.u32 %v321, %v324
      %v326 = vrot.slane %v325, 4
      %v328 = vshll.u32 %v179, 16
      %v330 = vrot.slane %v328, 5
      %v331 = vsel %vm221, %v326, %v330
      %v332 = vshrl.u32 %v179, 16
      %v334 = vrot.slane %v332, 4
      %v335 = vor.u32 %v334, %v330
      %v336 = vrot.slane %v335, 4
      %v338 = vshll.u32 %v207, 16
      %v340 = vrot.slane %v338, 5
      %v341 = vsel %vm221, %v336, %v340
      %v343 = vshrl.u32 %v180, 16
      %v345 = vrot.slane %v343, 4
      %v346 = vshll.u32 %v180, 16
      %v348 = vrot.slane %v346, 5
      %v349 = vor.u32 %v345, %v348
      %v350 = vrot.slane %v349, 4
      %v352 = vshll.u32 %v181, 16
      %v354 = vrot.slane %v352, 5
      %v355 = vsel %vm221, %v350, %v354
      %v356 = vshrl.u32 %v181, 16
      %v358 = vrot.slane %v356, 4
      %v359 = vor.u32 %v358, %v354
      %v360 = vrot.slane %v359, 4
      %v362 = vshll.u32 %v208, 16
      %v364 = vrot.slane %v362, 5
      %v365 = vsel %vm221, %v360, %v364
      %v367 = vshrl.u32 %v182, 16
      %v369 = vrot.slane %v367, 4
      %v370 = vshll.u32 %v182, 16
      %v372 = vrot.slane %v370, 5
      %v373 = vor.u32 %v369, %v372
      %v374 = vrot.slane %v373, 4
      %v376 = vshll.u32 %v183, 16
      %v378 = vrot.slane %v376, 5
      %v379 = vsel %vm221, %v374, %v378
      %v380 = vshrl.u32 %v183, 16
      %v382 = vrot.slane %v380, 4
      %v383 = vor.u32 %v382, %v378
      %v384 = vrot.slane %v383, 4
      %v386 = vshll.u32 %v209, 16
      %v388 = vrot.slane %v386, 5
      %v389 = vsel %vm221, %v384, %v388
      %v391 = vshrl.u32 %v184, 16
      %v393 = vrot.slane %v391, 4
      %v394 = vshll.u32 %v184, 16
      %v396 = vrot.slane %v394, 5
      %v397 = vor.u32 %v393, %v396
      %v398 = vrot.slane %v397, 4
      %v400 = vshll.u32 %v185, 16
      %v402 = vrot.slane %v400, 5
      %v403 = vsel %vm221, %v398, %v402
      %v404 = vshrl.u32 %v185, 16
      %v406 = vrot.slane %v404, 4
      %v407 = vor.u32 %v406, %v402
      %v408 = vrot.slane %v407, 4
      %v410 = vshll.u32 %v210, 16
      %v412 = vrot.slane %v410, 5
      %v413 = vsel %vm221, %v408, %v412
      %v415 = vshrl.u32 %v186, 16
      %v417 = vrot.slane %v415, 4
      %v418 = vshll.u32 %v186, 16
      %v420 = vrot.slane %v418, 5
      %v421 = vor.u32 %v417, %v420
      %v422 = vrot.slane %v421, 4
      %v424 = vshll.u32 %v187, 16
      %v426 = vrot.slane %v424, 5
      %v427 = vsel %vm221, %v422, %v426
      %v428 = vshrl.u32 %v187, 16
      %v430 = vrot.slane %v428, 4
      %v431 = vor.u32 %v430, %v426
      %v432 = vrot.slane %v431, 4
      %v434 = vshll.u32 %v211, 16
      %v436 = vrot.slane %v434, 5
      %v437 = vsel %vm221, %v432, %v436
      %v439 = vshrl.u32 %v188, 16
      %v441 = vrot.slane %v439, 4
      %v442 = vshll.u32 %v188, 16
      %v444 = vrot.slane %v442, 5
      %v445 = vor.u32 %v441, %v444
      %v446 = vrot.slane %v445, 4
      %v448 = vshll.u32 %v189, 16
      %v450 = vrot.slane %v448, 5
      %v451 = vsel %vm221, %v446, %v450
      %v452 = vshrl.u32 %v189, 16
      %v454 = vrot.slane %v452, 4
      %v455 = vor.u32 %v454, %v450
      %v456 = vrot.slane %v455, 4
      %v458 = vshll.u32 %v212, 16
      %v460 = vrot.slane %v458, 5
      %v461 = vsel %vm221, %v456, %v460
      %v463 = vshrl.u32 %v190, 16
      %v465 = vrot.slane %v463, 4
      %v466 = vshll.u32 %v190, 16
      %v468 = vrot.slane %v466, 5
      %v469 = vor.u32 %v465, %v468
      %v470 = vrot.slane %v469, 4
      %v472 = vshll.u32 %v191, 16
      %v474 = vrot.slane %v472, 5
      %v475 = vsel %vm221, %v470, %v474
      %v476 = vshrl.u32 %v191, 16
      %v478 = vrot.slane %v476, 4
      %v479 = vor.u32 %v478, %v474
      %v480 = vrot.slane %v479, 4
      %v482 = vshll.u32 %v213, 16
      %v484 = vrot.slane %v482, 5
      %v485 = vsel %vm221, %v480, %v484
      %v487 = vshrl.u32 %v192, 16
      %v489 = vrot.slane %v487, 4
      %v490 = vshll.u32 %v192, 16
      %v492 = vrot.slane %v490, 5
      %v493 = vor.u32 %v489, %v492
      %v494 = vrot.slane %v493, 4
      %v496 = vshll.u32 %v193, 16
      %v498 = vrot.slane %v496, 5
      %v499 = vsel %vm221, %v494, %v498
      %v500 = vshrl.u32 %v193, 16
      %v502 = vrot.slane %v500, 4
      %v503 = vor.u32 %v502, %v498
      %v504 = vrot.slane %v503, 4
      %v506 = vshll.u32 %v214, 16
      %v508 = vrot.slane %v506, 5
      %v509 = vsel %vm221, %v504, %v508
      %v511 = vshrl.u32 %v194, 16
      %v513 = vrot.slane %v511, 4
      %v514 = vshll.u32 %v194, 16
      %v516 = vrot.slane %v514, 5
      %v517 = vor.u32 %v513, %v516
      %v518 = vrot.slane %v517, 4
      %v520 = vshll.u32 %v195, 16
      %v522 = vrot.slane %v520, 5
      %v523 = vsel %vm221, %v518, %v522
      %v524 = vshrl.u32 %v195, 16
      %v526 = vrot.slane %v524, 4
      %v527 = vor.u32 %v526, %v522
      %v528 = vrot.slane %v527, 4
      %v530 = vshll.u32 %v215, 16
      %v532 = vrot.slane %v530, 5
      %v533 = vsel %vm221, %v528, %v532
      %v535 = vshrl.u32 %v196, 16
      %v537 = vrot.slane %v535, 4
      %v538 = vshll.u32 %v196, 16
      %v540 = vrot.slane %v538, 5
      %v541 = vor.u32 %v537, %v540
      %v542 = vrot.slane %v541, 4
      %v544 = vshll.u32 %v197, 16
      %v546 = vrot.slane %v544, 5
      %v547 = vsel %vm221, %v542, %v546
      %v548 = vshrl.u32 %v197, 16
      %v550 = vrot.slane %v548, 4
      %v551 = vor.u32 %v550, %v546
      %v552 = vrot.slane %v551, 4
      %v554 = vshll.u32 %v216, 16
      %v556 = vrot.slane %v554, 5
      %v557 = vsel %vm221, %v552, %v556
      %v559 = vshrl.u32 %v198, 16
      %v561 = vrot.slane %v559, 4
      %v562 = vshll.u32 %v198, 16
      %v564 = vrot.slane %v562, 5
      %v565 = vor.u32 %v561, %v564
      %v566 = vrot.slane %v565, 4
      %v568 = vshll.u32 %v199, 16
      %v570 = vrot.slane %v568, 5
      %v571 = vsel %vm221, %v566, %v570
      %v572 = vshrl.u32 %v199, 16
      %v574 = vrot.slane %v572, 4
      %v575 = vor.u32 %v574, %v570
      %v576 = vrot.slane %v575, 4
      %v578 = vshll.u32 %v217, 16
      %v580 = vrot.slane %v578, 5
      %v581 = vsel %vm221, %v576, %v580
      %v583 = vshrl.u32 %v200, 16
      %v585 = vrot.slane %v583, 4
      %v586 = vshll.u32 %v200, 16
      %v588 = vrot.slane %v586, 5
      %v589 = vor.u32 %v585, %v588
      %v590 = vrot.slane %v589, 4
      %v592 = vshll.u32 %v201, 16
      %v594 = vrot.slane %v592, 5
      %v595 = vsel %vm221, %v590, %v594
      %v596 = vshrl.u32 %v201, 16
      %v598 = vrot.slane %v596, 4
      %v599 = vor.u32 %v598, %v594
      %v600 = vrot.slane %v599, 4
      %v602 = vshll.u32 %v218, 16
      %v604 = vrot.slane %v602, 5
      %v605 = vsel %vm221, %v600, %v604
      %s606 = scalar_lea.vmem %s1, 2
      %v607 = vld [vmem:[%s606] sm:$0x3]
      %v608 = vunpack.c.l.b16 %v235
      %v609 = vunpack.c.l.b16 %v245
      %v610 = vunpack.c.l.b16 %v259
      %v611 = vunpack.c.l.b16 %v269
      %v612 = vunpack.c.l.b16 %v283
      %v613 = vunpack.c.l.b16 %v293
      %v614 = vunpack.c.l.b16 %v307
      %v615 = vunpack.c.l.b16 %v317
      %v616 = vunpack.c.l.b16 %v331
      %v617 = vunpack.c.l.b16 %v341
      %v618 = vunpack.c.l.b16 %v355
      %v619 = vunpack.c.l.b16 %v365
      %v620 = vunpack.c.l.b16 %v379
      %v621 = vunpack.c.l.b16 %v389
      %v622 = vunpack.c.l.b16 %v403
      %v623 = vunpack.c.l.b16 %v413
      %v624 = vunpack.c.l.b16 %v427
      %v625 = vunpack.c.l.b16 %v437
      %v626 = vunpack.c.l.b16 %v451
      %v627 = vunpack.c.l.b16 %v461
      %v628 = vunpack.c.l.b16 %v475
      %v629 = vunpack.c.l.b16 %v485
      %v630 = vunpack.c.l.b16 %v499
      %v631 = vunpack.c.l.b16 %v509
      %v632 = vunpack.c.l.b16 %v523
      %v633 = vunpack.c.l.b16 %v533
      %v634 = vunpack.c.l.b16 %v547
      %v635 = vunpack.c.l.b16 %v557
      %v636 = vunpack.c.l.b16 %v571
      %v637 = vunpack.c.l.b16 %v581
      %v638 = vunpack.c.l.b16 %v595
      %v639 = vunpack.c.l.b16 %v605
      %v640 = vpack.c.b16 %v609, %v608
      %v641 = vpack.c.b16 %v611, %v610
      %v642 = vpack.c.b16 %v613, %v612
      %v643 = vpack.c.b16 %v615, %v614
      %v644 = vpack.c.b16 %v617, %v616
      %v645 = vpack.c.b16 %v619, %v618
      %v646 = vpack.c.b16 %v621, %v620
      %v647 = vpack.c.b16 %v623, %v622
      %v648 = vpack.c.b16 %v625, %v624
      %v649 = vpack.c.b16 %v627, %v626
      %v650 = vpack.c.b16 %v629, %v628
      %v651 = vpack.c.b16 %v631, %v630
      %v652 = vpack.c.b16 %v633, %v632
      %v653 = vpack.c.b16 %v635, %v634
      %v654 = vpack.c.b16 %v637, %v636
      %v655 = vpack.c.b16 %v639, %v638
      %vm656 = vcmask 31744
      %v658 = vsel %vm656, %v640, 0
      %v661 = vsel %vm656, %v641, 0
      %v664 = vsel %vm656, %v642, 0
      %v667 = vsel %vm656, %v643, 0
      %v670 = vsel %vm656, %v644, 0
      %v673 = vsel %vm656, %v645, 0
      %v676 = vsel %vm656, %v646, 0
      %v679 = vsel %vm656, %v647, 0
      %v682 = vsel %vm656, %v648, 0
      %v685 = vsel %vm656, %v649, 0
      %v688 = vsel %vm656, %v650, 0
      %v691 = vsel %vm656, %v651, 0
      %v694 = vsel %vm656, %v652, 0
      %v697 = vsel %vm656, %v653, 0
      %v700 = vsel %vm656, %v654, 0
      %v703 = vsel %vm656, %v655, 0
      %vm705 = vcmask 1041408
      %v707 = vsel %vm705, %v607, 0
      %709 = vmatprep.subr.bf16.mxu0 0
      %710 = vmatpush1.bf16.msra.mxu0 %v707
      %711 = vmatprep.subr.bf16.mxu0 0
      %712 = vmatpush1.bf16.msra.mxu0 0
      %713 = vmatprep.subr.bf16.mxu0 0
      %714 = vmatpush1.bf16.msra.mxu0 0
      %715 = vmatprep.subr.bf16.mxu0 0
      %716 = vmatpush1.bf16.msra.mxu0 0
      %717 = vmatprep.subr.bf16.mxu0 0
      %718 = vmatpush1.bf16.msra.mxu0 0
      %719 = vmatprep.subr.bf16.mxu0 0
      %720 = vmatpush1.bf16.msra.mxu0 0
      %721 = vmatprep.subr.bf16.mxu0 0
      %722 = vmatpush1.bf16.msra.mxu0 0
      %723 = vmatprep.subr.bf16.mxu0 0
      %724 = vmatpush1.bf16.msra.mxu0 0
      %725 = vmatprep.subr.bf16.mxu0 0
      %726 = vmatpush1.bf16.msra.mxu0 0
      %727 = vmatprep.subr.bf16.mxu0 0
      %728 = vmatpush1.bf16.msra.mxu0 0
      %729 = vmatprep.subr.bf16.mxu0 0
      %730 = vmatpush1.bf16.msra.mxu0 0
      %731 = vmatprep.subr.bf16.mxu0 0
      %732 = vmatpush1.bf16.msra.mxu0 0
      %733 = vmatprep.subr.bf16.mxu0 0
      %734 = vmatpush1.bf16.msra.mxu0 0
      %735 = vmatprep.subr.bf16.mxu0 0
      %736 = vmatpush1.bf16.msra.mxu0 0
      %737 = vmatprep.subr.bf16.mxu0 0
      %738 = vmatpush1.bf16.msra.mxu0 0
      %739 = vmatprep.subr.bf16.mxu0 0
      %740 = vmatpush1.bf16.msra.mxu0 0
      %741 = vmatprep.mubr.bf16.mxu0 0
      %742 = vmatmul.mubr.bf16.gmra.mrb[0].mxu0 %v658
      %v743 = vpop.f32.mrb[0].mxu0
      %v744 = vadd.f32 0.0, %v743
      %v745 = vpop.f32.mrb[0].mxu0
      %v746 = vpop.f32.mrb[0].mxu0
      %v747 = vadd.f32 0.0, %v746
      %v748 = vpop.f32.mrb[0].mxu0
      %749 = vmatprep.mubr.bf16.mxu0 0
      %750 = vmatmul.mubr.bf16.gmra.mrb[0].mxu0 %v661
      %v751 = vpop.f32.mrb[0].mxu0
      %v752 = vadd.f32 0.0, %v751
      %v753 = vpop.f32.mrb[0].mxu0
      %v754 = vpop.f32.mrb[0].mxu0
      %v755 = vadd.f32 0.0, %v754
      %v756 = vpop.f32.mrb[0].mxu0
      %757 = vmatprep.mubr.bf16.mxu0 0
      %758 = vmatmul.mubr.bf16.gmra.mrb[0].mxu0 %v664
      %v759 = vpop.f32.mrb[0].mxu0
      %v760 = vadd.f32 0.0, %v759
      %v761 = vpop.f32.mrb[0].mxu0
      %v762 = vpop.f32.mrb[0].mxu0
      %v763 = vadd.f32 0.0, %v762
      %v764 = vpop.f32.mrb[0].mxu0
      %765 = vmatprep.mubr.bf16.mxu0 0
      %766 = vmatmul.mubr.bf16.gmra.mrb[0].mxu0 %v667
      %v767 = vpop.f32.mrb[0].mxu0
      %v768 = vadd.f32 0.0, %v767
      %v769 = vpop.f32.mrb[0].mxu0
      %v770 = vpop.f32.mrb[0].mxu0
      %v771 = vadd.f32 0.0, %v770
      %v772 = vpop.f32.mrb[0].mxu0
      %773 = vmatprep.mubr.bf16.mxu0 0
      %774 = vmatmul.mubr.bf16.gmra.mrb[0].mxu0 %v670
      %v775 = vpop.f32.mrb[0].mxu0
      %v776 = vadd.f32 0.0, %v775
      %v777 = vpop.f32.mrb[0].mxu0
      %v778 = vpop.f32.mrb[0].mxu0
      %v779 = vadd.f32 0.0, %v778
      %v780 = vpop.f32.mrb[0].mxu0
      %781 = vmatprep.mubr.bf16.mxu0 0
      %782 = vmatmul.mubr.bf16.gmra.mrb[0].mxu0 %v673
      %v783 = vpop.f32.mrb[0].mxu0
      %v784 = vadd.f32 0.0, %v783
      %v785 = vpop.f32.mrb[0].mxu0
      %v786 = vpop.f32.mrb[0].mxu0
      %v787 = vadd.f32 0.0, %v786
      %v788 = vpop.f32.mrb[0].mxu0
      %789 = vmatprep.mubr.bf16.mxu0 0
      %790 = vmatmul.mubr.bf16.gmra.mrb[0].mxu0 %v676
      %v791 = vpop.f32.mrb[0].mxu0
      %v792 = vadd.f32 0.0, %v791
      %v793 = vpop.f32.mrb[0].mxu0
      %v794 = vpop.f32.mrb[0].mxu0
      %v795 = vadd.f32 0.0, %v794
      %v796 = vpop.f32.mrb[0].mxu0
      %797 = vmatprep.mubr.bf16.mxu0 0
      %798 = vmatmul.mubr.bf16.gmra.mrb[0].mxu0 %v679
      %v799 = vpop.f32.mrb[0].mxu0
      %v800 = vadd.f32 0.0, %v799
      %v801 = vpop.f32.mrb[0].mxu0
      %v802 = vpop.f32.mrb[0].mxu0
      %v803 = vadd.f32 0.0, %v802
      %v804 = vpop.f32.mrb[0].mxu0
      %805 = vmatprep.mubr.bf16.mxu0 0
      %806 = vmatmul.mubr.bf16.gmra.mrb[0].mxu0 %v682
      %v807 = vpop.f32.mrb[0].mxu0
      %v808 = vadd.f32 0.0, %v807
      %v809 = vpop.f32.mrb[0].mxu0
      %v810 = vpop.f32.mrb[0].mxu0
      %v811 = vadd.f32 0.0, %v810
      %v812 = vpop.f32.mrb[0].mxu0
      %813 = vmatprep.mubr.bf16.mxu0 0
      %814 = vmatmul.mubr.bf16.gmra.mrb[0].mxu0 %v685
      %v815 = vpop.f32.mrb[0].mxu0
      %v816 = vadd.f32 0.0, %v815
      %v817 = vpop.f32.mrb[0].mxu0
      %v818 = vpop.f32.mrb[0].mxu0
      %v819 = vadd.f32 0.0, %v818
      %v820 = vpop.f32.mrb[0].mxu0
      %821 = vmatprep.mubr.bf16.mxu0 0
      %822 = vmatmul.mubr.bf16.gmra.mrb[0].mxu0 %v688
      %v823 = vpop.f32.mrb[0].mxu0
      %v824 = vadd.f32 0.0, %v823
      %v825 = vpop.f32.mrb[0].mxu0
      %v826 = vpop.f32.mrb[0].mxu0
      %v827 = vadd.f32 0.0, %v826
      %v828 = vpop.f32.mrb[0].mxu0
      %829 = vmatprep.mubr.bf16.mxu0 0
      %830 = vmatmul.mubr.bf16.gmra.mrb[0].mxu0 %v691
      %v831 = vpop.f32.mrb[0].mxu0
      %v832 = vadd.f32 0.0, %v831
      %v833 = vpop.f32.mrb[0].mxu0
      %v834 = vpop.f32.mrb[0].mxu0
      %v835 = vadd.f32 0.0, %v834
      %v836 = vpop.f32.mrb[0].mxu0
      %837 = vmatprep.mubr.bf16.mxu0 0
      %838 = vmatmul.mubr.bf16.gmra.mrb[0].mxu0 %v694
      %v839 = vpop.f32.mrb[0].mxu0
      %v840 = vadd.f32 0.0, %v839
      %v841 = vpop.f32.mrb[0].mxu0
      %v842 = vpop.f32.mrb[0].mxu0
      %v843 = vadd.f32 0.0, %v842
      %v844 = vpop.f32.mrb[0].mxu0
      %845 = vmatprep.mubr.bf16.mxu0 0
      %846 = vmatmul.mubr.bf16.gmra.mrb[0].mxu0 %v697
      %v847 = vpop.f32.mrb[0].mxu0
      %v848 = vadd.f32 0.0, %v847
      %v849 = vpop.f32.mrb[0].mxu0
      %v850 = vpop.f32.mrb[0].mxu0
      %v851 = vadd.f32 0.0, %v850
      %v852 = vpop.f32.mrb[0].mxu0
      %853 = vmatprep.mubr.bf16.mxu0 0
      %854 = vmatmul.mubr.bf16.gmra.mrb[0].mxu0 %v700
      %v855 = vpop.f32.mrb[0].mxu0
      %v856 = vadd.f32 0.0, %v855
      %v857 = vpop.f32.mrb[0].mxu0
      %v858 = vpop.f32.mrb[0].mxu0
      %v859 = vadd.f32 0.0, %v858
      %v860 = vpop.f32.mrb[0].mxu0
      %861 = vmatprep.mubr.bf16.mxu0 0
      %862 = vmatmul.mubr.bf16.gmra.mrb[0].mxu0 %v703
      %v863 = vpop.f32.mrb[0].mxu0
      %v864 = vadd.f32 0.0, %v863
      %v865 = vpop.f32.mrb[0].mxu0
      %v866 = vpop.f32.mrb[0].mxu0
      %v867 = vadd.f32 0.0, %v866
      %v868 = vpop.f32.mrb[0].mxu0
      %869 = vdwg.mxu0
      %v902 = vunpack.c.l.b16 %v170
      %v903 = vunpack.c.l.b16 %v171
      %v904 = vunpack.c.l.b16 %v172
      %v905 = vunpack.c.l.b16 %v173
      %v906 = vunpack.c.l.b16 %v174
      %v907 = vunpack.c.l.b16 %v175
      %v908 = vunpack.c.l.b16 %v176
      %v909 = vunpack.c.l.b16 %v177
      %v910 = vunpack.c.l.b16 %v178
      %v911 = vunpack.c.l.b16 %v179
      %v912 = vunpack.c.l.b16 %v180
      %v913 = vunpack.c.l.b16 %v181
      %v914 = vunpack.c.l.b16 %v182
      %v915 = vunpack.c.l.b16 %v183
      %v916 = vunpack.c.l.b16 %v184
      %v917 = vunpack.c.l.b16 %v185
      %v918 = vunpack.c.l.b16 %v186
      %v919 = vunpack.c.l.b16 %v187
      %v920 = vunpack.c.l.b16 %v188
      %v921 = vunpack.c.l.b16 %v189
      %v922 = vunpack.c.l.b16 %v190
      %v923 = vunpack.c.l.b16 %v191
      %v924 = vunpack.c.l.b16 %v192
      %v925 = vunpack.c.l.b16 %v193
      %v926 = vunpack.c.l.b16 %v194
      %v927 = vunpack.c.l.b16 %v195
      %v928 = vunpack.c.l.b16 %v196
      %v929 = vunpack.c.l.b16 %v197
      %v930 = vunpack.c.l.b16 %v198
      %v931 = vunpack.c.l.b16 %v199
      %v932 = vunpack.c.l.b16 %v200
      %v933 = vunpack.c.l.b16 %v201
      %v934 = vpack.c.b16 %v903, %v902
      %v935 = vpack.c.b16 %v905, %v904
      %v936 = vpack.c.b16 %v907, %v906
      %v937 = vpack.c.b16 %v909, %v908
      %v938 = vpack.c.b16 %v911, %v910
      %v939 = vpack.c.b16 %v913, %v912
      %v940 = vpack.c.b16 %v915, %v914
      %v941 = vpack.c.b16 %v917, %v916
      %v942 = vpack.c.b16 %v919, %v918
      %v943 = vpack.c.b16 %v921, %v920
      %v944 = vpack.c.b16 %v923, %v922
      %v945 = vpack.c.b16 %v925, %v924
      %v946 = vpack.c.b16 %v927, %v926
      %v947 = vpack.c.b16 %v929, %v928
      %v948 = vpack.c.b16 %v931, %v930
      %v949 = vpack.c.b16 %v933, %v932
      %v951 = vsel %vm656, %v934, 0
      %v954 = vsel %vm656, %v935, 0
      %v957 = vsel %vm656, %v936, 0
      %v960 = vsel %vm656, %v937, 0
      %v963 = vsel %vm656, %v938, 0
      %v966 = vsel %vm656, %v939, 0
      %v969 = vsel %vm656, %v940, 0
      %v972 = vsel %vm656, %v941, 0
      %v975 = vsel %vm656, %v942, 0
      %v978 = vsel %vm656, %v943, 0
      %v981 = vsel %vm656, %v944, 0
      %v984 = vsel %vm656, %v945, 0
      %v987 = vsel %vm656, %v946, 0
      %v990 = vsel %vm656, %v947, 0
      %v993 = vsel %vm656, %v948, 0
      %v996 = vsel %vm656, %v949, 0
      %v999 = vsel %vm705, %v202, 0
      %1001 = vmatprep.subr.bf16.mxu0 0
      %1002 = vmatpush1.bf16.msra.mxu0 %v999
      %1003 = vmatprep.subr.bf16.mxu0 0
      %1004 = vmatpush1.bf16.msra.mxu0 0
      %1005 = vmatprep.subr.bf16.mxu0 0
      %1006 = vmatpush1.bf16.msra.mxu0 0
      %1007 = vmatprep.subr.bf16.mxu0 0
      %1008 = vmatpush1.bf16.msra.mxu0 0
      %1009 = vmatprep.subr.bf16.mxu0 0
      %1010 = vmatpush1.bf16.msra.mxu0 0
      %1011 = vmatprep.subr.bf16.mxu0 0
      %1012 = vmatpush1.bf16.msra.mxu0 0
      %1013 = vmatprep.subr.bf16.mxu0 0
      %1014 = vmatpush1.bf16.msra.mxu0 0
      %1015 = vmatprep.subr.bf16.mxu0 0
      %1016 = vmatpush1.bf16.msra.mxu0 0
      %1017 = vmatprep.subr.bf16.mxu0 0
      %1018 = vmatpush1.bf16.msra.mxu0 0
      %1019 = vmatprep.subr.bf16.mxu0 0
      %1020 = vmatpush1.bf16.msra.mxu0 0
      %1021 = vmatprep.subr.bf16.mxu0 0
      %1022 = vmatpush1.bf16.msra.mxu0 0
      %1023 = vmatprep.subr.bf16.mxu0 0
      %1024 = vmatpush1.bf16.msra.mxu0 0
      %1025 = vmatprep.subr.bf16.mxu0 0
      %1026 = vmatpush1.bf16.msra.mxu0 0
      %1027 = vmatprep.subr.bf16.mxu0 0
      %1028 = vmatpush1.bf16.msra.mxu0 0
      %1029 = vmatprep.subr.bf16.mxu0 0
      %1030 = vmatpush1.bf16.msra.mxu0 0
      %1031 = vmatprep.subr.bf16.mxu0 0
      %1032 = vmatpush1.bf16.msra.mxu0 0
      %1033 = vmatprep.mubr.bf16.mxu0 0
      %1034 = vmatmul.mubr.bf16.gmra.mrb[0].mxu0 %v951
      %v1035 = vpop.f32.mrb[0].mxu0
      %v1036 = vadd.f32 %v744, %v1035
      %v1037 = vpop.f32.mrb[0].mxu0
      %v1038 = vpop.f32.mrb[0].mxu0
      %v1039 = vadd.f32 %v747, %v1038
      %v1040 = vpop.f32.mrb[0].mxu0
      %1041 = vmatprep.mubr.bf16.mxu0 0
      %1042 = vmatmul.mubr.bf16.gmra.mrb[0].mxu0 %v954
      %v1043 = vpop.f32.mrb[0].mxu0
      %v1044 = vadd.f32 %v752, %v1043
      %v1045 = vpop.f32.mrb[0].mxu0
      %v1046 = vpop.f32.mrb[0].mxu0
      %v1047 = vadd.f32 %v755, %v1046
      %v1048 = vpop.f32.mrb[0].mxu0
      %1049 = vmatprep.mubr.bf16.mxu0 0
      %1050 = vmatmul.mubr.bf16.gmra.mrb[0].mxu0 %v957
      %v1051 = vpop.f32.mrb[0].mxu0
      %v1052 = vadd.f32 %v760, %v1051
      %v1053 = vpop.f32.mrb[0].mxu0
      %v1054 = vpop.f32.mrb[0].mxu0
      %v1055 = vadd.f32 %v763, %v1054
      %v1056 = vpop.f32.mrb[0].mxu0
      %1057 = vmatprep.mubr.bf16.mxu0 0
      %1058 = vmatmul.mubr.bf16.gmra.mrb[0].mxu0 %v960
      %v1059 = vpop.f32.mrb[0].mxu0
      %v1060 = vadd.f32 %v768, %v1059
      %v1061 = vpop.f32.mrb[0].mxu0
      %v1062 = vpop.f32.mrb[0].mxu0
      %v1063 = vadd.f32 %v771, %v1062
      %v1064 = vpop.f32.mrb[0].mxu0
      %1065 = vmatprep.mubr.bf16.mxu0 0
      %1066 = vmatmul.mubr.bf16.gmra.mrb[0].mxu0 %v963
      %v1067 = vpop.f32.mrb[0].mxu0
      %v1068 = vadd.f32 %v776, %v1067
      %v1069 = vpop.f32.mrb[0].mxu0
      %v1070 = vpop.f32.mrb[0].mxu0
      %v1071 = vadd.f32 %v779, %v1070
      %v1072 = vpop.f32.mrb[0].mxu0
      %1073 = vmatprep.mubr.bf16.mxu0 0
      %1074 = vmatmul.mubr.bf16.gmra.mrb[0].mxu0 %v966
      %v1075 = vpop.f32.mrb[0].mxu0
      %v1076 = vadd.f32 %v784, %v1075
      %v1077 = vpop.f32.mrb[0].mxu0
      %v1078 = vpop.f32.mrb[0].mxu0
      %v1079 = vadd.f32 %v787, %v1078
      %v1080 = vpop.f32.mrb[0].mxu0
      %1081 = vmatprep.mubr.bf16.mxu0 0
      %1082 = vmatmul.mubr.bf16.gmra.mrb[0].mxu0 %v969
      %v1083 = vpop.f32.mrb[0].mxu0
      %v1084 = vadd.f32 %v792, %v1083
      %v1085 = vpop.f32.mrb[0].mxu0
      %v1086 = vpop.f32.mrb[0].mxu0
      %v1087 = vadd.f32 %v795, %v1086
      %v1088 = vpop.f32.mrb[0].mxu0
      %1089 = vmatprep.mubr.bf16.mxu0 0
      %1090 = vmatmul.mubr.bf16.gmra.mrb[0].mxu0 %v972
      %v1091 = vpop.f32.mrb[0].mxu0
      %v1092 = vadd.f32 %v800, %v1091
      %v1093 = vpop.f32.mrb[0].mxu0
      %v1094 = vpop.f32.mrb[0].mxu0
      %v1095 = vadd.f32 %v803, %v1094
      %v1096 = vpop.f32.mrb[0].mxu0
      %1097 = vmatprep.mubr.bf16.mxu0 0
      %1098 = vmatmul.mubr.bf16.gmra.mrb[0].mxu0 %v975
      %v1099 = vpop.f32.mrb[0].mxu0
      %v1100 = vadd.f32 %v808, %v1099
      %v1101 = vpop.f32.mrb[0].mxu0
      %v1102 = vpop.f32.mrb[0].mxu0
      %v1103 = vadd.f32 %v811, %v1102
      %v1104 = vpop.f32.mrb[0].mxu0
      %1105 = vmatprep.mubr.bf16.mxu0 0
      %1106 = vmatmul.mubr.bf16.gmra.mrb[0].mxu0 %v978
      %v1107 = vpop.f32.mrb[0].mxu0
      %v1108 = vadd.f32 %v816, %v1107
      %v1109 = vpop.f32.mrb[0].mxu0
      %v1110 = vpop.f32.mrb[0].mxu0
      %v1111 = vadd.f32 %v819, %v1110
      %v1112 = vpop.f32.mrb[0].mxu0
      %1113 = vmatprep.mubr.bf16.mxu0 0
      %1114 = vmatmul.mubr.bf16.gmra.mrb[0].mxu0 %v981
      %v1115 = vpop.f32.mrb[0].mxu0
      %v1116 = vadd.f32 %v824, %v1115
      %v1117 = vpop.f32.mrb[0].mxu0
      %v1118 = vpop.f32.mrb[0].mxu0
      %v1119 = vadd.f32 %v827, %v1118
      %v1120 = vpop.f32.mrb[0].mxu0
      %1121 = vmatprep.mubr.bf16.mxu0 0
      %1122 = vmatmul.mubr.bf16.gmra.mrb[0].mxu0 %v984
      %v1123 = vpop.f32.mrb[0].mxu0
      %v1124 = vadd.f32 %v832, %v1123
      %v1125 = vpop.f32.mrb[0].mxu0
      %v1126 = vpop.f32.mrb[0].mxu0
      %v1127 = vadd.f32 %v835, %v1126
      %v1128 = vpop.f32.mrb[0].mxu0
      %1129 = vmatprep.mubr.bf16.mxu0 0
      %1130 = vmatmul.mubr.bf16.gmra.mrb[0].mxu0 %v987
      %v1131 = vpop.f32.mrb[0].mxu0
      %v1132 = vadd.f32 %v840, %v1131
      %v1133 = vpop.f32.mrb[0].mxu0
      %v1134 = vpop.f32.mrb[0].mxu0
      %v1135 = vadd.f32 %v843, %v1134
      %v1136 = vpop.f32.mrb[0].mxu0
      %1137 = vmatprep.mubr.bf16.mxu0 0
      %1138 = vmatmul.mubr.bf16.gmra.mrb[0].mxu0 %v990
      %v1139 = vpop.f32.mrb[0].mxu0
      %v1140 = vadd.f32 %v848, %v1139
      %v1141 = vpop.f32.mrb[0].mxu0
      %v1142 = vpop.f32.mrb[0].mxu0
      %v1143 = vadd.f32 %v851, %v1142
      %v1144 = vpop.f32.mrb[0].mxu0
      %1145 = vmatprep.mubr.bf16.mxu0 0
      %1146 = vmatmul.mubr.bf16.gmra.mrb[0].mxu0 %v993
      %v1147 = vpop.f32.mrb[0].mxu0
      %v1148 = vadd.f32 %v856, %v1147
      %v1149 = vpop.f32.mrb[0].mxu0
      %v1150 = vpop.f32.mrb[0].mxu0
      %v1151 = vadd.f32 %v859, %v1150
      %v1152 = vpop.f32.mrb[0].mxu0
      %1153 = vmatprep.mubr.bf16.mxu0 0
      %1154 = vmatmul.mubr.bf16.gmra.mrb[0].mxu0 %v996
      %v1155 = vpop.f32.mrb[0].mxu0
      %v1156 = vadd.f32 %v864, %v1155
      %v1157 = vpop.f32.mrb[0].mxu0
      %v1158 = vpop.f32.mrb[0].mxu0
      %v1159 = vadd.f32 %v867, %v1158
      %v1160 = vpop.f32.mrb[0].mxu0
      %1161 = vdwg.mxu0
      %v1162 = vld [vmem:[%s164] sm:$0xe]
      %v1163 = vld [vmem:[%s164 + $0xc] sm:$0xe]
      %v1164 = vld [vmem:[%s164 + $0x18] sm:$0xe]
      %v1165 = vld [vmem:[%s164 + $0x24] sm:$0xe]
      %v1166 = vld [vmem:[%s164 + $0x30] sm:$0xe]
      %v1167 = vld [vmem:[%s164 + $0x3c] sm:$0xe]
      %v1168 = vld [vmem:[%s164 + $0x48] sm:$0xe]
      %v1169 = vld [vmem:[%s164 + $0x54] sm:$0xe]
      %v1170 = vld [vmem:[%s164 + $0x60] sm:$0xe]
      %v1171 = vld [vmem:[%s164 + $0x6c] sm:$0xe]
      %v1172 = vld [vmem:[%s164 + $0x78] sm:$0xe]
      %v1173 = vld [vmem:[%s164 + $0x84] sm:$0xe]
      %v1174 = vld [vmem:[%s164 + $0x90] sm:$0xe]
      %v1175 = vld [vmem:[%s164 + $0x9c] sm:$0xe]
      %v1176 = vld [vmem:[%s164 + $0xa8] sm:$0xe]
      %v1177 = vld [vmem:[%s164 + $0xb4] sm:$0xe]
      %vm1210 = vcmask 1042432
      %vm1211 = vcmask 1046532
      %vm1212 = vmor %vm1210, %vm1211
      %v1213 = vrot.slane %v1162, 5
      %v1214 = vrot.slane %v1213, 4
      %v1215 = vrot.slane %v171, 5
      %v1216 = vsel %vm1212, %v1214, %v1215
      %v1217 = vrot.slane %v1215, 4
      %v1218 = vrot.slane %v203, 5
      %v1219 = vsel %vm1212, %v1217, %v1218
      %v1220 = vrot.slane %v1163, 5
      %v1221 = vrot.slane %v1220, 4
      %v1222 = vrot.slane %v173, 5
      %v1223 = vsel %vm1212, %v1221, %v1222
      %v1224 = vrot.slane %v1222, 4
      %v1225 = vrot.slane %v204, 5
      %v1226 = vsel %vm1212, %v1224, %v1225
      %v1227 = vrot.slane %v1164, 5
      %v1228 = vrot.slane %v1227, 4
      %v1229 = vrot.slane %v175, 5
      %v1230 = vsel %vm1212, %v1228, %v1229
      %v1231 = vrot.slane %v1229, 4
      %v1232 = vrot.slane %v205, 5
      %v1233 = vsel %vm1212, %v1231, %v1232
      %v1234 = vrot.slane %v1165, 5
      %v1235 = vrot.slane %v1234, 4
      %v1236 = vrot.slane %v177, 5
      %v1237 = vsel %vm1212, %v1235, %v1236
      %v1238 = vrot.slane %v1236, 4
      %v1239 = vrot.slane %v206, 5
      %v1240 = vsel %vm1212, %v1238, %v1239
      %v1241 = vrot.slane %v1166, 5
      %v1242 = vrot.slane %v1241, 4
      %v1243 = vrot.slane %v179, 5
      %v1244 = vsel %vm1212, %v1242, %v1243
      %v1245 = vrot.slane %v1243, 4
      %v1246 = vrot.slane %v207, 5
      %v1247 = vsel %vm1212, %v1245, %v1246
      %v1248 = vrot.slane %v1167, 5
      %v1249 = vrot.slane %v1248, 4
      %v1250 = vrot.slane %v181, 5
      %v1251 = vsel %vm1212, %v1249, %v1250
      %v1252 = vrot.slane %v1250, 4
      %v1253 = vrot.slane %v208, 5
      %v1254 = vsel %vm1212, %v1252, %v1253
      %v1255 = vrot.slane %v1168, 5
      %v1256 = vrot.slane %v1255, 4
      %v1257 = vrot.slane %v183, 5
      %v1258 = vsel %vm1212, %v1256, %v1257
      %v1259 = vrot.slane %v1257, 4
      %v1260 = vrot.slane %v209, 5
      %v1261 = vsel %vm1212, %v1259, %v1260
      %v1262 = vrot.slane %v1169, 5
      %v1263 = vrot.slane %v1262, 4
      %v1264 = vrot.slane %v185, 5
      %v1265 = vsel %vm1212, %v1263, %v1264
      %v1266 = vrot.slane %v1264, 4
      %v1267 = vrot.slane %v210, 5
      %v1268 = vsel %vm1212, %v1266, %v1267
      %v1269 = vrot.slane %v1170, 5
      %v1270 = vrot.slane %v1269, 4
      %v1271 = vrot.slane %v187, 5
      %v1272 = vsel %vm1212, %v1270, %v1271
      %v1273 = vrot.slane %v1271, 4
      %v1274 = vrot.slane %v211, 5
      %v1275 = vsel %vm1212, %v1273, %v1274
      %v1276 = vrot.slane %v1171, 5
      %v1277 = vrot.slane %v1276, 4
      %v1278 = vrot.slane %v189, 5
      %v1279 = vsel %vm1212, %v1277, %v1278
      %v1280 = vrot.slane %v1278, 4
      %v1281 = vrot.slane %v212, 5
      %v1282 = vsel %vm1212, %v1280, %v1281
      %v1283 = vrot.slane %v1172, 5
      %v1284 = vrot.slane %v1283, 4
      %v1285 = vrot.slane %v191, 5
      %v1286 = vsel %vm1212, %v1284, %v1285
      %v1287 = vrot.slane %v1285, 4
      %v1288 = vrot.slane %v213, 5
      %v1289 = vsel %vm1212, %v1287, %v1288
      %v1290 = vrot.slane %v1173, 5
      %v1291 = vrot.slane %v1290, 4
      %v1292 = vrot.slane %v193, 5
      %v1293 = vsel %vm1212, %v1291, %v1292
      %v1294 = vrot.slane %v1292, 4
      %v1295 = vrot.slane %v214, 5
      %v1296 = vsel %vm1212, %v1294, %v1295
      %v1297 = vrot.slane %v1174, 5
      %v1298 = vrot.slane %v1297, 4
      %v1299 = vrot.slane %v195, 5
      %v1300 = vsel %vm1212, %v1298, %v1299
      %v1301 = vrot.slane %v1299, 4
      %v1302 = vrot.slane %v215, 5
      %v1303 = vsel %vm1212, %v1301, %v1302
      %v1304 = vrot.slane %v1175, 5
      %v1305 = vrot.slane %v1304, 4
      %v1306 = vrot.slane %v197, 5
      %v1307 = vsel %vm1212, %v1305, %v1306
      %v1308 = vrot.slane %v1306, 4
      %v1309 = vrot.slane %v216, 5
      %v1310 = vsel %vm1212, %v1308, %v1309
      %v1311 = vrot.slane %v1176, 5
      %v1312 = vrot.slane %v1311, 4
      %v1313 = vrot.slane %v199, 5
      %v1314 = vsel %vm1212, %v1312, %v1313
      %v1315 = vrot.slane %v1313, 4
      %v1316 = vrot.slane %v217, 5
      %v1317 = vsel %vm1212, %v1315, %v1316
      %v1318 = vrot.slane %v1177, 5
      %v1319 = vrot.slane %v1318, 4
      %v1320 = vrot.slane %v201, 5
      %v1321 = vsel %vm1212, %v1319, %v1320
      %v1322 = vrot.slane %v1320, 4
      %v1323 = vrot.slane %v218, 5
      %v1324 = vsel %vm1212, %v1322, %v1323
      %s1325 = scalar_lea.vmem %s1, 4
      %v1326 = vld [vmem:[%s1325] sm:$0x3]
      %v1327 = vunpack.c.l.b16 %v1216
      %v1328 = vunpack.c.l.b16 %v1219
      %v1329 = vunpack.c.l.b16 %v1223
      %v1330 = vunpack.c.l.b16 %v1226
      %v1331 = vunpack.c.l.b16 %v1230
      %v1332 = vunpack.c.l.b16 %v1233
      %v1333 = vunpack.c.l.b16 %v1237
      %v1334 = vunpack.c.l.b16 %v1240
      %v1335 = vunpack.c.l.b16 %v1244
      %v1336 = vunpack.c.l.b16 %v1247
      %v1337 = vunpack.c.l.b16 %v1251
      %v1338 = vunpack.c.l.b16 %v1254
      %v1339 = vunpack.c.l.b16 %v1258
      %v1340 = vunpack.c.l.b16 %v1261
      %v1341 = vunpack.c.l.b16 %v1265
      %v1342 = vunpack.c.l.b16 %v1268
      %v1343 = vunpack.c.l.b16 %v1272
      %v1344 = vunpack.c.l.b16 %v1275
      %v1345 = vunpack.c.l.b16 %v1279
      %v1346 = vunpack.c.l.b16 %v1282
      %v1347 = vunpack.c.l.b16 %v1286
      %v1348 = vunpack.c.l.b16 %v1289
      %v1349 = vunpack.c.l.b16 %v1293
      %v1350 = vunpack.c.l.b16 %v1296
      %v1351 = vunpack.c.l.b16 %v1300
      %v1352 = vunpack.c.l.b16 %v1303
      %v1353 = vunpack.c.l.b16 %v1307
      %v1354 = vunpack.c.l.b16 %v1310
      %v1355 = vunpack.c.l.b16 %v1314
      %v1356 = vunpack.c.l.b16 %v1317
      %v1357 = vunpack.c.l.b16 %v1321
      %v1358 = vunpack.c.l.b16 %v1324
      %v1359 = vpack.c.b16 %v1328, %v1327
      %v1360 = vpack.c.b16 %v1330, %v1329
      %v1361 = vpack.c.b16 %v1332, %v1331
      %v1362 = vpack.c.b16 %v1334, %v1333
      %v1363 = vpack.c.b16 %v1336, %v1335
      %v1364 = vpack.c.b16 %v1338, %v1337
      %v1365 = vpack.c.b16 %v1340, %v1339
      %v1366 = vpack.c.b16 %v1342, %v1341
      %v1367 = vpack.c.b16 %v1344, %v1343
      %v1368 = vpack.c.b16 %v1346, %v1345
      %v1369 = vpack.c.b16 %v1348, %v1347
      %v1370 = vpack.c.b16 %v1350, %v1349
      %v1371 = vpack.c.b16 %v1352, %v1351
      %v1372 = vpack.c.b16 %v1354, %v1353
      %v1373 = vpack.c.b16 %v1356, %v1355
      %v1374 = vpack.c.b16 %v1358, %v1357
      %v1376 = vsel %vm656, %v1359, 0
      %v1379 = vsel %vm656, %v1360, 0
      %v1382 = vsel %vm656, %v1361, 0
      %v1385 = vsel %vm656, %v1362, 0
      %v1388 = vsel %vm656, %v1363, 0
      %v1391 = vsel %vm656, %v1364, 0
      %v1394 = vsel %vm656, %v1365, 0
      %v1397 = vsel %vm656, %v1366, 0
      %v1400 = vsel %vm656, %v1367, 0
      %v1403 = vsel %vm656, %v1368, 0
      %v1406 = vsel %vm656, %v1369, 0
      %v1409 = vsel %vm656, %v1370, 0
      %v1412 = vsel %vm656, %v1371, 0
      %v1415 = vsel %vm656, %v1372, 0
      %v1418 = vsel %vm656, %v1373, 0
      %v1421 = vsel %vm656, %v1374, 0
      %v1424 = vsel %vm705, %v1326, 0
      %1426 = vmatprep.subr.bf16.mxu0 0
      %1427 = vmatpush1.bf16.msra.mxu0 %v1424
      %1428 = vmatprep.subr.bf16.mxu0 0
      %1429 = vmatpush1.bf16.msra.mxu0 0
      %1430 = vmatprep.subr.bf16.mxu0 0
      %1431 = vmatpush1.bf16.msra.mxu0 0
      %1432 = vmatprep.subr.bf16.mxu0 0
      %1433 = vmatpush1.bf16.msra.mxu0 0
      %1434 = vmatprep.subr.bf16.mxu0 0
      %1435 = vmatpush1.bf16.msra.mxu0 0
      %1436 = vmatprep.subr.bf16.mxu0 0
      %1437 = vmatpush1.bf16.msra.mxu0 0
      %1438 = vmatprep.subr.bf16.mxu0 0
      %1439 = vmatpush1.bf16.msra.mxu0 0
      %1440 = vmatprep.subr.bf16.mxu0 0
      %1441 = vmatpush1.bf16.msra.mxu0 0
      %1442 = vmatprep.subr.bf16.mxu0 0
      %1443 = vmatpush1.bf16.msra.mxu0 0
      %1444 = vmatprep.subr.bf16.mxu0 0
      %1445 = vmatpush1.bf16.msra.mxu0 0
      %1446 = vmatprep.subr.bf16.mxu0 0
      %1447 = vmatpush1.bf16.msra.mxu0 0
      %1448 = vmatprep.subr.bf16.mxu0 0
      %1449 = vmatpush1.bf16.msra.mxu0 0
      %1450 = vmatprep.subr.bf16.mxu0 0
      %1451 = vmatpush1.bf16.msra.mxu0 0
      %1452 = vmatprep.subr.bf16.mxu0 0
      %1453 = vmatpush1.bf16.msra.mxu0 0
      %1454 = vmatprep.subr.bf16.mxu0 0
      %1455 = vmatpush1.bf16.msra.mxu0 0
      %1456 = vmatprep.subr.bf16.mxu0 0
      %1457 = vmatpush1.bf16.msra.mxu0 0
      %1458 = vmatprep.mubr.bf16.mxu0 0
      %1459 = vmatmul.mubr.bf16.gmra.mrb[0].mxu0 %v1376
      %v1460 = vpop.f32.mrb[0].mxu0
      %v1461 = vadd.f32 0.0, %v1460
      %v1462 = vpop.f32.mrb[0].mxu0
      %v1463 = vpop.f32.mrb[0].mxu0
      %v1464 = vadd.f32 0.0, %v1463
      %v1465 = vpop.f32.mrb[0].mxu0
      %1466 = vmatprep.mubr.bf16.mxu0 0
      %1467 = vmatmul.mubr.bf16.gmra.mrb[0].mxu0 %v1379
      %v1468 = vpop.f32.mrb[0].mxu0
      %v1469 = vadd.f32 0.0, %v1468
      %v1470 = vpop.f32.mrb[0].mxu0
      %v1471 = vpop.f32.mrb[0].mxu0
      %v1472 = vadd.f32 0.0, %v1471
      %v1473 = vpop.f32.mrb[0].mxu0
      %1474 = vmatprep.mubr.bf16.mxu0 0
      %1475 = vmatmul.mubr.bf16.gmra.mrb[0].mxu0 %v1382
      %v1476 = vpop.f32.mrb[0].mxu0
      %v1477 = vadd.f32 0.0, %v1476
      %v1478 = vpop.f32.mrb[0].mxu0
      %v1479 = vpop.f32.mrb[0].mxu0
      %v1480 = vadd.f32 0.0, %v1479
      %v1481 = vpop.f32.mrb[0].mxu0
      %1482 = vmatprep.mubr.bf16.mxu0 0
      %1483 = vmatmul.mubr.bf16.gmra.mrb[0].mxu0 %v1385
      %v1484 = vpop.f32.mrb[0].mxu0
      %v1485 = vadd.f32 0.0, %v1484
      %v1486 = vpop.f32.mrb[0].mxu0
      %v1487 = vpop.f32.mrb[0].mxu0
      %v1488 = vadd.f32 0.0, %v1487
      %v1489 = vpop.f32.mrb[0].mxu0
      %1490 = vmatprep.mubr.bf16.mxu0 0
      %1491 = vmatmul.mubr.bf16.gmra.mrb[0].mxu0 %v1388
      %v1492 = vpop.f32.mrb[0].mxu0
      %v1493 = vadd.f32 0.0, %v1492
      %v1494 = vpop.f32.mrb[0].mxu0
      %v1495 = vpop.f32.mrb[0].mxu0
      %v1496 = vadd.f32 0.0, %v1495
      %v1497 = vpop.f32.mrb[0].mxu0
      %1498 = vmatprep.mubr.bf16.mxu0 0
      %1499 = vmatmul.mubr.bf16.gmra.mrb[0].mxu0 %v1391
      %v1500 = vpop.f32.mrb[0].mxu0
      %v1501 = vadd.f32 0.0, %v1500
      %v1502 = vpop.f32.mrb[0].mxu0
      %v1503 = vpop.f32.mrb[0].mxu0
      %v1504 = vadd.f32 0.0, %v1503
      %v1505 = vpop.f32.mrb[0].mxu0
      %1506 = vmatprep.mubr.bf16.mxu0 0
      %1507 = vmatmul.mubr.bf16.gmra.mrb[0].mxu0 %v1394
      %v1508 = vpop.f32.mrb[0].mxu0
      %v1509 = vadd.f32 0.0, %v1508
      %v1510 = vpop.f32.mrb[0].mxu0
      %v1511 = vpop.f32.mrb[0].mxu0
      %v1512 = vadd.f32 0.0, %v1511
      %v1513 = vpop.f32.mrb[0].mxu0
      %1514 = vmatprep.mubr.bf16.mxu0 0
      %1515 = vmatmul.mubr.bf16.gmra.mrb[0].mxu0 %v1397
      %v1516 = vpop.f32.mrb[0].mxu0
      %v1517 = vadd.f32 0.0, %v1516
      %v1518 = vpop.f32.mrb[0].mxu0
      %v1519 = vpop.f32.mrb[0].mxu0
      %v1520 = vadd.f32 0.0, %v1519
      %v1521 = vpop.f32.mrb[0].mxu0
      %1522 = vmatprep.mubr.bf16.mxu0 0
      %1523 = vmatmul.mubr.bf16.gmra.mrb[0].mxu0 %v1400
      %v1524 = vpop.f32.mrb[0].mxu0
      %v1525 = vadd.f32 0.0, %v1524
      %v1526 = vpop.f32.mrb[0].mxu0
      %v1527 = vpop.f32.mrb[0].mxu0
      %v1528 = vadd.f32 0.0, %v1527
      %v1529 = vpop.f32.mrb[0].mxu0
      %1530 = vmatprep.mubr.bf16.mxu0 0
      %1531 = vmatmul.mubr.bf16.gmra.mrb[0].mxu0 %v1403
      %v1532 = vpop.f32.mrb[0].mxu0
      %v1533 = vadd.f32 0.0, %v1532
      %v1534 = vpop.f32.mrb[0].mxu0
      %v1535 = vpop.f32.mrb[0].mxu0
      %v1536 = vadd.f32 0.0, %v1535
      %v1537 = vpop.f32.mrb[0].mxu0
      %1538 = vmatprep.mubr.bf16.mxu0 0
      %1539 = vmatmul.mubr.bf16.gmra.mrb[0].mxu0 %v1406
      %v1540 = vpop.f32.mrb[0].mxu0
      %v1541 = vadd.f32 0.0, %v1540
      %v1542 = vpop.f32.mrb[0].mxu0
      %v1543 = vpop.f32.mrb[0].mxu0
      %v1544 = vadd.f32 0.0, %v1543
      %v1545 = vpop.f32.mrb[0].mxu0
      %1546 = vmatprep.mubr.bf16.mxu0 0
      %1547 = vmatmul.mubr.bf16.gmra.mrb[0].mxu0 %v1409
      %v1548 = vpop.f32.mrb[0].mxu0
      %v1549 = vadd.f32 0.0, %v1548
      %v1550 = vpop.f32.mrb[0].mxu0
      %v1551 = vpop.f32.mrb[0].mxu0
      %v1552 = vadd.f32 0.0, %v1551
      %v1553 = vpop.f32.mrb[0].mxu0
      %1554 = vmatprep.mubr.bf16.mxu0 0
      %1555 = vmatmul.mubr.bf16.gmra.mrb[0].mxu0 %v1412
      %v1556 = vpop.f32.mrb[0].mxu0
      %v1557 = vadd.f32 0.0, %v1556
      %v1558 = vpop.f32.mrb[0].mxu0
      %v1559 = vpop.f32.mrb[0].mxu0
      %v1560 = vadd.f32 0.0, %v1559
      %v1561 = vpop.f32.mrb[0].mxu0
      %1562 = vmatprep.mubr.bf16.mxu0 0
      %1563 = vmatmul.mubr.bf16.gmra.mrb[0].mxu0 %v1415
      %v1564 = vpop.f32.mrb[0].mxu0
      %v1565 = vadd.f32 0.0, %v1564
      %v1566 = vpop.f32.mrb[0].mxu0
      %v1567 = vpop.f32.mrb[0].mxu0
      %v1568 = vadd.f32 0.0, %v1567
      %v1569 = vpop.f32.mrb[0].mxu0
      %1570 = vmatprep.mubr.bf16.mxu0 0
      %1571 = vmatmul.mubr.bf16.gmra.mrb[0].mxu0 %v1418
      %v1572 = vpop.f32.mrb[0].mxu0
      %v1573 = vadd.f32 0.0, %v1572
      %v1574 = vpop.f32.mrb[0].mxu0
      %v1575 = vpop.f32.mrb[0].mxu0
      %v1576 = vadd.f32 0.0, %v1575
      %v1577 = vpop.f32.mrb[0].mxu0
      %1578 = vmatprep.mubr.bf16.mxu0 0
      %1579 = vmatmul.mubr.bf16.gmra.mrb[0].mxu0 %v1421
      %v1580 = vpop.f32.mrb[0].mxu0
      %v1581 = vadd.f32 0.0, %v1580
      %v1582 = vpop.f32.mrb[0].mxu0
      %v1583 = vpop.f32.mrb[0].mxu0
      %v1584 = vadd.f32 0.0, %v1583
      %v1585 = vpop.f32.mrb[0].mxu0
      %1586 = vdwg.mxu0
      %v1587 = vadd.f32 %v1036, %v1461
      %v1588 = vadd.f32 %v1039, %v1464
      %v1589 = vadd.f32 %v1044, %v1469
      %v1590 = vadd.f32 %v1047, %v1472
      %v1591 = vadd.f32 %v1052, %v1477
      %v1592 = vadd.f32 %v1055, %v1480
      %v1593 = vadd.f32 %v1060, %v1485
      %v1594 = vadd.f32 %v1063, %v1488
      %v1595 = vadd.f32 %v1068, %v1493
      %v1596 = vadd.f32 %v1071, %v1496
      %v1597 = vadd.f32 %v1076, %v1501
      %v1598 = vadd.f32 %v1079, %v1504
      %v1599 = vadd.f32 %v1084, %v1509
      %v1600 = vadd.f32 %v1087, %v1512
      %v1601 = vadd.f32 %v1092, %v1517
      %v1602 = vadd.f32 %v1095, %v1520
      %v1603 = vadd.f32 %v1100, %v1525
      %v1604 = vadd.f32 %v1103, %v1528
      %v1605 = vadd.f32 %v1108, %v1533
      %v1606 = vadd.f32 %v1111, %v1536
      %v1607 = vadd.f32 %v1116, %v1541
      %v1608 = vadd.f32 %v1119, %v1544
      %v1609 = vadd.f32 %v1124, %v1549
      %v1610 = vadd.f32 %v1127, %v1552
      %v1611 = vadd.f32 %v1132, %v1557
      %v1612 = vadd.f32 %v1135, %v1560
      %v1613 = vadd.f32 %v1140, %v1565
      %v1614 = vadd.f32 %v1143, %v1568
      %v1615 = vadd.f32 %v1148, %v1573
      %v1616 = vadd.f32 %v1151, %v1576
      %v1617 = vadd.f32 %v1156, %v1581
      %v1618 = vadd.f32 %v1159, %v1584
      %s1619 = scalar_lea.vmem %s164, 12
      %v1620 = vld [vmem:[%s1619] sm:$0xf]
      %v1621 = vld [vmem:[%s1619 + $0x4] sm:$0xf]
      %v1622 = vld [vmem:[%s1619 + $0xc] sm:$0xf]
      %v1623 = vld [vmem:[%s1619 + $0x10] sm:$0xf]
      %v1624 = vld [vmem:[%s1619 + $0x18] sm:$0xf]
      %v1625 = vld [vmem:[%s1619 + $0x1c] sm:$0xf]
      %v1626 = vld [vmem:[%s1619 + $0x24] sm:$0xf]
      %v1627 = vld [vmem:[%s1619 + $0x28] sm:$0xf]
      %v1628 = vld [vmem:[%s1619 + $0x30] sm:$0xf]
      %v1629 = vld [vmem:[%s1619 + $0x34] sm:$0xf]
      %v1630 = vld [vmem:[%s1619 + $0x3c] sm:$0xf]
      %v1631 = vld [vmem:[%s1619 + $0x40] sm:$0xf]
      %v1632 = vld [vmem:[%s1619 + $0x48] sm:$0xf]
      %v1633 = vld [vmem:[%s1619 + $0x4c] sm:$0xf]
      %v1634 = vld [vmem:[%s1619 + $0x54] sm:$0xf]
      %v1635 = vld [vmem:[%s1619 + $0x58] sm:$0xf]
      %v1636 = vld [vmem:[%s1619 + $0x60] sm:$0xf]
      %v1637 = vld [vmem:[%s1619 + $0x64] sm:$0xf]
      %v1638 = vld [vmem:[%s1619 + $0x6c] sm:$0xf]
      %v1639 = vld [vmem:[%s1619 + $0x70] sm:$0xf]
      %v1640 = vld [vmem:[%s1619 + $0x78] sm:$0xf]
      %v1641 = vld [vmem:[%s1619 + $0x7c] sm:$0xf]
      %v1642 = vld [vmem:[%s1619 + $0x84] sm:$0xf]
      %v1643 = vld [vmem:[%s1619 + $0x88] sm:$0xf]
      %v1644 = vld [vmem:[%s1619 + $0x90] sm:$0xf]
      %v1645 = vld [vmem:[%s1619 + $0x94] sm:$0xf]
      %v1646 = vld [vmem:[%s1619 + $0x9c] sm:$0xf]
      %v1647 = vld [vmem:[%s1619 + $0xa0] sm:$0xf]
      %v1648 = vld [vmem:[%s1619 + $0xa8] sm:$0xf]
      %v1649 = vld [vmem:[%s1619 + $0xac] sm:$0xf]
      %v1650 = vld [vmem:[%s1619 + $0xb4] sm:$0xf]
      %v1651 = vld [vmem:[%s1619 + $0xb8] sm:$0xf]
      %s1652 = scalar_lea.vmem %s1, 6
      %v1653 = vld [vmem:[%s1652] sm:$0x3]
      %v1686 = vunpack.c.l.b16 %v1620
      %v1687 = vunpack.c.l.b16 %v1621
      %v1688 = vunpack.c.l.b16 %v1622
      %v1689 = vunpack.c.l.b16 %v1623
      %v1690 = vunpack.c.l.b16 %v1624
      %v1691 = vunpack.c.l.b16 %v1625
      %v1692 = vunpack.c.l.b16 %v1626
      %v1693 = vunpack.c.l.b16 %v1627
      %v1694 = vunpack.c.l.b16 %v1628
      %v1695 = vunpack.c.l.b16 %v1629
      %v1696 = vunpack.c.l.b16 %v1630
      %v1697 = vunpack.c.l.b16 %v1631
      %v1698 = vunpack.c.l.b16 %v1632
      %v1699 = vunpack.c.l.b16 %v1633
      %v1700 = vunpack.c.l.b16 %v1634
      %v1701 = vunpack.c.l.b16 %v1635
      %v1702 = vunpack.c.l.b16 %v1636
      %v1703 = vunpack.c.l.b16 %v1637
      %v1704 = vunpack.c.l.b16 %v1638
      %v1705 = vunpack.c.l.b16 %v1639
      %v1706 = vunpack.c.l.b16 %v1640
      %v1707 = vunpack.c.l.b16 %v1641
      %v1708 = vunpack.c.l.b16 %v1642
      %v1709 = vunpack.c.l.b16 %v1643
      %v1710 = vunpack.c.l.b16 %v1644
      %v1711 = vunpack.c.l.b16 %v1645
      %v1712 = vunpack.c.l.b16 %v1646
      %v1713 = vunpack.c.l.b16 %v1647
      %v1714 = vunpack.c.l.b16 %v1648
      %v1715 = vunpack.c.l.b16 %v1649
      %v1716 = vunpack.c.l.b16 %v1650
      %v1717 = vunpack.c.l.b16 %v1651
      %v1718 = vpack.c.b16 %v1687, %v1686
      %v1719 = vpack.c.b16 %v1689, %v1688
      %v1720 = vpack.c.b16 %v1691, %v1690
      %v1721 = vpack.c.b16 %v1693, %v1692
      %v1722 = vpack.c.b16 %v1695, %v1694
      %v1723 = vpack.c.b16 %v1697, %v1696
      %v1724 = vpack.c.b16 %v1699, %v1698
      %v1725 = vpack.c.b16 %v1701, %v1700
      %v1726 = vpack.c.b16 %v1703, %v1702
      %v1727 = vpack.c.b16 %v1705, %v1704
      %v1728 = vpack.c.b16 %v1707, %v1706
      %v1729 = vpack.c.b16 %v1709, %v1708
      %v1730 = vpack.c.b16 %v1711, %v1710
      %v1731 = vpack.c.b16 %v1713, %v1712
      %v1732 = vpack.c.b16 %v1715, %v1714
      %v1733 = vpack.c.b16 %v1717, %v1716
      %v1735 = vsel %vm656, %v1718, 0
      %v1738 = vsel %vm656, %v1719, 0
      %v1741 = vsel %vm656, %v1720, 0
      %v1744 = vsel %vm656, %v1721, 0
      %v1747 = vsel %vm656, %v1722, 0
      %v1750 = vsel %vm656, %v1723, 0
      %v1753 = vsel %vm656, %v1724, 0
      %v1756 = vsel %vm656, %v1725, 0
      %v1759 = vsel %vm656, %v1726, 0
      %v1762 = vsel %vm656, %v1727, 0
      %v1765 = vsel %vm656, %v1728, 0
      %v1768 = vsel %vm656, %v1729, 0
      %v1771 = vsel %vm656, %v1730, 0
      %v1774 = vsel %vm656, %v1731, 0
      %v1777 = vsel %vm656, %v1732, 0
      %v1780 = vsel %vm656, %v1733, 0
      %v1783 = vsel %vm705, %v1653, 0
      %1785 = vmatprep.subr.bf16.mxu0 0
      %1786 = vmatpush1.bf16.msra.mxu0 %v1783
      %1787 = vmatprep.subr.bf16.mxu0 0
      %1788 = vmatpush1.bf16.msra.mxu0 0
      %1789 = vmatprep.subr.bf16.mxu0 0
      %1790 = vmatpush1.bf16.msra.mxu0 0
      %1791 = vmatprep.subr.bf16.mxu0 0
      %1792 = vmatpush1.bf16.msra.mxu0 0
      %1793 = vmatprep.subr.bf16.mxu0 0
      %1794 = vmatpush1.bf16.msra.mxu0 0
      %1795 = vmatprep.subr.bf16.mxu0 0
      %1796 = vmatpush1.bf16.msra.mxu0 0
      %1797 = vmatprep.subr.bf16.mxu0 0
      %1798 = vmatpush1.bf16.msra.mxu0 0
      %1799 = vmatprep.subr.bf16.mxu0 0
      %1800 = vmatpush1.bf16.msra.mxu0 0
      %1801 = vmatprep.subr.bf16.mxu0 0
      %1802 = vmatpush1.bf16.msra.mxu0 0
      %1803 = vmatprep.subr.bf16.mxu0 0
      %1804 = vmatpush1.bf16.msra.mxu0 0
      %1805 = vmatprep.subr.bf16.mxu0 0
      %1806 = vmatpush1.bf16.msra.mxu0 0
      %1807 = vmatprep.subr.bf16.mxu0 0
      %1808 = vmatpush1.bf16.msra.mxu0 0
      %1809 = vmatprep.subr.bf16.mxu0 0
      %1810 = vmatpush1.bf16.msra.mxu0 0
      %1811 = vmatprep.subr.bf16.mxu0 0
      %1812 = vmatpush1.bf16.msra.mxu0 0
      %1813 = vmatprep.subr.bf16.mxu0 0
      %1814 = vmatpush1.bf16.msra.mxu0 0
      %1815 = vmatprep.subr.bf16.mxu0 0
      %1816 = vmatpush1.bf16.msra.mxu0 0
      %1817 = vmatprep.mubr.bf16.mxu0 0
      %1818 = vmatmul.mubr.bf16.gmra.mrb[0].mxu0 %v1735
      %v1819 = vpop.f32.mrb[0].mxu0
      %v1820 = vadd.f32 0.0, %v1819
      %v1821 = vpop.f32.mrb[0].mxu0
      %v1822 = vpop.f32.mrb[0].mxu0
      %v1823 = vadd.f32 0.0, %v1822
      %v1824 = vpop.f32.mrb[0].mxu0
      %1825 = vmatprep.mubr.bf16.mxu0 0
      %1826 = vmatmul.mubr.bf16.gmra.mrb[0].mxu0 %v1738
      %v1827 = vpop.f32.mrb[0].mxu0
      %v1828 = vadd.f32 0.0, %v1827
      %v1829 = vpop.f32.mrb[0].mxu0
      %v1830 = vpop.f32.mrb[0].mxu0
      %v1831 = vadd.f32 0.0, %v1830
      %v1832 = vpop.f32.mrb[0].mxu0
      %1833 = vmatprep.mubr.bf16.mxu0 0
      %1834 = vmatmul.mubr.bf16.gmra.mrb[0].mxu0 %v1741
      %v1835 = vpop.f32.mrb[0].mxu0
      %v1836 = vadd.f32 0.0, %v1835
      %v1837 = vpop.f32.mrb[0].mxu0
      %v1838 = vpop.f32.mrb[0].mxu0
      %v1839 = vadd.f32 0.0, %v1838
      %v1840 = vpop.f32.mrb[0].mxu0
      %1841 = vmatprep.mubr.bf16.mxu0 0
      %1842 = vmatmul.mubr.bf16.gmra.mrb[0].mxu0 %v1744
      %v1843 = vpop.f32.mrb[0].mxu0
      %v1844 = vadd.f32 0.0, %v1843
      %v1845 = vpop.f32.mrb[0].mxu0
      %v1846 = vpop.f32.mrb[0].mxu0
      %v1847 = vadd.f32 0.0, %v1846
      %v1848 = vpop.f32.mrb[0].mxu0
      %1849 = vmatprep.mubr.bf16.mxu0 0
      %1850 = vmatmul.mubr.bf16.gmra.mrb[0].mxu0 %v1747
      %v1851 = vpop.f32.mrb[0].mxu0
      %v1852 = vadd.f32 0.0, %v1851
      %v1853 = vpop.f32.mrb[0].mxu0
      %v1854 = vpop.f32.mrb[0].mxu0
      %v1855 = vadd.f32 0.0, %v1854
      %v1856 = vpop.f32.mrb[0].mxu0
      %1857 = vmatprep.mubr.bf16.mxu0 0
      %1858 = vmatmul.mubr.bf16.gmra.mrb[0].mxu0 %v1750
      %v1859 = vpop.f32.mrb[0].mxu0
      %v1860 = vadd.f32 0.0, %v1859
      %v1861 = vpop.f32.mrb[0].mxu0
      %v1862 = vpop.f32.mrb[0].mxu0
      %v1863 = vadd.f32 0.0, %v1862
      %v1864 = vpop.f32.mrb[0].mxu0
      %1865 = vmatprep.mubr.bf16.mxu0 0
      %1866 = vmatmul.mubr.bf16.gmra.mrb[0].mxu0 %v1753
      %v1867 = vpop.f32.mrb[0].mxu0
      %v1868 = vadd.f32 0.0, %v1867
      %v1869 = vpop.f32.mrb[0].mxu0
      %v1870 = vpop.f32.mrb[0].mxu0
      %v1871 = vadd.f32 0.0, %v1870
      %v1872 = vpop.f32.mrb[0].mxu0
      %1873 = vmatprep.mubr.bf16.mxu0 0
      %1874 = vmatmul.mubr.bf16.gmra.mrb[0].mxu0 %v1756
      %v1875 = vpop.f32.mrb[0].mxu0
      %v1876 = vadd.f32 0.0, %v1875
      %v1877 = vpop.f32.mrb[0].mxu0
      %v1878 = vpop.f32.mrb[0].mxu0
      %v1879 = vadd.f32 0.0, %v1878
      %v1880 = vpop.f32.mrb[0].mxu0
      %1881 = vmatprep.mubr.bf16.mxu0 0
      %1882 = vmatmul.mubr.bf16.gmra.mrb[0].mxu0 %v1759
      %v1883 = vpop.f32.mrb[0].mxu0
      %v1884 = vadd.f32 0.0, %v1883
      %v1885 = vpop.f32.mrb[0].mxu0
      %v1886 = vpop.f32.mrb[0].mxu0
      %v1887 = vadd.f32 0.0, %v1886
      %v1888 = vpop.f32.mrb[0].mxu0
      %1889 = vmatprep.mubr.bf16.mxu0 0
      %1890 = vmatmul.mubr.bf16.gmra.mrb[0].mxu0 %v1762
      %v1891 = vpop.f32.mrb[0].mxu0
      %v1892 = vadd.f32 0.0, %v1891
      %v1893 = vpop.f32.mrb[0].mxu0
      %v1894 = vpop.f32.mrb[0].mxu0
      %v1895 = vadd.f32 0.0, %v1894
      %v1896 = vpop.f32.mrb[0].mxu0
      %1897 = vmatprep.mubr.bf16.mxu0 0
      %1898 = vmatmul.mubr.bf16.gmra.mrb[0].mxu0 %v1765
      %v1899 = vpop.f32.mrb[0].mxu0
      %v1900 = vadd.f32 0.0, %v1899
      %v1901 = vpop.f32.mrb[0].mxu0
      %v1902 = vpop.f32.mrb[0].mxu0
      %v1903 = vadd.f32 0.0, %v1902
      %v1904 = vpop.f32.mrb[0].mxu0
      %1905 = vmatprep.mubr.bf16.mxu0 0
      %1906 = vmatmul.mubr.bf16.gmra.mrb[0].mxu0 %v1768
      %v1907 = vpop.f32.mrb[0].mxu0
      %v1908 = vadd.f32 0.0, %v1907
      %v1909 = vpop.f32.mrb[0].mxu0
      %v1910 = vpop.f32.mrb[0].mxu0
      %v1911 = vadd.f32 0.0, %v1910
      %v1912 = vpop.f32.mrb[0].mxu0
      %1913 = vmatprep.mubr.bf16.mxu0 0
      %1914 = vmatmul.mubr.bf16.gmra.mrb[0].mxu0 %v1771
      %v1915 = vpop.f32.mrb[0].mxu0
      %v1916 = vadd.f32 0.0, %v1915
      %v1917 = vpop.f32.mrb[0].mxu0
      %v1918 = vpop.f32.mrb[0].mxu0
      %v1919 = vadd.f32 0.0, %v1918
      %v1920 = vpop.f32.mrb[0].mxu0
      %1921 = vmatprep.mubr.bf16.mxu0 0
      %1922 = vmatmul.mubr.bf16.gmra.mrb[0].mxu0 %v1774
      %v1923 = vpop.f32.mrb[0].mxu0
      %v1924 = vadd.f32 0.0, %v1923
      %v1925 = vpop.f32.mrb[0].mxu0
      %v1926 = vpop.f32.mrb[0].mxu0
      %v1927 = vadd.f32 0.0, %v1926
      %v1928 = vpop.f32.mrb[0].mxu0
      %1929 = vmatprep.mubr.bf16.mxu0 0
      %1930 = vmatmul.mubr.bf16.gmra.mrb[0].mxu0 %v1777
      %v1931 = vpop.f32.mrb[0].mxu0
      %v1932 = vadd.f32 0.0, %v1931
      %v1933 = vpop.f32.mrb[0].mxu0
      %v1934 = vpop.f32.mrb[0].mxu0
      %v1935 = vadd.f32 0.0, %v1934
      %v1936 = vpop.f32.mrb[0].mxu0
      %1937 = vmatprep.mubr.bf16.mxu0 0
      %1938 = vmatmul.mubr.bf16.gmra.mrb[0].mxu0 %v1780
      %v1939 = vpop.f32.mrb[0].mxu0
      %v1940 = vadd.f32 0.0, %v1939
      %v1941 = vpop.f32.mrb[0].mxu0
      %v1942 = vpop.f32.mrb[0].mxu0
      %v1943 = vadd.f32 0.0, %v1942
      %v1944 = vpop.f32.mrb[0].mxu0
      %1945 = vdwg.mxu0
      %v1946 = vadd.f32 %v1587, %v1820
      %v1947 = vadd.f32 %v1588, %v1823
      %v1948 = vadd.f32 %v1589, %v1828
      %v1949 = vadd.f32 %v1590, %v1831
      %v1950 = vadd.f32 %v1591, %v1836
      %v1951 = vadd.f32 %v1592, %v1839
      %v1952 = vadd.f32 %v1593, %v1844
      %v1953 = vadd.f32 %v1594, %v1847
      %v1954 = vadd.f32 %v1595, %v1852
      %v1955 = vadd.f32 %v1596, %v1855
      %v1956 = vadd.f32 %v1597, %v1860
      %v1957 = vadd.f32 %v1598, %v1863
      %v1958 = vadd.f32 %v1599, %v1868
      %v1959 = vadd.f32 %v1600, %v1871
      %v1960 = vadd.f32 %v1601, %v1876
      %v1961 = vadd.f32 %v1602, %v1879
      %v1962 = vadd.f32 %v1603, %v1884
      %v1963 = vadd.f32 %v1604, %v1887
      %v1964 = vadd.f32 %v1605, %v1892
      %v1965 = vadd.f32 %v1606, %v1895
      %v1966 = vadd.f32 %v1607, %v1900
      %v1967 = vadd.f32 %v1608, %v1903
      %v1968 = vadd.f32 %v1609, %v1908
      %v1969 = vadd.f32 %v1610, %v1911
      %v1970 = vadd.f32 %v1611, %v1916
      %v1971 = vadd.f32 %v1612, %v1919
      %v1972 = vadd.f32 %v1613, %v1924
      %v1973 = vadd.f32 %v1614, %v1927
      %v1974 = vadd.f32 %v1615, %v1932
      %v1975 = vadd.f32 %v1616, %v1935
      %v1976 = vadd.f32 %v1617, %v1940
      %v1977 = vadd.f32 %v1618, %v1943
      %v1978 = vld [vmem:[%s1619] sm:$0xf]
      %v1979 = vld [vmem:[%s1619 + $0x4] sm:$0xf]
      %v1980 = vld [vmem:[%s1619 + $0x8] sm:$0x1]
      %v1981 = vld [vmem:[%s1619 + $0xc] sm:$0xf]
      %v1982 = vld [vmem:[%s1619 + $0x10] sm:$0xf]
      %v1983 = vld [vmem:[%s1619 + $0x14] sm:$0x1]
      %v1984 = vld [vmem:[%s1619 + $0x18] sm:$0xf]
      %v1985 = vld [vmem:[%s1619 + $0x1c] sm:$0xf]
      %v1986 = vld [vmem:[%s1619 + $0x20] sm:$0x1]
      %v1987 = vld [vmem:[%s1619 + $0x24] sm:$0xf]
      %v1988 = vld [vmem:[%s1619 + $0x28] sm:$0xf]
      %v1989 = vld [vmem:[%s1619 + $0x2c] sm:$0x1]
      %v1990 = vld [vmem:[%s1619 + $0x30] sm:$0xf]
      %v1991 = vld [vmem:[%s1619 + $0x34] sm:$0xf]
      %v1992 = vld [vmem:[%s1619 + $0x38] sm:$0x1]
      %v1993 = vld [vmem:[%s1619 + $0x3c] sm:$0xf]
      %v1994 = vld [vmem:[%s1619 + $0x40] sm:$0xf]
      %v1995 = vld [vmem:[%s1619 + $0x44] sm:$0x1]
      %v1996 = vld [vmem:[%s1619 + $0x48] sm:$0xf]
      %v1997 = vld [vmem:[%s1619 + $0x4c] sm:$0xf]
      %v1998 = vld [vmem:[%s1619 + $0x50] sm:$0x1]
      %v1999 = vld [vmem:[%s1619 + $0x54] sm:$0xf]
      %v2000 = vld [vmem:[%s1619 + $0x58] sm:$0xf]
      %v2001 = vld [vmem:[%s1619 + $0x5c] sm:$0x1]
      %v2002 = vld [vmem:[%s1619 + $0x60] sm:$0xf]
      %v2003 = vld [vmem:[%s1619 + $0x64] sm:$0xf]
      %v2004 = vld [vmem:[%s1619 + $0x68] sm:$0x1]
      %v2005 = vld [vmem:[%s1619 + $0x6c] sm:$0xf]
      %v2006 = vld [vmem:[%s1619 + $0x70] sm:$0xf]
      %v2007 = vld [vmem:[%s1619 + $0x74] sm:$0x1]
      %v2008 = vld [vmem:[%s1619 + $0x78] sm:$0xf]
      %v2009 = vld [vmem:[%s1619 + $0x7c] sm:$0xf]
      %v2010 = vld [vmem:[%s1619 + $0x80] sm:$0x1]
      %v2011 = vld [vmem:[%s1619 + $0x84] sm:$0xf]
      %v2012 = vld [vmem:[%s1619 + $0x88] sm:$0xf]
      %v2013 = vld [vmem:[%s1619 + $0x8c] sm:$0x1]
      %v2014 = vld [vmem:[%s1619 + $0x90] sm:$0xf]
      %v2015 = vld [vmem:[%s1619 + $0x94] sm:$0xf]
      %v2016 = vld [vmem:[%s1619 + $0x98] sm:$0x1]
      %v2017 = vld [vmem:[%s1619 + $0x9c] sm:$0xf]
      %v2018 = vld [vmem:[%s1619 + $0xa0] sm:$0xf]
      %v2019 = vld [vmem:[%s1619 + $0xa4] sm:$0x1]
      %v2020 = vld [vmem:[%s1619 + $0xa8] sm:$0xf]
      %v2021 = vld [vmem:[%s1619 + $0xac] sm:$0xf]
      %v2022 = vld [vmem:[%s1619 + $0xb0] sm:$0x1]
      %v2023 = vld [vmem:[%s1619 + $0xb4] sm:$0xf]
      %v2024 = vld [vmem:[%s1619 + $0xb8] sm:$0xf]
      %v2025 = vld [vmem:[%s1619 + $0xbc] sm:$0x1]
      %v2027 = vshrl.u32 %v1978, 16
      %v2029 = vrot.slane %v2027, 4
      %v2030 = vshll.u32 %v1978, 16
      %v2032 = vrot.slane %v2030, 5
      %v2033 = vor.u32 %v2029, %v2032
      %v2034 = vrot.slane %v2033, 4
      %v2036 = vshll.u32 %v1979, 16
      %v2038 = vrot.slane %v2036, 5
      %v2039 = vsel %vm221, %v2034, %v2038
      %v2040 = vshrl.u32 %v1979, 16
      %v2042 = vrot.slane %v2040, 4
      %v2043 = vor.u32 %v2042, %v2038
      %v2044 = vrot.slane %v2043, 4
      %v2046 = vshll.u32 %v1980, 16
      %v2048 = vrot.slane %v2046, 5
      %v2049 = vsel %vm221, %v2044, %v2048
      %v2051 = vshrl.u32 %v1981, 16
      %v2053 = vrot.slane %v2051, 4
      %v2054 = vshll.u32 %v1981, 16
      %v2056 = vrot.slane %v2054, 5
      %v2057 = vor.u32 %v2053, %v2056
      %v2058 = vrot.slane %v2057, 4
      %v2060 = vshll.u32 %v1982, 16
      %v2062 = vrot.slane %v2060, 5
      %v2063 = vsel %vm221, %v2058, %v2062
      %v2064 = vshrl.u32 %v1982, 16
      %v2066 = vrot.slane %v2064, 4
      %v2067 = vor.u32 %v2066, %v2062
      %v2068 = vrot.slane %v2067, 4
      %v2070 = vshll.u32 %v1983, 16
      %v2072 = vrot.slane %v2070, 5
      %v2073 = vsel %vm221, %v2068, %v2072
      %v2075 = vshrl.u32 %v1984, 16
      %v2077 = vrot.slane %v2075, 4
      %v2078 = vshll.u32 %v1984, 16
      %v2080 = vrot.slane %v2078, 5
      %v2081 = vor.u32 %v2077, %v2080
      %v2082 = vrot.slane %v2081, 4
      %v2084 = vshll.u32 %v1985, 16
      %v2086 = vrot.slane %v2084, 5
      %v2087 = vsel %vm221, %v2082, %v2086
      %v2088 = vshrl.u32 %v1985, 16
      %v2090 = vrot.slane %v2088, 4
      %v2091 = vor.u32 %v2090, %v2086
      %v2092 = vrot.slane %v2091, 4
      %v2094 = vshll.u32 %v1986, 16
      %v2096 = vrot.slane %v2094, 5
      %v2097 = vsel %vm221, %v2092, %v2096
      %v2099 = vshrl.u32 %v1987, 16
      %v2101 = vrot.slane %v2099, 4
      %v2102 = vshll.u32 %v1987, 16
      %v2104 = vrot.slane %v2102, 5
      %v2105 = vor.u32 %v2101, %v2104
      %v2106 = vrot.slane %v2105, 4
      %v2108 = vshll.u32 %v1988, 16
      %v2110 = vrot.slane %v2108, 5
      %v2111 = vsel %vm221, %v2106, %v2110
      %v2112 = vshrl.u32 %v1988, 16
      %v2114 = vrot.slane %v2112, 4
      %v2115 = vor.u32 %v2114, %v2110
      %v2116 = vrot.slane %v2115, 4
      %v2118 = vshll.u32 %v1989, 16
      %v2120 = vrot.slane %v2118, 5
      %v2121 = vsel %vm221, %v2116, %v2120
      %v2123 = vshrl.u32 %v1990, 16
      %v2125 = vrot.slane %v2123, 4
      %v2126 = vshll.u32 %v1990, 16
      %v2128 = vrot.slane %v2126, 5
      %v2129 = vor.u32 %v2125, %v2128
      %v2130 = vrot.slane %v2129, 4
      %v2132 = vshll.u32 %v1991, 16
      %v2134 = vrot.slane %v2132, 5
      %v2135 = vsel %vm221, %v2130, %v2134
      %v2136 = vshrl.u32 %v1991, 16
      %v2138 = vrot.slane %v2136, 4
      %v2139 = vor.u32 %v2138, %v2134
      %v2140 = vrot.slane %v2139, 4
      %v2142 = vshll.u32 %v1992, 16
      %v2144 = vrot.slane %v2142, 5
      %v2145 = vsel %vm221, %v2140, %v2144
      %v2147 = vshrl.u32 %v1993, 16
      %v2149 = vrot.slane %v2147, 4
      %v2150 = vshll.u32 %v1993, 16
      %v2152 = vrot.slane %v2150, 5
      %v2153 = vor.u32 %v2149, %v2152
      %v2154 = vrot.slane %v2153, 4
      %v2156 = vshll.u32 %v1994, 16
      %v2158 = vrot.slane %v2156, 5
      %v2159 = vsel %vm221, %v2154, %v2158
      %v2160 = vshrl.u32 %v1994, 16
      %v2162 = vrot.slane %v2160, 4
      %v2163 = vor.u32 %v2162, %v2158
      %v2164 = vrot.slane %v2163, 4
      %v2166 = vshll.u32 %v1995, 16
      %v2168 = vrot.slane %v2166, 5
      %v2169 = vsel %vm221, %v2164, %v2168
      %v2171 = vshrl.u32 %v1996, 16
      %v2173 = vrot.slane %v2171, 4
      %v2174 = vshll.u32 %v1996, 16
      %v2176 = vrot.slane %v2174, 5
      %v2177 = vor.u32 %v2173, %v2176
      %v2178 = vrot.slane %v2177, 4
      %v2180 = vshll.u32 %v1997, 16
      %v2182 = vrot.slane %v2180, 5
      %v2183 = vsel %vm221, %v2178, %v2182
      %v2184 = vshrl.u32 %v1997, 16
      %v2186 = vrot.slane %v2184, 4
      %v2187 = vor.u32 %v2186, %v2182
      %v2188 = vrot.slane %v2187, 4
      %v2190 = vshll.u32 %v1998, 16
      %v2192 = vrot.slane %v2190, 5
      %v2193 = vsel %vm221, %v2188, %v2192
      %v2195 = vshrl.u32 %v1999, 16
      %v2197 = vrot.slane %v2195, 4
      %v2198 = vshll.u32 %v1999, 16
      %v2200 = vrot.slane %v2198, 5
      %v2201 = vor.u32 %v2197, %v2200
      %v2202 = vrot.slane %v2201, 4
      %v2204 = vshll.u32 %v2000, 16
      %v2206 = vrot.slane %v2204, 5
      %v2207 = vsel %vm221, %v2202, %v2206
      %v2208 = vshrl.u32 %v2000, 16
      %v2210 = vrot.slane %v2208, 4
      %v2211 = vor.u32 %v2210, %v2206
      %v2212 = vrot.slane %v2211, 4
      %v2214 = vshll.u32 %v2001, 16
      %v2216 = vrot.slane %v2214, 5
      %v2217 = vsel %vm221, %v2212, %v2216
      %v2219 = vshrl.u32 %v2002, 16
      %v2221 = vrot.slane %v2219, 4
      %v2222 = vshll.u32 %v2002, 16
      %v2224 = vrot.slane %v2222, 5
      %v2225 = vor.u32 %v2221, %v2224
      %v2226 = vrot.slane %v2225, 4
      %v2228 = vshll.u32 %v2003, 16
      %v2230 = vrot.slane %v2228, 5
      %v2231 = vsel %vm221, %v2226, %v2230
      %v2232 = vshrl.u32 %v2003, 16
      %v2234 = vrot.slane %v2232, 4
      %v2235 = vor.u32 %v2234, %v2230
      %v2236 = vrot.slane %v2235, 4
      %v2238 = vshll.u32 %v2004, 16
      %v2240 = vrot.slane %v2238, 5
      %v2241 = vsel %vm221, %v2236, %v2240
      %v2243 = vshrl.u32 %v2005, 16
      %v2245 = vrot.slane %v2243, 4
      %v2246 = vshll.u32 %v2005, 16
      %v2248 = vrot.slane %v2246, 5
      %v2249 = vor.u32 %v2245, %v2248
      %v2250 = vrot.slane %v2249, 4
      %v2252 = vshll.u32 %v2006, 16
      %v2254 = vrot.slane %v2252, 5
      %v2255 = vsel %vm221, %v2250, %v2254
      %v2256 = vshrl.u32 %v2006, 16
      %v2258 = vrot.slane %v2256, 4
      %v2259 = vor.u32 %v2258, %v2254
      %v2260 = vrot.slane %v2259, 4
      %v2262 = vshll.u32 %v2007, 16
      %v2264 = vrot.slane %v2262, 5
      %v2265 = vsel %vm221, %v2260, %v2264
      %v2267 = vshrl.u32 %v2008, 16
      %v2269 = vrot.slane %v2267, 4
      %v2270 = vshll.u32 %v2008, 16
      %v2272 = vrot.slane %v2270, 5
      %v2273 = vor.u32 %v2269, %v2272
      %v2274 = vrot.slane %v2273, 4
      %v2276 = vshll.u32 %v2009, 16
      %v2278 = vrot.slane %v2276, 5
      %v2279 = vsel %vm221, %v2274, %v2278
      %v2280 = vshrl.u32 %v2009, 16
      %v2282 = vrot.slane %v2280, 4
      %v2283 = vor.u32 %v2282, %v2278
      %v2284 = vrot.slane %v2283, 4
      %v2286 = vshll.u32 %v2010, 16
      %v2288 = vrot.slane %v2286, 5
      %v2289 = vsel %vm221, %v2284, %v2288
      %v2291 = vshrl.u32 %v2011, 16
      %v2293 = vrot.slane %v2291, 4
      %v2294 = vshll.u32 %v2011, 16
      %v2296 = vrot.slane %v2294, 5
      %v2297 = vor.u32 %v2293, %v2296
      %v2298 = vrot.slane %v2297, 4
      %v2300 = vshll.u32 %v2012, 16
      %v2302 = vrot.slane %v2300, 5
      %v2303 = vsel %vm221, %v2298, %v2302
      %v2304 = vshrl.u32 %v2012, 16
      %v2306 = vrot.slane %v2304, 4
      %v2307 = vor.u32 %v2306, %v2302
      %v2308 = vrot.slane %v2307, 4
      %v2310 = vshll.u32 %v2013, 16
      %v2312 = vrot.slane %v2310, 5
      %v2313 = vsel %vm221, %v2308, %v2312
      %v2315 = vshrl.u32 %v2014, 16
      %v2317 = vrot.slane %v2315, 4
      %v2318 = vshll.u32 %v2014, 16
      %v2320 = vrot.slane %v2318, 5
      %v2321 = vor.u32 %v2317, %v2320
      %v2322 = vrot.slane %v2321, 4
      %v2324 = vshll.u32 %v2015, 16
      %v2326 = vrot.slane %v2324, 5
      %v2327 = vsel %vm221, %v2322, %v2326
      %v2328 = vshrl.u32 %v2015, 16
      %v2330 = vrot.slane %v2328, 4
      %v2331 = vor.u32 %v2330, %v2326
      %v2332 = vrot.slane %v2331, 4
      %v2334 = vshll.u32 %v2016, 16
      %v2336 = vrot.slane %v2334, 5
      %v2337 = vsel %vm221, %v2332, %v2336
      %v2339 = vshrl.u32 %v2017, 16
      %v2341 = vrot.slane %v2339, 4
      %v2342 = vshll.u32 %v2017, 16
      %v2344 = vrot.slane %v2342, 5
      %v2345 = vor.u32 %v2341, %v2344
      %v2346 = vrot.slane %v2345, 4
      %v2348 = vshll.u32 %v2018, 16
      %v2350 = vrot.slane %v2348, 5
      %v2351 = vsel %vm221, %v2346, %v2350
      %v2352 = vshrl.u32 %v2018, 16
      %v2354 = vrot.slane %v2352, 4
      %v2355 = vor.u32 %v2354, %v2350
      %v2356 = vrot.slane %v2355, 4
      %v2358 = vshll.u32 %v2019, 16
      %v2360 = vrot.slane %v2358, 5
      %v2361 = vsel %vm221, %v2356, %v2360
      %v2363 = vshrl.u32 %v2020, 16
      %v2365 = vrot.slane %v2363, 4
      %v2366 = vshll.u32 %v2020, 16
      %v2368 = vrot.slane %v2366, 5
      %v2369 = vor.u32 %v2365, %v2368
      %v2370 = vrot.slane %v2369, 4
      %v2372 = vshll.u32 %v2021, 16
      %v2374 = vrot.slane %v2372, 5
      %v2375 = vsel %vm221, %v2370, %v2374
      %v2376 = vshrl.u32 %v2021, 16
      %v2378 = vrot.slane %v2376, 4
      %v2379 = vor.u32 %v2378, %v2374
      %v2380 = vrot.slane %v2379, 4
      %v2382 = vshll.u32 %v2022, 16
      %v2384 = vrot.slane %v2382, 5
      %v2385 = vsel %vm221, %v2380, %v2384
      %v2387 = vshrl.u32 %v2023, 16
      %v2389 = vrot.slane %v2387, 4
      %v2390 = vshll.u32 %v2023, 16
      %v2392 = vrot.slane %v2390, 5
      %v2393 = vor.u32 %v2389, %v2392
      %v2394 = vrot.slane %v2393, 4
      %v2396 = vshll.u32 %v2024, 16
      %v2398 = vrot.slane %v2396, 5
      %v2399 = vsel %vm221, %v2394, %v2398
      %v2400 = vshrl.u32 %v2024, 16
      %v2402 = vrot.slane %v2400, 4
      %v2403 = vor.u32 %v2402, %v2398
      %v2404 = vrot.slane %v2403, 4
      %v2406 = vshll.u32 %v2025, 16
      %v2408 = vrot.slane %v2406, 5
      %v2409 = vsel %vm221, %v2404, %v2408
      %s2410 = scalar_lea.vmem %s1, 8
      %v2411 = vld [vmem:[%s2410] sm:$0x3]
      %v2412 = vunpack.c.l.b16 %v2039
      %v2413 = vunpack.c.l.b16 %v2049
      %v2414 = vunpack.c.l.b16 %v2063
      %v2415 = vunpack.c.l.b16 %v2073
      %v2416 = vunpack.c.l.b16 %v2087
      %v2417 = vunpack.c.l.b16 %v2097
      %v2418 = vunpack.c.l.b16 %v2111
      %v2419 = vunpack.c.l.b16 %v2121
      %v2420 = vunpack.c.l.b16 %v2135
      %v2421 = vunpack.c.l.b16 %v2145
      %v2422 = vunpack.c.l.b16 %v2159
      %v2423 = vunpack.c.l.b16 %v2169
      %v2424 = vunpack.c.l.b16 %v2183
      %v2425 = vunpack.c.l.b16 %v2193
      %v2426 = vunpack.c.l.b16 %v2207
      %v2427 = vunpack.c.l.b16 %v2217
      %v2428 = vunpack.c.l.b16 %v2231
      %v2429 = vunpack.c.l.b16 %v2241
      %v2430 = vunpack.c.l.b16 %v2255
      %v2431 = vunpack.c.l.b16 %v2265
      %v2432 = vunpack.c.l.b16 %v2279
      %v2433 = vunpack.c.l.b16 %v2289
      %v2434 = vunpack.c.l.b16 %v2303
      %v2435 = vunpack.c.l.b16 %v2313
      %v2436 = vunpack.c.l.b16 %v2327
      %v2437 = vunpack.c.l.b16 %v2337
      %v2438 = vunpack.c.l.b16 %v2351
      %v2439 = vunpack.c.l.b16 %v2361
      %v2440 = vunpack.c.l.b16 %v2375
      %v2441 = vunpack.c.l.b16 %v2385
      %v2442 = vunpack.c.l.b16 %v2399
      %v2443 = vunpack.c.l.b16 %v2409
      %v2444 = vpack.c.b16 %v2413, %v2412
      %v2445 = vpack.c.b16 %v2415, %v2414
      %v2446 = vpack.c.b16 %v2417, %v2416
      %v2447 = vpack.c.b16 %v2419, %v2418
      %v2448 = vpack.c.b16 %v2421, %v2420
      %v2449 = vpack.c.b16 %v2423, %v2422
      %v2450 = vpack.c.b16 %v2425, %v2424
      %v2451 = vpack.c.b16 %v2427, %v2426
      %v2452 = vpack.c.b16 %v2429, %v2428
      %v2453 = vpack.c.b16 %v2431, %v2430
      %v2454 = vpack.c.b16 %v2433, %v2432
      %v2455 = vpack.c.b16 %v2435, %v2434
      %v2456 = vpack.c.b16 %v2437, %v2436
      %v2457 = vpack.c.b16 %v2439, %v2438
      %v2458 = vpack.c.b16 %v2441, %v2440
      %v2459 = vpack.c.b16 %v2443, %v2442
      %v2461 = vsel %vm656, %v2444, 0
      %v2464 = vsel %vm656, %v2445, 0
      %v2467 = vsel %vm656, %v2446, 0
      %v2470 = vsel %vm656, %v2447, 0
      %v2473 = vsel %vm656, %v2448, 0
      %v2476 = vsel %vm656, %v2449, 0
      %v2479 = vsel %vm656, %v2450, 0
      %v2482 = vsel %vm656, %v2451, 0
      %v2485 = vsel %vm656, %v2452, 0
      %v2488 = vsel %vm656, %v2453, 0
      %v2491 = vsel %vm656, %v2454, 0
      %v2494 = vsel %vm656, %v2455, 0
      %v2497 = vsel %vm656, %v2456, 0
      %v2500 = vsel %vm656, %v2457, 0
      %v2503 = vsel %vm656, %v2458, 0
      %v2506 = vsel %vm656, %v2459, 0
      %v2509 = vsel %vm705, %v2411, 0
      %2511 = vmatprep.subr.bf16.mxu0 0
      %2512 = vmatpush1.bf16.msra.mxu0 %v2509
      %2513 = vmatprep.subr.bf16.mxu0 0
      %2514 = vmatpush1.bf16.msra.mxu0 0
      %2515 = vmatprep.subr.bf16.mxu0 0
      %2516 = vmatpush1.bf16.msra.mxu0 0
      %2517 = vmatprep.subr.bf16.mxu0 0
      %2518 = vmatpush1.bf16.msra.mxu0 0
      %2519 = vmatprep.subr.bf16.mxu0 0
      %2520 = vmatpush1.bf16.msra.mxu0 0
      %2521 = vmatprep.subr.bf16.mxu0 0
      %2522 = vmatpush1.bf16.msra.mxu0 0
      %2523 = vmatprep.subr.bf16.mxu0 0
      %2524 = vmatpush1.bf16.msra.mxu0 0
      %2525 = vmatprep.subr.bf16.mxu0 0
      %2526 = vmatpush1.bf16.msra.mxu0 0
      %2527 = vmatprep.subr.bf16.mxu0 0
      %2528 = vmatpush1.bf16.msra.mxu0 0
      %2529 = vmatprep.subr.bf16.mxu0 0
      %2530 = vmatpush1.bf16.msra.mxu0 0
      %2531 = vmatprep.subr.bf16.mxu0 0
      %2532 = vmatpush1.bf16.msra.mxu0 0
      %2533 = vmatprep.subr.bf16.mxu0 0
      %2534 = vmatpush1.bf16.msra.mxu0 0
      %2535 = vmatprep.subr.bf16.mxu0 0
      %2536 = vmatpush1.bf16.msra.mxu0 0
      %2537 = vmatprep.subr.bf16.mxu0 0
      %2538 = vmatpush1.bf16.msra.mxu0 0
      %2539 = vmatprep.subr.bf16.mxu0 0
      %2540 = vmatpush1.bf16.msra.mxu0 0
      %2541 = vmatprep.subr.bf16.mxu0 0
      %2542 = vmatpush1.bf16.msra.mxu0 0
      %2543 = vmatprep.mubr.bf16.mxu0 0
      %2544 = vmatmul.mubr.bf16.gmra.mrb[0].mxu0 %v2461
      %v2545 = vpop.f32.mrb[0].mxu0
      %v2546 = vadd.f32 0.0, %v2545
      %v2547 = vpop.f32.mrb[0].mxu0
      %v2548 = vpop.f32.mrb[0].mxu0
      %v2549 = vadd.f32 0.0, %v2548
      %v2550 = vpop.f32.mrb[0].mxu0
      %2551 = vmatprep.mubr.bf16.mxu0 0
      %2552 = vmatmul.mubr.bf16.gmra.mrb[0].mxu0 %v2464
      %v2553 = vpop.f32.mrb[0].mxu0
      %v2554 = vadd.f32 0.0, %v2553
      %v2555 = vpop.f32.mrb[0].mxu0
      %v2556 = vpop.f32.mrb[0].mxu0
      %v2557 = vadd.f32 0.0, %v2556
      %v2558 = vpop.f32.mrb[0].mxu0
      %2559 = vmatprep.mubr.bf16.mxu0 0
      %2560 = vmatmul.mubr.bf16.gmra.mrb[0].mxu0 %v2467
      %v2561 = vpop.f32.mrb[0].mxu0
      %v2562 = vadd.f32 0.0, %v2561
      %v2563 = vpop.f32.mrb[0].mxu0
      %v2564 = vpop.f32.mrb[0].mxu0
      %v2565 = vadd.f32 0.0, %v2564
      %v2566 = vpop.f32.mrb[0].mxu0
      %2567 = vmatprep.mubr.bf16.mxu0 0
      %2568 = vmatmul.mubr.bf16.gmra.mrb[0].mxu0 %v2470
      %v2569 = vpop.f32.mrb[0].mxu0
      %v2570 = vadd.f32 0.0, %v2569
      %v2571 = vpop.f32.mrb[0].mxu0
      %v2572 = vpop.f32.mrb[0].mxu0
      %v2573 = vadd.f32 0.0, %v2572
      %v2574 = vpop.f32.mrb[0].mxu0
      %2575 = vmatprep.mubr.bf16.mxu0 0
      %2576 = vmatmul.mubr.bf16.gmra.mrb[0].mxu0 %v2473
      %v2577 = vpop.f32.mrb[0].mxu0
      %v2578 = vadd.f32 0.0, %v2577
      %v2579 = vpop.f32.mrb[0].mxu0
      %v2580 = vpop.f32.mrb[0].mxu0
      %v2581 = vadd.f32 0.0, %v2580
      %v2582 = vpop.f32.mrb[0].mxu0
      %2583 = vmatprep.mubr.bf16.mxu0 0
      %2584 = vmatmul.mubr.bf16.gmra.mrb[0].mxu0 %v2476
      %v2585 = vpop.f32.mrb[0].mxu0
      %v2586 = vadd.f32 0.0, %v2585
      %v2587 = vpop.f32.mrb[0].mxu0
      %v2588 = vpop.f32.mrb[0].mxu0
      %v2589 = vadd.f32 0.0, %v2588
      %v2590 = vpop.f32.mrb[0].mxu0
      %2591 = vmatprep.mubr.bf16.mxu0 0
      %2592 = vmatmul.mubr.bf16.gmra.mrb[0].mxu0 %v2479
      %v2593 = vpop.f32.mrb[0].mxu0
      %v2594 = vadd.f32 0.0, %v2593
      %v2595 = vpop.f32.mrb[0].mxu0
      %v2596 = vpop.f32.mrb[0].mxu0
      %v2597 = vadd.f32 0.0, %v2596
      %v2598 = vpop.f32.mrb[0].mxu0
      %2599 = vmatprep.mubr.bf16.mxu0 0
      %2600 = vmatmul.mubr.bf16.gmra.mrb[0].mxu0 %v2482
      %v2601 = vpop.f32.mrb[0].mxu0
      %v2602 = vadd.f32 0.0, %v2601
      %v2603 = vpop.f32.mrb[0].mxu0
      %v2604 = vpop.f32.mrb[0].mxu0
      %v2605 = vadd.f32 0.0, %v2604
      %v2606 = vpop.f32.mrb[0].mxu0
      %2607 = vmatprep.mubr.bf16.mxu0 0
      %2608 = vmatmul.mubr.bf16.gmra.mrb[0].mxu0 %v2485
      %v2609 = vpop.f32.mrb[0].mxu0
      %v2610 = vadd.f32 0.0, %v2609
      %v2611 = vpop.f32.mrb[0].mxu0
      %v2612 = vpop.f32.mrb[0].mxu0
      %v2613 = vadd.f32 0.0, %v2612
      %v2614 = vpop.f32.mrb[0].mxu0
      %2615 = vmatprep.mubr.bf16.mxu0 0
      %2616 = vmatmul.mubr.bf16.gmra.mrb[0].mxu0 %v2488
      %v2617 = vpop.f32.mrb[0].mxu0
      %v2618 = vadd.f32 0.0, %v2617
      %v2619 = vpop.f32.mrb[0].mxu0
      %v2620 = vpop.f32.mrb[0].mxu0
      %v2621 = vadd.f32 0.0, %v2620
      %v2622 = vpop.f32.mrb[0].mxu0
      %2623 = vmatprep.mubr.bf16.mxu0 0
      %2624 = vmatmul.mubr.bf16.gmra.mrb[0].mxu0 %v2491
      %v2625 = vpop.f32.mrb[0].mxu0
      %v2626 = vadd.f32 0.0, %v2625
      %v2627 = vpop.f32.mrb[0].mxu0
      %v2628 = vpop.f32.mrb[0].mxu0
      %v2629 = vadd.f32 0.0, %v2628
      %v2630 = vpop.f32.mrb[0].mxu0
      %2631 = vmatprep.mubr.bf16.mxu0 0
      %2632 = vmatmul.mubr.bf16.gmra.mrb[0].mxu0 %v2494
      %v2633 = vpop.f32.mrb[0].mxu0
      %v2634 = vadd.f32 0.0, %v2633
      %v2635 = vpop.f32.mrb[0].mxu0
      %v2636 = vpop.f32.mrb[0].mxu0
      %v2637 = vadd.f32 0.0, %v2636
      %v2638 = vpop.f32.mrb[0].mxu0
      %2639 = vmatprep.mubr.bf16.mxu0 0
      %2640 = vmatmul.mubr.bf16.gmra.mrb[0].mxu0 %v2497
      %v2641 = vpop.f32.mrb[0].mxu0
      %v2642 = vadd.f32 0.0, %v2641
      %v2643 = vpop.f32.mrb[0].mxu0
      %v2644 = vpop.f32.mrb[0].mxu0
      %v2645 = vadd.f32 0.0, %v2644
      %v2646 = vpop.f32.mrb[0].mxu0
      %2647 = vmatprep.mubr.bf16.mxu0 0
      %2648 = vmatmul.mubr.bf16.gmra.mrb[0].mxu0 %v2500
      %v2649 = vpop.f32.mrb[0].mxu0
      %v2650 = vadd.f32 0.0, %v2649
      %v2651 = vpop.f32.mrb[0].mxu0
      %v2652 = vpop.f32.mrb[0].mxu0
      %v2653 = vadd.f32 0.0, %v2652
      %v2654 = vpop.f32.mrb[0].mxu0
      %2655 = vmatprep.mubr.bf16.mxu0 0
      %2656 = vmatmul.mubr.bf16.gmra.mrb[0].mxu0 %v2503
      %v2657 = vpop.f32.mrb[0].mxu0
      %v2658 = vadd.f32 0.0, %v2657
      %v2659 = vpop.f32.mrb[0].mxu0
      %v2660 = vpop.f32.mrb[0].mxu0
      %v2661 = vadd.f32 0.0, %v2660
      %v2662 = vpop.f32.mrb[0].mxu0
      %2663 = vmatprep.mubr.bf16.mxu0 0
      %2664 = vmatmul.mubr.bf16.gmra.mrb[0].mxu0 %v2506
      %v2665 = vpop.f32.mrb[0].mxu0
      %v2666 = vadd.f32 0.0, %v2665
      %v2667 = vpop.f32.mrb[0].mxu0
      %v2668 = vpop.f32.mrb[0].mxu0
      %v2669 = vadd.f32 0.0, %v2668
      %v2670 = vpop.f32.mrb[0].mxu0
      %2671 = vdwg.mxu0
      %v2672 = vadd.f32 %v1946, %v2546
      %v2673 = vadd.f32 %v1947, %v2549
      %v2674 = vadd.f32 %v1948, %v2554
      %v2675 = vadd.f32 %v1949, %v2557
      %v2676 = vadd.f32 %v1950, %v2562
      %v2677 = vadd.f32 %v1951, %v2565
      %v2678 = vadd.f32 %v1952, %v2570
      %v2679 = vadd.f32 %v1953, %v2573
      %v2680 = vadd.f32 %v1954, %v2578
      %v2681 = vadd.f32 %v1955, %v2581
      %v2682 = vadd.f32 %v1956, %v2586
      %v2683 = vadd.f32 %v1957, %v2589
      %v2684 = vadd.f32 %v1958, %v2594
      %v2685 = vadd.f32 %v1959, %v2597
      %v2686 = vadd.f32 %v1960, %v2602
      %v2687 = vadd.f32 %v1961, %v2605
      %v2688 = vadd.f32 %v1962, %v2610
      %v2689 = vadd.f32 %v1963, %v2613
      %v2690 = vadd.f32 %v1964, %v2618
      %v2691 = vadd.f32 %v1965, %v2621
      %v2692 = vadd.f32 %v1966, %v2626
      %v2693 = vadd.f32 %v1967, %v2629
      %v2694 = vadd.f32 %v1968, %v2634
      %v2695 = vadd.f32 %v1969, %v2637
      %v2696 = vadd.f32 %v1970, %v2642
      %v2697 = vadd.f32 %v1971, %v2645
      %v2698 = vadd.f32 %v1972, %v2650
      %v2699 = vadd.f32 %v1973, %v2653
      %v2700 = vadd.f32 %v1974, %v2658
      %v2701 = vadd.f32 %v1975, %v2661
      %v2702 = vadd.f32 %v1976, %v2666
      %v2703 = vadd.f32 %v1977, %v2669
      %v2704 = vld [vmem:[%s1619] sm:$0xe]
      %v2705 = vld [vmem:[%s1619 + $0xc] sm:$0xe]
      %v2706 = vld [vmem:[%s1619 + $0x18] sm:$0xe]
      %v2707 = vld [vmem:[%s1619 + $0x24] sm:$0xe]
      %v2708 = vld [vmem:[%s1619 + $0x30] sm:$0xe]
      %v2709 = vld [vmem:[%s1619 + $0x3c] sm:$0xe]
      %v2710 = vld [vmem:[%s1619 + $0x48] sm:$0xe]
      %v2711 = vld [vmem:[%s1619 + $0x54] sm:$0xe]
      %v2712 = vld [vmem:[%s1619 + $0x60] sm:$0xe]
      %v2713 = vld [vmem:[%s1619 + $0x6c] sm:$0xe]
      %v2714 = vld [vmem:[%s1619 + $0x78] sm:$0xe]
      %v2715 = vld [vmem:[%s1619 + $0x84] sm:$0xe]
      %v2716 = vld [vmem:[%s1619 + $0x90] sm:$0xe]
      %v2717 = vld [vmem:[%s1619 + $0x9c] sm:$0xe]
      %v2718 = vld [vmem:[%s1619 + $0xa8] sm:$0xe]
      %v2719 = vld [vmem:[%s1619 + $0xb4] sm:$0xe]
      %v2768 = vrot.slane %v2704, 5
      %v2769 = vrot.slane %v2768, 4
      %v2770 = vrot.slane %v1979, 5
      %v2771 = vsel %vm1212, %v2769, %v2770
      %v2772 = vrot.slane %v2770, 4
      %v2773 = vrot.slane %v1980, 5
      %v2774 = vsel %vm1212, %v2772, %v2773
      %v2775 = vrot.slane %v2705, 5
      %v2776 = vrot.slane %v2775, 4
      %v2777 = vrot.slane %v1982, 5
      %v2778 = vsel %vm1212, %v2776, %v2777
      %v2779 = vrot.slane %v2777, 4
      %v2780 = vrot.slane %v1983, 5
      %v2781 = vsel %vm1212, %v2779, %v2780
      %v2782 = vrot.slane %v2706, 5
      %v2783 = vrot.slane %v2782, 4
      %v2784 = vrot.slane %v1985, 5
      %v2785 = vsel %vm1212, %v2783, %v2784
      %v2786 = vrot.slane %v2784, 4
      %v2787 = vrot.slane %v1986, 5
      %v2788 = vsel %vm1212, %v2786, %v2787
      %v2789 = vrot.slane %v2707, 5
      %v2790 = vrot.slane %v2789, 4
      %v2791 = vrot.slane %v1988, 5
      %v2792 = vsel %vm1212, %v2790, %v2791
      %v2793 = vrot.slane %v2791, 4
      %v2794 = vrot.slane %v1989, 5
      %v2795 = vsel %vm1212, %v2793, %v2794
      %v2796 = vrot.slane %v2708, 5
      %v2797 = vrot.slane %v2796, 4
      %v2798 = vrot.slane %v1991, 5
      %v2799 = vsel %vm1212, %v2797, %v2798
      %v2800 = vrot.slane %v2798, 4
      %v2801 = vrot.slane %v1992, 5
      %v2802 = vsel %vm1212, %v2800, %v2801
      %v2803 = vrot.slane %v2709, 5
      %v2804 = vrot.slane %v2803, 4
      %v2805 = vrot.slane %v1994, 5
      %v2806 = vsel %vm1212, %v2804, %v2805
      %v2807 = vrot.slane %v2805, 4
      %v2808 = vrot.slane %v1995, 5
      %v2809 = vsel %vm1212, %v2807, %v2808
      %v2810 = vrot.slane %v2710, 5
      %v2811 = vrot.slane %v2810, 4
      %v2812 = vrot.slane %v1997, 5
      %v2813 = vsel %vm1212, %v2811, %v2812
      %v2814 = vrot.slane %v2812, 4
      %v2815 = vrot.slane %v1998, 5
      %v2816 = vsel %vm1212, %v2814, %v2815
      %v2817 = vrot.slane %v2711, 5
      %v2818 = vrot.slane %v2817, 4
      %v2819 = vrot.slane %v2000, 5
      %v2820 = vsel %vm1212, %v2818, %v2819
      %v2821 = vrot.slane %v2819, 4
      %v2822 = vrot.slane %v2001, 5
      %v2823 = vsel %vm1212, %v2821, %v2822
      %v2824 = vrot.slane %v2712, 5
      %v2825 = vrot.slane %v2824, 4
      %v2826 = vrot.slane %v2003, 5
      %v2827 = vsel %vm1212, %v2825, %v2826
      %v2828 = vrot.slane %v2826, 4
      %v2829 = vrot.slane %v2004, 5
      %v2830 = vsel %vm1212, %v2828, %v2829
      %v2831 = vrot.slane %v2713, 5
      %v2832 = vrot.slane %v2831, 4
      %v2833 = vrot.slane %v2006, 5
      %v2834 = vsel %vm1212, %v2832, %v2833
      %v2835 = vrot.slane %v2833, 4
      %v2836 = vrot.slane %v2007, 5
      %v2837 = vsel %vm1212, %v2835, %v2836
      %v2838 = vrot.slane %v2714, 5
      %v2839 = vrot.slane %v2838, 4
      %v2840 = vrot.slane %v2009, 5
      %v2841 = vsel %vm1212, %v2839, %v2840
      %v2842 = vrot.slane %v2840, 4
      %v2843 = vrot.slane %v2010, 5
      %v2844 = vsel %vm1212, %v2842, %v2843
      %v2845 = vrot.slane %v2715, 5
      %v2846 = vrot.slane %v2845, 4
      %v2847 = vrot.slane %v2012, 5
      %v2848 = vsel %vm1212, %v2846, %v2847
      %v2849 = vrot.slane %v2847, 4
      %v2850 = vrot.slane %v2013, 5
      %v2851 = vsel %vm1212, %v2849, %v2850
      %v2852 = vrot.slane %v2716, 5
      %v2853 = vrot.slane %v2852, 4
      %v2854 = vrot.slane %v2015, 5
      %v2855 = vsel %vm1212, %v2853, %v2854
      %v2856 = vrot.slane %v2854, 4
      %v2857 = vrot.slane %v2016, 5
      %v2858 = vsel %vm1212, %v2856, %v2857
      %v2859 = vrot.slane %v2717, 5
      %v2860 = vrot.slane %v2859, 4
      %v2861 = vrot.slane %v2018, 5
      %v2862 = vsel %vm1212, %v2860, %v2861
      %v2863 = vrot.slane %v2861, 4
      %v2864 = vrot.slane %v2019, 5
      %v2865 = vsel %vm1212, %v2863, %v2864
      %v2866 = vrot.slane %v2718, 5
      %v2867 = vrot.slane %v2866, 4
      %v2868 = vrot.slane %v2021, 5
      %v2869 = vsel %vm1212, %v2867, %v2868
      %v2870 = vrot.slane %v2868, 4
      %v2871 = vrot.slane %v2022, 5
      %v2872 = vsel %vm1212, %v2870, %v2871
      %v2873 = vrot.slane %v2719, 5
      %v2874 = vrot.slane %v2873, 4
      %v2875 = vrot.slane %v2024, 5
      %v2876 = vsel %vm1212, %v2874, %v2875
      %v2877 = vrot.slane %v2875, 4
      %v2878 = vrot.slane %v2025, 5
      %v2879 = vsel %vm1212, %v2877, %v2878
      %s2880 = scalar_lea.vmem %s1, 10
      %v2881 = vld [vmem:[%s2880] sm:$0x3]
      %v2882 = vunpack.c.l.b16 %v2771
      %v2883 = vunpack.c.l.b16 %v2774
      %v2884 = vunpack.c.l.b16 %v2778
      %v2885 = vunpack.c.l.b16 %v2781
      %v2886 = vunpack.c.l.b16 %v2785
      %v2887 = vunpack.c.l.b16 %v2788
      %v2888 = vunpack.c.l.b16 %v2792
      %v2889 = vunpack.c.l.b16 %v2795
      %v2890 = vunpack.c.l.b16 %v2799
      %v2891 = vunpack.c.l.b16 %v2802
      %v2892 = vunpack.c.l.b16 %v2806
      %v2893 = vunpack.c.l.b16 %v2809
      %v2894 = vunpack.c.l.b16 %v2813
      %v2895 = vunpack.c.l.b16 %v2816
      %v2896 = vunpack.c.l.b16 %v2820
      %v2897 = vunpack.c.l.b16 %v2823
      %v2898 = vunpack.c.l.b16 %v2827
      %v2899 = vunpack.c.l.b16 %v2830
      %v2900 = vunpack.c.l.b16 %v2834
      %v2901 = vunpack.c.l.b16 %v2837
      %v2902 = vunpack.c.l.b16 %v2841
      %v2903 = vunpack.c.l.b16 %v2844
      %v2904 = vunpack.c.l.b16 %v2848
      %v2905 = vunpack.c.l.b16 %v2851
      %v2906 = vunpack.c.l.b16 %v2855
      %v2907 = vunpack.c.l.b16 %v2858
      %v2908 = vunpack.c.l.b16 %v2862
      %v2909 = vunpack.c.l.b16 %v2865
      %v2910 = vunpack.c.l.b16 %v2869
      %v2911 = vunpack.c.l.b16 %v2872
      %v2912 = vunpack.c.l.b16 %v2876
      %v2913 = vunpack.c.l.b16 %v2879
      %v2914 = vpack.c.b16 %v2883, %v2882
      %v2915 = vpack.c.b16 %v2885, %v2884
      %v2916 = vpack.c.b16 %v2887, %v2886
      %v2917 = vpack.c.b16 %v2889, %v2888
      %v2918 = vpack.c.b16 %v2891, %v2890
      %v2919 = vpack.c.b16 %v2893, %v2892
      %v2920 = vpack.c.b16 %v2895, %v2894
      %v2921 = vpack.c.b16 %v2897, %v2896
      %v2922 = vpack.c.b16 %v2899, %v2898
      %v2923 = vpack.c.b16 %v2901, %v2900
      %v2924 = vpack.c.b16 %v2903, %v2902
      %v2925 = vpack.c.b16 %v2905, %v2904
      %v2926 = vpack.c.b16 %v2907, %v2906
      %v2927 = vpack.c.b16 %v2909, %v2908
      %v2928 = vpack.c.b16 %v2911, %v2910
      %v2929 = vpack.c.b16 %v2913, %v2912
      %v2931 = vsel %vm656, %v2914, 0
      %v2934 = vsel %vm656, %v2915, 0
      %v2937 = vsel %vm656, %v2916, 0
      %v2940 = vsel %vm656, %v2917, 0
      %v2943 = vsel %vm656, %v2918, 0
      %v2946 = vsel %vm656, %v2919, 0
      %v2949 = vsel %vm656, %v2920, 0
      %v2952 = vsel %vm656, %v2921, 0
      %v2955 = vsel %vm656, %v2922, 0
      %v2958 = vsel %vm656, %v2923, 0
      %v2961 = vsel %vm656, %v2924, 0
      %v2964 = vsel %vm656, %v2925, 0
      %v2967 = vsel %vm656, %v2926, 0
      %v2970 = vsel %vm656, %v2927, 0
      %v2973 = vsel %vm656, %v2928, 0
      %v2976 = vsel %vm656, %v2929, 0
      %v2979 = vsel %vm705, %v2881, 0
      %2981 = vmatprep.subr.bf16.mxu0 0
      %2982 = vmatpush1.bf16.msra.mxu0 %v2979
      %2983 = vmatprep.subr.bf16.mxu0 0
      %2984 = vmatpush1.bf16.msra.mxu0 0
      %2985 = vmatprep.subr.bf16.mxu0 0
      %2986 = vmatpush1.bf16.msra.mxu0 0
      %2987 = vmatprep.subr.bf16.mxu0 0
      %2988 = vmatpush1.bf16.msra.mxu0 0
      %2989 = vmatprep.subr.bf16.mxu0 0
      %2990 = vmatpush1.bf16.msra.mxu0 0
      %2991 = vmatprep.subr.bf16.mxu0 0
      %2992 = vmatpush1.bf16.msra.mxu0 0
      %2993 = vmatprep.subr.bf16.mxu0 0
      %2994 = vmatpush1.bf16.msra.mxu0 0
      %2995 = vmatprep.subr.bf16.mxu0 0
      %2996 = vmatpush1.bf16.msra.mxu0 0
      %2997 = vmatprep.subr.bf16.mxu0 0
      %2998 = vmatpush1.bf16.msra.mxu0 0
      %2999 = vmatprep.subr.bf16.mxu0 0
      %3000 = vmatpush1.bf16.msra.mxu0 0
      %3001 = vmatprep.subr.bf16.mxu0 0
      %3002 = vmatpush1.bf16.msra.mxu0 0
      %3003 = vmatprep.subr.bf16.mxu0 0
      %3004 = vmatpush1.bf16.msra.mxu0 0
      %3005 = vmatprep.subr.bf16.mxu0 0
      %3006 = vmatpush1.bf16.msra.mxu0 0
      %3007 = vmatprep.subr.bf16.mxu0 0
      %3008 = vmatpush1.bf16.msra.mxu0 0
      %3009 = vmatprep.subr.bf16.mxu0 0
      %3010 = vmatpush1.bf16.msra.mxu0 0
      %3011 = vmatprep.subr.bf16.mxu0 0
      %3012 = vmatpush1.bf16.msra.mxu0 0
      %3013 = vmatprep.mubr.bf16.mxu0 0
      %3014 = vmatmul.mubr.bf16.gmra.mrb[0].mxu0 %v2931
      %v3015 = vpop.f32.mrb[0].mxu0
      %v3016 = vadd.f32 0.0, %v3015
      %v3017 = vpop.f32.mrb[0].mxu0
      %v3018 = vpop.f32.mrb[0].mxu0
      %v3019 = vadd.f32 0.0, %v3018
      %v3020 = vpop.f32.mrb[0].mxu0
      %3021 = vmatprep.mubr.bf16.mxu0 0
      %3022 = vmatmul.mubr.bf16.gmra.mrb[0].mxu0 %v2934
      %v3023 = vpop.f32.mrb[0].mxu0
      %v3024 = vadd.f32 0.0, %v3023
      %v3025 = vpop.f32.mrb[0].mxu0
      %v3026 = vpop.f32.mrb[0].mxu0
      %v3027 = vadd.f32 0.0, %v3026
      %v3028 = vpop.f32.mrb[0].mxu0
      %3029 = vmatprep.mubr.bf16.mxu0 0
      %3030 = vmatmul.mubr.bf16.gmra.mrb[0].mxu0 %v2937
      %v3031 = vpop.f32.mrb[0].mxu0
      %v3032 = vadd.f32 0.0, %v3031
      %v3033 = vpop.f32.mrb[0].mxu0
      %v3034 = vpop.f32.mrb[0].mxu0
      %v3035 = vadd.f32 0.0, %v3034
      %v3036 = vpop.f32.mrb[0].mxu0
      %3037 = vmatprep.mubr.bf16.mxu0 0
      %3038 = vmatmul.mubr.bf16.gmra.mrb[0].mxu0 %v2940
      %v3039 = vpop.f32.mrb[0].mxu0
      %v3040 = vadd.f32 0.0, %v3039
      %v3041 = vpop.f32.mrb[0].mxu0
      %v3042 = vpop.f32.mrb[0].mxu0
      %v3043 = vadd.f32 0.0, %v3042
      %v3044 = vpop.f32.mrb[0].mxu0
      %3045 = vmatprep.mubr.bf16.mxu0 0
      %3046 = vmatmul.mubr.bf16.gmra.mrb[0].mxu0 %v2943
      %v3047 = vpop.f32.mrb[0].mxu0
      %v3048 = vadd.f32 0.0, %v3047
      %v3049 = vpop.f32.mrb[0].mxu0
      %v3050 = vpop.f32.mrb[0].mxu0
      %v3051 = vadd.f32 0.0, %v3050
      %v3052 = vpop.f32.mrb[0].mxu0
      %3053 = vmatprep.mubr.bf16.mxu0 0
      %3054 = vmatmul.mubr.bf16.gmra.mrb[0].mxu0 %v2946
      %v3055 = vpop.f32.mrb[0].mxu0
      %v3056 = vadd.f32 0.0, %v3055
      %v3057 = vpop.f32.mrb[0].mxu0
      %v3058 = vpop.f32.mrb[0].mxu0
      %v3059 = vadd.f32 0.0, %v3058
      %v3060 = vpop.f32.mrb[0].mxu0
      %3061 = vmatprep.mubr.bf16.mxu0 0
      %3062 = vmatmul.mubr.bf16.gmra.mrb[0].mxu0 %v2949
      %v3063 = vpop.f32.mrb[0].mxu0
      %v3064 = vadd.f32 0.0, %v3063
      %v3065 = vpop.f32.mrb[0].mxu0
      %v3066 = vpop.f32.mrb[0].mxu0
      %v3067 = vadd.f32 0.0, %v3066
      %v3068 = vpop.f32.mrb[0].mxu0
      %3069 = vmatprep.mubr.bf16.mxu0 0
      %3070 = vmatmul.mubr.bf16.gmra.mrb[0].mxu0 %v2952
      %v3071 = vpop.f32.mrb[0].mxu0
      %v3072 = vadd.f32 0.0, %v3071
      %v3073 = vpop.f32.mrb[0].mxu0
      %v3074 = vpop.f32.mrb[0].mxu0
      %v3075 = vadd.f32 0.0, %v3074
      %v3076 = vpop.f32.mrb[0].mxu0
      %3077 = vmatprep.mubr.bf16.mxu0 0
      %3078 = vmatmul.mubr.bf16.gmra.mrb[0].mxu0 %v2955
      %v3079 = vpop.f32.mrb[0].mxu0
      %v3080 = vadd.f32 0.0, %v3079
      %v3081 = vpop.f32.mrb[0].mxu0
      %v3082 = vpop.f32.mrb[0].mxu0
      %v3083 = vadd.f32 0.0, %v3082
      %v3084 = vpop.f32.mrb[0].mxu0
      %3085 = vmatprep.mubr.bf16.mxu0 0
      %3086 = vmatmul.mubr.bf16.gmra.mrb[0].mxu0 %v2958
      %v3087 = vpop.f32.mrb[0].mxu0
      %v3088 = vadd.f32 0.0, %v3087
      %v3089 = vpop.f32.mrb[0].mxu0
      %v3090 = vpop.f32.mrb[0].mxu0
      %v3091 = vadd.f32 0.0, %v3090
      %v3092 = vpop.f32.mrb[0].mxu0
      %3093 = vmatprep.mubr.bf16.mxu0 0
      %3094 = vmatmul.mubr.bf16.gmra.mrb[0].mxu0 %v2961
      %v3095 = vpop.f32.mrb[0].mxu0
      %v3096 = vadd.f32 0.0, %v3095
      %v3097 = vpop.f32.mrb[0].mxu0
      %v3098 = vpop.f32.mrb[0].mxu0
      %v3099 = vadd.f32 0.0, %v3098
      %v3100 = vpop.f32.mrb[0].mxu0
      %3101 = vmatprep.mubr.bf16.mxu0 0
      %3102 = vmatmul.mubr.bf16.gmra.mrb[0].mxu0 %v2964
      %v3103 = vpop.f32.mrb[0].mxu0
      %v3104 = vadd.f32 0.0, %v3103
      %v3105 = vpop.f32.mrb[0].mxu0
      %v3106 = vpop.f32.mrb[0].mxu0
      %v3107 = vadd.f32 0.0, %v3106
      %v3108 = vpop.f32.mrb[0].mxu0
      %3109 = vmatprep.mubr.bf16.mxu0 0
      %3110 = vmatmul.mubr.bf16.gmra.mrb[0].mxu0 %v2967
      %v3111 = vpop.f32.mrb[0].mxu0
      %v3112 = vadd.f32 0.0, %v3111
      %v3113 = vpop.f32.mrb[0].mxu0
      %v3114 = vpop.f32.mrb[0].mxu0
      %v3115 = vadd.f32 0.0, %v3114
      %v3116 = vpop.f32.mrb[0].mxu0
      %3117 = vmatprep.mubr.bf16.mxu0 0
      %3118 = vmatmul.mubr.bf16.gmra.mrb[0].mxu0 %v2970
      %v3119 = vpop.f32.mrb[0].mxu0
      %v3120 = vadd.f32 0.0, %v3119
      %v3121 = vpop.f32.mrb[0].mxu0
      %v3122 = vpop.f32.mrb[0].mxu0
      %v3123 = vadd.f32 0.0, %v3122
      %v3124 = vpop.f32.mrb[0].mxu0
      %3125 = vmatprep.mubr.bf16.mxu0 0
      %3126 = vmatmul.mubr.bf16.gmra.mrb[0].mxu0 %v2973
      %v3127 = vpop.f32.mrb[0].mxu0
      %v3128 = vadd.f32 0.0, %v3127
      %v3129 = vpop.f32.mrb[0].mxu0
      %v3130 = vpop.f32.mrb[0].mxu0
      %v3131 = vadd.f32 0.0, %v3130
      %v3132 = vpop.f32.mrb[0].mxu0
      %3133 = vmatprep.mubr.bf16.mxu0 0
      %3134 = vmatmul.mubr.bf16.gmra.mrb[0].mxu0 %v2976
      %v3135 = vpop.f32.mrb[0].mxu0
      %v3136 = vadd.f32 0.0, %v3135
      %v3137 = vpop.f32.mrb[0].mxu0
      %v3138 = vpop.f32.mrb[0].mxu0
      %v3139 = vadd.f32 0.0, %v3138
      %v3140 = vpop.f32.mrb[0].mxu0
      %3141 = vdwg.mxu0
      %v3142 = vadd.f32 %v2672, %v3016
      %v3143 = vadd.f32 %v2673, %v3019
      %v3144 = vadd.f32 %v2674, %v3024
      %v3145 = vadd.f32 %v2675, %v3027
      %v3146 = vadd.f32 %v2676, %v3032
      %v3147 = vadd.f32 %v2677, %v3035
      %v3148 = vadd.f32 %v2678, %v3040
      %v3149 = vadd.f32 %v2679, %v3043
      %v3150 = vadd.f32 %v2680, %v3048
      %v3151 = vadd.f32 %v2681, %v3051
      %v3152 = vadd.f32 %v2682, %v3056
      %v3153 = vadd.f32 %v2683, %v3059
      %v3154 = vadd.f32 %v2684, %v3064
      %v3155 = vadd.f32 %v2685, %v3067
      %v3156 = vadd.f32 %v2686, %v3072
      %v3157 = vadd.f32 %v2687, %v3075
      %v3158 = vadd.f32 %v2688, %v3080
      %v3159 = vadd.f32 %v2689, %v3083
      %v3160 = vadd.f32 %v2690, %v3088
      %v3161 = vadd.f32 %v2691, %v3091
      %v3162 = vadd.f32 %v2692, %v3096
      %v3163 = vadd.f32 %v2693, %v3099
      %v3164 = vadd.f32 %v2694, %v3104
      %v3165 = vadd.f32 %v2695, %v3107
      %v3166 = vadd.f32 %v2696, %v3112
      %v3167 = vadd.f32 %v2697, %v3115
      %v3168 = vadd.f32 %v2698, %v3120
      %v3169 = vadd.f32 %v2699, %v3123
      %v3170 = vadd.f32 %v2700, %v3128
      %v3171 = vadd.f32 %v2701, %v3131
      %v3172 = vadd.f32 %v2702, %v3136
      %v3173 = vadd.f32 %v2703, %v3139
      %s3174 = scalar_lea.vmem %s164, 24
      %v3175 = vld [vmem:[%s3174] sm:$0xf]
      %v3176 = vld [vmem:[%s3174 + $0x4] sm:$0xf]
      %v3177 = vld [vmem:[%s3174 + $0xc] sm:$0xf]
      %v3178 = vld [vmem:[%s3174 + $0x10] sm:$0xf]
      %v3179 = vld [vmem:[%s3174 + $0x18] sm:$0xf]
      %v3180 = vld [vmem:[%s3174 + $0x1c] sm:$0xf]
      %v3181 = vld [vmem:[%s3174 + $0x24] sm:$0xf]
      %v3182 = vld [vmem:[%s3174 + $0x28] sm:$0xf]
      %v3183 = vld [vmem:[%s3174 + $0x30] sm:$0xf]
      %v3184 = vld [vmem:[%s3174 + $0x34] sm:$0xf]
      %v3185 = vld [vmem:[%s3174 + $0x3c] sm:$0xf]
      %v3186 = vld [vmem:[%s3174 + $0x40] sm:$0xf]
      %v3187 = vld [vmem:[%s3174 + $0x48] sm:$0xf]
      %v3188 = vld [vmem:[%s3174 + $0x4c] sm:$0xf]
      %v3189 = vld [vmem:[%s3174 + $0x54] sm:$0xf]
      %v3190 = vld [vmem:[%s3174 + $0x58] sm:$0xf]
      %v3191 = vld [vmem:[%s3174 + $0x60] sm:$0xf]
      %v3192 = vld [vmem:[%s3174 + $0x64] sm:$0xf]
      %v3193 = vld [vmem:[%s3174 + $0x6c] sm:$0xf]
      %v3194 = vld [vmem:[%s3174 + $0x70] sm:$0xf]
      %v3195 = vld [vmem:[%s3174 + $0x78] sm:$0xf]
      %v3196 = vld [vmem:[%s3174 + $0x7c] sm:$0xf]
      %v3197 = vld [vmem:[%s3174 + $0x84] sm:$0xf]
      %v3198 = vld [vmem:[%s3174 + $0x88] sm:$0xf]
      %v3199 = vld [vmem:[%s3174 + $0x90] sm:$0xf]
      %v3200 = vld [vmem:[%s3174 + $0x94] sm:$0xf]
      %v3201 = vld [vmem:[%s3174 + $0x9c] sm:$0xf]
      %v3202 = vld [vmem:[%s3174 + $0xa0] sm:$0xf]
      %v3203 = vld [vmem:[%s3174 + $0xa8] sm:$0xf]
      %v3204 = vld [vmem:[%s3174 + $0xac] sm:$0xf]
      %v3205 = vld [vmem:[%s3174 + $0xb4] sm:$0xf]
      %v3206 = vld [vmem:[%s3174 + $0xb8] sm:$0xf]
      %s3207 = scalar_lea.vmem %s1, 12
      %v3208 = vld [vmem:[%s3207] sm:$0x3]
      %v3241 = vunpack.c.l.b16 %v3175
      %v3242 = vunpack.c.l.b16 %v3176
      %v3243 = vunpack.c.l.b16 %v3177
      %v3244 = vunpack.c.l.b16 %v3178
      %v3245 = vunpack.c.l.b16 %v3179
      %v3246 = vunpack.c.l.b16 %v3180
      %v3247 = vunpack.c.l.b16 %v3181
      %v3248 = vunpack.c.l.b16 %v3182
      %v3249 = vunpack.c.l.b16 %v3183
      %v3250 = vunpack.c.l.b16 %v3184
      %v3251 = vunpack.c.l.b16 %v3185
      %v3252 = vunpack.c.l.b16 %v3186
      %v3253 = vunpack.c.l.b16 %v3187
      %v3254 = vunpack.c.l.b16 %v3188
      %v3255 = vunpack.c.l.b16 %v3189
      %v3256 = vunpack.c.l.b16 %v3190
      %v3257 = vunpack.c.l.b16 %v3191
      %v3258 = vunpack.c.l.b16 %v3192
      %v3259 = vunpack.c.l.b16 %v3193
      %v3260 = vunpack.c.l.b16 %v3194
      %v3261 = vunpack.c.l.b16 %v3195
      %v3262 = vunpack.c.l.b16 %v3196
      %v3263 = vunpack.c.l.b16 %v3197
      %v3264 = vunpack.c.l.b16 %v3198
      %v3265 = vunpack.c.l.b16 %v3199
      %v3266 = vunpack.c.l.b16 %v3200
      %v3267 = vunpack.c.l.b16 %v3201
      %v3268 = vunpack.c.l.b16 %v3202
      %v3269 = vunpack.c.l.b16 %v3203
      %v3270 = vunpack.c.l.b16 %v3204
      %v3271 = vunpack.c.l.b16 %v3205
      %v3272 = vunpack.c.l.b16 %v3206
      %v3273 = vpack.c.b16 %v3242, %v3241
      %v3274 = vpack.c.b16 %v3244, %v3243
      %v3275 = vpack.c.b16 %v3246, %v3245
      %v3276 = vpack.c.b16 %v3248, %v3247
      %v3277 = vpack.c.b16 %v3250, %v3249
      %v3278 = vpack.c.b16 %v3252, %v3251
      %v3279 = vpack.c.b16 %v3254, %v3253
      %v3280 = vpack.c.b16 %v3256, %v3255
      %v3281 = vpack.c.b16 %v3258, %v3257
      %v3282 = vpack.c.b16 %v3260, %v3259
      %v3283 = vpack.c.b16 %v3262, %v3261
      %v3284 = vpack.c.b16 %v3264, %v3263
      %v3285 = vpack.c.b16 %v3266, %v3265
      %v3286 = vpack.c.b16 %v3268, %v3267
      %v3287 = vpack.c.b16 %v3270, %v3269
      %v3288 = vpack.c.b16 %v3272, %v3271
      %v3290 = vsel %vm656, %v3273, 0
      %v3293 = vsel %vm656, %v3274, 0
      %v3296 = vsel %vm656, %v3275, 0
      %v3299 = vsel %vm656, %v3276, 0
      %v3302 = vsel %vm656, %v3277, 0
      %v3305 = vsel %vm656, %v3278, 0
      %v3308 = vsel %vm656, %v3279, 0
      %v3311 = vsel %vm656, %v3280, 0
      %v3314 = vsel %vm656, %v3281, 0
      %v3317 = vsel %vm656, %v3282, 0
      %v3320 = vsel %vm656, %v3283, 0
      %v3323 = vsel %vm656, %v3284, 0
      %v3326 = vsel %vm656, %v3285, 0
      %v3329 = vsel %vm656, %v3286, 0
      %v3332 = vsel %vm656, %v3287, 0
      %v3335 = vsel %vm656, %v3288, 0
      %v3338 = vsel %vm705, %v3208, 0
      %3340 = vmatprep.subr.bf16.mxu0 0
      %3341 = vmatpush1.bf16.msra.mxu0 %v3338
      %3342 = vmatprep.subr.bf16.mxu0 0
      %3343 = vmatpush1.bf16.msra.mxu0 0
      %3344 = vmatprep.subr.bf16.mxu0 0
      %3345 = vmatpush1.bf16.msra.mxu0 0
      %3346 = vmatprep.subr.bf16.mxu0 0
      %3347 = vmatpush1.bf16.msra.mxu0 0
      %3348 = vmatprep.subr.bf16.mxu0 0
      %3349 = vmatpush1.bf16.msra.mxu0 0
      %3350 = vmatprep.subr.bf16.mxu0 0
      %3351 = vmatpush1.bf16.msra.mxu0 0
      %3352 = vmatprep.subr.bf16.mxu0 0
      %3353 = vmatpush1.bf16.msra.mxu0 0
      %3354 = vmatprep.subr.bf16.mxu0 0
      %3355 = vmatpush1.bf16.msra.mxu0 0
      %3356 = vmatprep.subr.bf16.mxu0 0
      %3357 = vmatpush1.bf16.msra.mxu0 0
      %3358 = vmatprep.subr.bf16.mxu0 0
      %3359 = vmatpush1.bf16.msra.mxu0 0
      %3360 = vmatprep.subr.bf16.mxu0 0
      %3361 = vmatpush1.bf16.msra.mxu0 0
      %3362 = vmatprep.subr.bf16.mxu0 0
      %3363 = vmatpush1.bf16.msra.mxu0 0
      %3364 = vmatprep.subr.bf16.mxu0 0
      %3365 = vmatpush1.bf16.msra.mxu0 0
      %3366 = vmatprep.subr.bf16.mxu0 0
      %3367 = vmatpush1.bf16.msra.mxu0 0
      %3368 = vmatprep.subr.bf16.mxu0 0
      %3369 = vmatpush1.bf16.msra.mxu0 0
      %3370 = vmatprep.subr.bf16.mxu0 0
      %3371 = vmatpush1.bf16.msra.mxu0 0
      %3372 = vmatprep.mubr.bf16.mxu0 0
      %3373 = vmatmul.mubr.bf16.gmra.mrb[0].mxu0 %v3290
      %v3374 = vpop.f32.mrb[0].mxu0
      %v3375 = vadd.f32 0.0, %v3374
      %v3376 = vpop.f32.mrb[0].mxu0
      %v3377 = vpop.f32.mrb[0].mxu0
      %v3378 = vadd.f32 0.0, %v3377
      %v3379 = vpop.f32.mrb[0].mxu0
      %3380 = vmatprep.mubr.bf16.mxu0 0
      %3381 = vmatmul.mubr.bf16.gmra.mrb[0].mxu0 %v3293
      %v3382 = vpop.f32.mrb[0].mxu0
      %v3383 = vadd.f32 0.0, %v3382
      %v3384 = vpop.f32.mrb[0].mxu0
      %v3385 = vpop.f32.mrb[0].mxu0
      %v3386 = vadd.f32 0.0, %v3385
      %v3387 = vpop.f32.mrb[0].mxu0
      %3388 = vmatprep.mubr.bf16.mxu0 0
      %3389 = vmatmul.mubr.bf16.gmra.mrb[0].mxu0 %v3296
      %v3390 = vpop.f32.mrb[0].mxu0
      %v3391 = vadd.f32 0.0, %v3390
      %v3392 = vpop.f32.mrb[0].mxu0
      %v3393 = vpop.f32.mrb[0].mxu0
      %v3394 = vadd.f32 0.0, %v3393
      %v3395 = vpop.f32.mrb[0].mxu0
      %3396 = vmatprep.mubr.bf16.mxu0 0
      %3397 = vmatmul.mubr.bf16.gmra.mrb[0].mxu0 %v3299
      %v3398 = vpop.f32.mrb[0].mxu0
      %v3399 = vadd.f32 0.0, %v3398
      %v3400 = vpop.f32.mrb[0].mxu0
      %v3401 = vpop.f32.mrb[0].mxu0
      %v3402 = vadd.f32 0.0, %v3401
      %v3403 = vpop.f32.mrb[0].mxu0
      %3404 = vmatprep.mubr.bf16.mxu0 0
      %3405 = vmatmul.mubr.bf16.gmra.mrb[0].mxu0 %v3302
      %v3406 = vpop.f32.mrb[0].mxu0
      %v3407 = vadd.f32 0.0, %v3406
      %v3408 = vpop.f32.mrb[0].mxu0
      %v3409 = vpop.f32.mrb[0].mxu0
      %v3410 = vadd.f32 0.0, %v3409
      %v3411 = vpop.f32.mrb[0].mxu0
      %3412 = vmatprep.mubr.bf16.mxu0 0
      %3413 = vmatmul.mubr.bf16.gmra.mrb[0].mxu0 %v3305
      %v3414 = vpop.f32.mrb[0].mxu0
      %v3415 = vadd.f32 0.0, %v3414
      %v3416 = vpop.f32.mrb[0].mxu0
      %v3417 = vpop.f32.mrb[0].mxu0
      %v3418 = vadd.f32 0.0, %v3417
      %v3419 = vpop.f32.mrb[0].mxu0
      %3420 = vmatprep.mubr.bf16.mxu0 0
      %3421 = vmatmul.mubr.bf16.gmra.mrb[0].mxu0 %v3308
      %v3422 = vpop.f32.mrb[0].mxu0
      %v3423 = vadd.f32 0.0, %v3422
      %v3424 = vpop.f32.mrb[0].mxu0
      %v3425 = vpop.f32.mrb[0].mxu0
      %v3426 = vadd.f32 0.0, %v3425
      %v3427 = vpop.f32.mrb[0].mxu0
      %3428 = vmatprep.mubr.bf16.mxu0 0
      %3429 = vmatmul.mubr.bf16.gmra.mrb[0].mxu0 %v3311
      %v3430 = vpop.f32.mrb[0].mxu0
      %v3431 = vadd.f32 0.0, %v3430
      %v3432 = vpop.f32.mrb[0].mxu0
      %v3433 = vpop.f32.mrb[0].mxu0
      %v3434 = vadd.f32 0.0, %v3433
      %v3435 = vpop.f32.mrb[0].mxu0
      %3436 = vmatprep.mubr.bf16.mxu0 0
      %3437 = vmatmul.mubr.bf16.gmra.mrb[0].mxu0 %v3314
      %v3438 = vpop.f32.mrb[0].mxu0
      %v3439 = vadd.f32 0.0, %v3438
      %v3440 = vpop.f32.mrb[0].mxu0
      %v3441 = vpop.f32.mrb[0].mxu0
      %v3442 = vadd.f32 0.0, %v3441
      %v3443 = vpop.f32.mrb[0].mxu0
      %3444 = vmatprep.mubr.bf16.mxu0 0
      %3445 = vmatmul.mubr.bf16.gmra.mrb[0].mxu0 %v3317
      %v3446 = vpop.f32.mrb[0].mxu0
      %v3447 = vadd.f32 0.0, %v3446
      %v3448 = vpop.f32.mrb[0].mxu0
      %v3449 = vpop.f32.mrb[0].mxu0
      %v3450 = vadd.f32 0.0, %v3449
      %v3451 = vpop.f32.mrb[0].mxu0
      %3452 = vmatprep.mubr.bf16.mxu0 0
      %3453 = vmatmul.mubr.bf16.gmra.mrb[0].mxu0 %v3320
      %v3454 = vpop.f32.mrb[0].mxu0
      %v3455 = vadd.f32 0.0, %v3454
      %v3456 = vpop.f32.mrb[0].mxu0
      %v3457 = vpop.f32.mrb[0].mxu0
      %v3458 = vadd.f32 0.0, %v3457
      %v3459 = vpop.f32.mrb[0].mxu0
      %3460 = vmatprep.mubr.bf16.mxu0 0
      %3461 = vmatmul.mubr.bf16.gmra.mrb[0].mxu0 %v3323
      %v3462 = vpop.f32.mrb[0].mxu0
      %v3463 = vadd.f32 0.0, %v3462
      %v3464 = vpop.f32.mrb[0].mxu0
      %v3465 = vpop.f32.mrb[0].mxu0
      %v3466 = vadd.f32 0.0, %v3465
      %v3467 = vpop.f32.mrb[0].mxu0
      %3468 = vmatprep.mubr.bf16.mxu0 0
      %3469 = vmatmul.mubr.bf16.gmra.mrb[0].mxu0 %v3326
      %v3470 = vpop.f32.mrb[0].mxu0
      %v3471 = vadd.f32 0.0, %v3470
      %v3472 = vpop.f32.mrb[0].mxu0
      %v3473 = vpop.f32.mrb[0].mxu0
      %v3474 = vadd.f32 0.0, %v3473
      %v3475 = vpop.f32.mrb[0].mxu0
      %3476 = vmatprep.mubr.bf16.mxu0 0
      %3477 = vmatmul.mubr.bf16.gmra.mrb[0].mxu0 %v3329
      %v3478 = vpop.f32.mrb[0].mxu0
      %v3479 = vadd.f32 0.0, %v3478
      %v3480 = vpop.f32.mrb[0].mxu0
      %v3481 = vpop.f32.mrb[0].mxu0
      %v3482 = vadd.f32 0.0, %v3481
      %v3483 = vpop.f32.mrb[0].mxu0
      %3484 = vmatprep.mubr.bf16.mxu0 0
      %3485 = vmatmul.mubr.bf16.gmra.mrb[0].mxu0 %v3332
      %v3486 = vpop.f32.mrb[0].mxu0
      %v3487 = vadd.f32 0.0, %v3486
      %v3488 = vpop.f32.mrb[0].mxu0
      %v3489 = vpop.f32.mrb[0].mxu0
      %v3490 = vadd.f32 0.0, %v3489
      %v3491 = vpop.f32.mrb[0].mxu0
      %3492 = vmatprep.mubr.bf16.mxu0 0
      %3493 = vmatmul.mubr.bf16.gmra.mrb[0].mxu0 %v3335
      %v3494 = vpop.f32.mrb[0].mxu0
      %v3495 = vadd.f32 0.0, %v3494
      %v3496 = vpop.f32.mrb[0].mxu0
      %v3497 = vpop.f32.mrb[0].mxu0
      %v3498 = vadd.f32 0.0, %v3497
      %v3499 = vpop.f32.mrb[0].mxu0
      %3500 = vdwg.mxu0
      %v3501 = vadd.f32 %v3142, %v3375
      %v3502 = vadd.f32 %v3143, %v3378
      %v3503 = vadd.f32 %v3144, %v3383
      %v3504 = vadd.f32 %v3145, %v3386
      %v3505 = vadd.f32 %v3146, %v3391
      %v3506 = vadd.f32 %v3147, %v3394
      %v3507 = vadd.f32 %v3148, %v3399
      %v3508 = vadd.f32 %v3149, %v3402
      %v3509 = vadd.f32 %v3150, %v3407
      %v3510 = vadd.f32 %v3151, %v3410
      %v3511 = vadd.f32 %v3152, %v3415
      %v3512 = vadd.f32 %v3153, %v3418
      %v3513 = vadd.f32 %v3154, %v3423
      %v3514 = vadd.f32 %v3155, %v3426
      %v3515 = vadd.f32 %v3156, %v3431
      %v3516 = vadd.f32 %v3157, %v3434
      %v3517 = vadd.f32 %v3158, %v3439
      %v3518 = vadd.f32 %v3159, %v3442
      %v3519 = vadd.f32 %v3160, %v3447
      %v3520 = vadd.f32 %v3161, %v3450
      %v3521 = vadd.f32 %v3162, %v3455
      %v3522 = vadd.f32 %v3163, %v3458
      %v3523 = vadd.f32 %v3164, %v3463
      %v3524 = vadd.f32 %v3165, %v3466
      %v3525 = vadd.f32 %v3166, %v3471
      %v3526 = vadd.f32 %v3167, %v3474
      %v3527 = vadd.f32 %v3168, %v3479
      %v3528 = vadd.f32 %v3169, %v3482
      %v3529 = vadd.f32 %v3170, %v3487
      %v3530 = vadd.f32 %v3171, %v3490
      %v3531 = vadd.f32 %v3172, %v3495
      %v3532 = vadd.f32 %v3173, %v3498
      %v3533 = vld [vmem:[%s3174] sm:$0xf]
      %v3534 = vld [vmem:[%s3174 + $0x4] sm:$0xf]
      %v3535 = vld [vmem:[%s3174 + $0x8] sm:$0x1]
      %v3536 = vld [vmem:[%s3174 + $0xc] sm:$0xf]
      %v3537 = vld [vmem:[%s3174 + $0x10] sm:$0xf]
      %v3538 = vld [vmem:[%s3174 + $0x14] sm:$0x1]
      %v3539 = vld [vmem:[%s3174 + $0x18] sm:$0xf]
      %v3540 = vld [vmem:[%s3174 + $0x1c] sm:$0xf]
      %v3541 = vld [vmem:[%s3174 + $0x20] sm:$0x1]
      %v3542 = vld [vmem:[%s3174 + $0x24] sm:$0xf]
      %v3543 = vld [vmem:[%s3174 + $0x28] sm:$0xf]
      %v3544 = vld [vmem:[%s3174 + $0x2c] sm:$0x1]
      %v3545 = vld [vmem:[%s3174 + $0x30] sm:$0xf]
      %v3546 = vld [vmem:[%s3174 + $0x34] sm:$0xf]
      %v3547 = vld [vmem:[%s3174 + $0x38] sm:$0x1]
      %v3548 = vld [vmem:[%s3174 + $0x3c] sm:$0xf]
      %v3549 = vld [vmem:[%s3174 + $0x40] sm:$0xf]
      %v3550 = vld [vmem:[%s3174 + $0x44] sm:$0x1]
      %v3551 = vld [vmem:[%s3174 + $0x48] sm:$0xf]
      %v3552 = vld [vmem:[%s3174 + $0x4c] sm:$0xf]
      %v3553 = vld [vmem:[%s3174 + $0x50] sm:$0x1]
      %v3554 = vld [vmem:[%s3174 + $0x54] sm:$0xf]
      %v3555 = vld [vmem:[%s3174 + $0x58] sm:$0xf]
      %v3556 = vld [vmem:[%s3174 + $0x5c] sm:$0x1]
      %v3557 = vld [vmem:[%s3174 + $0x60] sm:$0xf]
      %v3558 = vld [vmem:[%s3174 + $0x64] sm:$0xf]
      %v3559 = vld [vmem:[%s3174 + $0x68] sm:$0x1]
      %v3560 = vld [vmem:[%s3174 + $0x6c] sm:$0xf]
      %v3561 = vld [vmem:[%s3174 + $0x70] sm:$0xf]
      %v3562 = vld [vmem:[%s3174 + $0x74] sm:$0x1]
      %v3563 = vld [vmem:[%s3174 + $0x78] sm:$0xf]
      %v3564 = vld [vmem:[%s3174 + $0x7c] sm:$0xf]
      %v3565 = vld [vmem:[%s3174 + $0x80] sm:$0x1]
      %v3566 = vld [vmem:[%s3174 + $0x84] sm:$0xf]
      %v3567 = vld [vmem:[%s3174 + $0x88] sm:$0xf]
      %v3568 = vld [vmem:[%s3174 + $0x8c] sm:$0x1]
      %v3569 = vld [vmem:[%s3174 + $0x90] sm:$0xf]
      %v3570 = vld [vmem:[%s3174 + $0x94] sm:$0xf]
      %v3571 = vld [vmem:[%s3174 + $0x98] sm:$0x1]
      %v3572 = vld [vmem:[%s3174 + $0x9c] sm:$0xf]
      %v3573 = vld [vmem:[%s3174 + $0xa0] sm:$0xf]
      %v3574 = vld [vmem:[%s3174 + $0xa4] sm:$0x1]
      %v3575 = vld [vmem:[%s3174 + $0xa8] sm:$0xf]
      %v3576 = vld [vmem:[%s3174 + $0xac] sm:$0xf]
      %v3577 = vld [vmem:[%s3174 + $0xb0] sm:$0x1]
      %v3578 = vld [vmem:[%s3174 + $0xb4] sm:$0xf]
      %v3579 = vld [vmem:[%s3174 + $0xb8] sm:$0xf]
      %v3580 = vld [vmem:[%s3174 + $0xbc] sm:$0x1]
      %v3582 = vshrl.u32 %v3533, 16
      %v3584 = vrot.slane %v3582, 4
      %v3585 = vshll.u32 %v3533, 16
      %v3587 = vrot.slane %v3585, 5
      %v3588 = vor.u32 %v3584, %v3587
      %v3589 = vrot.slane %v3588, 4
      %v3591 = vshll.u32 %v3534, 16
      %v3593 = vrot.slane %v3591, 5
      %v3594 = vsel %vm221, %v3589, %v3593
      %v3595 = vshrl.u32 %v3534, 16
      %v3597 = vrot.slane %v3595, 4
      %v3598 = vor.u32 %v3597, %v3593
      %v3599 = vrot.slane %v3598, 4
      %v3601 = vshll.u32 %v3535, 16
      %v3603 = vrot.slane %v3601, 5
      %v3604 = vsel %vm221, %v3599, %v3603
      %v3606 = vshrl.u32 %v3536, 16
      %v3608 = vrot.slane %v3606, 4
      %v3609 = vshll.u32 %v3536, 16
      %v3611 = vrot.slane %v3609, 5
      %v3612 = vor.u32 %v3608, %v3611
      %v3613 = vrot.slane %v3612, 4
      %v3615 = vshll.u32 %v3537, 16
      %v3617 = vrot.slane %v3615, 5
      %v3618 = vsel %vm221, %v3613, %v3617
      %v3619 = vshrl.u32 %v3537, 16
      %v3621 = vrot.slane %v3619, 4
      %v3622 = vor.u32 %v3621, %v3617
      %v3623 = vrot.slane %v3622, 4
      %v3625 = vshll.u32 %v3538, 16
      %v3627 = vrot.slane %v3625, 5
      %v3628 = vsel %vm221, %v3623, %v3627
      %v3630 = vshrl.u32 %v3539, 16
      %v3632 = vrot.slane %v3630, 4
      %v3633 = vshll.u32 %v3539, 16
      %v3635 = vrot.slane %v3633, 5
      %v3636 = vor.u32 %v3632, %v3635
      %v3637 = vrot.slane %v3636, 4
      %v3639 = vshll.u32 %v3540, 16
      %v3641 = vrot.slane %v3639, 5
      %v3642 = vsel %vm221, %v3637, %v3641
      %v3643 = vshrl.u32 %v3540, 16
      %v3645 = vrot.slane %v3643, 4
      %v3646 = vor.u32 %v3645, %v3641
      %v3647 = vrot.slane %v3646, 4
      %v3649 = vshll.u32 %v3541, 16
      %v3651 = vrot.slane %v3649, 5
      %v3652 = vsel %vm221, %v3647, %v3651
      %v3654 = vshrl.u32 %v3542, 16
      %v3656 = vrot.slane %v3654, 4
      %v3657 = vshll.u32 %v3542, 16
      %v3659 = vrot.slane %v3657, 5
      %v3660 = vor.u32 %v3656, %v3659
      %v3661 = vrot.slane %v3660, 4
      %v3663 = vshll.u32 %v3543, 16
      %v3665 = vrot.slane %v3663, 5
      %v3666 = vsel %vm221, %v3661, %v3665
      %v3667 = vshrl.u32 %v3543, 16
      %v3669 = vrot.slane %v3667, 4
      %v3670 = vor.u32 %v3669, %v3665
      %v3671 = vrot.slane %v3670, 4
      %v3673 = vshll.u32 %v3544, 16
      %v3675 = vrot.slane %v3673, 5
      %v3676 = vsel %vm221, %v3671, %v3675
      %v3678 = vshrl.u32 %v3545, 16
      %v3680 = vrot.slane %v3678, 4
      %v3681 = vshll.u32 %v3545, 16
      %v3683 = vrot.slane %v3681, 5
      %v3684 = vor.u32 %v3680, %v3683
      %v3685 = vrot.slane %v3684, 4
      %v3687 = vshll.u32 %v3546, 16
      %v3689 = vrot.slane %v3687, 5
      %v3690 = vsel %vm221, %v3685, %v3689
      %v3691 = vshrl.u32 %v3546, 16
      %v3693 = vrot.slane %v3691, 4
      %v3694 = vor.u32 %v3693, %v3689
      %v3695 = vrot.slane %v3694, 4
      %v3697 = vshll.u32 %v3547, 16
      %v3699 = vrot.slane %v3697, 5
      %v3700 = vsel %vm221, %v3695, %v3699
      %v3702 = vshrl.u32 %v3548, 16
      %v3704 = vrot.slane %v3702, 4
      %v3705 = vshll.u32 %v3548, 16
      %v3707 = vrot.slane %v3705, 5
      %v3708 = vor.u32 %v3704, %v3707
      %v3709 = vrot.slane %v3708, 4
      %v3711 = vshll.u32 %v3549, 16
      %v3713 = vrot.slane %v3711, 5
      %v3714 = vsel %vm221, %v3709, %v3713
      %v3715 = vshrl.u32 %v3549, 16
      %v3717 = vrot.slane %v3715, 4
      %v3718 = vor.u32 %v3717, %v3713
      %v3719 = vrot.slane %v3718, 4
      %v3721 = vshll.u32 %v3550, 16
      %v3723 = vrot.slane %v3721, 5
      %v3724 = vsel %vm221, %v3719, %v3723
      %v3726 = vshrl.u32 %v3551, 16
      %v3728 = vrot.slane %v3726, 4
      %v3729 = vshll.u32 %v3551, 16
      %v3731 = vrot.slane %v3729, 5
      %v3732 = vor.u32 %v3728, %v3731
      %v3733 = vrot.slane %v3732, 4
      %v3735 = vshll.u32 %v3552, 16
      %v3737 = vrot.slane %v3735, 5
      %v3738 = vsel %vm221, %v3733, %v3737
      %v3739 = vshrl.u32 %v3552, 16
      %v3741 = vrot.slane %v3739, 4
      %v3742 = vor.u32 %v3741, %v3737
      %v3743 = vrot.slane %v3742, 4
      %v3745 = vshll.u32 %v3553, 16
      %v3747 = vrot.slane %v3745, 5
      %v3748 = vsel %vm221, %v3743, %v3747
      %v3750 = vshrl.u32 %v3554, 16
      %v3752 = vrot.slane %v3750, 4
      %v3753 = vshll.u32 %v3554, 16
      %v3755 = vrot.slane %v3753, 5
      %v3756 = vor.u32 %v3752, %v3755
      %v3757 = vrot.slane %v3756, 4
      %v3759 = vshll.u32 %v3555, 16
      %v3761 = vrot.slane %v3759, 5
      %v3762 = vsel %vm221, %v3757, %v3761
      %v3763 = vshrl.u32 %v3555, 16
      %v3765 = vrot.slane %v3763, 4
      %v3766 = vor.u32 %v3765, %v3761
      %v3767 = vrot.slane %v3766, 4
      %v3769 = vshll.u32 %v3556, 16
      %v3771 = vrot.slane %v3769, 5
      %v3772 = vsel %vm221, %v3767, %v3771
      %v3774 = vshrl.u32 %v3557, 16
      %v3776 = vrot.slane %v3774, 4
      %v3777 = vshll.u32 %v3557, 16
      %v3779 = vrot.slane %v3777, 5
      %v3780 = vor.u32 %v3776, %v3779
      %v3781 = vrot.slane %v3780, 4
      %v3783 = vshll.u32 %v3558, 16
      %v3785 = vrot.slane %v3783, 5
      %v3786 = vsel %vm221, %v3781, %v3785
      %v3787 = vshrl.u32 %v3558, 16
      %v3789 = vrot.slane %v3787, 4
      %v3790 = vor.u32 %v3789, %v3785
      %v3791 = vrot.slane %v3790, 4
      %v3793 = vshll.u32 %v3559, 16
      %v3795 = vrot.slane %v3793, 5
      %v3796 = vsel %vm221, %v3791, %v3795
      %v3798 = vshrl.u32 %v3560, 16
      %v3800 = vrot.slane %v3798, 4
      %v3801 = vshll.u32 %v3560, 16
      %v3803 = vrot.slane %v3801, 5
      %v3804 = vor.u32 %v3800, %v3803
      %v3805 = vrot.slane %v3804, 4
      %v3807 = vshll.u32 %v3561, 16
      %v3809 = vrot.slane %v3807, 5
      %v3810 = vsel %vm221, %v3805, %v3809
      %v3811 = vshrl.u32 %v3561, 16
      %v3813 = vrot.slane %v3811, 4
      %v3814 = vor.u32 %v3813, %v3809
      %v3815 = vrot.slane %v3814, 4
      %v3817 = vshll.u32 %v3562, 16
      %v3819 = vrot.slane %v3817, 5
      %v3820 = vsel %vm221, %v3815, %v3819
      %v3822 = vshrl.u32 %v3563, 16
      %v3824 = vrot.slane %v3822, 4
      %v3825 = vshll.u32 %v3563, 16
      %v3827 = vrot.slane %v3825, 5
      %v3828 = vor.u32 %v3824, %v3827
      %v3829 = vrot.slane %v3828, 4
      %v3831 = vshll.u32 %v3564, 16
      %v3833 = vrot.slane %v3831, 5
      %v3834 = vsel %vm221, %v3829, %v3833
      %v3835 = vshrl.u32 %v3564, 16
      %v3837 = vrot.slane %v3835, 4
      %v3838 = vor.u32 %v3837, %v3833
      %v3839 = vrot.slane %v3838, 4
      %v3841 = vshll.u32 %v3565, 16
      %v3843 = vrot.slane %v3841, 5
      %v3844 = vsel %vm221, %v3839, %v3843
      %v3846 = vshrl.u32 %v3566, 16
      %v3848 = vrot.slane %v3846, 4
      %v3849 = vshll.u32 %v3566, 16
      %v3851 = vrot.slane %v3849, 5
      %v3852 = vor.u32 %v3848, %v3851
      %v3853 = vrot.slane %v3852, 4
      %v3855 = vshll.u32 %v3567, 16
      %v3857 = vrot.slane %v3855, 5
      %v3858 = vsel %vm221, %v3853, %v3857
      %v3859 = vshrl.u32 %v3567, 16
      %v3861 = vrot.slane %v3859, 4
      %v3862 = vor.u32 %v3861, %v3857
      %v3863 = vrot.slane %v3862, 4
      %v3865 = vshll.u32 %v3568, 16
      %v3867 = vrot.slane %v3865, 5
      %v3868 = vsel %vm221, %v3863, %v3867
      %v3870 = vshrl.u32 %v3569, 16
      %v3872 = vrot.slane %v3870, 4
      %v3873 = vshll.u32 %v3569, 16
      %v3875 = vrot.slane %v3873, 5
      %v3876 = vor.u32 %v3872, %v3875
      %v3877 = vrot.slane %v3876, 4
      %v3879 = vshll.u32 %v3570, 16
      %v3881 = vrot.slane %v3879, 5
      %v3882 = vsel %vm221, %v3877, %v3881
      %v3883 = vshrl.u32 %v3570, 16
      %v3885 = vrot.slane %v3883, 4
      %v3886 = vor.u32 %v3885, %v3881
      %v3887 = vrot.slane %v3886, 4
      %v3889 = vshll.u32 %v3571, 16
      %v3891 = vrot.slane %v3889, 5
      %v3892 = vsel %vm221, %v3887, %v3891
      %v3894 = vshrl.u32 %v3572, 16
      %v3896 = vrot.slane %v3894, 4
      %v3897 = vshll.u32 %v3572, 16
      %v3899 = vrot.slane %v3897, 5
      %v3900 = vor.u32 %v3896, %v3899
      %v3901 = vrot.slane %v3900, 4
      %v3903 = vshll.u32 %v3573, 16
      %v3905 = vrot.slane %v3903, 5
      %v3906 = vsel %vm221, %v3901, %v3905
      %v3907 = vshrl.u32 %v3573, 16
      %v3909 = vrot.slane %v3907, 4
      %v3910 = vor.u32 %v3909, %v3905
      %v3911 = vrot.slane %v3910, 4
      %v3913 = vshll.u32 %v3574, 16
      %v3915 = vrot.slane %v3913, 5
      %v3916 = vsel %vm221, %v3911, %v3915
      %v3918 = vshrl.u32 %v3575, 16
      %v3920 = vrot.slane %v3918, 4
      %v3921 = vshll.u32 %v3575, 16
      %v3923 = vrot.slane %v3921, 5
      %v3924 = vor.u32 %v3920, %v3923
      %v3925 = vrot.slane %v3924, 4
      %v3927 = vshll.u32 %v3576, 16
      %v3929 = vrot.slane %v3927, 5
      %v3930 = vsel %vm221, %v3925, %v3929
      %v3931 = vshrl.u32 %v3576, 16
      %v3933 = vrot.slane %v3931, 4
      %v3934 = vor.u32 %v3933, %v3929
      %v3935 = vrot.slane %v3934, 4
      %v3937 = vshll.u32 %v3577, 16
      %v3939 = vrot.slane %v3937, 5
      %v3940 = vsel %vm221, %v3935, %v3939
      %v3942 = vshrl.u32 %v3578, 16
      %v3944 = vrot.slane %v3942, 4
      %v3945 = vshll.u32 %v3578, 16
      %v3947 = vrot.slane %v3945, 5
      %v3948 = vor.u32 %v3944, %v3947
      %v3949 = vrot.slane %v3948, 4
      %v3951 = vshll.u32 %v3579, 16
      %v3953 = vrot.slane %v3951, 5
      %v3954 = vsel %vm221, %v3949, %v3953
      %v3955 = vshrl.u32 %v3579, 16
      %v3957 = vrot.slane %v3955, 4
      %v3958 = vor.u32 %v3957, %v3953
      %v3959 = vrot.slane %v3958, 4
      %v3961 = vshll.u32 %v3580, 16
      %v3963 = vrot.slane %v3961, 5
      %v3964 = vsel %vm221, %v3959, %v3963
      %s3965 = scalar_lea.vmem %s1, 14
      %v3966 = vld [vmem:[%s3965] sm:$0x3]
      %v3967 = vunpack.c.l.b16 %v3594
      %v3968 = vunpack.c.l.b16 %v3604
      %v3969 = vunpack.c.l.b16 %v3618
      %v3970 = vunpack.c.l.b16 %v3628
      %v3971 = vunpack.c.l.b16 %v3642
      %v3972 = vunpack.c.l.b16 %v3652
      %v3973 = vunpack.c.l.b16 %v3666
      %v3974 = vunpack.c.l.b16 %v3676
      %v3975 = vunpack.c.l.b16 %v3690
      %v3976 = vunpack.c.l.b16 %v3700
      %v3977 = vunpack.c.l.b16 %v3714
      %v3978 = vunpack.c.l.b16 %v3724
      %v3979 = vunpack.c.l.b16 %v3738
      %v3980 = vunpack.c.l.b16 %v3748
      %v3981 = vunpack.c.l.b16 %v3762
      %v3982 = vunpack.c.l.b16 %v3772
      %v3983 = vunpack.c.l.b16 %v3786
      %v3984 = vunpack.c.l.b16 %v3796
      %v3985 = vunpack.c.l.b16 %v3810
      %v3986 = vunpack.c.l.b16 %v3820
      %v3987 = vunpack.c.l.b16 %v3834
      %v3988 = vunpack.c.l.b16 %v3844
      %v3989 = vunpack.c.l.b16 %v3858
      %v3990 = vunpack.c.l.b16 %v3868
      %v3991 = vunpack.c.l.b16 %v3882
      %v3992 = vunpack.c.l.b16 %v3892
      %v3993 = vunpack.c.l.b16 %v3906
      %v3994 = vunpack.c.l.b16 %v3916
      %v3995 = vunpack.c.l.b16 %v3930
      %v3996 = vunpack.c.l.b16 %v3940
      %v3997 = vunpack.c.l.b16 %v3954
      %v3998 = vunpack.c.l.b16 %v3964
      %v3999 = vpack.c.b16 %v3968, %v3967
      %v4000 = vpack.c.b16 %v3970, %v3969
      %v4001 = vpack.c.b16 %v3972, %v3971
      %v4002 = vpack.c.b16 %v3974, %v3973
      %v4003 = vpack.c.b16 %v3976, %v3975
      %v4004 = vpack.c.b16 %v3978, %v3977
      %v4005 = vpack.c.b16 %v3980, %v3979
      %v4006 = vpack.c.b16 %v3982, %v3981
      %v4007 = vpack.c.b16 %v3984, %v3983
      %v4008 = vpack.c.b16 %v3986, %v3985
      %v4009 = vpack.c.b16 %v3988, %v3987
      %v4010 = vpack.c.b16 %v3990, %v3989
      %v4011 = vpack.c.b16 %v3992, %v3991
      %v4012 = vpack.c.b16 %v3994, %v3993
      %v4013 = vpack.c.b16 %v3996, %v3995
      %v4014 = vpack.c.b16 %v3998, %v3997
      %v4016 = vsel %vm656, %v3999, 0
      %v4019 = vsel %vm656, %v4000, 0
      %v4022 = vsel %vm656, %v4001, 0
      %v4025 = vsel %vm656, %v4002, 0
      %v4028 = vsel %vm656, %v4003, 0
      %v4031 = vsel %vm656, %v4004, 0
      %v4034 = vsel %vm656, %v4005, 0
      %v4037 = vsel %vm656, %v4006, 0
      %v4040 = vsel %vm656, %v4007, 0
      %v4043 = vsel %vm656, %v4008, 0
      %v4046 = vsel %vm656, %v4009, 0
      %v4049 = vsel %vm656, %v4010, 0
      %v4052 = vsel %vm656, %v4011, 0
      %v4055 = vsel %vm656, %v4012, 0
      %v4058 = vsel %vm656, %v4013, 0
      %v4061 = vsel %vm656, %v4014, 0
      %v4064 = vsel %vm705, %v3966, 0
      %4066 = vmatprep.subr.bf16.mxu0 0
      %4067 = vmatpush1.bf16.msra.mxu0 %v4064
      %4068 = vmatprep.subr.bf16.mxu0 0
      %4069 = vmatpush1.bf16.msra.mxu0 0
      %4070 = vmatprep.subr.bf16.mxu0 0
      %4071 = vmatpush1.bf16.msra.mxu0 0
      %4072 = vmatprep.subr.bf16.mxu0 0
      %4073 = vmatpush1.bf16.msra.mxu0 0
      %4074 = vmatprep.subr.bf16.mxu0 0
      %4075 = vmatpush1.bf16.msra.mxu0 0
      %4076 = vmatprep.subr.bf16.mxu0 0
      %4077 = vmatpush1.bf16.msra.mxu0 0
      %4078 = vmatprep.subr.bf16.mxu0 0
      %4079 = vmatpush1.bf16.msra.mxu0 0
      %4080 = vmatprep.subr.bf16.mxu0 0
      %4081 = vmatpush1.bf16.msra.mxu0 0
      %4082 = vmatprep.subr.bf16.mxu0 0
      %4083 = vmatpush1.bf16.msra.mxu0 0
      %4084 = vmatprep.subr.bf16.mxu0 0
      %4085 = vmatpush1.bf16.msra.mxu0 0
      %4086 = vmatprep.subr.bf16.mxu0 0
      %4087 = vmatpush1.bf16.msra.mxu0 0
      %4088 = vmatprep.subr.bf16.mxu0 0
      %4089 = vmatpush1.bf16.msra.mxu0 0
      %4090 = vmatprep.subr.bf16.mxu0 0
      %4091 = vmatpush1.bf16.msra.mxu0 0
      %4092 = vmatprep.subr.bf16.mxu0 0
      %4093 = vmatpush1.bf16.msra.mxu0 0
      %4094 = vmatprep.subr.bf16.mxu0 0
      %4095 = vmatpush1.bf16.msra.mxu0 0
      %4096 = vmatprep.subr.bf16.mxu0 0
      %4097 = vmatpush1.bf16.msra.mxu0 0
      %4098 = vmatprep.mubr.bf16.mxu0 0
      %4099 = vmatmul.mubr.bf16.gmra.mrb[0].mxu0 %v4016
      %v4100 = vpop.f32.mrb[0].mxu0
      %v4101 = vadd.f32 0.0, %v4100
      %v4102 = vpop.f32.mrb[0].mxu0
      %v4103 = vpop.f32.mrb[0].mxu0
      %v4104 = vadd.f32 0.0, %v4103
      %v4105 = vpop.f32.mrb[0].mxu0
      %4106 = vmatprep.mubr.bf16.mxu0 0
      %4107 = vmatmul.mubr.bf16.gmra.mrb[0].mxu0 %v4019
      %v4108 = vpop.f32.mrb[0].mxu0
      %v4109 = vadd.f32 0.0, %v4108
      %v4110 = vpop.f32.mrb[0].mxu0
      %v4111 = vpop.f32.mrb[0].mxu0
      %v4112 = vadd.f32 0.0, %v4111
      %v4113 = vpop.f32.mrb[0].mxu0
      %4114 = vmatprep.mubr.bf16.mxu0 0
      %4115 = vmatmul.mubr.bf16.gmra.mrb[0].mxu0 %v4022
      %v4116 = vpop.f32.mrb[0].mxu0
      %v4117 = vadd.f32 0.0, %v4116
      %v4118 = vpop.f32.mrb[0].mxu0
      %v4119 = vpop.f32.mrb[0].mxu0
      %v4120 = vadd.f32 0.0, %v4119
      %v4121 = vpop.f32.mrb[0].mxu0
      %4122 = vmatprep.mubr.bf16.mxu0 0
      %4123 = vmatmul.mubr.bf16.gmra.mrb[0].mxu0 %v4025
      %v4124 = vpop.f32.mrb[0].mxu0
      %v4125 = vadd.f32 0.0, %v4124
      %v4126 = vpop.f32.mrb[0].mxu0
      %v4127 = vpop.f32.mrb[0].mxu0
      %v4128 = vadd.f32 0.0, %v4127
      %v4129 = vpop.f32.mrb[0].mxu0
      %4130 = vmatprep.mubr.bf16.mxu0 0
      %4131 = vmatmul.mubr.bf16.gmra.mrb[0].mxu0 %v4028
      %v4132 = vpop.f32.mrb[0].mxu0
      %v4133 = vadd.f32 0.0, %v4132
      %v4134 = vpop.f32.mrb[0].mxu0
      %v4135 = vpop.f32.mrb[0].mxu0
      %v4136 = vadd.f32 0.0, %v4135
      %v4137 = vpop.f32.mrb[0].mxu0
      %4138 = vmatprep.mubr.bf16.mxu0 0
      %4139 = vmatmul.mubr.bf16.gmra.mrb[0].mxu0 %v4031
      %v4140 = vpop.f32.mrb[0].mxu0
      %v4141 = vadd.f32 0.0, %v4140
      %v4142 = vpop.f32.mrb[0].mxu0
      %v4143 = vpop.f32.mrb[0].mxu0
      %v4144 = vadd.f32 0.0, %v4143
      %v4145 = vpop.f32.mrb[0].mxu0
      %4146 = vmatprep.mubr.bf16.mxu0 0
      %4147 = vmatmul.mubr.bf16.gmra.mrb[0].mxu0 %v4034
      %v4148 = vpop.f32.mrb[0].mxu0
      %v4149 = vadd.f32 0.0, %v4148
      %v4150 = vpop.f32.mrb[0].mxu0
      %v4151 = vpop.f32.mrb[0].mxu0
      %v4152 = vadd.f32 0.0, %v4151
      %v4153 = vpop.f32.mrb[0].mxu0
      %4154 = vmatprep.mubr.bf16.mxu0 0
      %4155 = vmatmul.mubr.bf16.gmra.mrb[0].mxu0 %v4037
      %v4156 = vpop.f32.mrb[0].mxu0
      %v4157 = vadd.f32 0.0, %v4156
      %v4158 = vpop.f32.mrb[0].mxu0
      %v4159 = vpop.f32.mrb[0].mxu0
      %v4160 = vadd.f32 0.0, %v4159
      %v4161 = vpop.f32.mrb[0].mxu0
      %4162 = vmatprep.mubr.bf16.mxu0 0
      %4163 = vmatmul.mubr.bf16.gmra.mrb[0].mxu0 %v4040
      %v4164 = vpop.f32.mrb[0].mxu0
      %v4165 = vadd.f32 0.0, %v4164
      %v4166 = vpop.f32.mrb[0].mxu0
      %v4167 = vpop.f32.mrb[0].mxu0
      %v4168 = vadd.f32 0.0, %v4167
      %v4169 = vpop.f32.mrb[0].mxu0
      %4170 = vmatprep.mubr.bf16.mxu0 0
      %4171 = vmatmul.mubr.bf16.gmra.mrb[0].mxu0 %v4043
      %v4172 = vpop.f32.mrb[0].mxu0
      %v4173 = vadd.f32 0.0, %v4172
      %v4174 = vpop.f32.mrb[0].mxu0
      %v4175 = vpop.f32.mrb[0].mxu0
      %v4176 = vadd.f32 0.0, %v4175
      %v4177 = vpop.f32.mrb[0].mxu0
      %4178 = vmatprep.mubr.bf16.mxu0 0
      %4179 = vmatmul.mubr.bf16.gmra.mrb[0].mxu0 %v4046
      %v4180 = vpop.f32.mrb[0].mxu0
      %v4181 = vadd.f32 0.0, %v4180
      %v4182 = vpop.f32.mrb[0].mxu0
      %v4183 = vpop.f32.mrb[0].mxu0
      %v4184 = vadd.f32 0.0, %v4183
      %v4185 = vpop.f32.mrb[0].mxu0
      %4186 = vmatprep.mubr.bf16.mxu0 0
      %4187 = vmatmul.mubr.bf16.gmra.mrb[0].mxu0 %v4049
      %v4188 = vpop.f32.mrb[0].mxu0
      %v4189 = vadd.f32 0.0, %v4188
      %v4190 = vpop.f32.mrb[0].mxu0
      %v4191 = vpop.f32.mrb[0].mxu0
      %v4192 = vadd.f32 0.0, %v4191
      %v4193 = vpop.f32.mrb[0].mxu0
      %4194 = vmatprep.mubr.bf16.mxu0 0
      %4195 = vmatmul.mubr.bf16.gmra.mrb[0].mxu0 %v4052
      %v4196 = vpop.f32.mrb[0].mxu0
      %v4197 = vadd.f32 0.0, %v4196
      %v4198 = vpop.f32.mrb[0].mxu0
      %v4199 = vpop.f32.mrb[0].mxu0
      %v4200 = vadd.f32 0.0, %v4199
      %v4201 = vpop.f32.mrb[0].mxu0
      %4202 = vmatprep.mubr.bf16.mxu0 0
      %4203 = vmatmul.mubr.bf16.gmra.mrb[0].mxu0 %v4055
      %v4204 = vpop.f32.mrb[0].mxu0
      %v4205 = vadd.f32 0.0, %v4204
      %v4206 = vpop.f32.mrb[0].mxu0
      %v4207 = vpop.f32.mrb[0].mxu0
      %v4208 = vadd.f32 0.0, %v4207
      %v4209 = vpop.f32.mrb[0].mxu0
      %4210 = vmatprep.mubr.bf16.mxu0 0
      %4211 = vmatmul.mubr.bf16.gmra.mrb[0].mxu0 %v4058
      %v4212 = vpop.f32.mrb[0].mxu0
      %v4213 = vadd.f32 0.0, %v4212
      %v4214 = vpop.f32.mrb[0].mxu0
      %v4215 = vpop.f32.mrb[0].mxu0
      %v4216 = vadd.f32 0.0, %v4215
      %v4217 = vpop.f32.mrb[0].mxu0
      %4218 = vmatprep.mubr.bf16.mxu0 0
      %4219 = vmatmul.mubr.bf16.gmra.mrb[0].mxu0 %v4061
      %v4220 = vpop.f32.mrb[0].mxu0
      %v4221 = vadd.f32 0.0, %v4220
      %v4222 = vpop.f32.mrb[0].mxu0
      %v4223 = vpop.f32.mrb[0].mxu0
      %v4224 = vadd.f32 0.0, %v4223
      %v4225 = vpop.f32.mrb[0].mxu0
      %4226 = vdwg.mxu0
      %v4227 = vadd.f32 %v3501, %v4101
      %v4228 = vadd.f32 %v3502, %v4104
      %v4229 = vadd.f32 %v3503, %v4109
      %v4230 = vadd.f32 %v3504, %v4112
      %v4231 = vadd.f32 %v3505, %v4117
      %v4232 = vadd.f32 %v3506, %v4120
      %v4233 = vadd.f32 %v3507, %v4125
      %v4234 = vadd.f32 %v3508, %v4128
      %v4235 = vadd.f32 %v3509, %v4133
      %v4236 = vadd.f32 %v3510, %v4136
      %v4237 = vadd.f32 %v3511, %v4141
      %v4238 = vadd.f32 %v3512, %v4144
      %v4239 = vadd.f32 %v3513, %v4149
      %v4240 = vadd.f32 %v3514, %v4152
      %v4241 = vadd.f32 %v3515, %v4157
      %v4242 = vadd.f32 %v3516, %v4160
      %v4243 = vadd.f32 %v3517, %v4165
      %v4244 = vadd.f32 %v3518, %v4168
      %v4245 = vadd.f32 %v3519, %v4173
      %v4246 = vadd.f32 %v3520, %v4176
      %v4247 = vadd.f32 %v3521, %v4181
      %v4248 = vadd.f32 %v3522, %v4184
      %v4249 = vadd.f32 %v3523, %v4189
      %v4250 = vadd.f32 %v3524, %v4192
      %v4251 = vadd.f32 %v3525, %v4197
      %v4252 = vadd.f32 %v3526, %v4200
      %v4253 = vadd.f32 %v3527, %v4205
      %v4254 = vadd.f32 %v3528, %v4208
      %v4255 = vadd.f32 %v3529, %v4213
      %v4256 = vadd.f32 %v3530, %v4216
      %v4257 = vadd.f32 %v3531, %v4221
      %v4258 = vadd.f32 %v3532, %v4224
      %v4259 = vld [vmem:[%s3174] sm:$0xe]
      %v4260 = vld [vmem:[%s3174 + $0xc] sm:$0xe]
      %v4261 = vld [vmem:[%s3174 + $0x18] sm:$0xe]
      %v4262 = vld [vmem:[%s3174 + $0x24] sm:$0xe]
      %v4263 = vld [vmem:[%s3174 + $0x30] sm:$0xe]
      %v4264 = vld [vmem:[%s3174 + $0x3c] sm:$0xe]
      %v4265 = vld [vmem:[%s3174 + $0x48] sm:$0xe]
      %v4266 = vld [vmem:[%s3174 + $0x54] sm:$0xe]
      %v4267 = vld [vmem:[%s3174 + $0x60] sm:$0xe]
      %v4268 = vld [vmem:[%s3174 + $0x6c] sm:$0xe]
      %v4269 = vld [vmem:[%s3174 + $0x78] sm:$0xe]
      %v4270 = vld [vmem:[%s3174 + $0x84] sm:$0xe]
      %v4271 = vld [vmem:[%s3174 + $0x90] sm:$0xe]
      %v4272 = vld [vmem:[%s3174 + $0x9c] sm:$0xe]
      %v4273 = vld [vmem:[%s3174 + $0xa8] sm:$0xe]
      %v4274 = vld [vmem:[%s3174 + $0xb4] sm:$0xe]
      %v4323 = vrot.slane %v4259, 5
      %v4324 = vrot.slane %v4323, 4
      %v4325 = vrot.slane %v3534, 5
      %v4326 = vsel %vm1212, %v4324, %v4325
      %v4327 = vrot.slane %v4325, 4
      %v4328 = vrot.slane %v3535, 5
      %v4329 = vsel %vm1212, %v4327, %v4328
      %v4330 = vrot.slane %v4260, 5
      %v4331 = vrot.slane %v4330, 4
      %v4332 = vrot.slane %v3537, 5
      %v4333 = vsel %vm1212, %v4331, %v4332
      %v4334 = vrot.slane %v4332, 4
      %v4335 = vrot.slane %v3538, 5
      %v4336 = vsel %vm1212, %v4334, %v4335
      %v4337 = vrot.slane %v4261, 5
      %v4338 = vrot.slane %v4337, 4
      %v4339 = vrot.slane %v3540, 5
      %v4340 = vsel %vm1212, %v4338, %v4339
      %v4341 = vrot.slane %v4339, 4
      %v4342 = vrot.slane %v3541, 5
      %v4343 = vsel %vm1212, %v4341, %v4342
      %v4344 = vrot.slane %v4262, 5
      %v4345 = vrot.slane %v4344, 4
      %v4346 = vrot.slane %v3543, 5
      %v4347 = vsel %vm1212, %v4345, %v4346
      %v4348 = vrot.slane %v4346, 4
      %v4349 = vrot.slane %v3544, 5
      %v4350 = vsel %vm1212, %v4348, %v4349
      %v4351 = vrot.slane %v4263, 5
      %v4352 = vrot.slane %v4351, 4
      %v4353 = vrot.slane %v3546, 5
      %v4354 = vsel %vm1212, %v4352, %v4353
      %v4355 = vrot.slane %v4353, 4
      %v4356 = vrot.slane %v3547, 5
      %v4357 = vsel %vm1212, %v4355, %v4356
      %v4358 = vrot.slane %v4264, 5
      %v4359 = vrot.slane %v4358, 4
      %v4360 = vrot.slane %v3549, 5
      %v4361 = vsel %vm1212, %v4359, %v4360
      %v4362 = vrot.slane %v4360, 4
      %v4363 = vrot.slane %v3550, 5
      %v4364 = vsel %vm1212, %v4362, %v4363
      %v4365 = vrot.slane %v4265, 5
      %v4366 = vrot.slane %v4365, 4
      %v4367 = vrot.slane %v3552, 5
      %v4368 = vsel %vm1212, %v4366, %v4367
      %v4369 = vrot.slane %v4367, 4
      %v4370 = vrot.slane %v3553, 5
      %v4371 = vsel %vm1212, %v4369, %v4370
      %v4372 = vrot.slane %v4266, 5
      %v4373 = vrot.slane %v4372, 4
      %v4374 = vrot.slane %v3555, 5
      %v4375 = vsel %vm1212, %v4373, %v4374
      %v4376 = vrot.slane %v4374, 4
      %v4377 = vrot.slane %v3556, 5
      %v4378 = vsel %vm1212, %v4376, %v4377
      %v4379 = vrot.slane %v4267, 5
      %v4380 = vrot.slane %v4379, 4
      %v4381 = vrot.slane %v3558, 5
      %v4382 = vsel %vm1212, %v4380, %v4381
      %v4383 = vrot.slane %v4381, 4
      %v4384 = vrot.slane %v3559, 5
      %v4385 = vsel %vm1212, %v4383, %v4384
      %v4386 = vrot.slane %v4268, 5
      %v4387 = vrot.slane %v4386, 4
      %v4388 = vrot.slane %v3561, 5
      %v4389 = vsel %vm1212, %v4387, %v4388
      %v4390 = vrot.slane %v4388, 4
      %v4391 = vrot.slane %v3562, 5
      %v4392 = vsel %vm1212, %v4390, %v4391
      %v4393 = vrot.slane %v4269, 5
      %v4394 = vrot.slane %v4393, 4
      %v4395 = vrot.slane %v3564, 5
      %v4396 = vsel %vm1212, %v4394, %v4395
      %v4397 = vrot.slane %v4395, 4
      %v4398 = vrot.slane %v3565, 5
      %v4399 = vsel %vm1212, %v4397, %v4398
      %v4400 = vrot.slane %v4270, 5
      %v4401 = vrot.slane %v4400, 4
      %v4402 = vrot.slane %v3567, 5
      %v4403 = vsel %vm1212, %v4401, %v4402
      %v4404 = vrot.slane %v4402, 4
      %v4405 = vrot.slane %v3568, 5
      %v4406 = vsel %vm1212, %v4404, %v4405
      %v4407 = vrot.slane %v4271, 5
      %v4408 = vrot.slane %v4407, 4
      %v4409 = vrot.slane %v3570, 5
      %v4410 = vsel %vm1212, %v4408, %v4409
      %v4411 = vrot.slane %v4409, 4
      %v4412 = vrot.slane %v3571, 5
      %v4413 = vsel %vm1212, %v4411, %v4412
      %v4414 = vrot.slane %v4272, 5
      %v4415 = vrot.slane %v4414, 4
      %v4416 = vrot.slane %v3573, 5
      %v4417 = vsel %vm1212, %v4415, %v4416
      %v4418 = vrot.slane %v4416, 4
      %v4419 = vrot.slane %v3574, 5
      %v4420 = vsel %vm1212, %v4418, %v4419
      %v4421 = vrot.slane %v4273, 5
      %v4422 = vrot.slane %v4421, 4
      %v4423 = vrot.slane %v3576, 5
      %v4424 = vsel %vm1212, %v4422, %v4423
      %v4425 = vrot.slane %v4423, 4
      %v4426 = vrot.slane %v3577, 5
      %v4427 = vsel %vm1212, %v4425, %v4426
      %v4428 = vrot.slane %v4274, 5
      %v4429 = vrot.slane %v4428, 4
      %v4430 = vrot.slane %v3579, 5
      %v4431 = vsel %vm1212, %v4429, %v4430
      %v4432 = vrot.slane %v4430, 4
      %v4433 = vrot.slane %v3580, 5
      %v4434 = vsel %vm1212, %v4432, %v4433
      %s4435 = scalar_lea.vmem %s1, 16
      %v4436 = vld [vmem:[%s4435] sm:$0x3]
      %v4437 = vunpack.c.l.b16 %v4326
      %v4438 = vunpack.c.l.b16 %v4329
      %v4439 = vunpack.c.l.b16 %v4333
      %v4440 = vunpack.c.l.b16 %v4336
      %v4441 = vunpack.c.l.b16 %v4340
      %v4442 = vunpack.c.l.b16 %v4343
      %v4443 = vunpack.c.l.b16 %v4347
      %v4444 = vunpack.c.l.b16 %v4350
      %v4445 = vunpack.c.l.b16 %v4354
      %v4446 = vunpack.c.l.b16 %v4357
      %v4447 = vunpack.c.l.b16 %v4361
      %v4448 = vunpack.c.l.b16 %v4364
      %v4449 = vunpack.c.l.b16 %v4368
      %v4450 = vunpack.c.l.b16 %v4371
      %v4451 = vunpack.c.l.b16 %v4375
      %v4452 = vunpack.c.l.b16 %v4378
      %v4453 = vunpack.c.l.b16 %v4382
      %v4454 = vunpack.c.l.b16 %v4385
      %v4455 = vunpack.c.l.b16 %v4389
      %v4456 = vunpack.c.l.b16 %v4392
      %v4457 = vunpack.c.l.b16 %v4396
      %v4458 = vunpack.c.l.b16 %v4399
      %v4459 = vunpack.c.l.b16 %v4403
      %v4460 = vunpack.c.l.b16 %v4406
      %v4461 = vunpack.c.l.b16 %v4410
      %v4462 = vunpack.c.l.b16 %v4413
      %v4463 = vunpack.c.l.b16 %v4417
      %v4464 = vunpack.c.l.b16 %v4420
      %v4465 = vunpack.c.l.b16 %v4424
      %v4466 = vunpack.c.l.b16 %v4427
      %v4467 = vunpack.c.l.b16 %v4431
      %v4468 = vunpack.c.l.b16 %v4434
      %v4469 = vpack.c.b16 %v4438, %v4437
      %v4470 = vpack.c.b16 %v4440, %v4439
      %v4471 = vpack.c.b16 %v4442, %v4441
      %v4472 = vpack.c.b16 %v4444, %v4443
      %v4473 = vpack.c.b16 %v4446, %v4445
      %v4474 = vpack.c.b16 %v4448, %v4447
      %v4475 = vpack.c.b16 %v4450, %v4449
      %v4476 = vpack.c.b16 %v4452, %v4451
      %v4477 = vpack.c.b16 %v4454, %v4453
      %v4478 = vpack.c.b16 %v4456, %v4455
      %v4479 = vpack.c.b16 %v4458, %v4457
      %v4480 = vpack.c.b16 %v4460, %v4459
      %v4481 = vpack.c.b16 %v4462, %v4461
      %v4482 = vpack.c.b16 %v4464, %v4463
      %v4483 = vpack.c.b16 %v4466, %v4465
      %v4484 = vpack.c.b16 %v4468, %v4467
      %v4486 = vsel %vm656, %v4469, 0
      %v4489 = vsel %vm656, %v4470, 0
      %v4492 = vsel %vm656, %v4471, 0
      %v4495 = vsel %vm656, %v4472, 0
      %v4498 = vsel %vm656, %v4473, 0
      %v4501 = vsel %vm656, %v4474, 0
      %v4504 = vsel %vm656, %v4475, 0
      %v4507 = vsel %vm656, %v4476, 0
      %v4510 = vsel %vm656, %v4477, 0
      %v4513 = vsel %vm656, %v4478, 0
      %v4516 = vsel %vm656, %v4479, 0
      %v4519 = vsel %vm656, %v4480, 0
      %v4522 = vsel %vm656, %v4481, 0
      %v4525 = vsel %vm656, %v4482, 0
      %v4528 = vsel %vm656, %v4483, 0
      %v4531 = vsel %vm656, %v4484, 0
      %v4534 = vsel %vm705, %v4436, 0
      %4536 = vmatprep.subr.bf16.mxu0 0
      %4537 = vmatpush1.bf16.msra.mxu0 %v4534
      %4538 = vmatprep.subr.bf16.mxu0 0
      %4539 = vmatpush1.bf16.msra.mxu0 0
      %4540 = vmatprep.subr.bf16.mxu0 0
      %4541 = vmatpush1.bf16.msra.mxu0 0
      %4542 = vmatprep.subr.bf16.mxu0 0
      %4543 = vmatpush1.bf16.msra.mxu0 0
      %4544 = vmatprep.subr.bf16.mxu0 0
      %4545 = vmatpush1.bf16.msra.mxu0 0
      %4546 = vmatprep.subr.bf16.mxu0 0
      %4547 = vmatpush1.bf16.msra.mxu0 0
      %4548 = vmatprep.subr.bf16.mxu0 0
      %4549 = vmatpush1.bf16.msra.mxu0 0
      %4550 = vmatprep.subr.bf16.mxu0 0
      %4551 = vmatpush1.bf16.msra.mxu0 0
      %4552 = vmatprep.subr.bf16.mxu0 0
      %4553 = vmatpush1.bf16.msra.mxu0 0
      %4554 = vmatprep.subr.bf16.mxu0 0
      %4555 = vmatpush1.bf16.msra.mxu0 0
      %4556 = vmatprep.subr.bf16.mxu0 0
      %4557 = vmatpush1.bf16.msra.mxu0 0
      %4558 = vmatprep.subr.bf16.mxu0 0
      %4559 = vmatpush1.bf16.msra.mxu0 0
      %4560 = vmatprep.subr.bf16.mxu0 0
      %4561 = vmatpush1.bf16.msra.mxu0 0
      %4562 = vmatprep.subr.bf16.mxu0 0
      %4563 = vmatpush1.bf16.msra.mxu0 0
      %4564 = vmatprep.subr.bf16.mxu0 0
      %4565 = vmatpush1.bf16.msra.mxu0 0
      %4566 = vmatprep.subr.bf16.mxu0 0
      %4567 = vmatpush1.bf16.msra.mxu0 0
      %4568 = vmatprep.mubr.bf16.mxu0 0
      %4569 = vmatmul.mubr.bf16.gmra.mrb[0].mxu0 %v4486
      %v4570 = vpop.f32.mrb[0].mxu0
      %v4571 = vadd.f32 0.0, %v4570
      %v4572 = vpop.f32.mrb[0].mxu0
      %v4573 = vpop.f32.mrb[0].mxu0
      %v4574 = vadd.f32 0.0, %v4573
      %v4575 = vpop.f32.mrb[0].mxu0
      %4576 = vmatprep.mubr.bf16.mxu0 0
      %4577 = vmatmul.mubr.bf16.gmra.mrb[0].mxu0 %v4489
      %v4578 = vpop.f32.mrb[0].mxu0
      %v4579 = vadd.f32 0.0, %v4578
      %v4580 = vpop.f32.mrb[0].mxu0
      %v4581 = vpop.f32.mrb[0].mxu0
      %v4582 = vadd.f32 0.0, %v4581
      %v4583 = vpop.f32.mrb[0].mxu0
      %4584 = vmatprep.mubr.bf16.mxu0 0
      %4585 = vmatmul.mubr.bf16.gmra.mrb[0].mxu0 %v4492
      %v4586 = vpop.f32.mrb[0].mxu0
      %v4587 = vadd.f32 0.0, %v4586
      %v4588 = vpop.f32.mrb[0].mxu0
      %v4589 = vpop.f32.mrb[0].mxu0
      %v4590 = vadd.f32 0.0, %v4589
      %v4591 = vpop.f32.mrb[0].mxu0
      %4592 = vmatprep.mubr.bf16.mxu0 0
      %4593 = vmatmul.mubr.bf16.gmra.mrb[0].mxu0 %v4495
      %v4594 = vpop.f32.mrb[0].mxu0
      %v4595 = vadd.f32 0.0, %v4594
      %v4596 = vpop.f32.mrb[0].mxu0
      %v4597 = vpop.f32.mrb[0].mxu0
      %v4598 = vadd.f32 0.0, %v4597
      %v4599 = vpop.f32.mrb[0].mxu0
      %4600 = vmatprep.mubr.bf16.mxu0 0
      %4601 = vmatmul.mubr.bf16.gmra.mrb[0].mxu0 %v4498
      %v4602 = vpop.f32.mrb[0].mxu0
      %v4603 = vadd.f32 0.0, %v4602
      %v4604 = vpop.f32.mrb[0].mxu0
      %v4605 = vpop.f32.mrb[0].mxu0
      %v4606 = vadd.f32 0.0, %v4605
      %v4607 = vpop.f32.mrb[0].mxu0
      %4608 = vmatprep.mubr.bf16.mxu0 0
      %4609 = vmatmul.mubr.bf16.gmra.mrb[0].mxu0 %v4501
      %v4610 = vpop.f32.mrb[0].mxu0
      %v4611 = vadd.f32 0.0, %v4610
      %v4612 = vpop.f32.mrb[0].mxu0
      %v4613 = vpop.f32.mrb[0].mxu0
      %v4614 = vadd.f32 0.0, %v4613
      %v4615 = vpop.f32.mrb[0].mxu0
      %4616 = vmatprep.mubr.bf16.mxu0 0
      %4617 = vmatmul.mubr.bf16.gmra.mrb[0].mxu0 %v4504
      %v4618 = vpop.f32.mrb[0].mxu0
      %v4619 = vadd.f32 0.0, %v4618
      %v4620 = vpop.f32.mrb[0].mxu0
      %v4621 = vpop.f32.mrb[0].mxu0
      %v4622 = vadd.f32 0.0, %v4621
      %v4623 = vpop.f32.mrb[0].mxu0
      %4624 = vmatprep.mubr.bf16.mxu0 0
      %4625 = vmatmul.mubr.bf16.gmra.mrb[0].mxu0 %v4507
      %v4626 = vpop.f32.mrb[0].mxu0
      %v4627 = vadd.f32 0.0, %v4626
      %v4628 = vpop.f32.mrb[0].mxu0
      %v4629 = vpop.f32.mrb[0].mxu0
      %v4630 = vadd.f32 0.0, %v4629
      %v4631 = vpop.f32.mrb[0].mxu0
      %4632 = vmatprep.mubr.bf16.mxu0 0
      %4633 = vmatmul.mubr.bf16.gmra.mrb[0].mxu0 %v4510
      %v4634 = vpop.f32.mrb[0].mxu0
      %v4635 = vadd.f32 0.0, %v4634
      %v4636 = vpop.f32.mrb[0].mxu0
      %v4637 = vpop.f32.mrb[0].mxu0
      %v4638 = vadd.f32 0.0, %v4637
      %v4639 = vpop.f32.mrb[0].mxu0
      %4640 = vmatprep.mubr.bf16.mxu0 0
      %4641 = vmatmul.mubr.bf16.gmra.mrb[0].mxu0 %v4513
      %v4642 = vpop.f32.mrb[0].mxu0
      %v4643 = vadd.f32 0.0, %v4642
      %v4644 = vpop.f32.mrb[0].mxu0
      %v4645 = vpop.f32.mrb[0].mxu0
      %v4646 = vadd.f32 0.0, %v4645
      %v4647 = vpop.f32.mrb[0].mxu0
      %4648 = vmatprep.mubr.bf16.mxu0 0
      %4649 = vmatmul.mubr.bf16.gmra.mrb[0].mxu0 %v4516
      %v4650 = vpop.f32.mrb[0].mxu0
      %v4651 = vadd.f32 0.0, %v4650
      %v4652 = vpop.f32.mrb[0].mxu0
      %v4653 = vpop.f32.mrb[0].mxu0
      %v4654 = vadd.f32 0.0, %v4653
      %v4655 = vpop.f32.mrb[0].mxu0
      %4656 = vmatprep.mubr.bf16.mxu0 0
      %4657 = vmatmul.mubr.bf16.gmra.mrb[0].mxu0 %v4519
      %v4658 = vpop.f32.mrb[0].mxu0
      %v4659 = vadd.f32 0.0, %v4658
      %v4660 = vpop.f32.mrb[0].mxu0
      %v4661 = vpop.f32.mrb[0].mxu0
      %v4662 = vadd.f32 0.0, %v4661
      %v4663 = vpop.f32.mrb[0].mxu0
      %4664 = vmatprep.mubr.bf16.mxu0 0
      %4665 = vmatmul.mubr.bf16.gmra.mrb[0].mxu0 %v4522
      %v4666 = vpop.f32.mrb[0].mxu0
      %v4667 = vadd.f32 0.0, %v4666
      %v4668 = vpop.f32.mrb[0].mxu0
      %v4669 = vpop.f32.mrb[0].mxu0
      %v4670 = vadd.f32 0.0, %v4669
      %v4671 = vpop.f32.mrb[0].mxu0
      %4672 = vmatprep.mubr.bf16.mxu0 0
      %4673 = vmatmul.mubr.bf16.gmra.mrb[0].mxu0 %v4525
      %v4674 = vpop.f32.mrb[0].mxu0
      %v4675 = vadd.f32 0.0, %v4674
      %v4676 = vpop.f32.mrb[0].mxu0
      %v4677 = vpop.f32.mrb[0].mxu0
      %v4678 = vadd.f32 0.0, %v4677
      %v4679 = vpop.f32.mrb[0].mxu0
      %4680 = vmatprep.mubr.bf16.mxu0 0
      %4681 = vmatmul.mubr.bf16.gmra.mrb[0].mxu0 %v4528
      %v4682 = vpop.f32.mrb[0].mxu0
      %v4683 = vadd.f32 0.0, %v4682
      %v4684 = vpop.f32.mrb[0].mxu0
      %v4685 = vpop.f32.mrb[0].mxu0
      %v4686 = vadd.f32 0.0, %v4685
      %v4687 = vpop.f32.mrb[0].mxu0
      %4688 = vmatprep.mubr.bf16.mxu0 0
      %4689 = vmatmul.mubr.bf16.gmra.mrb[0].mxu0 %v4531
      %v4690 = vpop.f32.mrb[0].mxu0
      %v4691 = vadd.f32 0.0, %v4690
      %v4692 = vpop.f32.mrb[0].mxu0
      %v4693 = vpop.f32.mrb[0].mxu0
      %v4694 = vadd.f32 0.0, %v4693
      %v4695 = vpop.f32.mrb[0].mxu0
      %4696 = vdwg.mxu0
      %v4697 = vadd.f32 %v4227, %v4571
      %v4698 = vadd.f32 %v4228, %v4574
      %v4699 = vadd.f32 %v4229, %v4579
      %v4700 = vadd.f32 %v4230, %v4582
      %v4701 = vadd.f32 %v4231, %v4587
      %v4702 = vadd.f32 %v4232, %v4590
      %v4703 = vadd.f32 %v4233, %v4595
      %v4704 = vadd.f32 %v4234, %v4598
      %v4705 = vadd.f32 %v4235, %v4603
      %v4706 = vadd.f32 %v4236, %v4606
      %v4707 = vadd.f32 %v4237, %v4611
      %v4708 = vadd.f32 %v4238, %v4614
      %v4709 = vadd.f32 %v4239, %v4619
      %v4710 = vadd.f32 %v4240, %v4622
      %v4711 = vadd.f32 %v4241, %v4627
      %v4712 = vadd.f32 %v4242, %v4630
      %v4713 = vadd.f32 %v4243, %v4635
      %v4714 = vadd.f32 %v4244, %v4638
      %v4715 = vadd.f32 %v4245, %v4643
      %v4716 = vadd.f32 %v4246, %v4646
      %v4717 = vadd.f32 %v4247, %v4651
      %v4718 = vadd.f32 %v4248, %v4654
      %v4719 = vadd.f32 %v4249, %v4659
      %v4720 = vadd.f32 %v4250, %v4662
      %v4721 = vadd.f32 %v4251, %v4667
      %v4722 = vadd.f32 %v4252, %v4670
      %v4723 = vadd.f32 %v4253, %v4675
      %v4724 = vadd.f32 %v4254, %v4678
      %v4725 = vadd.f32 %v4255, %v4683
      %v4726 = vadd.f32 %v4256, %v4686
      %v4727 = vadd.f32 %v4257, %v4691
      %v4728 = vadd.f32 %v4258, %v4694
      %v4729 = vld [vmem:[%s2] sm:$0x1]
      %v4731 = vlaneseq
      %v4732 = vshrl.u32 %v4731, 7
      %v4733 = vsub.s32 0, %v4732
      %v4734 = vrot.slane %v4729, %v4733
      %v4736 = vadd.f32 %v4697, %v4734
      %v4737 = vadd.f32 %v4698, %v4734
      %v4738 = vadd.f32 %v4699, %v4734
      %v4739 = vadd.f32 %v4700, %v4734
      %v4740 = vadd.f32 %v4701, %v4734
      %v4741 = vadd.f32 %v4702, %v4734
      %v4742 = vadd.f32 %v4703, %v4734
      %v4743 = vadd.f32 %v4704, %v4734
      %v4744 = vadd.f32 %v4705, %v4734
      %v4745 = vadd.f32 %v4706, %v4734
      %v4746 = vadd.f32 %v4707, %v4734
      %v4747 = vadd.f32 %v4708, %v4734
      %v4748 = vadd.f32 %v4709, %v4734
      %v4749 = vadd.f32 %v4710, %v4734
      %v4750 = vadd.f32 %v4711, %v4734
      %v4751 = vadd.f32 %v4712, %v4734
      %v4752 = vadd.f32 %v4713, %v4734
      %v4753 = vadd.f32 %v4714, %v4734
      %v4754 = vadd.f32 %v4715, %v4734
      %v4755 = vadd.f32 %v4716, %v4734
      %v4756 = vadd.f32 %v4717, %v4734
      %v4757 = vadd.f32 %v4718, %v4734
      %v4758 = vadd.f32 %v4719, %v4734
      %v4759 = vadd.f32 %v4720, %v4734
      %v4760 = vadd.f32 %v4721, %v4734
      %v4761 = vadd.f32 %v4722, %v4734
      %v4762 = vadd.f32 %v4723, %v4734
      %v4763 = vadd.f32 %v4724, %v4734
      %v4764 = vadd.f32 %v4725, %v4734
      %v4765 = vadd.f32 %v4726, %v4734
      %v4766 = vadd.f32 %v4727, %v4734
      %v4767 = vadd.f32 %v4728, %v4734
      %v4768 = vadd.f32 %v4736, %v4737
      %v4769 = vadd.f32 %v4768, %v4738
      %v4770 = vadd.f32 %v4769, %v4739
      %v4771 = vadd.f32 %v4770, %v4740
      %v4772 = vadd.f32 %v4771, %v4741
      %v4773 = vadd.f32 %v4772, %v4742
      %v4774 = vadd.f32 %v4773, %v4743
      %v4775 = vadd.f32 %v4774, %v4744
      %v4776 = vadd.f32 %v4775, %v4745
      %v4777 = vadd.f32 %v4776, %v4746
      %v4778 = vadd.f32 %v4777, %v4747
      %v4779 = vadd.f32 %v4778, %v4748
      %v4780 = vadd.f32 %v4779, %v4749
      %v4781 = vadd.f32 %v4780, %v4750
      %v4782 = vadd.f32 %v4781, %v4751
      %v4783 = vadd.f32 %v4782, %v4752
      %v4784 = vadd.f32 %v4783, %v4753
      %v4785 = vadd.f32 %v4784, %v4754
      %v4786 = vadd.f32 %v4785, %v4755
      %v4787 = vadd.f32 %v4786, %v4756
      %v4788 = vadd.f32 %v4787, %v4757
      %v4789 = vadd.f32 %v4788, %v4758
      %v4790 = vadd.f32 %v4789, %v4759
      %v4791 = vadd.f32 %v4790, %v4760
      %v4792 = vadd.f32 %v4791, %v4761
      %v4793 = vadd.f32 %v4792, %v4762
      %v4794 = vadd.f32 %v4793, %v4763
      %v4795 = vadd.f32 %v4794, %v4764
      %v4796 = vadd.f32 %v4795, %v4765
      %v4797 = vadd.f32 %v4796, %v4766
      %v4798 = vadd.f32 %v4797, %v4767
      %v4799 = vrot.slane %v4798, 4
      %v4800 = vadd.f32 %v4798, %v4799
      %v4801 = vrot.slane %v4800, 2
      %v4802 = vadd.f32 %v4800, %v4801
      %v4803 = vrot.slane %v4802, 1
      %v4804 = vadd.f32 %v4802, %v4803
      %4805 = vst [vmem:[%s168] sm:$0x1] %v4804
      %v4806 = vmul.f32 %v4736, %v4736
      %v4807 = vmul.f32 %v4737, %v4737
      %v4808 = vmul.f32 %v4738, %v4738
      %v4809 = vmul.f32 %v4739, %v4739
      %v4810 = vmul.f32 %v4740, %v4740
      %v4811 = vmul.f32 %v4741, %v4741
      %v4812 = vmul.f32 %v4742, %v4742
      %v4813 = vmul.f32 %v4743, %v4743
      %v4814 = vmul.f32 %v4744, %v4744
      %v4815 = vmul.f32 %v4745, %v4745
      %v4816 = vmul.f32 %v4746, %v4746
      %v4817 = vmul.f32 %v4747, %v4747
      %v4818 = vmul.f32 %v4748, %v4748
      %v4819 = vmul.f32 %v4749, %v4749
      %v4820 = vmul.f32 %v4750, %v4750
      %v4821 = vmul.f32 %v4751, %v4751
      %v4822 = vmul.f32 %v4752, %v4752
      %v4823 = vmul.f32 %v4753, %v4753
      %v4824 = vmul.f32 %v4754, %v4754
      %v4825 = vmul.f32 %v4755, %v4755
      %v4826 = vmul.f32 %v4756, %v4756
      %v4827 = vmul.f32 %v4757, %v4757
      %v4828 = vmul.f32 %v4758, %v4758
      %v4829 = vmul.f32 %v4759, %v4759
      %v4830 = vmul.f32 %v4760, %v4760
      %v4831 = vmul.f32 %v4761, %v4761
      %v4832 = vmul.f32 %v4762, %v4762
      %v4833 = vmul.f32 %v4763, %v4763
      %v4834 = vmul.f32 %v4764, %v4764
      %v4835 = vmul.f32 %v4765, %v4765
      %v4836 = vmul.f32 %v4766, %v4766
      %v4837 = vmul.f32 %v4767, %v4767
      %v4838 = vadd.f32 %v4806, %v4807
      %v4839 = vadd.f32 %v4838, %v4808
      %v4840 = vadd.f32 %v4839, %v4809
      %v4841 = vadd.f32 %v4840, %v4810
      %v4842 = vadd.f32 %v4841, %v4811
      %v4843 = vadd.f32 %v4842, %v4812
      %v4844 = vadd.f32 %v4843, %v4813
      %v4845 = vadd.f32 %v4844, %v4814
      %v4846 = vadd.f32 %v4845, %v4815
      %v4847 = vadd.f32 %v4846, %v4816
      %v4848 = vadd.f32 %v4847, %v4817
      %v4849 = vadd.f32 %v4848, %v4818
      %v4850 = vadd.f32 %v4849, %v4819
      %v4851 = vadd.f32 %v4850, %v4820
      %v4852 = vadd.f32 %v4851, %v4821
      %v4853 = vadd.f32 %v4852, %v4822
      %v4854 = vadd.f32 %v4853, %v4823
      %v4855 = vadd.f32 %v4854, %v4824
      %v4856 = vadd.f32 %v4855, %v4825
      %v4857 = vadd.f32 %v4856, %v4826
      %v4858 = vadd.f32 %v4857, %v4827
      %v4859 = vadd.f32 %v4858, %v4828
      %v4860 = vadd.f32 %v4859, %v4829
      %v4861 = vadd.f32 %v4860, %v4830
      %v4862 = vadd.f32 %v4861, %v4831
      %v4863 = vadd.f32 %v4862, %v4832
      %v4864 = vadd.f32 %v4863, %v4833
      %v4865 = vadd.f32 %v4864, %v4834
      %v4866 = vadd.f32 %v4865, %v4835
      %v4867 = vadd.f32 %v4866, %v4836
      %v4868 = vadd.f32 %v4867, %v4837
      %v4869 = vrot.slane %v4868, 4
      %v4870 = vadd.f32 %v4868, %v4869
      %v4871 = vrot.slane %v4870, 2
      %v4872 = vadd.f32 %v4870, %v4871
      %v4873 = vrot.slane %v4872, 1
      %v4874 = vadd.f32 %v4872, %v4873
      %4875 = vst [vmem:[%s168 + $0x1] sm:$0x1] %v4874
      %p4876 = scmp.lt.s32.totalorder %s14, 1
      %s4877 = scalar_select %p4876, %s14, 1
      %s4878 = smul.addr %s4877, 2
      %s4879 = scalar_lea.vmem %s3, %s4878
      // Predicated region
      $region33: #{model_section_forward.2} parent=31 // pred_check
        %p4880 = pneg %p100
      $region34: #{model_section_forward.2} parent=31 // pred_check_branch
        %4882 = sbr.rel (%p4880) target = $region36
      $region35: #{model_section_forward.2} parent=31 // pred_region
        _
      $region36: #{model_section_forward.2} parent=31 // pred_fallthru
        _
    $region32: #{model_section_forward.2} parent=5 // pred_fallthru
      _
    %p4883 = scmp.le.s32.totalorder 2, %s9
    // Predicated region
    $region37: #{model_section_forward.2} parent=5 // pred_check
      %p4884 = pneg %p4883
    $region38: #{model_section_forward.2} parent=5 // pred_check_branch
      %4886 = sbr.rel (%p4884) target = $region40
    $region39: #{model_section_forward.2} parent=5 // pred_region
      %s4887 = ssub.s32 %s9, 2
      // Predicated region
      $region41: #{model_section_forward.2} parent=39 // pred_check
        %p4888 = pneg %p106
      $region42: #{model_section_forward.2} parent=39 // pred_check_branch
        %4890 = sbr.rel (%p4888) target = $region44
      $region43: #{model_section_forward.2} parent=39 // pred_region
        %p4891 = scmp.lt.s32.totalorder %s15, 1
        %s4892 = scalar_select %p4891, %s15, 1
        %s4893 = smul.addr %s4892, 2
        %s4894 = scalar_lea.vmem %s3, %s4893
      $region44: #{model_section_forward.2} parent=39 // pred_fallthru
        _
    $region40: #{model_section_forward.2} parent=5 // pred_fallthru
      _
  $region6: #{model_section_forward.2} parent=0 // loop_footer
    %s13 = sadd.s32 1, %s9
  $region7: #{model_section_forward.2} parent=0 // loop_footer_branch
    %8 = sbr.rel target = $region3
  $region8: #{model_section_forward.2} parent=0 // loop_exit
    _

// kernel: model_section_forward.3
$region0: #{model_section_forward.3}
  #allocation0 [shape = 'u32[]', space=smem, size = 0x4, offset = 0x4, fixed_abs, tag = 'smem constant byte address 0x4 - core index']
  #allocation1 [shape = 'u32[144,128]{1,0:T(1,128)}', space=vmem, size = 0x12000, scoped, tag = 'internal scratch']
  #allocation2 [shape = 'f32[128,128]{1,0:T(8,128)}', space=vmem, size = 0x10000, scoped, tag = 'scratch operand']
  %s0 = inlined_call_operand.vmem [shape: bf16[2,18,18,4], index: 0, kind: input, shape index: {}]
  %s1 = inlined_call_operand.vmem [shape: bf16[9,4,128], index: 1, kind: input, shape index: {}]
  %s2 = inlined_call_operand.vmem [shape: f32[1,128], index: 2, kind: input, shape index: {}]
  %s3 = inlined_call_operand.vmem [shape: f32[1,128], index: 3, kind: input, shape index: {}]
  %s4 = inlined_call_operand.vmem [shape: f32[1,128], index: 4, kind: input, shape index: {}]
  %s5 = inlined_call_operand.vmem [shape: f32[2,8,8,128], index: 5, kind: output, shape index: {}]
  %s6 = sld [smem:[#allocation0]]
  $region53: #{model_section_forward.3} parent=0
    _
  %s8 = ssub.s32 1, %s6
  %s9 = scalar_select 0, %s8, %s6
  loop: start=0, step=1, limit=4
  $region2: #{model_section_forward.3} parent=0 // loop_pre_header
    _
  $region3: #{model_section_forward.3} parent=0 // loop_header
    %s11 = sphi 0, %s15
    %p12 = scmp.ge.s32.totalorder %s11, 4
    %s21 = sphi 0, %s23
    %s24 = sphi 0, %s21
    %s25 = sphi 0, %s24
    %s41 = sphi 0, %s25
    %s45 = sphi 0, %s45
    %s47 = sphi 0, %s45
    %s48 = sphi 0, %s47
    %s62 = sphi 0, %s48
    %s66 = sphi 0, %s66
    %s68 = sphi 0, %s66
    %s69 = sphi 0, %s68
    %s83 = sphi 0, %s69
    %s87 = sphi 0, %s87
    %s89 = sphi 0, %s87
    %s90 = sphi 0, %s89
    %s104 = sphi 0, %s90
    %s108 = sphi 0, %s108
    %s110 = sphi 0, %s108
    %s111 = sphi 0, %s110
    %s125 = sphi 0, %s111
    %s131 = sphi 0, %s133
    %s134 = sphi 0, %s131
    %s135 = sphi 0, %s134
    %s151 = sphi 0, %s135
  $region4: #{model_section_forward.3} parent=0 // loop_header_branch
    %14 = sbr.rel (%p12) target = $region8
  $region5: #{model_section_forward.3} parent=0 // loop_body
    %s16 = ssub.s32 %s11, 1
    %s17 = ssub.s32 %s11, 2
    %s18 = sadd.s32 %s11, 1
    %s19 = ssub.s32 %s11, %s18
    %p20 = scmp.eq.s32.totalorder %s19, 0
    %s22 = sadd.s32 %s21, 1
    %s23 = scalar_select %p20, %s21, %s22
    %p26 = pneg %p20
    %p27 = scmp.eq.s32.totalorder %s11, 1
    %p28 = por %p26, %p27
    %p29 = scmp.ne.s32.totalorder %s21, %s24
    %p30 = scmp.eq.s32.totalorder %s11, 0
    %p31 = por %p29, %p30
    %p32 = scmp.ne.s32.totalorder %s21, %s24
    %p33 = scmp.eq.s32.totalorder %s16, 1
    %p34 = por %p32, %p33
    %p35 = scmp.ne.s32.totalorder %s24, %s25
    %p36 = scmp.eq.s32.totalorder %s16, 0
    %p37 = por %p35, %p36
    %p38 = scmp.ne.s32.totalorder %s24, %s25
    %p39 = scmp.eq.s32.totalorder %s17, 1
    %p40 = por %p38, %p39
    %p42 = scmp.ne.s32.totalorder %s25, %s41
    %p43 = scmp.eq.s32.totalorder %s17, 0
    %p44 = por %p42, %p43
    %s46 = sadd.s32 %s45, 1
    %p49 = scmp.eq.s32.totalorder %s11, 1
    %p50 = scmp.ne.s32.totalorder %s45, %s47
    %p51 = scmp.eq.s32.totalorder %s11, 0
    %p52 = por %p50, %p51
    %p53 = scmp.ne.s32.totalorder %s45, %s47
    %p54 = scmp.eq.s32.totalorder %s16, 1
    %p55 = por %p53, %p54
    %p56 = scmp.ne.s32.totalorder %s47, %s48
    %p57 = scmp.eq.s32.totalorder %s16, 0
    %p58 = por %p56, %p57
    %p59 = scmp.ne.s32.totalorder %s47, %s48
    %p60 = scmp.eq.s32.totalorder %s17, 1
    %p61 = por %p59, %p60
    %p63 = scmp.ne.s32.totalorder %s48, %s62
    %p64 = scmp.eq.s32.totalorder %s17, 0
    %p65 = por %p63, %p64
    %s67 = sadd.s32 %s66, 1
    %p70 = scmp.eq.s32.totalorder %s11, 1
    %p71 = scmp.ne.s32.totalorder %s66, %s68
    %p72 = scmp.eq.s32.totalorder %s11, 0
    %p73 = por %p71, %p72
    %p74 = scmp.ne.s32.totalorder %s66, %s68
    %p75 = scmp.eq.s32.totalorder %s16, 1
    %p76 = por %p74, %p75
    %p77 = scmp.ne.s32.totalorder %s68, %s69
    %p78 = scmp.eq.s32.totalorder %s16, 0
    %p79 = por %p77, %p78
    %p80 = scmp.ne.s32.totalorder %s68, %s69
    %p81 = scmp.eq.s32.totalorder %s17, 1
    %p82 = por %p80, %p81
    %p84 = scmp.ne.s32.totalorder %s69, %s83
    %p85 = scmp.eq.s32.totalorder %s17, 0
    %p86 = por %p84, %p85
    %s88 = sadd.s32 %s87, 1
    %p91 = scmp.eq.s32.totalorder %s11, 1
    %p92 = scmp.ne.s32.totalorder %s87, %s89
    %p93 = scmp.eq.s32.totalorder %s11, 0
    %p94 = por %p92, %p93
    %p95 = scmp.ne.s32.totalorder %s87, %s89
    %p96 = scmp.eq.s32.totalorder %s16, 1
    %p97 = por %p95, %p96
    %p98 = scmp.ne.s32.totalorder %s89, %s90
    %p99 = scmp.eq.s32.totalorder %s16, 0
    %p100 = por %p98, %p99
    %p101 = scmp.ne.s32.totalorder %s89, %s90
    %p102 = scmp.eq.s32.totalorder %s17, 1
    %p103 = por %p101, %p102
    %p105 = scmp.ne.s32.totalorder %s90, %s104
    %p106 = scmp.eq.s32.totalorder %s17, 0
    %p107 = por %p105, %p106
    %s109 = sadd.s32 %s108, 1
    %p112 = scmp.eq.s32.totalorder %s11, 1
    %p113 = scmp.ne.s32.totalorder %s108, %s110
    %p114 = scmp.eq.s32.totalorder %s11, 0
    %p115 = por %p113, %p114
    %p116 = scmp.ne.s32.totalorder %s108, %s110
    %p117 = scmp.eq.s32.totalorder %s16, 1
    %p118 = por %p116, %p117
    %p119 = scmp.ne.s32.totalorder %s110, %s111
    %p120 = scmp.eq.s32.totalorder %s16, 0
    %p121 = por %p119, %p120
    %p122 = scmp.ne.s32.totalorder %s110, %s111
    %p123 = scmp.eq.s32.totalorder %s17, 1
    %p124 = por %p122, %p123
    %p126 = scmp.ne.s32.totalorder %s111, %s125
    %p127 = scmp.eq.s32.totalorder %s17, 0
    %p128 = por %p126, %p127
    %s129 = ssub.s32 %s11, %s18
    %p130 = scmp.eq.s32.totalorder %s129, 0
    %s132 = sadd.s32 %s131, 1
    %s133 = scalar_select %p130, %s131, %s132
    %p136 = pneg %p130
    %p137 = scmp.eq.s32.totalorder %s11, 1
    %p138 = por %p136, %p137
    %p139 = scmp.ne.s32.totalorder %s131, %s134
    %p140 = scmp.eq.s32.totalorder %s11, 0
    %p141 = por %p139, %p140
    %p142 = scmp.ne.s32.totalorder %s131, %s134
    %p143 = scmp.eq.s32.totalorder %s16, 1
    %p144 = por %p142, %p143
    %p145 = scmp.ne.s32.totalorder %s134, %s135
    %p146 = scmp.eq.s32.totalorder %s16, 0
    %p147 = por %p145, %p146
    %p148 = scmp.ne.s32.totalorder %s134, %s135
    %p149 = scmp.eq.s32.totalorder %s17, 1
    %p150 = por %p148, %p149
    %p152 = scmp.ne.s32.totalorder %s135, %s151
    %p153 = scmp.eq.s32.totalorder %s17, 0
    %p154 = por %p152, %p153
    %p155 = scmp.le.s32.totalorder 1, %s11
    %p156 = scmp.lt.s32.totalorder %s11, 3
    %p157 = pnand %p155, %p156
    %p158 = pneg %p157
    // Predicated region
    $region9: #{model_section_forward.3} parent=5 // pred_check
      _
    $region10: #{model_section_forward.3} parent=5 // pred_check_branch
      %160 = sbr.rel (%p157) target = $region12
    $region11: #{model_section_forward.3} parent=5 // pred_region
      %s161 = ssub.s32 %s11, 1
      // Predicated region
      $region13: #{model_section_forward.3} parent=11 // pred_check
        %p162 = pneg %p58
      $region14: #{model_section_forward.3} parent=11 // pred_check_branch
        %164 = sbr.rel (%p162) target = $region16
      $region15: #{model_section_forward.3} parent=11 // pred_region
        _
      $region16: #{model_section_forward.3} parent=11 // pred_fallthru
        _
      // Predicated region
      $region17: #{model_section_forward.3} parent=11 // pred_check
        %p165 = pneg %p79
      $region18: #{model_section_forward.3} parent=11 // pred_check_branch
        %167 = sbr.rel (%p165) target = $region20
      $region19: #{model_section_forward.3} parent=11 // pred_region
        _
      $region20: #{model_section_forward.3} parent=11 // pred_fallthru
        _
      // Predicated region
      $region21: #{model_section_forward.3} parent=11 // pred_check
        %p168 = pneg %p100
      $region22: #{model_section_forward.3} parent=11 // pred_check_branch
        %170 = sbr.rel (%p168) target = $region24
      $region23: #{model_section_forward.3} parent=11 // pred_region
        _
      $region24: #{model_section_forward.3} parent=11 // pred_fallthru
        _
      // Predicated region
      $region25: #{model_section_forward.3} parent=11 // pred_check
        %p171 = pneg %p121
      $region26: #{model_section_forward.3} parent=11 // pred_check_branch
        %173 = sbr.rel (%p171) target = $region28
      $region27: #{model_section_forward.3} parent=11 // pred_region
        _
      $region28: #{model_section_forward.3} parent=11 // pred_fallthru
        _
    $region12: #{model_section_forward.3} parent=5 // pred_fallthru
      _
    %p174 = scmp.lt.s32.totalorder %s11, 2
    // Predicated region
    $region29: #{model_section_forward.3} parent=5 // pred_check
      %p175 = pneg %p174
    $region30: #{model_section_forward.3} parent=5 // pred_check_branch
      %177 = sbr.rel (%p175) target = $region32
    $region31: #{model_section_forward.3} parent=5 // pred_region
      // Predicated region
      $region33: #{model_section_forward.3} parent=31 // pred_check
        %p178 = pneg %p31
      $region34: #{model_section_forward.3} parent=31 // pred_check_branch
        %180 = sbr.rel (%p178) target = $region36
      $region35: #{model_section_forward.3} parent=31 // pred_region
        %p181 = scmp.lt.s32.totalorder %s11, 1
        %s182 = scalar_select %p181, %s11, 1
        %s183 = smul.addr %s182, 54
        %s184 = smul.addr %s183, 4
        %s185 = scalar_lea.vmem %s0, %s184
      $region36: #{model_section_forward.3} parent=31 // pred_fallthru
        _
    $region32: #{model_section_forward.3} parent=5 // pred_fallthru
      _
    %p186 = scmp.le.s32.totalorder 1, %s11
    %p187 = scmp.lt.s32.totalorder %s11, 3
    %p188 = pnand %p186, %p187
    %p189 = pneg %p188
    // Predicated region
    $region37: #{model_section_forward.3} parent=5 // pred_check
      _
    $region38: #{model_section_forward.3} parent=5 // pred_check_branch
      %191 = sbr.rel (%p188) target = $region40
    $region39: #{model_section_forward.3} parent=5 // pred_region
      %s192 = ssub.s32 %s11, 1
      %p193 = scmp.lt.s32.totalorder %s16, 1
      %s194 = scalar_select %p193, %s16, 1
      %s195 = smul.addr %s194, 54
      %s196 = smul.addr %s195, 4
      %s197 = scalar_lea.vmem %s0, %s196
      %p198 = pneg %p37
      %p199 = pneg %p34
      %p200 = pneg %p58
      %p201 = pneg %p55
      %p202 = pneg %p79
      %p203 = pneg %p76
      %p204 = pneg %p100
      %p205 = pneg %p97
      %p206 = pneg %p121
      %p207 = pneg %p118
      %p208 = pneg %p147
      %p209 = pneg %p144
      %p210 = scmp.lt.s32.totalorder %s16, 1
      %s211 = scalar_select %p210, %s16, 1
      %s212 = smul.addr %s211, 8
      %s213 = smul.addr %s212, 8
      %s214 = scalar_lea.vmem %s5, %s213
      %p215 = scmp.lt.s32.totalorder %s16, 1
      %s216 = scalar_select %p215, %s16, 1
      %s217 = smul.addr %s216, 54
      %s218 = smul.addr %s217, 4
      %s219 = scalar_lea.vmem %s0, %s218
      %p220 = scmp.lt.s32.totalorder %s16, 1
      %s221 = scalar_select %p220, %s16, 1
      %s222 = smul.addr %s221, 8
      %s223 = smul.addr %s222, 8
      %s224 = scalar_lea.vmem %s5, %s223
      %v226 = vld [vmem:[%s219] sm:$0xf]
      %v227 = vld [vmem:[%s219 + $0x4] sm:$0xf]
      %v228 = vld [vmem:[%s219 + $0xc] sm:$0xf]
      %v229 = vld [vmem:[%s219 + $0x10] sm:$0xf]
      %v230 = vld [vmem:[%s219 + $0x18] sm:$0xf]
      %v231 = vld [vmem:[%s219 + $0x1c] sm:$0xf]
      %v232 = vld [vmem:[%s219 + $0x24] sm:$0xf]
      %v233 = vld [vmem:[%s219 + $0x28] sm:$0xf]
      %v234 = vld [vmem:[%s219 + $0x30] sm:$0xf]
      %v235 = vld [vmem:[%s219 + $0x34] sm:$0xf]
      %v236 = vld [vmem:[%s219 + $0x3c] sm:$0xf]
      %v237 = vld [vmem:[%s219 + $0x40] sm:$0xf]
      %v238 = vld [vmem:[%s219 + $0x48] sm:$0xf]
      %v239 = vld [vmem:[%s219 + $0x4c] sm:$0xf]
      %v240 = vld [vmem:[%s219 + $0x54] sm:$0xf]
      %v241 = vld [vmem:[%s219 + $0x58] sm:$0xf]
      %v242 = vld [vmem:[%s219 + $0x60] sm:$0xf]
      %v243 = vld [vmem:[%s219 + $0x64] sm:$0xf]
      %v244 = vld [vmem:[%s219 + $0x6c] sm:$0xf]
      %v245 = vld [vmem:[%s219 + $0x70] sm:$0xf]
      %v246 = vld [vmem:[%s219 + $0x78] sm:$0xf]
      %v247 = vld [vmem:[%s219 + $0x7c] sm:$0xf]
      %v248 = vld [vmem:[%s219 + $0x84] sm:$0xf]
      %v249 = vld [vmem:[%s219 + $0x88] sm:$0xf]
      %v250 = vld [vmem:[%s219 + $0x90] sm:$0xf]
      %v251 = vld [vmem:[%s219 + $0x94] sm:$0xf]
      %v252 = vld [vmem:[%s219 + $0x9c] sm:$0xf]
      %v253 = vld [vmem:[%s219 + $0xa0] sm:$0xf]
      %v254 = vld [vmem:[%s219 + $0xa8] sm:$0xf]
      %v255 = vld [vmem:[%s219 + $0xac] sm:$0xf]
      %v256 = vld [vmem:[%s219 + $0xb4] sm:$0xf]
      %v257 = vld [vmem:[%s219 + $0xb8] sm:$0xf]
      %v258 = vld [vmem:[%s1] sm:$0x3]
      %v259 = vld [vmem:[%s219 + $0x8] sm:$0x1]
      %v260 = vld [vmem:[%s219 + $0x14] sm:$0x1]
      %v261 = vld [vmem:[%s219 + $0x20] sm:$0x1]
      %v262 = vld [vmem:[%s219 + $0x2c] sm:$0x1]
      %v263 = vld [vmem:[%s219 + $0x38] sm:$0x1]
      %v264 = vld [vmem:[%s219 + $0x44] sm:$0x1]
      %v265 = vld [vmem:[%s219 + $0x50] sm:$0x1]
      %v266 = vld [vmem:[%s219 + $0x5c] sm:$0x1]
      %v267 = vld [vmem:[%s219 + $0x68] sm:$0x1]
      %v268 = vld [vmem:[%s219 + $0x74] sm:$0x1]
      %v269 = vld [vmem:[%s219 + $0x80] sm:$0x1]
      %v270 = vld [vmem:[%s219 + $0x8c] sm:$0x1]
      %v271 = vld [vmem:[%s219 + $0x98] sm:$0x1]
      %v272 = vld [vmem:[%s219 + $0xa4] sm:$0x1]
      %v273 = vld [vmem:[%s219 + $0xb0] sm:$0x1]
      %v274 = vld [vmem:[%s219 + $0xbc] sm:$0x1]
      %vm275 = vsmask.f32 3328
      %vm276 = vsmask.f32 7440
      %vm277 = vmor %vm275, %vm276
      %v279 = vshrl.u32 %v226, 16
      %v281 = vrot.slane %v279, 4
      %v282 = vshll.u32 %v226, 16
      %v284 = vrot.slane %v282, 5
      %v285 = vor.u32 %v281, %v284
      %v286 = vrot.slane %v285, 4
      %v288 = vshll.u32 %v227, 16
      %v290 = vrot.slane %v288, 5
      %v291 = vsel %vm277, %v286, %v290
      %v292 = vshrl.u32 %v227, 16
      %v294 = vrot.slane %v292, 4
      %v295 = vor.u32 %v294, %v290
      %v296 = vrot.slane %v295, 4
      %v298 = vshll.u32 %v259, 16
      %v300 = vrot.slane %v298, 5
      %v301 = vsel %vm277, %v296, %v300
      %v303 = vshrl.u32 %v228, 16
      %v305 = vrot.slane %v303, 4
      %v306 = vshll.u32 %v228, 16
      %v308 = vrot.slane %v306, 5
      %v309 = vor.u32 %v305, %v308
      %v310 = vrot.slane %v309, 4
      %v312 = vshll.u32 %v229, 16
      %v314 = vrot.slane %v312, 5
      %v315 = vsel %vm277, %v310, %v314
      %v316 = vshrl.u32 %v229, 16
      %v318 = vrot.slane %v316, 4
      %v319 = vor.u32 %v318, %v314
      %v320 = vrot.slane %v319, 4
      %v322 = vshll.u32 %v260, 16
      %v324 = vrot.slane %v322, 5
      %v325 = vsel %vm277, %v320, %v324
      %v327 = vshrl.u32 %v230, 16
      %v329 = vrot.slane %v327, 4
      %v330 = vshll.u32 %v230, 16
      %v332 = vrot.slane %v330, 5
      %v333 = vor.u32 %v329, %v332
      %v334 = vrot.slane %v333, 4
      %v336 = vshll.u32 %v231, 16
      %v338 = vrot.slane %v336, 5
      %v339 = vsel %vm277, %v334, %v338
      %v340 = vshrl.u32 %v231, 16
      %v342 = vrot.slane %v340, 4
      %v343 = vor.u32 %v342, %v338
      %v344 = vrot.slane %v343, 4
      %v346 = vshll.u32 %v261, 16
      %v348 = vrot.slane %v346, 5
      %v349 = vsel %vm277, %v344, %v348
      %v351 = vshrl.u32 %v232, 16
      %v353 = vrot.slane %v351, 4
      %v354 = vshll.u32 %v232, 16
      %v356 = vrot.slane %v354, 5
      %v357 = vor.u32 %v353, %v356
      %v358 = vrot.slane %v357, 4
      %v360 = vshll.u32 %v233, 16
      %v362 = vrot.slane %v360, 5
      %v363 = vsel %vm277, %v358, %v362
      %v364 = vshrl.u32 %v233, 16
      %v366 = vrot.slane %v364, 4
      %v367 = vor.u32 %v366, %v362
      %v368 = vrot.slane %v367, 4
      %v370 = vshll.u32 %v262, 16
      %v372 = vrot.slane %v370, 5
      %v373 = vsel %vm277, %v368, %v372
      %v375 = vshrl.u32 %v234, 16
      %v377 = vrot.slane %v375, 4
      %v378 = vshll.u32 %v234, 16
      %v380 = vrot.slane %v378, 5
      %v381 = vor.u32 %v377, %v380
      %v382 = vrot.slane %v381, 4
      %v384 = vshll.u32 %v235, 16
      %v386 = vrot.slane %v384, 5
      %v387 = vsel %vm277, %v382, %v386
      %v388 = vshrl.u32 %v235, 16
      %v390 = vrot.slane %v388, 4
      %v391 = vor.u32 %v390, %v386
      %v392 = vrot.slane %v391, 4
      %v394 = vshll.u32 %v263, 16
      %v396 = vrot.slane %v394, 5
      %v397 = vsel %vm277, %v392, %v396
      %v399 = vshrl.u32 %v236, 16
      %v401 = vrot.slane %v399, 4
      %v402 = vshll.u32 %v236, 16
      %v404 = vrot.slane %v402, 5
      %v405 = vor.u32 %v401, %v404
      %v406 = vrot.slane %v405, 4
      %v408 = vshll.u32 %v237, 16
      %v410 = vrot.slane %v408, 5
      %v411 = vsel %vm277, %v406, %v410
      %v412 = vshrl.u32 %v237, 16
      %v414 = vrot.slane %v412, 4
      %v415 = vor.u32 %v414, %v410
      %v416 = vrot.slane %v415, 4
      %v418 = vshll.u32 %v264, 16
      %v420 = vrot.slane %v418, 5
      %v421 = vsel %vm277, %v416, %v420
      %v423 = vshrl.u32 %v238, 16
      %v425 = vrot.slane %v423, 4
      %v426 = vshll.u32 %v238, 16
      %v428 = vrot.slane %v426, 5
      %v429 = vor.u32 %v425, %v428
      %v430 = vrot.slane %v429, 4
      %v432 = vshll.u32 %v239, 16
      %v434 = vrot.slane %v432, 5
      %v435 = vsel %vm277, %v430, %v434
      %v436 = vshrl.u32 %v239, 16
      %v438 = vrot.slane %v436, 4
      %v439 = vor.u32 %v438, %v434
      %v440 = vrot.slane %v439, 4
      %v442 = vshll.u32 %v265, 16
      %v444 = vrot.slane %v442, 5
      %v445 = vsel %vm277, %v440, %v444
      %v447 = vshrl.u32 %v240, 16
      %v449 = vrot.slane %v447, 4
      %v450 = vshll.u32 %v240, 16
      %v452 = vrot.slane %v450, 5
      %v453 = vor.u32 %v449, %v452
      %v454 = vrot.slane %v453, 4
      %v456 = vshll.u32 %v241, 16
      %v458 = vrot.slane %v456, 5
      %v459 = vsel %vm277, %v454, %v458
      %v460 = vshrl.u32 %v241, 16
      %v462 = vrot.slane %v460, 4
      %v463 = vor.u32 %v462, %v458
      %v464 = vrot.slane %v463, 4
      %v466 = vshll.u32 %v266, 16
      %v468 = vrot.slane %v466, 5
      %v469 = vsel %vm277, %v464, %v468
      %v471 = vshrl.u32 %v242, 16
      %v473 = vrot.slane %v471, 4
      %v474 = vshll.u32 %v242, 16
      %v476 = vrot.slane %v474, 5
      %v477 = vor.u32 %v473, %v476
      %v478 = vrot.slane %v477, 4
      %v480 = vshll.u32 %v243, 16
      %v482 = vrot.slane %v480, 5
      %v483 = vsel %vm277, %v478, %v482
      %v484 = vshrl.u32 %v243, 16
      %v486 = vrot.slane %v484, 4
      %v487 = vor.u32 %v486, %v482
      %v488 = vrot.slane %v487, 4
      %v490 = vshll.u32 %v267, 16
      %v492 = vrot.slane %v490, 5
      %v493 = vsel %vm277, %v488, %v492
      %v495 = vshrl.u32 %v244, 16
      %v497 = vrot.slane %v495, 4
      %v498 = vshll.u32 %v244, 16
      %v500 = vrot.slane %v498, 5
      %v501 = vor.u32 %v497, %v500
      %v502 = vrot.slane %v501, 4
      %v504 = vshll.u32 %v245, 16
      %v506 = vrot.slane %v504, 5
      %v507 = vsel %vm277, %v502, %v506
      %v508 = vshrl.u32 %v245, 16
      %v510 = vrot.slane %v508, 4
      %v511 = vor.u32 %v510, %v506
      %v512 = vrot.slane %v511, 4
      %v514 = vshll.u32 %v268, 16
      %v516 = vrot.slane %v514, 5
      %v517 = vsel %vm277, %v512, %v516
      %v519 = vshrl.u32 %v246, 16
      %v521 = vrot.slane %v519, 4
      %v522 = vshll.u32 %v246, 16
      %v524 = vrot.slane %v522, 5
      %v525 = vor.u32 %v521, %v524
      %v526 = vrot.slane %v525, 4
      %v528 = vshll.u32 %v247, 16
      %v530 = vrot.slane %v528, 5
      %v531 = vsel %vm277, %v526, %v530
      %v532 = vshrl.u32 %v247, 16
      %v534 = vrot.slane %v532, 4
      %v535 = vor.u32 %v534, %v530
      %v536 = vrot.slane %v535, 4
      %v538 = vshll.u32 %v269, 16
      %v540 = vrot.slane %v538, 5
      %v541 = vsel %vm277, %v536, %v540
      %v543 = vshrl.u32 %v248, 16
      %v545 = vrot.slane %v543, 4
      %v546 = vshll.u32 %v248, 16
      %v548 = vrot.slane %v546, 5
      %v549 = vor.u32 %v545, %v548
      %v550 = vrot.slane %v549, 4
      %v552 = vshll.u32 %v249, 16
      %v554 = vrot.slane %v552, 5
      %v555 = vsel %vm277, %v550, %v554
      %v556 = vshrl.u32 %v249, 16
      %v558 = vrot.slane %v556, 4
      %v559 = vor.u32 %v558, %v554
      %v560 = vrot.slane %v559, 4
      %v562 = vshll.u32 %v270, 16
      %v564 = vrot.slane %v562, 5
      %v565 = vsel %vm277, %v560, %v564
      %v567 = vshrl.u32 %v250, 16
      %v569 = vrot.slane %v567, 4
      %v570 = vshll.u32 %v250, 16
      %v572 = vrot.slane %v570, 5
      %v573 = vor.u32 %v569, %v572
      %v574 = vrot.slane %v573, 4
      %v576 = vshll.u32 %v251, 16
      %v578 = vrot.slane %v576, 5
      %v579 = vsel %vm277, %v574, %v578
      %v580 = vshrl.u32 %v251, 16
      %v582 = vrot.slane %v580, 4
      %v583 = vor.u32 %v582, %v578
      %v584 = vrot.slane %v583, 4
      %v586 = vshll.u32 %v271, 16
      %v588 = vrot.slane %v586, 5
      %v589 = vsel %vm277, %v584, %v588
      %v591 = vshrl.u32 %v252, 16
      %v593 = vrot.slane %v591, 4
      %v594 = vshll.u32 %v252, 16
      %v596 = vrot.slane %v594, 5
      %v597 = vor.u32 %v593, %v596
      %v598 = vrot.slane %v597, 4
      %v600 = vshll.u32 %v253, 16
      %v602 = vrot.slane %v600, 5
      %v603 = vsel %vm277, %v598, %v602
      %v604 = vshrl.u32 %v253, 16
      %v606 = vrot.slane %v604, 4
      %v607 = vor.u32 %v606, %v602
      %v608 = vrot.slane %v607, 4
      %v610 = vshll.u32 %v272, 16
      %v612 = vrot.slane %v610, 5
      %v613 = vsel %vm277, %v608, %v612
      %v615 = vshrl.u32 %v254, 16
      %v617 = vrot.slane %v615, 4
      %v618 = vshll.u32 %v254, 16
      %v620 = vrot.slane %v618, 5
      %v621 = vor.u32 %v617, %v620
      %v622 = vrot.slane %v621, 4
      %v624 = vshll.u32 %v255, 16
      %v626 = vrot.slane %v624, 5
      %v627 = vsel %vm277, %v622, %v626
      %v628 = vshrl.u32 %v255, 16
      %v630 = vrot.slane %v628, 4
      %v631 = vor.u32 %v630, %v626
      %v632 = vrot.slane %v631, 4
      %v634 = vshll.u32 %v273, 16
      %v636 = vrot.slane %v634, 5
      %v637 = vsel %vm277, %v632, %v636
      %v639 = vshrl.u32 %v256, 16
      %v641 = vrot.slane %v639, 4
      %v642 = vshll.u32 %v256, 16
      %v644 = vrot.slane %v642, 5
      %v645 = vor.u32 %v641, %v644
      %v646 = vrot.slane %v645, 4
      %v648 = vshll.u32 %v257, 16
      %v650 = vrot.slane %v648, 5
      %v651 = vsel %vm277, %v646, %v650
      %v652 = vshrl.u32 %v257, 16
      %v654 = vrot.slane %v652, 4
      %v655 = vor.u32 %v654, %v650
      %v656 = vrot.slane %v655, 4
      %v658 = vshll.u32 %v274, 16
      %v660 = vrot.slane %v658, 5
      %v661 = vsel %vm277, %v656, %v660
      %s662 = scalar_lea.vmem %s1, 2
      %v663 = vld [vmem:[%s662] sm:$0x3]
      %v664 = vunpack.c.l.b16 %v291
      %v665 = vunpack.c.l.b16 %v301
      %v666 = vunpack.c.l.b16 %v315
      %v667 = vunpack.c.l.b16 %v325
      %v668 = vunpack.c.l.b16 %v339
      %v669 = vunpack.c.l.b16 %v349
      %v670 = vunpack.c.l.b16 %v363
      %v671 = vunpack.c.l.b16 %v373
      %v672 = vunpack.c.l.b16 %v387
      %v673 = vunpack.c.l.b16 %v397
      %v674 = vunpack.c.l.b16 %v411
      %v675 = vunpack.c.l.b16 %v421
      %v676 = vunpack.c.l.b16 %v435
      %v677 = vunpack.c.l.b16 %v445
      %v678 = vunpack.c.l.b16 %v459
      %v679 = vunpack.c.l.b16 %v469
      %v680 = vunpack.c.l.b16 %v483
      %v681 = vunpack.c.l.b16 %v493
      %v682 = vunpack.c.l.b16 %v507
      %v683 = vunpack.c.l.b16 %v517
      %v684 = vunpack.c.l.b16 %v531
      %v685 = vunpack.c.l.b16 %v541
      %v686 = vunpack.c.l.b16 %v555
      %v687 = vunpack.c.l.b16 %v565
      %v688 = vunpack.c.l.b16 %v579
      %v689 = vunpack.c.l.b16 %v589
      %v690 = vunpack.c.l.b16 %v603
      %v691 = vunpack.c.l.b16 %v613
      %v692 = vunpack.c.l.b16 %v627
      %v693 = vunpack.c.l.b16 %v637
      %v694 = vunpack.c.l.b16 %v651
      %v695 = vunpack.c.l.b16 %v661
      %v696 = vpack.c.b16 %v665, %v664
      %v697 = vpack.c.b16 %v667, %v666
      %v698 = vpack.c.b16 %v669, %v668
      %v699 = vpack.c.b16 %v671, %v670
      %v700 = vpack.c.b16 %v673, %v672
      %v701 = vpack.c.b16 %v675, %v674
      %v702 = vpack.c.b16 %v677, %v676
      %v703 = vpack.c.b16 %v679, %v678
      %v704 = vpack.c.b16 %v681, %v680
      %v705 = vpack.c.b16 %v683, %v682
      %v706 = vpack.c.b16 %v685, %v684
      %v707 = vpack.c.b16 %v687, %v686
      %v708 = vpack.c.b16 %v689, %v688
      %v709 = vpack.c.b16 %v691, %v690
      %v710 = vpack.c.b16 %v693, %v692
      %v711 = vpack.c.b16 %v695, %v694
      %vm712 = vcmask 31744
      %v714 = vsel %vm712, %v696, 0
      %v717 = vsel %vm712, %v697, 0
      %v720 = vsel %vm712, %v698, 0
      %v723 = vsel %vm712, %v699, 0
      %v726 = vsel %vm712, %v700, 0
      %v729 = vsel %vm712, %v701, 0
      %v732 = vsel %vm712, %v702, 0
      %v735 = vsel %vm712, %v703, 0
      %v738 = vsel %vm712, %v704, 0
      %v741 = vsel %vm712, %v705, 0
      %v744 = vsel %vm712, %v706, 0
      %v747 = vsel %vm712, %v707, 0
      %v750 = vsel %vm712, %v708, 0
      %v753 = vsel %vm712, %v709, 0
      %v756 = vsel %vm712, %v710, 0
      %v759 = vsel %vm712, %v711, 0
      %vm761 = vcmask 1041408
      %v763 = vsel %vm761, %v663, 0
      %765 = vmatprep.subr.bf16.mxu0 0
      %766 = vmatpush1.bf16.msra.mxu0 %v763
      %767 = vmatprep.subr.bf16.mxu0 0
      %768 = vmatpush1.bf16.msra.mxu0 0
      %769 = vmatprep.subr.bf16.mxu0 0
      %770 = vmatpush1.bf16.msra.mxu0 0
      %771 = vmatprep.subr.bf16.mxu0 0
      %772 = vmatpush1.bf16.msra.mxu0 0
      %773 = vmatprep.subr.bf16.mxu0 0
      %774 = vmatpush1.bf16.msra.mxu0 0
      %775 = vmatprep.subr.bf16.mxu0 0
      %776 = vmatpush1.bf16.msra.mxu0 0
      %777 = vmatprep.subr.bf16.mxu0 0
      %778 = vmatpush1.bf16.msra.mxu0 0
      %779 = vmatprep.subr.bf16.mxu0 0
      %780 = vmatpush1.bf16.msra.mxu0 0
      %781 = vmatprep.subr.bf16.mxu0 0
      %782 = vmatpush1.bf16.msra.mxu0 0
      %783 = vmatprep.subr.bf16.mxu0 0
      %784 = vmatpush1.bf16.msra.mxu0 0
      %785 = vmatprep.subr.bf16.mxu0 0
      %786 = vmatpush1.bf16.msra.mxu0 0
      %787 = vmatprep.subr.bf16.mxu0 0
      %788 = vmatpush1.bf16.msra.mxu0 0
      %789 = vmatprep.subr.bf16.mxu0 0
      %790 = vmatpush1.bf16.msra.mxu0 0
      %791 = vmatprep.subr.bf16.mxu0 0
      %792 = vmatpush1.bf16.msra.mxu0 0
      %793 = vmatprep.subr.bf16.mxu0 0
      %794 = vmatpush1.bf16.msra.mxu0 0
      %795 = vmatprep.subr.bf16.mxu0 0
      %796 = vmatpush1.bf16.msra.mxu0 0
      %797 = vmatprep.mubr.bf16.mxu0 0
      %798 = vmatmul.mubr.bf16.gmra.mrb[0].mxu0 %v714
      %v799 = vpop.f32.mrb[0].mxu0
      %v800 = vadd.f32 0.0, %v799
      %v801 = vpop.f32.mrb[0].mxu0
      %v802 = vpop.f32.mrb[0].mxu0
      %v803 = vadd.f32 0.0, %v802
      %v804 = vpop.f32.mrb[0].mxu0
      %805 = vmatprep.mubr.bf16.mxu0 0
      %806 = vmatmul.mubr.bf16.gmra.mrb[0].mxu0 %v717
      %v807 = vpop.f32.mrb[0].mxu0
      %v808 = vadd.f32 0.0, %v807
      %v809 = vpop.f32.mrb[0].mxu0
      %v810 = vpop.f32.mrb[0].mxu0
      %v811 = vadd.f32 0.0, %v810
      %v812 = vpop.f32.mrb[0].mxu0
      %813 = vmatprep.mubr.bf16.mxu0 0
      %814 = vmatmul.mubr.bf16.gmra.mrb[0].mxu0 %v720
      %v815 = vpop.f32.mrb[0].mxu0
      %v816 = vadd.f32 0.0, %v815
      %v817 = vpop.f32.mrb[0].mxu0
      %v818 = vpop.f32.mrb[0].mxu0
      %v819 = vadd.f32 0.0, %v818
      %v820 = vpop.f32.mrb[0].mxu0
      %821 = vmatprep.mubr.bf16.mxu0 0
      %822 = vmatmul.mubr.bf16.gmra.mrb[0].mxu0 %v723
      %v823 = vpop.f32.mrb[0].mxu0
      %v824 = vadd.f32 0.0, %v823
      %v825 = vpop.f32.mrb[0].mxu0
      %v826 = vpop.f32.mrb[0].mxu0
      %v827 = vadd.f32 0.0, %v826
      %v828 = vpop.f32.mrb[0].mxu0
      %829 = vmatprep.mubr.bf16.mxu0 0
      %830 = vmatmul.mubr.bf16.gmra.mrb[0].mxu0 %v726
      %v831 = vpop.f32.mrb[0].mxu0
      %v832 = vadd.f32 0.0, %v831
      %v833 = vpop.f32.mrb[0].mxu0
      %v834 = vpop.f32.mrb[0].mxu0
      %v835 = vadd.f32 0.0, %v834
      %v836 = vpop.f32.mrb[0].mxu0
      %837 = vmatprep.mubr.bf16.mxu0 0
      %838 = vmatmul.mubr.bf16.gmra.mrb[0].mxu0 %v729
      %v839 = vpop.f32.mrb[0].mxu0
      %v840 = vadd.f32 0.0, %v839
      %v841 = vpop.f32.mrb[0].mxu0
      %v842 = vpop.f32.mrb[0].mxu0
      %v843 = vadd.f32 0.0, %v842
      %v844 = vpop.f32.mrb[0].mxu0
      %845 = vmatprep.mubr.bf16.mxu0 0
      %846 = vmatmul.mubr.bf16.gmra.mrb[0].mxu0 %v732
      %v847 = vpop.f32.mrb[0].mxu0
      %v848 = vadd.f32 0.0, %v847
      %v849 = vpop.f32.mrb[0].mxu0
      %v850 = vpop.f32.mrb[0].mxu0
      %v851 = vadd.f32 0.0, %v850
      %v852 = vpop.f32.mrb[0].mxu0
      %853 = vmatprep.mubr.bf16.mxu0 0
      %854 = vmatmul.mubr.bf16.gmra.mrb[0].mxu0 %v735
      %v855 = vpop.f32.mrb[0].mxu0
      %v856 = vadd.f32 0.0, %v855
      %v857 = vpop.f32.mrb[0].mxu0
      %v858 = vpop.f32.mrb[0].mxu0
      %v859 = vadd.f32 0.0, %v858
      %v860 = vpop.f32.mrb[0].mxu0
      %861 = vmatprep.mubr.bf16.mxu0 0
      %862 = vmatmul.mubr.bf16.gmra.mrb[0].mxu0 %v738
      %v863 = vpop.f32.mrb[0].mxu0
      %v864 = vadd.f32 0.0, %v863
      %v865 = vpop.f32.mrb[0].mxu0
      %v866 = vpop.f32.mrb[0].mxu0
      %v867 = vadd.f32 0.0, %v866
      %v868 = vpop.f32.mrb[0].mxu0
      %869 = vmatprep.mubr.bf16.mxu0 0
      %870 = vmatmul.mubr.bf16.gmra.mrb[0].mxu0 %v741
      %v871 = vpop.f32.mrb[0].mxu0
      %v872 = vadd.f32 0.0, %v871
      %v873 = vpop.f32.mrb[0].mxu0
      %v874 = vpop.f32.mrb[0].mxu0
      %v875 = vadd.f32 0.0, %v874
      %v876 = vpop.f32.mrb[0].mxu0
      %877 = vmatprep.mubr.bf16.mxu0 0
      %878 = vmatmul.mubr.bf16.gmra.mrb[0].mxu0 %v744
      %v879 = vpop.f32.mrb[0].mxu0
      %v880 = vadd.f32 0.0, %v879
      %v881 = vpop.f32.mrb[0].mxu0
      %v882 = vpop.f32.mrb[0].mxu0
      %v883 = vadd.f32 0.0, %v882
      %v884 = vpop.f32.mrb[0].mxu0
      %885 = vmatprep.mubr.bf16.mxu0 0
      %886 = vmatmul.mubr.bf16.gmra.mrb[0].mxu0 %v747
      %v887 = vpop.f32.mrb[0].mxu0
      %v888 = vadd.f32 0.0, %v887
      %v889 = vpop.f32.mrb[0].mxu0
      %v890 = vpop.f32.mrb[0].mxu0
      %v891 = vadd.f32 0.0, %v890
      %v892 = vpop.f32.mrb[0].mxu0
      %893 = vmatprep.mubr.bf16.mxu0 0
      %894 = vmatmul.mubr.bf16.gmra.mrb[0].mxu0 %v750
      %v895 = vpop.f32.mrb[0].mxu0
      %v896 = vadd.f32 0.0, %v895
      %v897 = vpop.f32.mrb[0].mxu0
      %v898 = vpop.f32.mrb[0].mxu0
      %v899 = vadd.f32 0.0, %v898
      %v900 = vpop.f32.mrb[0].mxu0
      %901 = vmatprep.mubr.bf16.mxu0 0
      %902 = vmatmul.mubr.bf16.gmra.mrb[0].mxu0 %v753
      %v903 = vpop.f32.mrb[0].mxu0
      %v904 = vadd.f32 0.0, %v903
      %v905 = vpop.f32.mrb[0].mxu0
      %v906 = vpop.f32.mrb[0].mxu0
      %v907 = vadd.f32 0.0, %v906
      %v908 = vpop.f32.mrb[0].mxu0
      %909 = vmatprep.mubr.bf16.mxu0 0
      %910 = vmatmul.mubr.bf16.gmra.mrb[0].mxu0 %v756
      %v911 = vpop.f32.mrb[0].mxu0
      %v912 = vadd.f32 0.0, %v911
      %v913 = vpop.f32.mrb[0].mxu0
      %v914 = vpop.f32.mrb[0].mxu0
      %v915 = vadd.f32 0.0, %v914
      %v916 = vpop.f32.mrb[0].mxu0
      %917 = vmatprep.mubr.bf16.mxu0 0
      %918 = vmatmul.mubr.bf16.gmra.mrb[0].mxu0 %v759
      %v919 = vpop.f32.mrb[0].mxu0
      %v920 = vadd.f32 0.0, %v919
      %v921 = vpop.f32.mrb[0].mxu0
      %v922 = vpop.f32.mrb[0].mxu0
      %v923 = vadd.f32 0.0, %v922
      %v924 = vpop.f32.mrb[0].mxu0
      %925 = vdwg.mxu0
      %v958 = vunpack.c.l.b16 %v226
      %v959 = vunpack.c.l.b16 %v227
      %v960 = vunpack.c.l.b16 %v228
      %v961 = vunpack.c.l.b16 %v229
      %v962 = vunpack.c.l.b16 %v230
      %v963 = vunpack.c.l.b16 %v231
      %v964 = vunpack.c.l.b16 %v232
      %v965 = vunpack.c.l.b16 %v233
      %v966 = vunpack.c.l.b16 %v234
      %v967 = vunpack.c.l.b16 %v235
      %v968 = vunpack.c.l.b16 %v236
      %v969 = vunpack.c.l.b16 %v237
      %v970 = vunpack.c.l.b16 %v238
      %v971 = vunpack.c.l.b16 %v239
      %v972 = vunpack.c.l.b16 %v240
      %v973 = vunpack.c.l.b16 %v241
      %v974 = vunpack.c.l.b16 %v242
      %v975 = vunpack.c.l.b16 %v243
      %v976 = vunpack.c.l.b16 %v244
      %v977 = vunpack.c.l.b16 %v245
      %v978 = vunpack.c.l.b16 %v246
      %v979 = vunpack.c.l.b16 %v247
      %v980 = vunpack.c.l.b16 %v248
      %v981 = vunpack.c.l.b16 %v249
      %v982 = vunpack.c.l.b16 %v250
      %v983 = vunpack.c.l.b16 %v251
      %v984 = vunpack.c.l.b16 %v252
      %v985 = vunpack.c.l.b16 %v253
      %v986 = vunpack.c.l.b16 %v254
      %v987 = vunpack.c.l.b16 %v255
      %v988 = vunpack.c.l.b16 %v256
      %v989 = vunpack.c.l.b16 %v257
      %v990 = vpack.c.b16 %v959, %v958
      %v991 = vpack.c.b16 %v961, %v960
      %v992 = vpack.c.b16 %v963, %v962
      %v993 = vpack.c.b16 %v965, %v964
      %v994 = vpack.c.b16 %v967, %v966
      %v995 = vpack.c.b16 %v969, %v968
      %v996 = vpack.c.b16 %v971, %v970
      %v997 = vpack.c.b16 %v973, %v972
      %v998 = vpack.c.b16 %v975, %v974
      %v999 = vpack.c.b16 %v977, %v976
      %v1000 = vpack.c.b16 %v979, %v978
      %v1001 = vpack.c.b16 %v981, %v980
      %v1002 = vpack.c.b16 %v983, %v982
      %v1003 = vpack.c.b16 %v985, %v984
      %v1004 = vpack.c.b16 %v987, %v986
      %v1005 = vpack.c.b16 %v989, %v988
      %v1007 = vsel %vm712, %v990, 0
      %v1010 = vsel %vm712, %v991, 0
      %v1013 = vsel %vm712, %v992, 0
      %v1016 = vsel %vm712, %v993, 0
      %v1019 = vsel %vm712, %v994, 0
      %v1022 = vsel %vm712, %v995, 0
      %v1025 = vsel %vm712, %v996, 0
      %v1028 = vsel %vm712, %v997, 0
      %v1031 = vsel %vm712, %v998, 0
      %v1034 = vsel %vm712, %v999, 0
      %v1037 = vsel %vm712, %v1000, 0
      %v1040 = vsel %vm712, %v1001, 0
      %v1043 = vsel %vm712, %v1002, 0
      %v1046 = vsel %vm712, %v1003, 0
      %v1049 = vsel %vm712, %v1004, 0
      %v1052 = vsel %vm712, %v1005, 0
      %v1055 = vsel %vm761, %v258, 0
      %1057 = vmatprep.subr.bf16.mxu0 0
      %1058 = vmatpush1.bf16.msra.mxu0 %v1055
      %1059 = vmatprep.subr.bf16.mxu0 0
      %1060 = vmatpush1.bf16.msra.mxu0 0
      %1061 = vmatprep.subr.bf16.mxu0 0
      %1062 = vmatpush1.bf16.msra.mxu0 0
      %1063 = vmatprep.subr.bf16.mxu0 0
      %1064 = vmatpush1.bf16.msra.mxu0 0
      %1065 = vmatprep.subr.bf16.mxu0 0
      %1066 = vmatpush1.bf16.msra.mxu0 0
      %1067 = vmatprep.subr.bf16.mxu0 0
      %1068 = vmatpush1.bf16.msra.mxu0 0
      %1069 = vmatprep.subr.bf16.mxu0 0
      %1070 = vmatpush1.bf16.msra.mxu0 0
      %1071 = vmatprep.subr.bf16.mxu0 0
      %1072 = vmatpush1.bf16.msra.mxu0 0
      %1073 = vmatprep.subr.bf16.mxu0 0
      %1074 = vmatpush1.bf16.msra.mxu0 0
      %1075 = vmatprep.subr.bf16.mxu0 0
      %1076 = vmatpush1.bf16.msra.mxu0 0
      %1077 = vmatprep.subr.bf16.mxu0 0
      %1078 = vmatpush1.bf16.msra.mxu0 0
      %1079 = vmatprep.subr.bf16.mxu0 0
      %1080 = vmatpush1.bf16.msra.mxu0 0
      %1081 = vmatprep.subr.bf16.mxu0 0
      %1082 = vmatpush1.bf16.msra.mxu0 0
      %1083 = vmatprep.subr.bf16.mxu0 0
      %1084 = vmatpush1.bf16.msra.mxu0 0
      %1085 = vmatprep.subr.bf16.mxu0 0
      %1086 = vmatpush1.bf16.msra.mxu0 0
      %1087 = vmatprep.subr.bf16.mxu0 0
      %1088 = vmatpush1.bf16.msra.mxu0 0
      %1089 = vmatprep.mubr.bf16.mxu0 0
      %1090 = vmatmul.mubr.bf16.gmra.mrb[0].mxu0 %v1007
      %v1091 = vpop.f32.mrb[0].mxu0
      %v1092 = vadd.f32 %v800, %v1091
      %v1093 = vpop.f32.mrb[0].mxu0
      %v1094 = vpop.f32.mrb[0].mxu0
      %v1095 = vadd.f32 %v803, %v1094
      %v1096 = vpop.f32.mrb[0].mxu0
      %1097 = vmatprep.mubr.bf16.mxu0 0
      %1098 = vmatmul.mubr.bf16.gmra.mrb[0].mxu0 %v1010
      %v1099 = vpop.f32.mrb[0].mxu0
      %v1100 = vadd.f32 %v808, %v1099
      %v1101 = vpop.f32.mrb[0].mxu0
      %v1102 = vpop.f32.mrb[0].mxu0
      %v1103 = vadd.f32 %v811, %v1102
      %v1104 = vpop.f32.mrb[0].mxu0
      %1105 = vmatprep.mubr.bf16.mxu0 0
      %1106 = vmatmul.mubr.bf16.gmra.mrb[0].mxu0 %v1013
      %v1107 = vpop.f32.mrb[0].mxu0
      %v1108 = vadd.f32 %v816, %v1107
      %v1109 = vpop.f32.mrb[0].mxu0
      %v1110 = vpop.f32.mrb[0].mxu0
      %v1111 = vadd.f32 %v819, %v1110
      %v1112 = vpop.f32.mrb[0].mxu0
      %1113 = vmatprep.mubr.bf16.mxu0 0
      %1114 = vmatmul.mubr.bf16.gmra.mrb[0].mxu0 %v1016
      %v1115 = vpop.f32.mrb[0].mxu0
      %v1116 = vadd.f32 %v824, %v1115
      %v1117 = vpop.f32.mrb[0].mxu0
      %v1118 = vpop.f32.mrb[0].mxu0
      %v1119 = vadd.f32 %v827, %v1118
      %v1120 = vpop.f32.mrb[0].mxu0
      %1121 = vmatprep.mubr.bf16.mxu0 0
      %1122 = vmatmul.mubr.bf16.gmra.mrb[0].mxu0 %v1019
      %v1123 = vpop.f32.mrb[0].mxu0
      %v1124 = vadd.f32 %v832, %v1123
      %v1125 = vpop.f32.mrb[0].mxu0
      %v1126 = vpop.f32.mrb[0].mxu0
      %v1127 = vadd.f32 %v835, %v1126
      %v1128 = vpop.f32.mrb[0].mxu0
      %1129 = vmatprep.mubr.bf16.mxu0 0
      %1130 = vmatmul.mubr.bf16.gmra.mrb[0].mxu0 %v1022
      %v1131 = vpop.f32.mrb[0].mxu0
      %v1132 = vadd.f32 %v840, %v1131
      %v1133 = vpop.f32.mrb[0].mxu0
      %v1134 = vpop.f32.mrb[0].mxu0
      %v1135 = vadd.f32 %v843, %v1134
      %v1136 = vpop.f32.mrb[0].mxu0
      %1137 = vmatprep.mubr.bf16.mxu0 0
      %1138 = vmatmul.mubr.bf16.gmra.mrb[0].mxu0 %v1025
      %v1139 = vpop.f32.mrb[0].mxu0
      %v1140 = vadd.f32 %v848, %v1139
      %v1141 = vpop.f32.mrb[0].mxu0
      %v1142 = vpop.f32.mrb[0].mxu0
      %v1143 = vadd.f32 %v851, %v1142
      %v1144 = vpop.f32.mrb[0].mxu0
      %1145 = vmatprep.mubr.bf16.mxu0 0
      %1146 = vmatmul.mubr.bf16.gmra.mrb[0].mxu0 %v1028
      %v1147 = vpop.f32.mrb[0].mxu0
      %v1148 = vadd.f32 %v856, %v1147
      %v1149 = vpop.f32.mrb[0].mxu0
      %v1150 = vpop.f32.mrb[0].mxu0
      %v1151 = vadd.f32 %v859, %v1150
      %v1152 = vpop.f32.mrb[0].mxu0
      %1153 = vmatprep.mubr.bf16.mxu0 0
      %1154 = vmatmul.mubr.bf16.gmra.mrb[0].mxu0 %v1031
      %v1155 = vpop.f32.mrb[0].mxu0
      %v1156 = vadd.f32 %v864, %v1155
      %v1157 = vpop.f32.mrb[0].mxu0
      %v1158 = vpop.f32.mrb[0].mxu0
      %v1159 = vadd.f32 %v867, %v1158
      %v1160 = vpop.f32.mrb[0].mxu0
      %1161 = vmatprep.mubr.bf16.mxu0 0
      %1162 = vmatmul.mubr.bf16.gmra.mrb[0].mxu0 %v1034
      %v1163 = vpop.f32.mrb[0].mxu0
      %v1164 = vadd.f32 %v872, %v1163
      %v1165 = vpop.f32.mrb[0].mxu0
      %v1166 = vpop.f32.mrb[0].mxu0
      %v1167 = vadd.f32 %v875, %v1166
      %v1168 = vpop.f32.mrb[0].mxu0
      %1169 = vmatprep.mubr.bf16.mxu0 0
      %1170 = vmatmul.mubr.bf16.gmra.mrb[0].mxu0 %v1037
      %v1171 = vpop.f32.mrb[0].mxu0
      %v1172 = vadd.f32 %v880, %v1171
      %v1173 = vpop.f32.mrb[0].mxu0
      %v1174 = vpop.f32.mrb[0].mxu0
      %v1175 = vadd.f32 %v883, %v1174
      %v1176 = vpop.f32.mrb[0].mxu0
      %1177 = vmatprep.mubr.bf16.mxu0 0
      %1178 = vmatmul.mubr.bf16.gmra.mrb[0].mxu0 %v1040
      %v1179 = vpop.f32.mrb[0].mxu0
      %v1180 = vadd.f32 %v888, %v1179
      %v1181 = vpop.f32.mrb[0].mxu0
      %v1182 = vpop.f32.mrb[0].mxu0
      %v1183 = vadd.f32 %v891, %v1182
      %v1184 = vpop.f32.mrb[0].mxu0
      %1185 = vmatprep.mubr.bf16.mxu0 0
      %1186 = vmatmul.mubr.bf16.gmra.mrb[0].mxu0 %v1043
      %v1187 = vpop.f32.mrb[0].mxu0
      %v1188 = vadd.f32 %v896, %v1187
      %v1189 = vpop.f32.mrb[0].mxu0
      %v1190 = vpop.f32.mrb[0].mxu0
      %v1191 = vadd.f32 %v899, %v1190
      %v1192 = vpop.f32.mrb[0].mxu0
      %1193 = vmatprep.mubr.bf16.mxu0 0
      %1194 = vmatmul.mubr.bf16.gmra.mrb[0].mxu0 %v1046
      %v1195 = vpop.f32.mrb[0].mxu0
      %v1196 = vadd.f32 %v904, %v1195
      %v1197 = vpop.f32.mrb[0].mxu0
      %v1198 = vpop.f32.mrb[0].mxu0
      %v1199 = vadd.f32 %v907, %v1198
      %v1200 = vpop.f32.mrb[0].mxu0
      %1201 = vmatprep.mubr.bf16.mxu0 0
      %1202 = vmatmul.mubr.bf16.gmra.mrb[0].mxu0 %v1049
      %v1203 = vpop.f32.mrb[0].mxu0
      %v1204 = vadd.f32 %v912, %v1203
      %v1205 = vpop.f32.mrb[0].mxu0
      %v1206 = vpop.f32.mrb[0].mxu0
      %v1207 = vadd.f32 %v915, %v1206
      %v1208 = vpop.f32.mrb[0].mxu0
      %1209 = vmatprep.mubr.bf16.mxu0 0
      %1210 = vmatmul.mubr.bf16.gmra.mrb[0].mxu0 %v1052
      %v1211 = vpop.f32.mrb[0].mxu0
      %v1212 = vadd.f32 %v920, %v1211
      %v1213 = vpop.f32.mrb[0].mxu0
      %v1214 = vpop.f32.mrb[0].mxu0
      %v1215 = vadd.f32 %v923, %v1214
      %v1216 = vpop.f32.mrb[0].mxu0
      %1217 = vdwg.mxu0
      %v1218 = vld [vmem:[%s219] sm:$0xe]
      %v1219 = vld [vmem:[%s219 + $0xc] sm:$0xe]
      %v1220 = vld [vmem:[%s219 + $0x18] sm:$0xe]
      %v1221 = vld [vmem:[%s219 + $0x24] sm:$0xe]
      %v1222 = vld [vmem:[%s219 + $0x30] sm:$0xe]
      %v1223 = vld [vmem:[%s219 + $0x3c] sm:$0xe]
      %v1224 = vld [vmem:[%s219 + $0x48] sm:$0xe]
      %v1225 = vld [vmem:[%s219 + $0x54] sm:$0xe]
      %v1226 = vld [vmem:[%s219 + $0x60] sm:$0xe]
      %v1227 = vld [vmem:[%s219 + $0x6c] sm:$0xe]
      %v1228 = vld [vmem:[%s219 + $0x78] sm:$0xe]
      %v1229 = vld [vmem:[%s219 + $0x84] sm:$0xe]
      %v1230 = vld [vmem:[%s219 + $0x90] sm:$0xe]
      %v1231 = vld [vmem:[%s219 + $0x9c] sm:$0xe]
      %v1232 = vld [vmem:[%s219 + $0xa8] sm:$0xe]
      %v1233 = vld [vmem:[%s219 + $0xb4] sm:$0xe]
      %vm1266 = vcmask 1042432
      %vm1267 = vcmask 1046532
      %vm1268 = vmor %vm1266, %vm1267
      %v1269 = vrot.slane %v1218, 5
      %v1270 = vrot.slane %v1269, 4
      %v1271 = vrot.slane %v227, 5
      %v1272 = vsel %vm1268, %v1270, %v1271
      %v1273 = vrot.slane %v1271, 4
      %v1274 = vrot.slane %v259, 5
      %v1275 = vsel %vm1268, %v1273, %v1274
      %v1276 = vrot.slane %v1219, 5
      %v1277 = vrot.slane %v1276, 4
      %v1278 = vrot.slane %v229, 5
      %v1279 = vsel %vm1268, %v1277, %v1278
      %v1280 = vrot.slane %v1278, 4
      %v1281 = vrot.slane %v260, 5
      %v1282 = vsel %vm1268, %v1280, %v1281
      %v1283 = vrot.slane %v1220, 5
      %v1284 = vrot.slane %v1283, 4
      %v1285 = vrot.slane %v231, 5
      %v1286 = vsel %vm1268, %v1284, %v1285
      %v1287 = vrot.slane %v1285, 4
      %v1288 = vrot.slane %v261, 5
      %v1289 = vsel %vm1268, %v1287, %v1288
      %v1290 = vrot.slane %v1221, 5
      %v1291 = vrot.slane %v1290, 4
      %v1292 = vrot.slane %v233, 5
      %v1293 = vsel %vm1268, %v1291, %v1292
      %v1294 = vrot.slane %v1292, 4
      %v1295 = vrot.slane %v262, 5
      %v1296 = vsel %vm1268, %v1294, %v1295
      %v1297 = vrot.slane %v1222, 5
      %v1298 = vrot.slane %v1297, 4
      %v1299 = vrot.slane %v235, 5
      %v1300 = vsel %vm1268, %v1298, %v1299
      %v1301 = vrot.slane %v1299, 4
      %v1302 = vrot.slane %v263, 5
      %v1303 = vsel %vm1268, %v1301, %v1302
      %v1304 = vrot.slane %v1223, 5
      %v1305 = vrot.slane %v1304, 4
      %v1306 = vrot.slane %v237, 5
      %v1307 = vsel %vm1268, %v1305, %v1306
      %v1308 = vrot.slane %v1306, 4
      %v1309 = vrot.slane %v264, 5
      %v1310 = vsel %vm1268, %v1308, %v1309
      %v1311 = vrot.slane %v1224, 5
      %v1312 = vrot.slane %v1311, 4
      %v1313 = vrot.slane %v239, 5
      %v1314 = vsel %vm1268, %v1312, %v1313
      %v1315 = vrot.slane %v1313, 4
      %v1316 = vrot.slane %v265, 5
      %v1317 = vsel %vm1268, %v1315, %v1316
      %v1318 = vrot.slane %v1225, 5
      %v1319 = vrot.slane %v1318, 4
      %v1320 = vrot.slane %v241, 5
      %v1321 = vsel %vm1268, %v1319, %v1320
      %v1322 = vrot.slane %v1320, 4
      %v1323 = vrot.slane %v266, 5
      %v1324 = vsel %vm1268, %v1322, %v1323
      %v1325 = vrot.slane %v1226, 5
      %v1326 = vrot.slane %v1325, 4
      %v1327 = vrot.slane %v243, 5
      %v1328 = vsel %vm1268, %v1326, %v1327
      %v1329 = vrot.slane %v1327, 4
      %v1330 = vrot.slane %v267, 5
      %v1331 = vsel %vm1268, %v1329, %v1330
      %v1332 = vrot.slane %v1227, 5
      %v1333 = vrot.slane %v1332, 4
      %v1334 = vrot.slane %v245, 5
      %v1335 = vsel %vm1268, %v1333, %v1334
      %v1336 = vrot.slane %v1334, 4
      %v1337 = vrot.slane %v268, 5
      %v1338 = vsel %vm1268, %v1336, %v1337
      %v1339 = vrot.slane %v1228, 5
      %v1340 = vrot.slane %v1339, 4
      %v1341 = vrot.slane %v247, 5
      %v1342 = vsel %vm1268, %v1340, %v1341
      %v1343 = vrot.slane %v1341, 4
      %v1344 = vrot.slane %v269, 5
      %v1345 = vsel %vm1268, %v1343, %v1344
      %v1346 = vrot.slane %v1229, 5
      %v1347 = vrot.slane %v1346, 4
      %v1348 = vrot.slane %v249, 5
      %v1349 = vsel %vm1268, %v1347, %v1348
      %v1350 = vrot.slane %v1348, 4
      %v1351 = vrot.slane %v270, 5
      %v1352 = vsel %vm1268, %v1350, %v1351
      %v1353 = vrot.slane %v1230, 5
      %v1354 = vrot.slane %v1353, 4
      %v1355 = vrot.slane %v251, 5
      %v1356 = vsel %vm1268, %v1354, %v1355
      %v1357 = vrot.slane %v1355, 4
      %v1358 = vrot.slane %v271, 5
      %v1359 = vsel %vm1268, %v1357, %v1358
      %v1360 = vrot.slane %v1231, 5
      %v1361 = vrot.slane %v1360, 4
      %v1362 = vrot.slane %v253, 5
      %v1363 = vsel %vm1268, %v1361, %v1362
      %v1364 = vrot.slane %v1362, 4
      %v1365 = vrot.slane %v272, 5
      %v1366 = vsel %vm1268, %v1364, %v1365
      %v1367 = vrot.slane %v1232, 5
      %v1368 = vrot.slane %v1367, 4
      %v1369 = vrot.slane %v255, 5
      %v1370 = vsel %vm1268, %v1368, %v1369
      %v1371 = vrot.slane %v1369, 4
      %v1372 = vrot.slane %v273, 5
      %v1373 = vsel %vm1268, %v1371, %v1372
      %v1374 = vrot.slane %v1233, 5
      %v1375 = vrot.slane %v1374, 4
      %v1376 = vrot.slane %v257, 5
      %v1377 = vsel %vm1268, %v1375, %v1376
      %v1378 = vrot.slane %v1376, 4
      %v1379 = vrot.slane %v274, 5
      %v1380 = vsel %vm1268, %v1378, %v1379
      %s1381 = scalar_lea.vmem %s1, 4
      %v1382 = vld [vmem:[%s1381] sm:$0x3]
      %v1383 = vunpack.c.l.b16 %v1272
      %v1384 = vunpack.c.l.b16 %v1275
      %v1385 = vunpack.c.l.b16 %v1279
      %v1386 = vunpack.c.l.b16 %v1282
      %v1387 = vunpack.c.l.b16 %v1286
      %v1388 = vunpack.c.l.b16 %v1289
      %v1389 = vunpack.c.l.b16 %v1293
      %v1390 = vunpack.c.l.b16 %v1296
      %v1391 = vunpack.c.l.b16 %v1300
      %v1392 = vunpack.c.l.b16 %v1303
      %v1393 = vunpack.c.l.b16 %v1307
      %v1394 = vunpack.c.l.b16 %v1310
      %v1395 = vunpack.c.l.b16 %v1314
      %v1396 = vunpack.c.l.b16 %v1317
      %v1397 = vunpack.c.l.b16 %v1321
      %v1398 = vunpack.c.l.b16 %v1324
      %v1399 = vunpack.c.l.b16 %v1328
      %v1400 = vunpack.c.l.b16 %v1331
      %v1401 = vunpack.c.l.b16 %v1335
      %v1402 = vunpack.c.l.b16 %v1338
      %v1403 = vunpack.c.l.b16 %v1342
      %v1404 = vunpack.c.l.b16 %v1345
      %v1405 = vunpack.c.l.b16 %v1349
      %v1406 = vunpack.c.l.b16 %v1352
      %v1407 = vunpack.c.l.b16 %v1356
      %v1408 = vunpack.c.l.b16 %v1359
      %v1409 = vunpack.c.l.b16 %v1363
      %v1410 = vunpack.c.l.b16 %v1366
      %v1411 = vunpack.c.l.b16 %v1370
      %v1412 = vunpack.c.l.b16 %v1373
      %v1413 = vunpack.c.l.b16 %v1377
      %v1414 = vunpack.c.l.b16 %v1380
      %v1415 = vpack.c.b16 %v1384, %v1383
      %v1416 = vpack.c.b16 %v1386, %v1385
      %v1417 = vpack.c.b16 %v1388, %v1387
      %v1418 = vpack.c.b16 %v1390, %v1389
      %v1419 = vpack.c.b16 %v1392, %v1391
      %v1420 = vpack.c.b16 %v1394, %v1393
      %v1421 = vpack.c.b16 %v1396, %v1395
      %v1422 = vpack.c.b16 %v1398, %v1397
      %v1423 = vpack.c.b16 %v1400, %v1399
      %v1424 = vpack.c.b16 %v1402, %v1401
      %v1425 = vpack.c.b16 %v1404, %v1403
      %v1426 = vpack.c.b16 %v1406, %v1405
      %v1427 = vpack.c.b16 %v1408, %v1407
      %v1428 = vpack.c.b16 %v1410, %v1409
      %v1429 = vpack.c.b16 %v1412, %v1411
      %v1430 = vpack.c.b16 %v1414, %v1413
      %v1432 = vsel %vm712, %v1415, 0
      %v1435 = vsel %vm712, %v1416, 0
      %v1438 = vsel %vm712, %v1417, 0
      %v1441 = vsel %vm712, %v1418, 0
      %v1444 = vsel %vm712, %v1419, 0
      %v1447 = vsel %vm712, %v1420, 0
      %v1450 = vsel %vm712, %v1421, 0
      %v1453 = vsel %vm712, %v1422, 0
      %v1456 = vsel %vm712, %v1423, 0
      %v1459 = vsel %vm712, %v1424, 0
      %v1462 = vsel %vm712, %v1425, 0
      %v1465 = vsel %vm712, %v1426, 0
      %v1468 = vsel %vm712, %v1427, 0
      %v1471 = vsel %vm712, %v1428, 0
      %v1474 = vsel %vm712, %v1429, 0
      %v1477 = vsel %vm712, %v1430, 0
      %v1480 = vsel %vm761, %v1382, 0
      %1482 = vmatprep.subr.bf16.mxu0 0
      %1483 = vmatpush1.bf16.msra.mxu0 %v1480
      %1484 = vmatprep.subr.bf16.mxu0 0
      %1485 = vmatpush1.bf16.msra.mxu0 0
      %1486 = vmatprep.subr.bf16.mxu0 0
      %1487 = vmatpush1.bf16.msra.mxu0 0
      %1488 = vmatprep.subr.bf16.mxu0 0
      %1489 = vmatpush1.bf16.msra.mxu0 0
      %1490 = vmatprep.subr.bf16.mxu0 0
      %1491 = vmatpush1.bf16.msra.mxu0 0
      %1492 = vmatprep.subr.bf16.mxu0 0
      %1493 = vmatpush1.bf16.msra.mxu0 0
      %1494 = vmatprep.subr.bf16.mxu0 0
      %1495 = vmatpush1.bf16.msra.mxu0 0
      %1496 = vmatprep.subr.bf16.mxu0 0
      %1497 = vmatpush1.bf16.msra.mxu0 0
      %1498 = vmatprep.subr.bf16.mxu0 0
      %1499 = vmatpush1.bf16.msra.mxu0 0
      %1500 = vmatprep.subr.bf16.mxu0 0
      %1501 = vmatpush1.bf16.msra.mxu0 0
      %1502 = vmatprep.subr.bf16.mxu0 0
      %1503 = vmatpush1.bf16.msra.mxu0 0
      %1504 = vmatprep.subr.bf16.mxu0 0
      %1505 = vmatpush1.bf16.msra.mxu0 0
      %1506 = vmatprep.subr.bf16.mxu0 0
      %1507 = vmatpush1.bf16.msra.mxu0 0
      %1508 = vmatprep.subr.bf16.mxu0 0
      %1509 = vmatpush1.bf16.msra.mxu0 0
      %1510 = vmatprep.subr.bf16.mxu0 0
      %1511 = vmatpush1.bf16.msra.mxu0 0
      %1512 = vmatprep.subr.bf16.mxu0 0
      %1513 = vmatpush1.bf16.msra.mxu0 0
      %1514 = vmatprep.mubr.bf16.mxu0 0
      %1515 = vmatmul.mubr.bf16.gmra.mrb[0].mxu0 %v1432
      %v1516 = vpop.f32.mrb[0].mxu0
      %v1517 = vadd.f32 0.0, %v1516
      %v1518 = vpop.f32.mrb[0].mxu0
      %v1519 = vpop.f32.mrb[0].mxu0
      %v1520 = vadd.f32 0.0, %v1519
      %v1521 = vpop.f32.mrb[0].mxu0
      %1522 = vmatprep.mubr.bf16.mxu0 0
      %1523 = vmatmul.mubr.bf16.gmra.mrb[0].mxu0 %v1435
      %v1524 = vpop.f32.mrb[0].mxu0
      %v1525 = vadd.f32 0.0, %v1524
      %v1526 = vpop.f32.mrb[0].mxu0
      %v1527 = vpop.f32.mrb[0].mxu0
      %v1528 = vadd.f32 0.0, %v1527
      %v1529 = vpop.f32.mrb[0].mxu0
      %1530 = vmatprep.mubr.bf16.mxu0 0
      %1531 = vmatmul.mubr.bf16.gmra.mrb[0].mxu0 %v1438
      %v1532 = vpop.f32.mrb[0].mxu0
      %v1533 = vadd.f32 0.0, %v1532
      %v1534 = vpop.f32.mrb[0].mxu0
      %v1535 = vpop.f32.mrb[0].mxu0
      %v1536 = vadd.f32 0.0, %v1535
      %v1537 = vpop.f32.mrb[0].mxu0
      %1538 = vmatprep.mubr.bf16.mxu0 0
      %1539 = vmatmul.mubr.bf16.gmra.mrb[0].mxu0 %v1441
      %v1540 = vpop.f32.mrb[0].mxu0
      %v1541 = vadd.f32 0.0, %v1540
      %v1542 = vpop.f32.mrb[0].mxu0
      %v1543 = vpop.f32.mrb[0].mxu0
      %v1544 = vadd.f32 0.0, %v1543
      %v1545 = vpop.f32.mrb[0].mxu0
      %1546 = vmatprep.mubr.bf16.mxu0 0
      %1547 = vmatmul.mubr.bf16.gmra.mrb[0].mxu0 %v1444
      %v1548 = vpop.f32.mrb[0].mxu0
      %v1549 = vadd.f32 0.0, %v1548
      %v1550 = vpop.f32.mrb[0].mxu0
      %v1551 = vpop.f32.mrb[0].mxu0
      %v1552 = vadd.f32 0.0, %v1551
      %v1553 = vpop.f32.mrb[0].mxu0
      %1554 = vmatprep.mubr.bf16.mxu0 0
      %1555 = vmatmul.mubr.bf16.gmra.mrb[0].mxu0 %v1447
      %v1556 = vpop.f32.mrb[0].mxu0
      %v1557 = vadd.f32 0.0, %v1556
      %v1558 = vpop.f32.mrb[0].mxu0
      %v1559 = vpop.f32.mrb[0].mxu0
      %v1560 = vadd.f32 0.0, %v1559
      %v1561 = vpop.f32.mrb[0].mxu0
      %1562 = vmatprep.mubr.bf16.mxu0 0
      %1563 = vmatmul.mubr.bf16.gmra.mrb[0].mxu0 %v1450
      %v1564 = vpop.f32.mrb[0].mxu0
      %v1565 = vadd.f32 0.0, %v1564
      %v1566 = vpop.f32.mrb[0].mxu0
      %v1567 = vpop.f32.mrb[0].mxu0
      %v1568 = vadd.f32 0.0, %v1567
      %v1569 = vpop.f32.mrb[0].mxu0
      %1570 = vmatprep.mubr.bf16.mxu0 0
      %1571 = vmatmul.mubr.bf16.gmra.mrb[0].mxu0 %v1453
      %v1572 = vpop.f32.mrb[0].mxu0
      %v1573 = vadd.f32 0.0, %v1572
      %v1574 = vpop.f32.mrb[0].mxu0
      %v1575 = vpop.f32.mrb[0].mxu0
      %v1576 = vadd.f32 0.0, %v1575
      %v1577 = vpop.f32.mrb[0].mxu0
      %1578 = vmatprep.mubr.bf16.mxu0 0
      %1579 = vmatmul.mubr.bf16.gmra.mrb[0].mxu0 %v1456
      %v1580 = vpop.f32.mrb[0].mxu0
      %v1581 = vadd.f32 0.0, %v1580
      %v1582 = vpop.f32.mrb[0].mxu0
      %v1583 = vpop.f32.mrb[0].mxu0
      %v1584 = vadd.f32 0.0, %v1583
      %v1585 = vpop.f32.mrb[0].mxu0
      %1586 = vmatprep.mubr.bf16.mxu0 0
      %1587 = vmatmul.mubr.bf16.gmra.mrb[0].mxu0 %v1459
      %v1588 = vpop.f32.mrb[0].mxu0
      %v1589 = vadd.f32 0.0, %v1588
      %v1590 = vpop.f32.mrb[0].mxu0
      %v1591 = vpop.f32.mrb[0].mxu0
      %v1592 = vadd.f32 0.0, %v1591
      %v1593 = vpop.f32.mrb[0].mxu0
      %1594 = vmatprep.mubr.bf16.mxu0 0
      %1595 = vmatmul.mubr.bf16.gmra.mrb[0].mxu0 %v1462
      %v1596 = vpop.f32.mrb[0].mxu0
      %v1597 = vadd.f32 0.0, %v1596
      %v1598 = vpop.f32.mrb[0].mxu0
      %v1599 = vpop.f32.mrb[0].mxu0
      %v1600 = vadd.f32 0.0, %v1599
      %v1601 = vpop.f32.mrb[0].mxu0
      %1602 = vmatprep.mubr.bf16.mxu0 0
      %1603 = vmatmul.mubr.bf16.gmra.mrb[0].mxu0 %v1465
      %v1604 = vpop.f32.mrb[0].mxu0
      %v1605 = vadd.f32 0.0, %v1604
      %v1606 = vpop.f32.mrb[0].mxu0
      %v1607 = vpop.f32.mrb[0].mxu0
      %v1608 = vadd.f32 0.0, %v1607
      %v1609 = vpop.f32.mrb[0].mxu0
      %1610 = vmatprep.mubr.bf16.mxu0 0
      %1611 = vmatmul.mubr.bf16.gmra.mrb[0].mxu0 %v1468
      %v1612 = vpop.f32.mrb[0].mxu0
      %v1613 = vadd.f32 0.0, %v1612
      %v1614 = vpop.f32.mrb[0].mxu0
      %v1615 = vpop.f32.mrb[0].mxu0
      %v1616 = vadd.f32 0.0, %v1615
      %v1617 = vpop.f32.mrb[0].mxu0
      %1618 = vmatprep.mubr.bf16.mxu0 0
      %1619 = vmatmul.mubr.bf16.gmra.mrb[0].mxu0 %v1471
      %v1620 = vpop.f32.mrb[0].mxu0
      %v1621 = vadd.f32 0.0, %v1620
      %v1622 = vpop.f32.mrb[0].mxu0
      %v1623 = vpop.f32.mrb[0].mxu0
      %v1624 = vadd.f32 0.0, %v1623
      %v1625 = vpop.f32.mrb[0].mxu0
      %1626 = vmatprep.mubr.bf16.mxu0 0
      %1627 = vmatmul.mubr.bf16.gmra.mrb[0].mxu0 %v1474
      %v1628 = vpop.f32.mrb[0].mxu0
      %v1629 = vadd.f32 0.0, %v1628
      %v1630 = vpop.f32.mrb[0].mxu0
      %v1631 = vpop.f32.mrb[0].mxu0
      %v1632 = vadd.f32 0.0, %v1631
      %v1633 = vpop.f32.mrb[0].mxu0
      %1634 = vmatprep.mubr.bf16.mxu0 0
      %1635 = vmatmul.mubr.bf16.gmra.mrb[0].mxu0 %v1477
      %v1636 = vpop.f32.mrb[0].mxu0
      %v1637 = vadd.f32 0.0, %v1636
      %v1638 = vpop.f32.mrb[0].mxu0
      %v1639 = vpop.f32.mrb[0].mxu0
      %v1640 = vadd.f32 0.0, %v1639
      %v1641 = vpop.f32.mrb[0].mxu0
      %1642 = vdwg.mxu0
      %v1643 = vadd.f32 %v1092, %v1517
      %v1644 = vadd.f32 %v1095, %v1520
      %v1645 = vadd.f32 %v1100, %v1525
      %v1646 = vadd.f32 %v1103, %v1528
      %v1647 = vadd.f32 %v1108, %v1533
      %v1648 = vadd.f32 %v1111, %v1536
      %v1649 = vadd.f32 %v1116, %v1541
      %v1650 = vadd.f32 %v1119, %v1544
      %v1651 = vadd.f32 %v1124, %v1549
      %v1652 = vadd.f32 %v1127, %v1552
      %v1653 = vadd.f32 %v1132, %v1557
      %v1654 = vadd.f32 %v1135, %v1560
      %v1655 = vadd.f32 %v1140, %v1565
      %v1656 = vadd.f32 %v1143, %v1568
      %v1657 = vadd.f32 %v1148, %v1573
      %v1658 = vadd.f32 %v1151, %v1576
      %v1659 = vadd.f32 %v1156, %v1581
      %v1660 = vadd.f32 %v1159, %v1584
      %v1661 = vadd.f32 %v1164, %v1589
      %v1662 = vadd.f32 %v1167, %v1592
      %v1663 = vadd.f32 %v1172, %v1597
      %v1664 = vadd.f32 %v1175, %v1600
      %v1665 = vadd.f32 %v1180, %v1605
      %v1666 = vadd.f32 %v1183, %v1608
      %v1667 = vadd.f32 %v1188, %v1613
      %v1668 = vadd.f32 %v1191, %v1616
      %v1669 = vadd.f32 %v1196, %v1621
      %v1670 = vadd.f32 %v1199, %v1624
      %v1671 = vadd.f32 %v1204, %v1629
      %v1672 = vadd.f32 %v1207, %v1632
      %v1673 = vadd.f32 %v1212, %v1637
      %v1674 = vadd.f32 %v1215, %v1640
      %s1675 = scalar_lea.vmem %s219, 12
      %v1676 = vld [vmem:[%s1675] sm:$0xf]
      %v1677 = vld [vmem:[%s1675 + $0x4] sm:$0xf]
      %v1678 = vld [vmem:[%s1675 + $0xc] sm:$0xf]
      %v1679 = vld [vmem:[%s1675 + $0x10] sm:$0xf]
      %v1680 = vld [vmem:[%s1675 + $0x18] sm:$0xf]
      %v1681 = vld [vmem:[%s1675 + $0x1c] sm:$0xf]
      %v1682 = vld [vmem:[%s1675 + $0x24] sm:$0xf]
      %v1683 = vld [vmem:[%s1675 + $0x28] sm:$0xf]
      %v1684 = vld [vmem:[%s1675 + $0x30] sm:$0xf]
      %v1685 = vld [vmem:[%s1675 + $0x34] sm:$0xf]
      %v1686 = vld [vmem:[%s1675 + $0x3c] sm:$0xf]
      %v1687 = vld [vmem:[%s1675 + $0x40] sm:$0xf]
      %v1688 = vld [vmem:[%s1675 + $0x48] sm:$0xf]
      %v1689 = vld [vmem:[%s1675 + $0x4c] sm:$0xf]
      %v1690 = vld [vmem:[%s1675 + $0x54] sm:$0xf]
      %v1691 = vld [vmem:[%s1675 + $0x58] sm:$0xf]
      %v1692 = vld [vmem:[%s1675 + $0x60] sm:$0xf]
      %v1693 = vld [vmem:[%s1675 + $0x64] sm:$0xf]
      %v1694 = vld [vmem:[%s1675 + $0x6c] sm:$0xf]
      %v1695 = vld [vmem:[%s1675 + $0x70] sm:$0xf]
      %v1696 = vld [vmem:[%s1675 + $0x78] sm:$0xf]
      %v1697 = vld [vmem:[%s1675 + $0x7c] sm:$0xf]
      %v1698 = vld [vmem:[%s1675 + $0x84] sm:$0xf]
      %v1699 = vld [vmem:[%s1675 + $0x88] sm:$0xf]
      %v1700 = vld [vmem:[%s1675 + $0x90] sm:$0xf]
      %v1701 = vld [vmem:[%s1675 + $0x94] sm:$0xf]
      %v1702 = vld [vmem:[%s1675 + $0x9c] sm:$0xf]
      %v1703 = vld [vmem:[%s1675 + $0xa0] sm:$0xf]
      %v1704 = vld [vmem:[%s1675 + $0xa8] sm:$0xf]
      %v1705 = vld [vmem:[%s1675 + $0xac] sm:$0xf]
      %v1706 = vld [vmem:[%s1675 + $0xb4] sm:$0xf]
      %v1707 = vld [vmem:[%s1675 + $0xb8] sm:$0xf]
      %s1708 = scalar_lea.vmem %s1, 6
      %v1709 = vld [vmem:[%s1708] sm:$0x3]
      %v1742 = vunpack.c.l.b16 %v1676
      %v1743 = vunpack.c.l.b16 %v1677
      %v1744 = vunpack.c.l.b16 %v1678
      %v1745 = vunpack.c.l.b16 %v1679
      %v1746 = vunpack.c.l.b16 %v1680
      %v1747 = vunpack.c.l.b16 %v1681
      %v1748 = vunpack.c.l.b16 %v1682
      %v1749 = vunpack.c.l.b16 %v1683
      %v1750 = vunpack.c.l.b16 %v1684
      %v1751 = vunpack.c.l.b16 %v1685
      %v1752 = vunpack.c.l.b16 %v1686
      %v1753 = vunpack.c.l.b16 %v1687
      %v1754 = vunpack.c.l.b16 %v1688
      %v1755 = vunpack.c.l.b16 %v1689
      %v1756 = vunpack.c.l.b16 %v1690
      %v1757 = vunpack.c.l.b16 %v1691
      %v1758 = vunpack.c.l.b16 %v1692
      %v1759 = vunpack.c.l.b16 %v1693
      %v1760 = vunpack.c.l.b16 %v1694
      %v1761 = vunpack.c.l.b16 %v1695
      %v1762 = vunpack.c.l.b16 %v1696
      %v1763 = vunpack.c.l.b16 %v1697
      %v1764 = vunpack.c.l.b16 %v1698
      %v1765 = vunpack.c.l.b16 %v1699
      %v1766 = vunpack.c.l.b16 %v1700
      %v1767 = vunpack.c.l.b16 %v1701
      %v1768 = vunpack.c.l.b16 %v1702
      %v1769 = vunpack.c.l.b16 %v1703
      %v1770 = vunpack.c.l.b16 %v1704
      %v1771 = vunpack.c.l.b16 %v1705
      %v1772 = vunpack.c.l.b16 %v1706
      %v1773 = vunpack.c.l.b16 %v1707
      %v1774 = vpack.c.b16 %v1743, %v1742
      %v1775 = vpack.c.b16 %v1745, %v1744
      %v1776 = vpack.c.b16 %v1747, %v1746
      %v1777 = vpack.c.b16 %v1749, %v1748
      %v1778 = vpack.c.b16 %v1751, %v1750
      %v1779 = vpack.c.b16 %v1753, %v1752
      %v1780 = vpack.c.b16 %v1755, %v1754
      %v1781 = vpack.c.b16 %v1757, %v1756
      %v1782 = vpack.c.b16 %v1759, %v1758
      %v1783 = vpack.c.b16 %v1761, %v1760
      %v1784 = vpack.c.b16 %v1763, %v1762
      %v1785 = vpack.c.b16 %v1765, %v1764
      %v1786 = vpack.c.b16 %v1767, %v1766
      %v1787 = vpack.c.b16 %v1769, %v1768
      %v1788 = vpack.c.b16 %v1771, %v1770
      %v1789 = vpack.c.b16 %v1773, %v1772
      %v1791 = vsel %vm712, %v1774, 0
      %v1794 = vsel %vm712, %v1775, 0
      %v1797 = vsel %vm712, %v1776, 0
      %v1800 = vsel %vm712, %v1777, 0
      %v1803 = vsel %vm712, %v1778, 0
      %v1806 = vsel %vm712, %v1779, 0
      %v1809 = vsel %vm712, %v1780, 0
      %v1812 = vsel %vm712, %v1781, 0
      %v1815 = vsel %vm712, %v1782, 0
      %v1818 = vsel %vm712, %v1783, 0
      %v1821 = vsel %vm712, %v1784, 0
      %v1824 = vsel %vm712, %v1785, 0
      %v1827 = vsel %vm712, %v1786, 0
      %v1830 = vsel %vm712, %v1787, 0
      %v1833 = vsel %vm712, %v1788, 0
      %v1836 = vsel %vm712, %v1789, 0
      %v1839 = vsel %vm761, %v1709, 0
      %1841 = vmatprep.subr.bf16.mxu0 0
      %1842 = vmatpush1.bf16.msra.mxu0 %v1839
      %1843 = vmatprep.subr.bf16.mxu0 0
      %1844 = vmatpush1.bf16.msra.mxu0 0
      %1845 = vmatprep.subr.bf16.mxu0 0
      %1846 = vmatpush1.bf16.msra.mxu0 0
      %1847 = vmatprep.subr.bf16.mxu0 0
      %1848 = vmatpush1.bf16.msra.mxu0 0
      %1849 = vmatprep.subr.bf16.mxu0 0
      %1850 = vmatpush1.bf16.msra.mxu0 0
      %1851 = vmatprep.subr.bf16.mxu0 0
      %1852 = vmatpush1.bf16.msra.mxu0 0
      %1853 = vmatprep.subr.bf16.mxu0 0
      %1854 = vmatpush1.bf16.msra.mxu0 0
      %1855 = vmatprep.subr.bf16.mxu0 0
      %1856 = vmatpush1.bf16.msra.mxu0 0
      %1857 = vmatprep.subr.bf16.mxu0 0
      %1858 = vmatpush1.bf16.msra.mxu0 0
      %1859 = vmatprep.subr.bf16.mxu0 0
      %1860 = vmatpush1.bf16.msra.mxu0 0
      %1861 = vmatprep.subr.bf16.mxu0 0
      %1862 = vmatpush1.bf16.msra.mxu0 0
      %1863 = vmatprep.subr.bf16.mxu0 0
      %1864 = vmatpush1.bf16.msra.mxu0 0
      %1865 = vmatprep.subr.bf16.mxu0 0
      %1866 = vmatpush1.bf16.msra.mxu0 0
      %1867 = vmatprep.subr.bf16.mxu0 0
      %1868 = vmatpush1.bf16.msra.mxu0 0
      %1869 = vmatprep.subr.bf16.mxu0 0
      %1870 = vmatpush1.bf16.msra.mxu0 0
      %1871 = vmatprep.subr.bf16.mxu0 0
      %1872 = vmatpush1.bf16.msra.mxu0 0
      %1873 = vmatprep.mubr.bf16.mxu0 0
      %1874 = vmatmul.mubr.bf16.gmra.mrb[0].mxu0 %v1791
      %v1875 = vpop.f32.mrb[0].mxu0
      %v1876 = vadd.f32 0.0, %v1875
      %v1877 = vpop.f32.mrb[0].mxu0
      %v1878 = vpop.f32.mrb[0].mxu0
      %v1879 = vadd.f32 0.0, %v1878
      %v1880 = vpop.f32.mrb[0].mxu0
      %1881 = vmatprep.mubr.bf16.mxu0 0
      %1882 = vmatmul.mubr.bf16.gmra.mrb[0].mxu0 %v1794
      %v1883 = vpop.f32.mrb[0].mxu0
      %v1884 = vadd.f32 0.0, %v1883
      %v1885 = vpop.f32.mrb[0].mxu0
      %v1886 = vpop.f32.mrb[0].mxu0
      %v1887 = vadd.f32 0.0, %v1886
      %v1888 = vpop.f32.mrb[0].mxu0
      %1889 = vmatprep.mubr.bf16.mxu0 0
      %1890 = vmatmul.mubr.bf16.gmra.mrb[0].mxu0 %v1797
      %v1891 = vpop.f32.mrb[0].mxu0
      %v1892 = vadd.f32 0.0, %v1891
      %v1893 = vpop.f32.mrb[0].mxu0
      %v1894 = vpop.f32.mrb[0].mxu0
      %v1895 = vadd.f32 0.0, %v1894
      %v1896 = vpop.f32.mrb[0].mxu0
      %1897 = vmatprep.mubr.bf16.mxu0 0
      %1898 = vmatmul.mubr.bf16.gmra.mrb[0].mxu0 %v1800
      %v1899 = vpop.f32.mrb[0].mxu0
      %v1900 = vadd.f32 0.0, %v1899
      %v1901 = vpop.f32.mrb[0].mxu0
      %v1902 = vpop.f32.mrb[0].mxu0
      %v1903 = vadd.f32 0.0, %v1902
      %v1904 = vpop.f32.mrb[0].mxu0
      %1905 = vmatprep.mubr.bf16.mxu0 0
      %1906 = vmatmul.mubr.bf16.gmra.mrb[0].mxu0 %v1803
      %v1907 = vpop.f32.mrb[0].mxu0
      %v1908 = vadd.f32 0.0, %v1907
      %v1909 = vpop.f32.mrb[0].mxu0
      %v1910 = vpop.f32.mrb[0].mxu0
      %v1911 = vadd.f32 0.0, %v1910
      %v1912 = vpop.f32.mrb[0].mxu0
      %1913 = vmatprep.mubr.bf16.mxu0 0
      %1914 = vmatmul.mubr.bf16.gmra.mrb[0].mxu0 %v1806
      %v1915 = vpop.f32.mrb[0].mxu0
      %v1916 = vadd.f32 0.0, %v1915
      %v1917 = vpop.f32.mrb[0].mxu0
      %v1918 = vpop.f32.mrb[0].mxu0
      %v1919 = vadd.f32 0.0, %v1918
      %v1920 = vpop.f32.mrb[0].mxu0
      %1921 = vmatprep.mubr.bf16.mxu0 0
      %1922 = vmatmul.mubr.bf16.gmra.mrb[0].mxu0 %v1809
      %v1923 = vpop.f32.mrb[0].mxu0
      %v1924 = vadd.f32 0.0, %v1923
      %v1925 = vpop.f32.mrb[0].mxu0
      %v1926 = vpop.f32.mrb[0].mxu0
      %v1927 = vadd.f32 0.0, %v1926
      %v1928 = vpop.f32.mrb[0].mxu0
      %1929 = vmatprep.mubr.bf16.mxu0 0
      %1930 = vmatmul.mubr.bf16.gmra.mrb[0].mxu0 %v1812
      %v1931 = vpop.f32.mrb[0].mxu0
      %v1932 = vadd.f32 0.0, %v1931
      %v1933 = vpop.f32.mrb[0].mxu0
      %v1934 = vpop.f32.mrb[0].mxu0
      %v1935 = vadd.f32 0.0, %v1934
      %v1936 = vpop.f32.mrb[0].mxu0
      %1937 = vmatprep.mubr.bf16.mxu0 0
      %1938 = vmatmul.mubr.bf16.gmra.mrb[0].mxu0 %v1815
      %v1939 = vpop.f32.mrb[0].mxu0
      %v1940 = vadd.f32 0.0, %v1939
      %v1941 = vpop.f32.mrb[0].mxu0
      %v1942 = vpop.f32.mrb[0].mxu0
      %v1943 = vadd.f32 0.0, %v1942
      %v1944 = vpop.f32.mrb[0].mxu0
      %1945 = vmatprep.mubr.bf16.mxu0 0
      %1946 = vmatmul.mubr.bf16.gmra.mrb[0].mxu0 %v1818
      %v1947 = vpop.f32.mrb[0].mxu0
      %v1948 = vadd.f32 0.0, %v1947
      %v1949 = vpop.f32.mrb[0].mxu0
      %v1950 = vpop.f32.mrb[0].mxu0
      %v1951 = vadd.f32 0.0, %v1950
      %v1952 = vpop.f32.mrb[0].mxu0
      %1953 = vmatprep.mubr.bf16.mxu0 0
      %1954 = vmatmul.mubr.bf16.gmra.mrb[0].mxu0 %v1821
      %v1955 = vpop.f32.mrb[0].mxu0
      %v1956 = vadd.f32 0.0, %v1955
      %v1957 = vpop.f32.mrb[0].mxu0
      %v1958 = vpop.f32.mrb[0].mxu0
      %v1959 = vadd.f32 0.0, %v1958
      %v1960 = vpop.f32.mrb[0].mxu0
      %1961 = vmatprep.mubr.bf16.mxu0 0
      %1962 = vmatmul.mubr.bf16.gmra.mrb[0].mxu0 %v1824
      %v1963 = vpop.f32.mrb[0].mxu0
      %v1964 = vadd.f32 0.0, %v1963
      %v1965 = vpop.f32.mrb[0].mxu0
      %v1966 = vpop.f32.mrb[0].mxu0
      %v1967 = vadd.f32 0.0, %v1966
      %v1968 = vpop.f32.mrb[0].mxu0
      %1969 = vmatprep.mubr.bf16.mxu0 0
      %1970 = vmatmul.mubr.bf16.gmra.mrb[0].mxu0 %v1827
      %v1971 = vpop.f32.mrb[0].mxu0
      %v1972 = vadd.f32 0.0, %v1971
      %v1973 = vpop.f32.mrb[0].mxu0
      %v1974 = vpop.f32.mrb[0].mxu0
      %v1975 = vadd.f32 0.0, %v1974
      %v1976 = vpop.f32.mrb[0].mxu0
      %1977 = vmatprep.mubr.bf16.mxu0 0
      %1978 = vmatmul.mubr.bf16.gmra.mrb[0].mxu0 %v1830
      %v1979 = vpop.f32.mrb[0].mxu0
      %v1980 = vadd.f32 0.0, %v1979
      %v1981 = vpop.f32.mrb[0].mxu0
      %v1982 = vpop.f32.mrb[0].mxu0
      %v1983 = vadd.f32 0.0, %v1982
      %v1984 = vpop.f32.mrb[0].mxu0
      %1985 = vmatprep.mubr.bf16.mxu0 0
      %1986 = vmatmul.mubr.bf16.gmra.mrb[0].mxu0 %v1833
      %v1987 = vpop.f32.mrb[0].mxu0
      %v1988 = vadd.f32 0.0, %v1987
      %v1989 = vpop.f32.mrb[0].mxu0
      %v1990 = vpop.f32.mrb[0].mxu0
      %v1991 = vadd.f32 0.0, %v1990
      %v1992 = vpop.f32.mrb[0].mxu0
      %1993 = vmatprep.mubr.bf16.mxu0 0
      %1994 = vmatmul.mubr.bf16.gmra.mrb[0].mxu0 %v1836
      %v1995 = vpop.f32.mrb[0].mxu0
      %v1996 = vadd.f32 0.0, %v1995
      %v1997 = vpop.f32.mrb[0].mxu0
      %v1998 = vpop.f32.mrb[0].mxu0
      %v1999 = vadd.f32 0.0, %v1998
      %v2000 = vpop.f32.mrb[0].mxu0
      %2001 = vdwg.mxu0
      %v2002 = vadd.f32 %v1643, %v1876
      %v2003 = vadd.f32 %v1644, %v1879
      %v2004 = vadd.f32 %v1645, %v1884
      %v2005 = vadd.f32 %v1646, %v1887
      %v2006 = vadd.f32 %v1647, %v1892
      %v2007 = vadd.f32 %v1648, %v1895
      %v2008 = vadd.f32 %v1649, %v1900
      %v2009 = vadd.f32 %v1650, %v1903
      %v2010 = vadd.f32 %v1651, %v1908
      %v2011 = vadd.f32 %v1652, %v1911
      %v2012 = vadd.f32 %v1653, %v1916
      %v2013 = vadd.f32 %v1654, %v1919
      %v2014 = vadd.f32 %v1655, %v1924
      %v2015 = vadd.f32 %v1656, %v1927
      %v2016 = vadd.f32 %v1657, %v1932
      %v2017 = vadd.f32 %v1658, %v1935
      %v2018 = vadd.f32 %v1659, %v1940
      %v2019 = vadd.f32 %v1660, %v1943
      %v2020 = vadd.f32 %v1661, %v1948
      %v2021 = vadd.f32 %v1662, %v1951
      %v2022 = vadd.f32 %v1663, %v1956
      %v2023 = vadd.f32 %v1664, %v1959
      %v2024 = vadd.f32 %v1665, %v1964
      %v2025 = vadd.f32 %v1666, %v1967
      %v2026 = vadd.f32 %v1667, %v1972
      %v2027 = vadd.f32 %v1668, %v1975
      %v2028 = vadd.f32 %v1669, %v1980
      %v2029 = vadd.f32 %v1670, %v1983
      %v2030 = vadd.f32 %v1671, %v1988
      %v2031 = vadd.f32 %v1672, %v1991
      %v2032 = vadd.f32 %v1673, %v1996
      %v2033 = vadd.f32 %v1674, %v1999
      %v2034 = vld [vmem:[%s1675] sm:$0xf]
      %v2035 = vld [vmem:[%s1675 + $0x4] sm:$0xf]
      %v2036 = vld [vmem:[%s1675 + $0x8] sm:$0x1]
      %v2037 = vld [vmem:[%s1675 + $0xc] sm:$0xf]
      %v2038 = vld [vmem:[%s1675 + $0x10] sm:$0xf]
      %v2039 = vld [vmem:[%s1675 + $0x14] sm:$0x1]
      %v2040 = vld [vmem:[%s1675 + $0x18] sm:$0xf]
      %v2041 = vld [vmem:[%s1675 + $0x1c] sm:$0xf]
      %v2042 = vld [vmem:[%s1675 + $0x20] sm:$0x1]
      %v2043 = vld [vmem:[%s1675 + $0x24] sm:$0xf]
      %v2044 = vld [vmem:[%s1675 + $0x28] sm:$0xf]
      %v2045 = vld [vmem:[%s1675 + $0x2c] sm:$0x1]
      %v2046 = vld [vmem:[%s1675 + $0x30] sm:$0xf]
      %v2047 = vld [vmem:[%s1675 + $0x34] sm:$0xf]
      %v2048 = vld [vmem:[%s1675 + $0x38] sm:$0x1]
      %v2049 = vld [vmem:[%s1675 + $0x3c] sm:$0xf]
      %v2050 = vld [vmem:[%s1675 + $0x40] sm:$0xf]
      %v2051 = vld [vmem:[%s1675 + $0x44] sm:$0x1]
      %v2052 = vld [vmem:[%s1675 + $0x48] sm:$0xf]
      %v2053 = vld [vmem:[%s1675 + $0x4c] sm:$0xf]
      %v2054 = vld [vmem:[%s1675 + $0x50] sm:$0x1]
      %v2055 = vld [vmem:[%s1675 + $0x54] sm:$0xf]
      %v2056 = vld [vmem:[%s1675 + $0x58] sm:$0xf]
      %v2057 = vld [vmem:[%s1675 + $0x5c] sm:$0x1]
      %v2058 = vld [vmem:[%s1675 + $0x60] sm:$0xf]
      %v2059 = vld [vmem:[%s1675 + $0x64] sm:$0xf]
      %v2060 = vld [vmem:[%s1675 + $0x68] sm:$0x1]
      %v2061 = vld [vmem:[%s1675 + $0x6c] sm:$0xf]
      %v2062 = vld [vmem:[%s1675 + $0x70] sm:$0xf]
      %v2063 = vld [vmem:[%s1675 + $0x74] sm:$0x1]
      %v2064 = vld [vmem:[%s1675 + $0x78] sm:$0xf]
      %v2065 = vld [vmem:[%s1675 + $0x7c] sm:$0xf]
      %v2066 = vld [vmem:[%s1675 + $0x80] sm:$0x1]
      %v2067 = vld [vmem:[%s1675 + $0x84] sm:$0xf]
      %v2068 = vld [vmem:[%s1675 + $0x88] sm:$0xf]
      %v2069 = vld [vmem:[%s1675 + $0x8c] sm:$0x1]
      %v2070 = vld [vmem:[%s1675 + $0x90] sm:$0xf]
      %v2071 = vld [vmem:[%s1675 + $0x94] sm:$0xf]
      %v2072 = vld [vmem:[%s1675 + $0x98] sm:$0x1]
      %v2073 = vld [vmem:[%s1675 + $0x9c] sm:$0xf]
      %v2074 = vld [vmem:[%s1675 + $0xa0] sm:$0xf]
      %v2075 = vld [vmem:[%s1675 + $0xa4] sm:$0x1]
      %v2076 = vld [vmem:[%s1675 + $0xa8] sm:$0xf]
      %v2077 = vld [vmem:[%s1675 + $0xac] sm:$0xf]
      %v2078 = vld [vmem:[%s1675 + $0xb0] sm:$0x1]
      %v2079 = vld [vmem:[%s1675 + $0xb4] sm:$0xf]
      %v2080 = vld [vmem:[%s1675 + $0xb8] sm:$0xf]
      %v2081 = vld [vmem:[%s1675 + $0xbc] sm:$0x1]
      %v2083 = vshrl.u32 %v2034, 16
      %v2085 = vrot.slane %v2083, 4
      %v2086 = vshll.u32 %v2034, 16
      %v2088 = vrot.slane %v2086, 5
      %v2089 = vor.u32 %v2085, %v2088
      %v2090 = vrot.slane %v2089, 4
      %v2092 = vshll.u32 %v2035, 16
      %v2094 = vrot.slane %v2092, 5
      %v2095 = vsel %vm277, %v2090, %v2094
      %v2096 = vshrl.u32 %v2035, 16
      %v2098 = vrot.slane %v2096, 4
      %v2099 = vor.u32 %v2098, %v2094
      %v2100 = vrot.slane %v2099, 4
      %v2102 = vshll.u32 %v2036, 16
      %v2104 = vrot.slane %v2102, 5
      %v2105 = vsel %vm277, %v2100, %v2104
      %v2107 = vshrl.u32 %v2037, 16
      %v2109 = vrot.slane %v2107, 4
      %v2110 = vshll.u32 %v2037, 16
      %v2112 = vrot.slane %v2110, 5
      %v2113 = vor.u32 %v2109, %v2112
      %v2114 = vrot.slane %v2113, 4
      %v2116 = vshll.u32 %v2038, 16
      %v2118 = vrot.slane %v2116, 5
      %v2119 = vsel %vm277, %v2114, %v2118
      %v2120 = vshrl.u32 %v2038, 16
      %v2122 = vrot.slane %v2120, 4
      %v2123 = vor.u32 %v2122, %v2118
      %v2124 = vrot.slane %v2123, 4
      %v2126 = vshll.u32 %v2039, 16
      %v2128 = vrot.slane %v2126, 5
      %v2129 = vsel %vm277, %v2124, %v2128
      %v2131 = vshrl.u32 %v2040, 16
      %v2133 = vrot.slane %v2131, 4
      %v2134 = vshll.u32 %v2040, 16
      %v2136 = vrot.slane %v2134, 5
      %v2137 = vor.u32 %v2133, %v2136
      %v2138 = vrot.slane %v2137, 4
      %v2140 = vshll.u32 %v2041, 16
      %v2142 = vrot.slane %v2140, 5
      %v2143 = vsel %vm277, %v2138, %v2142
      %v2144 = vshrl.u32 %v2041, 16
      %v2146 = vrot.slane %v2144, 4
      %v2147 = vor.u32 %v2146, %v2142
      %v2148 = vrot.slane %v2147, 4
      %v2150 = vshll.u32 %v2042, 16
      %v2152 = vrot.slane %v2150, 5
      %v2153 = vsel %vm277, %v2148, %v2152
      %v2155 = vshrl.u32 %v2043, 16
      %v2157 = vrot.slane %v2155, 4
      %v2158 = vshll.u32 %v2043, 16
      %v2160 = vrot.slane %v2158, 5
      %v2161 = vor.u32 %v2157, %v2160
      %v2162 = vrot.slane %v2161, 4
      %v2164 = vshll.u32 %v2044, 16
      %v2166 = vrot.slane %v2164, 5
      %v2167 = vsel %vm277, %v2162, %v2166
      %v2168 = vshrl.u32 %v2044, 16
      %v2170 = vrot.slane %v2168, 4
      %v2171 = vor.u32 %v2170, %v2166
      %v2172 = vrot.slane %v2171, 4
      %v2174 = vshll.u32 %v2045, 16
      %v2176 = vrot.slane %v2174, 5
      %v2177 = vsel %vm277, %v2172, %v2176
      %v2179 = vshrl.u32 %v2046, 16
      %v2181 = vrot.slane %v2179, 4
      %v2182 = vshll.u32 %v2046, 16
      %v2184 = vrot.slane %v2182, 5
      %v2185 = vor.u32 %v2181, %v2184
      %v2186 = vrot.slane %v2185, 4
      %v2188 = vshll.u32 %v2047, 16
      %v2190 = vrot.slane %v2188, 5
      %v2191 = vsel %vm277, %v2186, %v2190
      %v2192 = vshrl.u32 %v2047, 16
      %v2194 = vrot.slane %v2192, 4
      %v2195 = vor.u32 %v2194, %v2190
      %v2196 = vrot.slane %v2195, 4
      %v2198 = vshll.u32 %v2048, 16
      %v2200 = vrot.slane %v2198, 5
      %v2201 = vsel %vm277, %v2196, %v2200
      %v2203 = vshrl.u32 %v2049, 16
      %v2205 = vrot.slane %v2203, 4
      %v2206 = vshll.u32 %v2049, 16
      %v2208 = vrot.slane %v2206, 5
      %v2209 = vor.u32 %v2205, %v2208
      %v2210 = vrot.slane %v2209, 4
      %v2212 = vshll.u32 %v2050, 16
      %v2214 = vrot.slane %v2212, 5
      %v2215 = vsel %vm277, %v2210, %v2214
      %v2216 = vshrl.u32 %v2050, 16
      %v2218 = vrot.slane %v2216, 4
      %v2219 = vor.u32 %v2218, %v2214
      %v2220 = vrot.slane %v2219, 4
      %v2222 = vshll.u32 %v2051, 16
      %v2224 = vrot.slane %v2222, 5
      %v2225 = vsel %vm277, %v2220, %v2224
      %v2227 = vshrl.u32 %v2052, 16
      %v2229 = vrot.slane %v2227, 4
      %v2230 = vshll.u32 %v2052, 16
      %v2232 = vrot.slane %v2230, 5
      %v2233 = vor.u32 %v2229, %v2232
      %v2234 = vrot.slane %v2233, 4
      %v2236 = vshll.u32 %v2053, 16
      %v2238 = vrot.slane %v2236, 5
      %v2239 = vsel %vm277, %v2234, %v2238
      %v2240 = vshrl.u32 %v2053, 16
      %v2242 = vrot.slane %v2240, 4
      %v2243 = vor.u32 %v2242, %v2238
      %v2244 = vrot.slane %v2243, 4
      %v2246 = vshll.u32 %v2054, 16
      %v2248 = vrot.slane %v2246, 5
      %v2249 = vsel %vm277, %v2244, %v2248
      %v2251 = vshrl.u32 %v2055, 16
      %v2253 = vrot.slane %v2251, 4
      %v2254 = vshll.u32 %v2055, 16
      %v2256 = vrot.slane %v2254, 5
      %v2257 = vor.u32 %v2253, %v2256
      %v2258 = vrot.slane %v2257, 4
      %v2260 = vshll.u32 %v2056, 16
      %v2262 = vrot.slane %v2260, 5
      %v2263 = vsel %vm277, %v2258, %v2262
      %v2264 = vshrl.u32 %v2056, 16
      %v2266 = vrot.slane %v2264, 4
      %v2267 = vor.u32 %v2266, %v2262
      %v2268 = vrot.slane %v2267, 4
      %v2270 = vshll.u32 %v2057, 16
      %v2272 = vrot.slane %v2270, 5
      %v2273 = vsel %vm277, %v2268, %v2272
      %v2275 = vshrl.u32 %v2058, 16
      %v2277 = vrot.slane %v2275, 4
      %v2278 = vshll.u32 %v2058, 16
      %v2280 = vrot.slane %v2278, 5
      %v2281 = vor.u32 %v2277, %v2280
      %v2282 = vrot.slane %v2281, 4
      %v2284 = vshll.u32 %v2059, 16
      %v2286 = vrot.slane %v2284, 5
      %v2287 = vsel %vm277, %v2282, %v2286
      %v2288 = vshrl.u32 %v2059, 16
      %v2290 = vrot.slane %v2288, 4
      %v2291 = vor.u32 %v2290, %v2286
      %v2292 = vrot.slane %v2291, 4
      %v2294 = vshll.u32 %v2060, 16
      %v2296 = vrot.slane %v2294, 5
      %v2297 = vsel %vm277, %v2292, %v2296
      %v2299 = vshrl.u32 %v2061, 16
      %v2301 = vrot.slane %v2299, 4
      %v2302 = vshll.u32 %v2061, 16
      %v2304 = vrot.slane %v2302, 5
      %v2305 = vor.u32 %v2301, %v2304
      %v2306 = vrot.slane %v2305, 4
      %v2308 = vshll.u32 %v2062, 16
      %v2310 = vrot.slane %v2308, 5
      %v2311 = vsel %vm277, %v2306, %v2310
      %v2312 = vshrl.u32 %v2062, 16
      %v2314 = vrot.slane %v2312, 4
      %v2315 = vor.u32 %v2314, %v2310
      %v2316 = vrot.slane %v2315, 4
      %v2318 = vshll.u32 %v2063, 16
      %v2320 = vrot.slane %v2318, 5
      %v2321 = vsel %vm277, %v2316, %v2320
      %v2323 = vshrl.u32 %v2064, 16
      %v2325 = vrot.slane %v2323, 4
      %v2326 = vshll.u32 %v2064, 16
      %v2328 = vrot.slane %v2326, 5
      %v2329 = vor.u32 %v2325, %v2328
      %v2330 = vrot.slane %v2329, 4
      %v2332 = vshll.u32 %v2065, 16
      %v2334 = vrot.slane %v2332, 5
      %v2335 = vsel %vm277, %v2330, %v2334
      %v2336 = vshrl.u32 %v2065, 16
      %v2338 = vrot.slane %v2336, 4
      %v2339 = vor.u32 %v2338, %v2334
      %v2340 = vrot.slane %v2339, 4
      %v2342 = vshll.u32 %v2066, 16
      %v2344 = vrot.slane %v2342, 5
      %v2345 = vsel %vm277, %v2340, %v2344
      %v2347 = vshrl.u32 %v2067, 16
      %v2349 = vrot.slane %v2347, 4
      %v2350 = vshll.u32 %v2067, 16
      %v2352 = vrot.slane %v2350, 5
      %v2353 = vor.u32 %v2349, %v2352
      %v2354 = vrot.slane %v2353, 4
      %v2356 = vshll.u32 %v2068, 16
      %v2358 = vrot.slane %v2356, 5
      %v2359 = vsel %vm277, %v2354, %v2358
      %v2360 = vshrl.u32 %v2068, 16
      %v2362 = vrot.slane %v2360, 4
      %v2363 = vor.u32 %v2362, %v2358
      %v2364 = vrot.slane %v2363, 4
      %v2366 = vshll.u32 %v2069, 16
      %v2368 = vrot.slane %v2366, 5
      %v2369 = vsel %vm277, %v2364, %v2368
      %v2371 = vshrl.u32 %v2070, 16
      %v2373 = vrot.slane %v2371, 4
      %v2374 = vshll.u32 %v2070, 16
      %v2376 = vrot.slane %v2374, 5
      %v2377 = vor.u32 %v2373, %v2376
      %v2378 = vrot.slane %v2377, 4
      %v2380 = vshll.u32 %v2071, 16
      %v2382 = vrot.slane %v2380, 5
      %v2383 = vsel %vm277, %v2378, %v2382
      %v2384 = vshrl.u32 %v2071, 16
      %v2386 = vrot.slane %v2384, 4
      %v2387 = vor.u32 %v2386, %v2382
      %v2388 = vrot.slane %v2387, 4
      %v2390 = vshll.u32 %v2072, 16
      %v2392 = vrot.slane %v2390, 5
      %v2393 = vsel %vm277, %v2388, %v2392
      %v2395 = vshrl.u32 %v2073, 16
      %v2397 = vrot.slane %v2395, 4
      %v2398 = vshll.u32 %v2073, 16
      %v2400 = vrot.slane %v2398, 5
      %v2401 = vor.u32 %v2397, %v2400
      %v2402 = vrot.slane %v2401, 4
      %v2404 = vshll.u32 %v2074, 16
      %v2406 = vrot.slane %v2404, 5
      %v2407 = vsel %vm277, %v2402, %v2406
      %v2408 = vshrl.u32 %v2074, 16
      %v2410 = vrot.slane %v2408, 4
      %v2411 = vor.u32 %v2410, %v2406
      %v2412 = vrot.slane %v2411, 4
      %v2414 = vshll.u32 %v2075, 16
      %v2416 = vrot.slane %v2414, 5
      %v2417 = vsel %vm277, %v2412, %v2416
      %v2419 = vshrl.u32 %v2076, 16
      %v2421 = vrot.slane %v2419, 4
      %v2422 = vshll.u32 %v2076, 16
      %v2424 = vrot.slane %v2422, 5
      %v2425 = vor.u32 %v2421, %v2424
      %v2426 = vrot.slane %v2425, 4
      %v2428 = vshll.u32 %v2077, 16
      %v2430 = vrot.slane %v2428, 5
      %v2431 = vsel %vm277, %v2426, %v2430
      %v2432 = vshrl.u32 %v2077, 16
      %v2434 = vrot.slane %v2432, 4
      %v2435 = vor.u32 %v2434, %v2430
      %v2436 = vrot.slane %v2435, 4
      %v2438 = vshll.u32 %v2078, 16
      %v2440 = vrot.slane %v2438, 5
      %v2441 = vsel %vm277, %v2436, %v2440
      %v2443 = vshrl.u32 %v2079, 16
      %v2445 = vrot.slane %v2443, 4
      %v2446 = vshll.u32 %v2079, 16
      %v2448 = vrot.slane %v2446, 5
      %v2449 = vor.u32 %v2445, %v2448
      %v2450 = vrot.slane %v2449, 4
      %v2452 = vshll.u32 %v2080, 16
      %v2454 = vrot.slane %v2452, 5
      %v2455 = vsel %vm277, %v2450, %v2454
      %v2456 = vshrl.u32 %v2080, 16
      %v2458 = vrot.slane %v2456, 4
      %v2459 = vor.u32 %v2458, %v2454
      %v2460 = vrot.slane %v2459, 4
      %v2462 = vshll.u32 %v2081, 16
      %v2464 = vrot.slane %v2462, 5
      %v2465 = vsel %vm277, %v2460, %v2464
      %s2466 = scalar_lea.vmem %s1, 8
      %v2467 = vld [vmem:[%s2466] sm:$0x3]
      %v2468 = vunpack.c.l.b16 %v2095
      %v2469 = vunpack.c.l.b16 %v2105
      %v2470 = vunpack.c.l.b16 %v2119
      %v2471 = vunpack.c.l.b16 %v2129
      %v2472 = vunpack.c.l.b16 %v2143
      %v2473 = vunpack.c.l.b16 %v2153
      %v2474 = vunpack.c.l.b16 %v2167
      %v2475 = vunpack.c.l.b16 %v2177
      %v2476 = vunpack.c.l.b16 %v2191
      %v2477 = vunpack.c.l.b16 %v2201
      %v2478 = vunpack.c.l.b16 %v2215
      %v2479 = vunpack.c.l.b16 %v2225
      %v2480 = vunpack.c.l.b16 %v2239
      %v2481 = vunpack.c.l.b16 %v2249
      %v2482 = vunpack.c.l.b16 %v2263
      %v2483 = vunpack.c.l.b16 %v2273
      %v2484 = vunpack.c.l.b16 %v2287
      %v2485 = vunpack.c.l.b16 %v2297
      %v2486 = vunpack.c.l.b16 %v2311
      %v2487 = vunpack.c.l.b16 %v2321
      %v2488 = vunpack.c.l.b16 %v2335
      %v2489 = vunpack.c.l.b16 %v2345
      %v2490 = vunpack.c.l.b16 %v2359
      %v2491 = vunpack.c.l.b16 %v2369
      %v2492 = vunpack.c.l.b16 %v2383
      %v2493 = vunpack.c.l.b16 %v2393
      %v2494 = vunpack.c.l.b16 %v2407
      %v2495 = vunpack.c.l.b16 %v2417
      %v2496 = vunpack.c.l.b16 %v2431
      %v2497 = vunpack.c.l.b16 %v2441
      %v2498 = vunpack.c.l.b16 %v2455
      %v2499 = vunpack.c.l.b16 %v2465
      %v2500 = vpack.c.b16 %v2469, %v2468
      %v2501 = vpack.c.b16 %v2471, %v2470
      %v2502 = vpack.c.b16 %v2473, %v2472
      %v2503 = vpack.c.b16 %v2475, %v2474
      %v2504 = vpack.c.b16 %v2477, %v2476
      %v2505 = vpack.c.b16 %v2479, %v2478
      %v2506 = vpack.c.b16 %v2481, %v2480
      %v2507 = vpack.c.b16 %v2483, %v2482
      %v2508 = vpack.c.b16 %v2485, %v2484
      %v2509 = vpack.c.b16 %v2487, %v2486
      %v2510 = vpack.c.b16 %v2489, %v2488
      %v2511 = vpack.c.b16 %v2491, %v2490
      %v2512 = vpack.c.b16 %v2493, %v2492
      %v2513 = vpack.c.b16 %v2495, %v2494
      %v2514 = vpack.c.b16 %v2497, %v2496
      %v2515 = vpack.c.b16 %v2499, %v2498
      %v2517 = vsel %vm712, %v2500, 0
      %v2520 = vsel %vm712, %v2501, 0
      %v2523 = vsel %vm712, %v2502, 0
      %v2526 = vsel %vm712, %v2503, 0
      %v2529 = vsel %vm712, %v2504, 0
      %v2532 = vsel %vm712, %v2505, 0
      %v2535 = vsel %vm712, %v2506, 0
      %v2538 = vsel %vm712, %v2507, 0
      %v2541 = vsel %vm712, %v2508, 0
      %v2544 = vsel %vm712, %v2509, 0
      %v2547 = vsel %vm712, %v2510, 0
      %v2550 = vsel %vm712, %v2511, 0
      %v2553 = vsel %vm712, %v2512, 0
      %v2556 = vsel %vm712, %v2513, 0
      %v2559 = vsel %vm712, %v2514, 0
      %v2562 = vsel %vm712, %v2515, 0
      %v2565 = vsel %vm761, %v2467, 0
      %2567 = vmatprep.subr.bf16.mxu0 0
      %2568 = vmatpush1.bf16.msra.mxu0 %v2565
      %2569 = vmatprep.subr.bf16.mxu0 0
      %2570 = vmatpush1.bf16.msra.mxu0 0
      %2571 = vmatprep.subr.bf16.mxu0 0
      %2572 = vmatpush1.bf16.msra.mxu0 0
      %2573 = vmatprep.subr.bf16.mxu0 0
      %2574 = vmatpush1.bf16.msra.mxu0 0
      %2575 = vmatprep.subr.bf16.mxu0 0
      %2576 = vmatpush1.bf16.msra.mxu0 0
      %2577 = vmatprep.subr.bf16.mxu0 0
      %2578 = vmatpush1.bf16.msra.mxu0 0
      %2579 = vmatprep.subr.bf16.mxu0 0
      %2580 = vmatpush1.bf16.msra.mxu0 0
      %2581 = vmatprep.subr.bf16.mxu0 0
      %2582 = vmatpush1.bf16.msra.mxu0 0
      %2583 = vmatprep.subr.bf16.mxu0 0
      %2584 = vmatpush1.bf16.msra.mxu0 0
      %2585 = vmatprep.subr.bf16.mxu0 0
      %2586 = vmatpush1.bf16.msra.mxu0 0
      %2587 = vmatprep.subr.bf16.mxu0 0
      %2588 = vmatpush1.bf16.msra.mxu0 0
      %2589 = vmatprep.subr.bf16.mxu0 0
      %2590 = vmatpush1.bf16.msra.mxu0 0
      %2591 = vmatprep.subr.bf16.mxu0 0
      %2592 = vmatpush1.bf16.msra.mxu0 0
      %2593 = vmatprep.subr.bf16.mxu0 0
      %2594 = vmatpush1.bf16.msra.mxu0 0
      %2595 = vmatprep.subr.bf16.mxu0 0
      %2596 = vmatpush1.bf16.msra.mxu0 0
      %2597 = vmatprep.subr.bf16.mxu0 0
      %2598 = vmatpush1.bf16.msra.mxu0 0
      %2599 = vmatprep.mubr.bf16.mxu0 0
      %2600 = vmatmul.mubr.bf16.gmra.mrb[0].mxu0 %v2517
      %v2601 = vpop.f32.mrb[0].mxu0
      %v2602 = vadd.f32 0.0, %v2601
      %v2603 = vpop.f32.mrb[0].mxu0
      %v2604 = vpop.f32.mrb[0].mxu0
      %v2605 = vadd.f32 0.0, %v2604
      %v2606 = vpop.f32.mrb[0].mxu0
      %2607 = vmatprep.mubr.bf16.mxu0 0
      %2608 = vmatmul.mubr.bf16.gmra.mrb[0].mxu0 %v2520
      %v2609 = vpop.f32.mrb[0].mxu0
      %v2610 = vadd.f32 0.0, %v2609
      %v2611 = vpop.f32.mrb[0].mxu0
      %v2612 = vpop.f32.mrb[0].mxu0
      %v2613 = vadd.f32 0.0, %v2612
      %v2614 = vpop.f32.mrb[0].mxu0
      %2615 = vmatprep.mubr.bf16.mxu0 0
      %2616 = vmatmul.mubr.bf16.gmra.mrb[0].mxu0 %v2523
      %v2617 = vpop.f32.mrb[0].mxu0
      %v2618 = vadd.f32 0.0, %v2617
      %v2619 = vpop.f32.mrb[0].mxu0
      %v2620 = vpop.f32.mrb[0].mxu0
      %v2621 = vadd.f32 0.0, %v2620
      %v2622 = vpop.f32.mrb[0].mxu0
      %2623 = vmatprep.mubr.bf16.mxu0 0
      %2624 = vmatmul.mubr.bf16.gmra.mrb[0].mxu0 %v2526
      %v2625 = vpop.f32.mrb[0].mxu0
      %v2626 = vadd.f32 0.0, %v2625
      %v2627 = vpop.f32.mrb[0].mxu0
      %v2628 = vpop.f32.mrb[0].mxu0
      %v2629 = vadd.f32 0.0, %v2628
      %v2630 = vpop.f32.mrb[0].mxu0
      %2631 = vmatprep.mubr.bf16.mxu0 0
      %2632 = vmatmul.mubr.bf16.gmra.mrb[0].mxu0 %v2529
      %v2633 = vpop.f32.mrb[0].mxu0
      %v2634 = vadd.f32 0.0, %v2633
      %v2635 = vpop.f32.mrb[0].mxu0
      %v2636 = vpop.f32.mrb[0].mxu0
      %v2637 = vadd.f32 0.0, %v2636
      %v2638 = vpop.f32.mrb[0].mxu0
      %2639 = vmatprep.mubr.bf16.mxu0 0
      %2640 = vmatmul.mubr.bf16.gmra.mrb[0].mxu0 %v2532
      %v2641 = vpop.f32.mrb[0].mxu0
      %v2642 = vadd.f32 0.0, %v2641
      %v2643 = vpop.f32.mrb[0].mxu0
      %v2644 = vpop.f32.mrb[0].mxu0
      %v2645 = vadd.f32 0.0, %v2644
      %v2646 = vpop.f32.mrb[0].mxu0
      %2647 = vmatprep.mubr.bf16.mxu0 0
      %2648 = vmatmul.mubr.bf16.gmra.mrb[0].mxu0 %v2535
      %v2649 = vpop.f32.mrb[0].mxu0
      %v2650 = vadd.f32 0.0, %v2649
      %v2651 = vpop.f32.mrb[0].mxu0
      %v2652 = vpop.f32.mrb[0].mxu0
      %v2653 = vadd.f32 0.0, %v2652
      %v2654 = vpop.f32.mrb[0].mxu0
      %2655 = vmatprep.mubr.bf16.mxu0 0
      %2656 = vmatmul.mubr.bf16.gmra.mrb[0].mxu0 %v2538
      %v2657 = vpop.f32.mrb[0].mxu0
      %v2658 = vadd.f32 0.0, %v2657
      %v2659 = vpop.f32.mrb[0].mxu0
      %v2660 = vpop.f32.mrb[0].mxu0
      %v2661 = vadd.f32 0.0, %v2660
      %v2662 = vpop.f32.mrb[0].mxu0
      %2663 = vmatprep.mubr.bf16.mxu0 0
      %2664 = vmatmul.mubr.bf16.gmra.mrb[0].mxu0 %v2541
      %v2665 = vpop.f32.mrb[0].mxu0
      %v2666 = vadd.f32 0.0, %v2665
      %v2667 = vpop.f32.mrb[0].mxu0
      %v2668 = vpop.f32.mrb[0].mxu0
      %v2669 = vadd.f32 0.0, %v2668
      %v2670 = vpop.f32.mrb[0].mxu0
      %2671 = vmatprep.mubr.bf16.mxu0 0
      %2672 = vmatmul.mubr.bf16.gmra.mrb[0].mxu0 %v2544
      %v2673 = vpop.f32.mrb[0].mxu0
      %v2674 = vadd.f32 0.0, %v2673
      %v2675 = vpop.f32.mrb[0].mxu0
      %v2676 = vpop.f32.mrb[0].mxu0
      %v2677 = vadd.f32 0.0, %v2676
      %v2678 = vpop.f32.mrb[0].mxu0
      %2679 = vmatprep.mubr.bf16.mxu0 0
      %2680 = vmatmul.mubr.bf16.gmra.mrb[0].mxu0 %v2547
      %v2681 = vpop.f32.mrb[0].mxu0
      %v2682 = vadd.f32 0.0, %v2681
      %v2683 = vpop.f32.mrb[0].mxu0
      %v2684 = vpop.f32.mrb[0].mxu0
      %v2685 = vadd.f32 0.0, %v2684
      %v2686 = vpop.f32.mrb[0].mxu0
      %2687 = vmatprep.mubr.bf16.mxu0 0
      %2688 = vmatmul.mubr.bf16.gmra.mrb[0].mxu0 %v2550
      %v2689 = vpop.f32.mrb[0].mxu0
      %v2690 = vadd.f32 0.0, %v2689
      %v2691 = vpop.f32.mrb[0].mxu0
      %v2692 = vpop.f32.mrb[0].mxu0
      %v2693 = vadd.f32 0.0, %v2692
      %v2694 = vpop.f32.mrb[0].mxu0
      %2695 = vmatprep.mubr.bf16.mxu0 0
      %2696 = vmatmul.mubr.bf16.gmra.mrb[0].mxu0 %v2553
      %v2697 = vpop.f32.mrb[0].mxu0
      %v2698 = vadd.f32 0.0, %v2697
      %v2699 = vpop.f32.mrb[0].mxu0
      %v2700 = vpop.f32.mrb[0].mxu0
      %v2701 = vadd.f32 0.0, %v2700
      %v2702 = vpop.f32.mrb[0].mxu0
      %2703 = vmatprep.mubr.bf16.mxu0 0
      %2704 = vmatmul.mubr.bf16.gmra.mrb[0].mxu0 %v2556
      %v2705 = vpop.f32.mrb[0].mxu0
      %v2706 = vadd.f32 0.0, %v2705
      %v2707 = vpop.f32.mrb[0].mxu0
      %v2708 = vpop.f32.mrb[0].mxu0
      %v2709 = vadd.f32 0.0, %v2708
      %v2710 = vpop.f32.mrb[0].mxu0
      %2711 = vmatprep.mubr.bf16.mxu0 0
      %2712 = vmatmul.mubr.bf16.gmra.mrb[0].mxu0 %v2559
      %v2713 = vpop.f32.mrb[0].mxu0
      %v2714 = vadd.f32 0.0, %v2713
      %v2715 = vpop.f32.mrb[0].mxu0
      %v2716 = vpop.f32.mrb[0].mxu0
      %v2717 = vadd.f32 0.0, %v2716
      %v2718 = vpop.f32.mrb[0].mxu0
      %2719 = vmatprep.mubr.bf16.mxu0 0
      %2720 = vmatmul.mubr.bf16.gmra.mrb[0].mxu0 %v2562
      %v2721 = vpop.f32.mrb[0].mxu0
      %v2722 = vadd.f32 0.0, %v2721
      %v2723 = vpop.f32.mrb[0].mxu0
      %v2724 = vpop.f32.mrb[0].mxu0
      %v2725 = vadd.f32 0.0, %v2724
      %v2726 = vpop.f32.mrb[0].mxu0
      %2727 = vdwg.mxu0
      %v2728 = vadd.f32 %v2002, %v2602
      %v2729 = vadd.f32 %v2003, %v2605
      %v2730 = vadd.f32 %v2004, %v2610
      %v2731 = vadd.f32 %v2005, %v2613
      %v2732 = vadd.f32 %v2006, %v2618
      %v2733 = vadd.f32 %v2007, %v2621
      %v2734 = vadd.f32 %v2008, %v2626
      %v2735 = vadd.f32 %v2009, %v2629
      %v2736 = vadd.f32 %v2010, %v2634
      %v2737 = vadd.f32 %v2011, %v2637
      %v2738 = vadd.f32 %v2012, %v2642
      %v2739 = vadd.f32 %v2013, %v2645
      %v2740 = vadd.f32 %v2014, %v2650
      %v2741 = vadd.f32 %v2015, %v2653
      %v2742 = vadd.f32 %v2016, %v2658
      %v2743 = vadd.f32 %v2017, %v2661
      %v2744 = vadd.f32 %v2018, %v2666
      %v2745 = vadd.f32 %v2019, %v2669
      %v2746 = vadd.f32 %v2020, %v2674
      %v2747 = vadd.f32 %v2021, %v2677
      %v2748 = vadd.f32 %v2022, %v2682
      %v2749 = vadd.f32 %v2023, %v2685
      %v2750 = vadd.f32 %v2024, %v2690
      %v2751 = vadd.f32 %v2025, %v2693
      %v2752 = vadd.f32 %v2026, %v2698
      %v2753 = vadd.f32 %v2027, %v2701
      %v2754 = vadd.f32 %v2028, %v2706
      %v2755 = vadd.f32 %v2029, %v2709
      %v2756 = vadd.f32 %v2030, %v2714
      %v2757 = vadd.f32 %v2031, %v2717
      %v2758 = vadd.f32 %v2032, %v2722
      %v2759 = vadd.f32 %v2033, %v2725
      %v2760 = vld [vmem:[%s1675] sm:$0xe]
      %v2761 = vld [vmem:[%s1675 + $0xc] sm:$0xe]
      %v2762 = vld [vmem:[%s1675 + $0x18] sm:$0xe]
      %v2763 = vld [vmem:[%s1675 + $0x24] sm:$0xe]
      %v2764 = vld [vmem:[%s1675 + $0x30] sm:$0xe]
      %v2765 = vld [vmem:[%s1675 + $0x3c] sm:$0xe]
      %v2766 = vld [vmem:[%s1675 + $0x48] sm:$0xe]
      %v2767 = vld [vmem:[%s1675 + $0x54] sm:$0xe]
      %v2768 = vld [vmem:[%s1675 + $0x60] sm:$0xe]
      %v2769 = vld [vmem:[%s1675 + $0x6c] sm:$0xe]
      %v2770 = vld [vmem:[%s1675 + $0x78] sm:$0xe]
      %v2771 = vld [vmem:[%s1675 + $0x84] sm:$0xe]
      %v2772 = vld [vmem:[%s1675 + $0x90] sm:$0xe]
      %v2773 = vld [vmem:[%s1675 + $0x9c] sm:$0xe]
      %v2774 = vld [vmem:[%s1675 + $0xa8] sm:$0xe]
      %v2775 = vld [vmem:[%s1675 + $0xb4] sm:$0xe]
      %v2824 = vrot.slane %v2760, 5
      %v2825 = vrot.slane %v2824, 4
      %v2826 = vrot.slane %v2035, 5
      %v2827 = vsel %vm1268, %v2825, %v2826
      %v2828 = vrot.slane %v2826, 4
      %v2829 = vrot.slane %v2036, 5
      %v2830 = vsel %vm1268, %v2828, %v2829
      %v2831 = vrot.slane %v2761, 5
      %v2832 = vrot.slane %v2831, 4
      %v2833 = vrot.slane %v2038, 5
      %v2834 = vsel %vm1268, %v2832, %v2833
      %v2835 = vrot.slane %v2833, 4
      %v2836 = vrot.slane %v2039, 5
      %v2837 = vsel %vm1268, %v2835, %v2836
      %v2838 = vrot.slane %v2762, 5
      %v2839 = vrot.slane %v2838, 4
      %v2840 = vrot.slane %v2041, 5
      %v2841 = vsel %vm1268, %v2839, %v2840
      %v2842 = vrot.slane %v2840, 4
      %v2843 = vrot.slane %v2042, 5
      %v2844 = vsel %vm1268, %v2842, %v2843
      %v2845 = vrot.slane %v2763, 5
      %v2846 = vrot.slane %v2845, 4
      %v2847 = vrot.slane %v2044, 5
      %v2848 = vsel %vm1268, %v2846, %v2847
      %v2849 = vrot.slane %v2847, 4
      %v2850 = vrot.slane %v2045, 5
      %v2851 = vsel %vm1268, %v2849, %v2850
      %v2852 = vrot.slane %v2764, 5
      %v2853 = vrot.slane %v2852, 4
      %v2854 = vrot.slane %v2047, 5
      %v2855 = vsel %vm1268, %v2853, %v2854
      %v2856 = vrot.slane %v2854, 4
      %v2857 = vrot.slane %v2048, 5
      %v2858 = vsel %vm1268, %v2856, %v2857
      %v2859 = vrot.slane %v2765, 5
      %v2860 = vrot.slane %v2859, 4
      %v2861 = vrot.slane %v2050, 5
      %v2862 = vsel %vm1268, %v2860, %v2861
      %v2863 = vrot.slane %v2861, 4
      %v2864 = vrot.slane %v2051, 5
      %v2865 = vsel %vm1268, %v2863, %v2864
      %v2866 = vrot.slane %v2766, 5
      %v2867 = vrot.slane %v2866, 4
      %v2868 = vrot.slane %v2053, 5
      %v2869 = vsel %vm1268, %v2867, %v2868
      %v2870 = vrot.slane %v2868, 4
      %v2871 = vrot.slane %v2054, 5
      %v2872 = vsel %vm1268, %v2870, %v2871
      %v2873 = vrot.slane %v2767, 5
      %v2874 = vrot.slane %v2873, 4
      %v2875 = vrot.slane %v2056, 5
      %v2876 = vsel %vm1268, %v2874, %v2875
      %v2877 = vrot.slane %v2875, 4
      %v2878 = vrot.slane %v2057, 5
      %v2879 = vsel %vm1268, %v2877, %v2878
      %v2880 = vrot.slane %v2768, 5
      %v2881 = vrot.slane %v2880, 4
      %v2882 = vrot.slane %v2059, 5
      %v2883 = vsel %vm1268, %v2881, %v2882
      %v2884 = vrot.slane %v2882, 4
      %v2885 = vrot.slane %v2060, 5
      %v2886 = vsel %vm1268, %v2884, %v2885
      %v2887 = vrot.slane %v2769, 5
      %v2888 = vrot.slane %v2887, 4
      %v2889 = vrot.slane %v2062, 5
      %v2890 = vsel %vm1268, %v2888, %v2889
      %v2891 = vrot.slane %v2889, 4
      %v2892 = vrot.slane %v2063, 5
      %v2893 = vsel %vm1268, %v2891, %v2892
      %v2894 = vrot.slane %v2770, 5
      %v2895 = vrot.slane %v2894, 4
      %v2896 = vrot.slane %v2065, 5
      %v2897 = vsel %vm1268, %v2895, %v2896
      %v2898 = vrot.slane %v2896, 4
      %v2899 = vrot.slane %v2066, 5
      %v2900 = vsel %vm1268, %v2898, %v2899
      %v2901 = vrot.slane %v2771, 5
      %v2902 = vrot.slane %v2901, 4
      %v2903 = vrot.slane %v2068, 5
      %v2904 = vsel %vm1268, %v2902, %v2903
      %v2905 = vrot.slane %v2903, 4
      %v2906 = vrot.slane %v2069, 5
      %v2907 = vsel %vm1268, %v2905, %v2906
      %v2908 = vrot.slane %v2772, 5
      %v2909 = vrot.slane %v2908, 4
      %v2910 = vrot.slane %v2071, 5
      %v2911 = vsel %vm1268, %v2909, %v2910
      %v2912 = vrot.slane %v2910, 4
      %v2913 = vrot.slane %v2072, 5
      %v2914 = vsel %vm1268, %v2912, %v2913
      %v2915 = vrot.slane %v2773, 5
      %v2916 = vrot.slane %v2915, 4
      %v2917 = vrot.slane %v2074, 5
      %v2918 = vsel %vm1268, %v2916, %v2917
      %v2919 = vrot.slane %v2917, 4
      %v2920 = vrot.slane %v2075, 5
      %v2921 = vsel %vm1268, %v2919, %v2920
      %v2922 = vrot.slane %v2774, 5
      %v2923 = vrot.slane %v2922, 4
      %v2924 = vrot.slane %v2077, 5
      %v2925 = vsel %vm1268, %v2923, %v2924
      %v2926 = vrot.slane %v2924, 4
      %v2927 = vrot.slane %v2078, 5
      %v2928 = vsel %vm1268, %v2926, %v2927
      %v2929 = vrot.slane %v2775, 5
      %v2930 = vrot.slane %v2929, 4
      %v2931 = vrot.slane %v2080, 5
      %v2932 = vsel %vm1268, %v2930, %v2931
      %v2933 = vrot.slane %v2931, 4
      %v2934 = vrot.slane %v2081, 5
      %v2935 = vsel %vm1268, %v2933, %v2934
      %s2936 = scalar_lea.vmem %s1, 10
      %v2937 = vld [vmem:[%s2936] sm:$0x3]
      %v2938 = vunpack.c.l.b16 %v2827
      %v2939 = vunpack.c.l.b16 %v2830
      %v2940 = vunpack.c.l.b16 %v2834
      %v2941 = vunpack.c.l.b16 %v2837
      %v2942 = vunpack.c.l.b16 %v2841
      %v2943 = vunpack.c.l.b16 %v2844
      %v2944 = vunpack.c.l.b16 %v2848
      %v2945 = vunpack.c.l.b16 %v2851
      %v2946 = vunpack.c.l.b16 %v2855
      %v2947 = vunpack.c.l.b16 %v2858
      %v2948 = vunpack.c.l.b16 %v2862
      %v2949 = vunpack.c.l.b16 %v2865
      %v2950 = vunpack.c.l.b16 %v2869
      %v2951 = vunpack.c.l.b16 %v2872
      %v2952 = vunpack.c.l.b16 %v2876
      %v2953 = vunpack.c.l.b16 %v2879
      %v2954 = vunpack.c.l.b16 %v2883
      %v2955 = vunpack.c.l.b16 %v2886
      %v2956 = vunpack.c.l.b16 %v2890
      %v2957 = vunpack.c.l.b16 %v2893
      %v2958 = vunpack.c.l.b16 %v2897
      %v2959 = vunpack.c.l.b16 %v2900
      %v2960 = vunpack.c.l.b16 %v2904
      %v2961 = vunpack.c.l.b16 %v2907
      %v2962 = vunpack.c.l.b16 %v2911
      %v2963 = vunpack.c.l.b16 %v2914
      %v2964 = vunpack.c.l.b16 %v2918
      %v2965 = vunpack.c.l.b16 %v2921
      %v2966 = vunpack.c.l.b16 %v2925
      %v2967 = vunpack.c.l.b16 %v2928
      %v2968 = vunpack.c.l.b16 %v2932
      %v2969 = vunpack.c.l.b16 %v2935
      %v2970 = vpack.c.b16 %v2939, %v2938
      %v2971 = vpack.c.b16 %v2941, %v2940
      %v2972 = vpack.c.b16 %v2943, %v2942
      %v2973 = vpack.c.b16 %v2945, %v2944
      %v2974 = vpack.c.b16 %v2947, %v2946
      %v2975 = vpack.c.b16 %v2949, %v2948
      %v2976 = vpack.c.b16 %v2951, %v2950
      %v2977 = vpack.c.b16 %v2953, %v2952
      %v2978 = vpack.c.b16 %v2955, %v2954
      %v2979 = vpack.c.b16 %v2957, %v2956
      %v2980 = vpack.c.b16 %v2959, %v2958
      %v2981 = vpack.c.b16 %v2961, %v2960
      %v2982 = vpack.c.b16 %v2963, %v2962
      %v2983 = vpack.c.b16 %v2965, %v2964
      %v2984 = vpack.c.b16 %v2967, %v2966
      %v2985 = vpack.c.b16 %v2969, %v2968
      %v2987 = vsel %vm712, %v2970, 0
      %v2990 = vsel %vm712, %v2971, 0
      %v2993 = vsel %vm712, %v2972, 0
      %v2996 = vsel %vm712, %v2973, 0
      %v2999 = vsel %vm712, %v2974, 0
      %v3002 = vsel %vm712, %v2975, 0
      %v3005 = vsel %vm712, %v2976, 0
      %v3008 = vsel %vm712, %v2977, 0
      %v3011 = vsel %vm712, %v2978, 0
      %v3014 = vsel %vm712, %v2979, 0
      %v3017 = vsel %vm712, %v2980, 0
      %v3020 = vsel %vm712, %v2981, 0
      %v3023 = vsel %vm712, %v2982, 0
      %v3026 = vsel %vm712, %v2983, 0
      %v3029 = vsel %vm712, %v2984, 0
      %v3032 = vsel %vm712, %v2985, 0
      %v3035 = vsel %vm761, %v2937, 0
      %3037 = vmatprep.subr.bf16.mxu0 0
      %3038 = vmatpush1.bf16.msra.mxu0 %v3035
      %3039 = vmatprep.subr.bf16.mxu0 0
      %3040 = vmatpush1.bf16.msra.mxu0 0
      %3041 = vmatprep.subr.bf16.mxu0 0
      %3042 = vmatpush1.bf16.msra.mxu0 0
      %3043 = vmatprep.subr.bf16.mxu0 0
      %3044 = vmatpush1.bf16.msra.mxu0 0
      %3045 = vmatprep.subr.bf16.mxu0 0
      %3046 = vmatpush1.bf16.msra.mxu0 0
      %3047 = vmatprep.subr.bf16.mxu0 0
      %3048 = vmatpush1.bf16.msra.mxu0 0
      %3049 = vmatprep.subr.bf16.mxu0 0
      %3050 = vmatpush1.bf16.msra.mxu0 0
      %3051 = vmatprep.subr.bf16.mxu0 0
      %3052 = vmatpush1.bf16.msra.mxu0 0
      %3053 = vmatprep.subr.bf16.mxu0 0
      %3054 = vmatpush1.bf16.msra.mxu0 0
      %3055 = vmatprep.subr.bf16.mxu0 0
      %3056 = vmatpush1.bf16.msra.mxu0 0
      %3057 = vmatprep.subr.bf16.mxu0 0
      %3058 = vmatpush1.bf16.msra.mxu0 0
      %3059 = vmatprep.subr.bf16.mxu0 0
      %3060 = vmatpush1.bf16.msra.mxu0 0
      %3061 = vmatprep.subr.bf16.mxu0 0
      %3062 = vmatpush1.bf16.msra.mxu0 0
      %3063 = vmatprep.subr.bf16.mxu0 0
      %3064 = vmatpush1.bf16.msra.mxu0 0
      %3065 = vmatprep.subr.bf16.mxu0 0
      %3066 = vmatpush1.bf16.msra.mxu0 0
      %3067 = vmatprep.subr.bf16.mxu0 0
      %3068 = vmatpush1.bf16.msra.mxu0 0
      %3069 = vmatprep.mubr.bf16.mxu0 0
      %3070 = vmatmul.mubr.bf16.gmra.mrb[0].mxu0 %v2987
      %v3071 = vpop.f32.mrb[0].mxu0
      %v3072 = vadd.f32 0.0, %v3071
      %v3073 = vpop.f32.mrb[0].mxu0
      %v3074 = vpop.f32.mrb[0].mxu0
      %v3075 = vadd.f32 0.0, %v3074
      %v3076 = vpop.f32.mrb[0].mxu0
      %3077 = vmatprep.mubr.bf16.mxu0 0
      %3078 = vmatmul.mubr.bf16.gmra.mrb[0].mxu0 %v2990
      %v3079 = vpop.f32.mrb[0].mxu0
      %v3080 = vadd.f32 0.0, %v3079
      %v3081 = vpop.f32.mrb[0].mxu0
      %v3082 = vpop.f32.mrb[0].mxu0
      %v3083 = vadd.f32 0.0, %v3082
      %v3084 = vpop.f32.mrb[0].mxu0
      %3085 = vmatprep.mubr.bf16.mxu0 0
      %3086 = vmatmul.mubr.bf16.gmra.mrb[0].mxu0 %v2993
      %v3087 = vpop.f32.mrb[0].mxu0
      %v3088 = vadd.f32 0.0, %v3087
      %v3089 = vpop.f32.mrb[0].mxu0
      %v3090 = vpop.f32.mrb[0].mxu0
      %v3091 = vadd.f32 0.0, %v3090
      %v3092 = vpop.f32.mrb[0].mxu0
      %3093 = vmatprep.mubr.bf16.mxu0 0
      %3094 = vmatmul.mubr.bf16.gmra.mrb[0].mxu0 %v2996
      %v3095 = vpop.f32.mrb[0].mxu0
      %v3096 = vadd.f32 0.0, %v3095
      %v3097 = vpop.f32.mrb[0].mxu0
      %v3098 = vpop.f32.mrb[0].mxu0
      %v3099 = vadd.f32 0.0, %v3098
      %v3100 = vpop.f32.mrb[0].mxu0
      %3101 = vmatprep.mubr.bf16.mxu0 0
      %3102 = vmatmul.mubr.bf16.gmra.mrb[0].mxu0 %v2999
      %v3103 = vpop.f32.mrb[0].mxu0
      %v3104 = vadd.f32 0.0, %v3103
      %v3105 = vpop.f32.mrb[0].mxu0
      %v3106 = vpop.f32.mrb[0].mxu0
      %v3107 = vadd.f32 0.0, %v3106
      %v3108 = vpop.f32.mrb[0].mxu0
      %3109 = vmatprep.mubr.bf16.mxu0 0
      %3110 = vmatmul.mubr.bf16.gmra.mrb[0].mxu0 %v3002
      %v3111 = vpop.f32.mrb[0].mxu0
      %v3112 = vadd.f32 0.0, %v3111
      %v3113 = vpop.f32.mrb[0].mxu0
      %v3114 = vpop.f32.mrb[0].mxu0
      %v3115 = vadd.f32 0.0, %v3114
      %v3116 = vpop.f32.mrb[0].mxu0
      %3117 = vmatprep.mubr.bf16.mxu0 0
      %3118 = vmatmul.mubr.bf16.gmra.mrb[0].mxu0 %v3005
      %v3119 = vpop.f32.mrb[0].mxu0
      %v3120 = vadd.f32 0.0, %v3119
      %v3121 = vpop.f32.mrb[0].mxu0
      %v3122 = vpop.f32.mrb[0].mxu0
      %v3123 = vadd.f32 0.0, %v3122
      %v3124 = vpop.f32.mrb[0].mxu0
      %3125 = vmatprep.mubr.bf16.mxu0 0
      %3126 = vmatmul.mubr.bf16.gmra.mrb[0].mxu0 %v3008
      %v3127 = vpop.f32.mrb[0].mxu0
      %v3128 = vadd.f32 0.0, %v3127
      %v3129 = vpop.f32.mrb[0].mxu0
      %v3130 = vpop.f32.mrb[0].mxu0
      %v3131 = vadd.f32 0.0, %v3130
      %v3132 = vpop.f32.mrb[0].mxu0
      %3133 = vmatprep.mubr.bf16.mxu0 0
      %3134 = vmatmul.mubr.bf16.gmra.mrb[0].mxu0 %v3011
      %v3135 = vpop.f32.mrb[0].mxu0
      %v3136 = vadd.f32 0.0, %v3135
      %v3137 = vpop.f32.mrb[0].mxu0
      %v3138 = vpop.f32.mrb[0].mxu0
      %v3139 = vadd.f32 0.0, %v3138
      %v3140 = vpop.f32.mrb[0].mxu0
      %3141 = vmatprep.mubr.bf16.mxu0 0
      %3142 = vmatmul.mubr.bf16.gmra.mrb[0].mxu0 %v3014
      %v3143 = vpop.f32.mrb[0].mxu0
      %v3144 = vadd.f32 0.0, %v3143
      %v3145 = vpop.f32.mrb[0].mxu0
      %v3146 = vpop.f32.mrb[0].mxu0
      %v3147 = vadd.f32 0.0, %v3146
      %v3148 = vpop.f32.mrb[0].mxu0
      %3149 = vmatprep.mubr.bf16.mxu0 0
      %3150 = vmatmul.mubr.bf16.gmra.mrb[0].mxu0 %v3017
      %v3151 = vpop.f32.mrb[0].mxu0
      %v3152 = vadd.f32 0.0, %v3151
      %v3153 = vpop.f32.mrb[0].mxu0
      %v3154 = vpop.f32.mrb[0].mxu0
      %v3155 = vadd.f32 0.0, %v3154
      %v3156 = vpop.f32.mrb[0].mxu0
      %3157 = vmatprep.mubr.bf16.mxu0 0
      %3158 = vmatmul.mubr.bf16.gmra.mrb[0].mxu0 %v3020
      %v3159 = vpop.f32.mrb[0].mxu0
      %v3160 = vadd.f32 0.0, %v3159
      %v3161 = vpop.f32.mrb[0].mxu0
      %v3162 = vpop.f32.mrb[0].mxu0
      %v3163 = vadd.f32 0.0, %v3162
      %v3164 = vpop.f32.mrb[0].mxu0
      %3165 = vmatprep.mubr.bf16.mxu0 0
      %3166 = vmatmul.mubr.bf16.gmra.mrb[0].mxu0 %v3023
      %v3167 = vpop.f32.mrb[0].mxu0
      %v3168 = vadd.f32 0.0, %v3167
      %v3169 = vpop.f32.mrb[0].mxu0
      %v3170 = vpop.f32.mrb[0].mxu0
      %v3171 = vadd.f32 0.0, %v3170
      %v3172 = vpop.f32.mrb[0].mxu0
      %3173 = vmatprep.mubr.bf16.mxu0 0
      %3174 = vmatmul.mubr.bf16.gmra.mrb[0].mxu0 %v3026
      %v3175 = vpop.f32.mrb[0].mxu0
      %v3176 = vadd.f32 0.0, %v3175
      %v3177 = vpop.f32.mrb[0].mxu0
      %v3178 = vpop.f32.mrb[0].mxu0
      %v3179 = vadd.f32 0.0, %v3178
      %v3180 = vpop.f32.mrb[0].mxu0
      %3181 = vmatprep.mubr.bf16.mxu0 0
      %3182 = vmatmul.mubr.bf16.gmra.mrb[0].mxu0 %v3029
      %v3183 = vpop.f32.mrb[0].mxu0
      %v3184 = vadd.f32 0.0, %v3183
      %v3185 = vpop.f32.mrb[0].mxu0
      %v3186 = vpop.f32.mrb[0].mxu0
      %v3187 = vadd.f32 0.0, %v3186
      %v3188 = vpop.f32.mrb[0].mxu0
      %3189 = vmatprep.mubr.bf16.mxu0 0
      %3190 = vmatmul.mubr.bf16.gmra.mrb[0].mxu0 %v3032
      %v3191 = vpop.f32.mrb[0].mxu0
      %v3192 = vadd.f32 0.0, %v3191
      %v3193 = vpop.f32.mrb[0].mxu0
      %v3194 = vpop.f32.mrb[0].mxu0
      %v3195 = vadd.f32 0.0, %v3194
      %v3196 = vpop.f32.mrb[0].mxu0
      %3197 = vdwg.mxu0
      %v3198 = vadd.f32 %v2728, %v3072
      %v3199 = vadd.f32 %v2729, %v3075
      %v3200 = vadd.f32 %v2730, %v3080
      %v3201 = vadd.f32 %v2731, %v3083
      %v3202 = vadd.f32 %v2732, %v3088
      %v3203 = vadd.f32 %v2733, %v3091
      %v3204 = vadd.f32 %v2734, %v3096
      %v3205 = vadd.f32 %v2735, %v3099
      %v3206 = vadd.f32 %v2736, %v3104
      %v3207 = vadd.f32 %v2737, %v3107
      %v3208 = vadd.f32 %v2738, %v3112
      %v3209 = vadd.f32 %v2739, %v3115
      %v3210 = vadd.f32 %v2740, %v3120
      %v3211 = vadd.f32 %v2741, %v3123
      %v3212 = vadd.f32 %v2742, %v3128
      %v3213 = vadd.f32 %v2743, %v3131
      %v3214 = vadd.f32 %v2744, %v3136
      %v3215 = vadd.f32 %v2745, %v3139
      %v3216 = vadd.f32 %v2746, %v3144
      %v3217 = vadd.f32 %v2747, %v3147
      %v3218 = vadd.f32 %v2748, %v3152
      %v3219 = vadd.f32 %v2749, %v3155
      %v3220 = vadd.f32 %v2750, %v3160
      %v3221 = vadd.f32 %v2751, %v3163
      %v3222 = vadd.f32 %v2752, %v3168
      %v3223 = vadd.f32 %v2753, %v3171
      %v3224 = vadd.f32 %v2754, %v3176
      %v3225 = vadd.f32 %v2755, %v3179
      %v3226 = vadd.f32 %v2756, %v3184
      %v3227 = vadd.f32 %v2757, %v3187
      %v3228 = vadd.f32 %v2758, %v3192
      %v3229 = vadd.f32 %v2759, %v3195
      %s3230 = scalar_lea.vmem %s219, 24
      %v3231 = vld [vmem:[%s3230] sm:$0xf]
      %v3232 = vld [vmem:[%s3230 + $0x4] sm:$0xf]
      %v3233 = vld [vmem:[%s3230 + $0xc] sm:$0xf]
      %v3234 = vld [vmem:[%s3230 + $0x10] sm:$0xf]
      %v3235 = vld [vmem:[%s3230 + $0x18] sm:$0xf]
      %v3236 = vld [vmem:[%s3230 + $0x1c] sm:$0xf]
      %v3237 = vld [vmem:[%s3230 + $0x24] sm:$0xf]
      %v3238 = vld [vmem:[%s3230 + $0x28] sm:$0xf]
      %v3239 = vld [vmem:[%s3230 + $0x30] sm:$0xf]
      %v3240 = vld [vmem:[%s3230 + $0x34] sm:$0xf]
      %v3241 = vld [vmem:[%s3230 + $0x3c] sm:$0xf]
      %v3242 = vld [vmem:[%s3230 + $0x40] sm:$0xf]
      %v3243 = vld [vmem:[%s3230 + $0x48] sm:$0xf]
      %v3244 = vld [vmem:[%s3230 + $0x4c] sm:$0xf]
      %v3245 = vld [vmem:[%s3230 + $0x54] sm:$0xf]
      %v3246 = vld [vmem:[%s3230 + $0x58] sm:$0xf]
      %v3247 = vld [vmem:[%s3230 + $0x60] sm:$0xf]
      %v3248 = vld [vmem:[%s3230 + $0x64] sm:$0xf]
      %v3249 = vld [vmem:[%s3230 + $0x6c] sm:$0xf]
      %v3250 = vld [vmem:[%s3230 + $0x70] sm:$0xf]
      %v3251 = vld [vmem:[%s3230 + $0x78] sm:$0xf]
      %v3252 = vld [vmem:[%s3230 + $0x7c] sm:$0xf]
      %v3253 = vld [vmem:[%s3230 + $0x84] sm:$0xf]
      %v3254 = vld [vmem:[%s3230 + $0x88] sm:$0xf]
      %v3255 = vld [vmem:[%s3230 + $0x90] sm:$0xf]
      %v3256 = vld [vmem:[%s3230 + $0x94] sm:$0xf]
      %v3257 = vld [vmem:[%s3230 + $0x9c] sm:$0xf]
      %v3258 = vld [vmem:[%s3230 + $0xa0] sm:$0xf]
      %v3259 = vld [vmem:[%s3230 + $0xa8] sm:$0xf]
      %v3260 = vld [vmem:[%s3230 + $0xac] sm:$0xf]
      %v3261 = vld [vmem:[%s3230 + $0xb4] sm:$0xf]
      %v3262 = vld [vmem:[%s3230 + $0xb8] sm:$0xf]
      %s3263 = scalar_lea.vmem %s1, 12
      %v3264 = vld [vmem:[%s3263] sm:$0x3]
      %v3297 = vunpack.c.l.b16 %v3231
      %v3298 = vunpack.c.l.b16 %v3232
      %v3299 = vunpack.c.l.b16 %v3233
      %v3300 = vunpack.c.l.b16 %v3234
      %v3301 = vunpack.c.l.b16 %v3235
      %v3302 = vunpack.c.l.b16 %v3236
      %v3303 = vunpack.c.l.b16 %v3237
      %v3304 = vunpack.c.l.b16 %v3238
      %v3305 = vunpack.c.l.b16 %v3239
      %v3306 = vunpack.c.l.b16 %v3240
      %v3307 = vunpack.c.l.b16 %v3241
      %v3308 = vunpack.c.l.b16 %v3242
      %v3309 = vunpack.c.l.b16 %v3243
      %v3310 = vunpack.c.l.b16 %v3244
      %v3311 = vunpack.c.l.b16 %v3245
      %v3312 = vunpack.c.l.b16 %v3246
      %v3313 = vunpack.c.l.b16 %v3247
      %v3314 = vunpack.c.l.b16 %v3248
      %v3315 = vunpack.c.l.b16 %v3249
      %v3316 = vunpack.c.l.b16 %v3250
      %v3317 = vunpack.c.l.b16 %v3251
      %v3318 = vunpack.c.l.b16 %v3252
      %v3319 = vunpack.c.l.b16 %v3253
      %v3320 = vunpack.c.l.b16 %v3254
      %v3321 = vunpack.c.l.b16 %v3255
      %v3322 = vunpack.c.l.b16 %v3256
      %v3323 = vunpack.c.l.b16 %v3257
      %v3324 = vunpack.c.l.b16 %v3258
      %v3325 = vunpack.c.l.b16 %v3259
      %v3326 = vunpack.c.l.b16 %v3260
      %v3327 = vunpack.c.l.b16 %v3261
      %v3328 = vunpack.c.l.b16 %v3262
      %v3329 = vpack.c.b16 %v3298, %v3297
      %v3330 = vpack.c.b16 %v3300, %v3299
      %v3331 = vpack.c.b16 %v3302, %v3301
      %v3332 = vpack.c.b16 %v3304, %v3303
      %v3333 = vpack.c.b16 %v3306, %v3305
      %v3334 = vpack.c.b16 %v3308, %v3307
      %v3335 = vpack.c.b16 %v3310, %v3309
      %v3336 = vpack.c.b16 %v3312, %v3311
      %v3337 = vpack.c.b16 %v3314, %v3313
      %v3338 = vpack.c.b16 %v3316, %v3315
      %v3339 = vpack.c.b16 %v3318, %v3317
      %v3340 = vpack.c.b16 %v3320, %v3319
      %v3341 = vpack.c.b16 %v3322, %v3321
      %v3342 = vpack.c.b16 %v3324, %v3323
      %v3343 = vpack.c.b16 %v3326, %v3325
      %v3344 = vpack.c.b16 %v3328, %v3327
      %v3346 = vsel %vm712, %v3329, 0
      %v3349 = vsel %vm712, %v3330, 0
      %v3352 = vsel %vm712, %v3331, 0
      %v3355 = vsel %vm712, %v3332, 0
      %v3358 = vsel %vm712, %v3333, 0
      %v3361 = vsel %vm712, %v3334, 0
      %v3364 = vsel %vm712, %v3335, 0
      %v3367 = vsel %vm712, %v3336, 0
      %v3370 = vsel %vm712, %v3337, 0
      %v3373 = vsel %vm712, %v3338, 0
      %v3376 = vsel %vm712, %v3339, 0
      %v3379 = vsel %vm712, %v3340, 0
      %v3382 = vsel %vm712, %v3341, 0
      %v3385 = vsel %vm712, %v3342, 0
      %v3388 = vsel %vm712, %v3343, 0
      %v3391 = vsel %vm712, %v3344, 0
      %v3394 = vsel %vm761, %v3264, 0
      %3396 = vmatprep.subr.bf16.mxu0 0
      %3397 = vmatpush1.bf16.msra.mxu0 %v3394
      %3398 = vmatprep.subr.bf16.mxu0 0
      %3399 = vmatpush1.bf16.msra.mxu0 0
      %3400 = vmatprep.subr.bf16.mxu0 0
      %3401 = vmatpush1.bf16.msra.mxu0 0
      %3402 = vmatprep.subr.bf16.mxu0 0
      %3403 = vmatpush1.bf16.msra.mxu0 0
      %3404 = vmatprep.subr.bf16.mxu0 0
      %3405 = vmatpush1.bf16.msra.mxu0 0
      %3406 = vmatprep.subr.bf16.mxu0 0
      %3407 = vmatpush1.bf16.msra.mxu0 0
      %3408 = vmatprep.subr.bf16.mxu0 0
      %3409 = vmatpush1.bf16.msra.mxu0 0
      %3410 = vmatprep.subr.bf16.mxu0 0
      %3411 = vmatpush1.bf16.msra.mxu0 0
      %3412 = vmatprep.subr.bf16.mxu0 0
      %3413 = vmatpush1.bf16.msra.mxu0 0
      %3414 = vmatprep.subr.bf16.mxu0 0
      %3415 = vmatpush1.bf16.msra.mxu0 0
      %3416 = vmatprep.subr.bf16.mxu0 0
      %3417 = vmatpush1.bf16.msra.mxu0 0
      %3418 = vmatprep.subr.bf16.mxu0 0
      %3419 = vmatpush1.bf16.msra.mxu0 0
      %3420 = vmatprep.subr.bf16.mxu0 0
      %3421 = vmatpush1.bf16.msra.mxu0 0
      %3422 = vmatprep.subr.bf16.mxu0 0
      %3423 = vmatpush1.bf16.msra.mxu0 0
      %3424 = vmatprep.subr.bf16.mxu0 0
      %3425 = vmatpush1.bf16.msra.mxu0 0
      %3426 = vmatprep.subr.bf16.mxu0 0
      %3427 = vmatpush1.bf16.msra.mxu0 0
      %3428 = vmatprep.mubr.bf16.mxu0 0
      %3429 = vmatmul.mubr.bf16.gmra.mrb[0].mxu0 %v3346
      %v3430 = vpop.f32.mrb[0].mxu0
      %v3431 = vadd.f32 0.0, %v3430
      %v3432 = vpop.f32.mrb[0].mxu0
      %v3433 = vpop.f32.mrb[0].mxu0
      %v3434 = vadd.f32 0.0, %v3433
      %v3435 = vpop.f32.mrb[0].mxu0
      %3436 = vmatprep.mubr.bf16.mxu0 0
      %3437 = vmatmul.mubr.bf16.gmra.mrb[0].mxu0 %v3349
      %v3438 = vpop.f32.mrb[0].mxu0
      %v3439 = vadd.f32 0.0, %v3438
      %v3440 = vpop.f32.mrb[0].mxu0
      %v3441 = vpop.f32.mrb[0].mxu0
      %v3442 = vadd.f32 0.0, %v3441
      %v3443 = vpop.f32.mrb[0].mxu0
      %3444 = vmatprep.mubr.bf16.mxu0 0
      %3445 = vmatmul.mubr.bf16.gmra.mrb[0].mxu0 %v3352
      %v3446 = vpop.f32.mrb[0].mxu0
      %v3447 = vadd.f32 0.0, %v3446
      %v3448 = vpop.f32.mrb[0].mxu0
      %v3449 = vpop.f32.mrb[0].mxu0
      %v3450 = vadd.f32 0.0, %v3449
      %v3451 = vpop.f32.mrb[0].mxu0
      %3452 = vmatprep.mubr.bf16.mxu0 0
      %3453 = vmatmul.mubr.bf16.gmra.mrb[0].mxu0 %v3355
      %v3454 = vpop.f32.mrb[0].mxu0
      %v3455 = vadd.f32 0.0, %v3454
      %v3456 = vpop.f32.mrb[0].mxu0
      %v3457 = vpop.f32.mrb[0].mxu0
      %v3458 = vadd.f32 0.0, %v3457
      %v3459 = vpop.f32.mrb[0].mxu0
      %3460 = vmatprep.mubr.bf16.mxu0 0
      %3461 = vmatmul.mubr.bf16.gmra.mrb[0].mxu0 %v3358
      %v3462 = vpop.f32.mrb[0].mxu0
      %v3463 = vadd.f32 0.0, %v3462
      %v3464 = vpop.f32.mrb[0].mxu0
      %v3465 = vpop.f32.mrb[0].mxu0
      %v3466 = vadd.f32 0.0, %v3465
      %v3467 = vpop.f32.mrb[0].mxu0
      %3468 = vmatprep.mubr.bf16.mxu0 0
      %3469 = vmatmul.mubr.bf16.gmra.mrb[0].mxu0 %v3361
      %v3470 = vpop.f32.mrb[0].mxu0
      %v3471 = vadd.f32 0.0, %v3470
      %v3472 = vpop.f32.mrb[0].mxu0
      %v3473 = vpop.f32.mrb[0].mxu0
      %v3474 = vadd.f32 0.0, %v3473
      %v3475 = vpop.f32.mrb[0].mxu0
      %3476 = vmatprep.mubr.bf16.mxu0 0
      %3477 = vmatmul.mubr.bf16.gmra.mrb[0].mxu0 %v3364
      %v3478 = vpop.f32.mrb[0].mxu0
      %v3479 = vadd.f32 0.0, %v3478
      %v3480 = vpop.f32.mrb[0].mxu0
      %v3481 = vpop.f32.mrb[0].mxu0
      %v3482 = vadd.f32 0.0, %v3481
      %v3483 = vpop.f32.mrb[0].mxu0
      %3484 = vmatprep.mubr.bf16.mxu0 0
      %3485 = vmatmul.mubr.bf16.gmra.mrb[0].mxu0 %v3367
      %v3486 = vpop.f32.mrb[0].mxu0
      %v3487 = vadd.f32 0.0, %v3486
      %v3488 = vpop.f32.mrb[0].mxu0
      %v3489 = vpop.f32.mrb[0].mxu0
      %v3490 = vadd.f32 0.0, %v3489
      %v3491 = vpop.f32.mrb[0].mxu0
      %3492 = vmatprep.mubr.bf16.mxu0 0
      %3493 = vmatmul.mubr.bf16.gmra.mrb[0].mxu0 %v3370
      %v3494 = vpop.f32.mrb[0].mxu0
      %v3495 = vadd.f32 0.0, %v3494
      %v3496 = vpop.f32.mrb[0].mxu0
      %v3497 = vpop.f32.mrb[0].mxu0
      %v3498 = vadd.f32 0.0, %v3497
      %v3499 = vpop.f32.mrb[0].mxu0
      %3500 = vmatprep.mubr.bf16.mxu0 0
      %3501 = vmatmul.mubr.bf16.gmra.mrb[0].mxu0 %v3373
      %v3502 = vpop.f32.mrb[0].mxu0
      %v3503 = vadd.f32 0.0, %v3502
      %v3504 = vpop.f32.mrb[0].mxu0
      %v3505 = vpop.f32.mrb[0].mxu0
      %v3506 = vadd.f32 0.0, %v3505
      %v3507 = vpop.f32.mrb[0].mxu0
      %3508 = vmatprep.mubr.bf16.mxu0 0
      %3509 = vmatmul.mubr.bf16.gmra.mrb[0].mxu0 %v3376
      %v3510 = vpop.f32.mrb[0].mxu0
      %v3511 = vadd.f32 0.0, %v3510
      %v3512 = vpop.f32.mrb[0].mxu0
      %v3513 = vpop.f32.mrb[0].mxu0
      %v3514 = vadd.f32 0.0, %v3513
      %v3515 = vpop.f32.mrb[0].mxu0
      %3516 = vmatprep.mubr.bf16.mxu0 0
      %3517 = vmatmul.mubr.bf16.gmra.mrb[0].mxu0 %v3379
      %v3518 = vpop.f32.mrb[0].mxu0
      %v3519 = vadd.f32 0.0, %v3518
      %v3520 = vpop.f32.mrb[0].mxu0
      %v3521 = vpop.f32.mrb[0].mxu0
      %v3522 = vadd.f32 0.0, %v3521
      %v3523 = vpop.f32.mrb[0].mxu0
      %3524 = vmatprep.mubr.bf16.mxu0 0
      %3525 = vmatmul.mubr.bf16.gmra.mrb[0].mxu0 %v3382
      %v3526 = vpop.f32.mrb[0].mxu0
      %v3527 = vadd.f32 0.0, %v3526
      %v3528 = vpop.f32.mrb[0].mxu0
      %v3529 = vpop.f32.mrb[0].mxu0
      %v3530 = vadd.f32 0.0, %v3529
      %v3531 = vpop.f32.mrb[0].mxu0
      %3532 = vmatprep.mubr.bf16.mxu0 0
      %3533 = vmatmul.mubr.bf16.gmra.mrb[0].mxu0 %v3385
      %v3534 = vpop.f32.mrb[0].mxu0
      %v3535 = vadd.f32 0.0, %v3534
      %v3536 = vpop.f32.mrb[0].mxu0
      %v3537 = vpop.f32.mrb[0].mxu0
      %v3538 = vadd.f32 0.0, %v3537
      %v3539 = vpop.f32.mrb[0].mxu0
      %3540 = vmatprep.mubr.bf16.mxu0 0
      %3541 = vmatmul.mubr.bf16.gmra.mrb[0].mxu0 %v3388
      %v3542 = vpop.f32.mrb[0].mxu0
      %v3543 = vadd.f32 0.0, %v3542
      %v3544 = vpop.f32.mrb[0].mxu0
      %v3545 = vpop.f32.mrb[0].mxu0
      %v3546 = vadd.f32 0.0, %v3545
      %v3547 = vpop.f32.mrb[0].mxu0
      %3548 = vmatprep.mubr.bf16.mxu0 0
      %3549 = vmatmul.mubr.bf16.gmra.mrb[0].mxu0 %v3391
      %v3550 = vpop.f32.mrb[0].mxu0
      %v3551 = vadd.f32 0.0, %v3550
      %v3552 = vpop.f32.mrb[0].mxu0
      %v3553 = vpop.f32.mrb[0].mxu0
      %v3554 = vadd.f32 0.0, %v3553
      %v3555 = vpop.f32.mrb[0].mxu0
      %3556 = vdwg.mxu0
      %v3557 = vadd.f32 %v3198, %v3431
      %v3558 = vadd.f32 %v3199, %v3434
      %v3559 = vadd.f32 %v3200, %v3439
      %v3560 = vadd.f32 %v3201, %v3442
      %v3561 = vadd.f32 %v3202, %v3447
      %v3562 = vadd.f32 %v3203, %v3450
      %v3563 = vadd.f32 %v3204, %v3455
      %v3564 = vadd.f32 %v3205, %v3458
      %v3565 = vadd.f32 %v3206, %v3463
      %v3566 = vadd.f32 %v3207, %v3466
      %v3567 = vadd.f32 %v3208, %v3471
      %v3568 = vadd.f32 %v3209, %v3474
      %v3569 = vadd.f32 %v3210, %v3479
      %v3570 = vadd.f32 %v3211, %v3482
      %v3571 = vadd.f32 %v3212, %v3487
      %v3572 = vadd.f32 %v3213, %v3490
      %v3573 = vadd.f32 %v3214, %v3495
      %v3574 = vadd.f32 %v3215, %v3498
      %v3575 = vadd.f32 %v3216, %v3503
      %v3576 = vadd.f32 %v3217, %v3506
      %v3577 = vadd.f32 %v3218, %v3511
      %v3578 = vadd.f32 %v3219, %v3514
      %v3579 = vadd.f32 %v3220, %v3519
      %v3580 = vadd.f32 %v3221, %v3522
      %v3581 = vadd.f32 %v3222, %v3527
      %v3582 = vadd.f32 %v3223, %v3530
      %v3583 = vadd.f32 %v3224, %v3535
      %v3584 = vadd.f32 %v3225, %v3538
      %v3585 = vadd.f32 %v3226, %v3543
      %v3586 = vadd.f32 %v3227, %v3546
      %v3587 = vadd.f32 %v3228, %v3551
      %v3588 = vadd.f32 %v3229, %v3554
      %v3589 = vld [vmem:[%s3230] sm:$0xf]
      %v3590 = vld [vmem:[%s3230 + $0x4] sm:$0xf]
      %v3591 = vld [vmem:[%s3230 + $0x8] sm:$0x1]
      %v3592 = vld [vmem:[%s3230 + $0xc] sm:$0xf]
      %v3593 = vld [vmem:[%s3230 + $0x10] sm:$0xf]
      %v3594 = vld [vmem:[%s3230 + $0x14] sm:$0x1]
      %v3595 = vld [vmem:[%s3230 + $0x18] sm:$0xf]
      %v3596 = vld [vmem:[%s3230 + $0x1c] sm:$0xf]
      %v3597 = vld [vmem:[%s3230 + $0x20] sm:$0x1]
      %v3598 = vld [vmem:[%s3230 + $0x24] sm:$0xf]
      %v3599 = vld [vmem:[%s3230 + $0x28] sm:$0xf]
      %v3600 = vld [vmem:[%s3230 + $0x2c] sm:$0x1]
      %v3601 = vld [vmem:[%s3230 + $0x30] sm:$0xf]
      %v3602 = vld [vmem:[%s3230 + $0x34] sm:$0xf]
      %v3603 = vld [vmem:[%s3230 + $0x38] sm:$0x1]
      %v3604 = vld [vmem:[%s3230 + $0x3c] sm:$0xf]
      %v3605 = vld [vmem:[%s3230 + $0x40] sm:$0xf]
      %v3606 = vld [vmem:[%s3230 + $0x44] sm:$0x1]
      %v3607 = vld [vmem:[%s3230 + $0x48] sm:$0xf]
      %v3608 = vld [vmem:[%s3230 + $0x4c] sm:$0xf]
      %v3609 = vld [vmem:[%s3230 + $0x50] sm:$0x1]
      %v3610 = vld [vmem:[%s3230 + $0x54] sm:$0xf]
      %v3611 = vld [vmem:[%s3230 + $0x58] sm:$0xf]
      %v3612 = vld [vmem:[%s3230 + $0x5c] sm:$0x1]
      %v3613 = vld [vmem:[%s3230 + $0x60] sm:$0xf]
      %v3614 = vld [vmem:[%s3230 + $0x64] sm:$0xf]
      %v3615 = vld [vmem:[%s3230 + $0x68] sm:$0x1]
      %v3616 = vld [vmem:[%s3230 + $0x6c] sm:$0xf]
      %v3617 = vld [vmem:[%s3230 + $0x70] sm:$0xf]
      %v3618 = vld [vmem:[%s3230 + $0x74] sm:$0x1]
      %v3619 = vld [vmem:[%s3230 + $0x78] sm:$0xf]
      %v3620 = vld [vmem:[%s3230 + $0x7c] sm:$0xf]
      %v3621 = vld [vmem:[%s3230 + $0x80] sm:$0x1]
      %v3622 = vld [vmem:[%s3230 + $0x84] sm:$0xf]
      %v3623 = vld [vmem:[%s3230 + $0x88] sm:$0xf]
      %v3624 = vld [vmem:[%s3230 + $0x8c] sm:$0x1]
      %v3625 = vld [vmem:[%s3230 + $0x90] sm:$0xf]
      %v3626 = vld [vmem:[%s3230 + $0x94] sm:$0xf]
      %v3627 = vld [vmem:[%s3230 + $0x98] sm:$0x1]
      %v3628 = vld [vmem:[%s3230 + $0x9c] sm:$0xf]
      %v3629 = vld [vmem:[%s3230 + $0xa0] sm:$0xf]
      %v3630 = vld [vmem:[%s3230 + $0xa4] sm:$0x1]
      %v3631 = vld [vmem:[%s3230 + $0xa8] sm:$0xf]
      %v3632 = vld [vmem:[%s3230 + $0xac] sm:$0xf]
      %v3633 = vld [vmem:[%s3230 + $0xb0] sm:$0x1]
      %v3634 = vld [vmem:[%s3230 + $0xb4] sm:$0xf]
      %v3635 = vld [vmem:[%s3230 + $0xb8] sm:$0xf]
      %v3636 = vld [vmem:[%s3230 + $0xbc] sm:$0x1]
      %v3638 = vshrl.u32 %v3589, 16
      %v3640 = vrot.slane %v3638, 4
      %v3641 = vshll.u32 %v3589, 16
      %v3643 = vrot.slane %v3641, 5
      %v3644 = vor.u32 %v3640, %v3643
      %v3645 = vrot.slane %v3644, 4
      %v3647 = vshll.u32 %v3590, 16
      %v3649 = vrot.slane %v3647, 5
      %v3650 = vsel %vm277, %v3645, %v3649
      %v3651 = vshrl.u32 %v3590, 16
      %v3653 = vrot.slane %v3651, 4
      %v3654 = vor.u32 %v3653, %v3649
      %v3655 = vrot.slane %v3654, 4
      %v3657 = vshll.u32 %v3591, 16
      %v3659 = vrot.slane %v3657, 5
      %v3660 = vsel %vm277, %v3655, %v3659
      %v3662 = vshrl.u32 %v3592, 16
      %v3664 = vrot.slane %v3662, 4
      %v3665 = vshll.u32 %v3592, 16
      %v3667 = vrot.slane %v3665, 5
      %v3668 = vor.u32 %v3664, %v3667
      %v3669 = vrot.slane %v3668, 4
      %v3671 = vshll.u32 %v3593, 16
      %v3673 = vrot.slane %v3671, 5
      %v3674 = vsel %vm277, %v3669, %v3673
      %v3675 = vshrl.u32 %v3593, 16
      %v3677 = vrot.slane %v3675, 4
      %v3678 = vor.u32 %v3677, %v3673
      %v3679 = vrot.slane %v3678, 4
      %v3681 = vshll.u32 %v3594, 16
      %v3683 = vrot.slane %v3681, 5
      %v3684 = vsel %vm277, %v3679, %v3683
      %v3686 = vshrl.u32 %v3595, 16
      %v3688 = vrot.slane %v3686, 4
      %v3689 = vshll.u32 %v3595, 16
      %v3691 = vrot.slane %v3689, 5
      %v3692 = vor.u32 %v3688, %v3691
      %v3693 = vrot.slane %v3692, 4
      %v3695 = vshll.u32 %v3596, 16
      %v3697 = vrot.slane %v3695, 5
      %v3698 = vsel %vm277, %v3693, %v3697
      %v3699 = vshrl.u32 %v3596, 16
      %v3701 = vrot.slane %v3699, 4
      %v3702 = vor.u32 %v3701, %v3697
      %v3703 = vrot.slane %v3702, 4
      %v3705 = vshll.u32 %v3597, 16
      %v3707 = vrot.slane %v3705, 5
      %v3708 = vsel %vm277, %v3703, %v3707
      %v3710 = vshrl.u32 %v3598, 16
      %v3712 = vrot.slane %v3710, 4
      %v3713 = vshll.u32 %v3598, 16
      %v3715 = vrot.slane %v3713, 5
      %v3716 = vor.u32 %v3712, %v3715
      %v3717 = vrot.slane %v3716, 4
      %v3719 = vshll.u32 %v3599, 16
      %v3721 = vrot.slane %v3719, 5
      %v3722 = vsel %vm277, %v3717, %v3721
      %v3723 = vshrl.u32 %v3599, 16
      %v3725 = vrot.slane %v3723, 4
      %v3726 = vor.u32 %v3725, %v3721
      %v3727 = vrot.slane %v3726, 4
      %v3729 = vshll.u32 %v3600, 16
      %v3731 = vrot.slane %v3729, 5
      %v3732 = vsel %vm277, %v3727, %v3731
      %v3734 = vshrl.u32 %v3601, 16
      %v3736 = vrot.slane %v3734, 4
      %v3737 = vshll.u32 %v3601, 16
      %v3739 = vrot.slane %v3737, 5
      %v3740 = vor.u32 %v3736, %v3739
      %v3741 = vrot.slane %v3740, 4
      %v3743 = vshll.u32 %v3602, 16
      %v3745 = vrot.slane %v3743, 5
      %v3746 = vsel %vm277, %v3741, %v3745
      %v3747 = vshrl.u32 %v3602, 16
      %v3749 = vrot.slane %v3747, 4
      %v3750 = vor.u32 %v3749, %v3745
      %v3751 = vrot.slane %v3750, 4
      %v3753 = vshll.u32 %v3603, 16
      %v3755 = vrot.slane %v3753, 5
      %v3756 = vsel %vm277, %v3751, %v3755
      %v3758 = vshrl.u32 %v3604, 16
      %v3760 = vrot.slane %v3758, 4
      %v3761 = vshll.u32 %v3604, 16
      %v3763 = vrot.slane %v3761, 5
      %v3764 = vor.u32 %v3760, %v3763
      %v3765 = vrot.slane %v3764, 4
      %v3767 = vshll.u32 %v3605, 16
      %v3769 = vrot.slane %v3767, 5
      %v3770 = vsel %vm277, %v3765, %v3769
      %v3771 = vshrl.u32 %v3605, 16
      %v3773 = vrot.slane %v3771, 4
      %v3774 = vor.u32 %v3773, %v3769
      %v3775 = vrot.slane %v3774, 4
      %v3777 = vshll.u32 %v3606, 16
      %v3779 = vrot.slane %v3777, 5
      %v3780 = vsel %vm277, %v3775, %v3779
      %v3782 = vshrl.u32 %v3607, 16
      %v3784 = vrot.slane %v3782, 4
      %v3785 = vshll.u32 %v3607, 16
      %v3787 = vrot.slane %v3785, 5
      %v3788 = vor.u32 %v3784, %v3787
      %v3789 = vrot.slane %v3788, 4
      %v3791 = vshll.u32 %v3608, 16
      %v3793 = vrot.slane %v3791, 5
      %v3794 = vsel %vm277, %v3789, %v3793
      %v3795 = vshrl.u32 %v3608, 16
      %v3797 = vrot.slane %v3795, 4
      %v3798 = vor.u32 %v3797, %v3793
      %v3799 = vrot.slane %v3798, 4
      %v3801 = vshll.u32 %v3609, 16
      %v3803 = vrot.slane %v3801, 5
      %v3804 = vsel %vm277, %v3799, %v3803
      %v3806 = vshrl.u32 %v3610, 16
      %v3808 = vrot.slane %v3806, 4
      %v3809 = vshll.u32 %v3610, 16
      %v3811 = vrot.slane %v3809, 5
      %v3812 = vor.u32 %v3808, %v3811
      %v3813 = vrot.slane %v3812, 4
      %v3815 = vshll.u32 %v3611, 16
      %v3817 = vrot.slane %v3815, 5
      %v3818 = vsel %vm277, %v3813, %v3817
      %v3819 = vshrl.u32 %v3611, 16
      %v3821 = vrot.slane %v3819, 4
      %v3822 = vor.u32 %v3821, %v3817
      %v3823 = vrot.slane %v3822, 4
      %v3825 = vshll.u32 %v3612, 16
      %v3827 = vrot.slane %v3825, 5
      %v3828 = vsel %vm277, %v3823, %v3827
      %v3830 = vshrl.u32 %v3613, 16
      %v3832 = vrot.slane %v3830, 4
      %v3833 = vshll.u32 %v3613, 16
      %v3835 = vrot.slane %v3833, 5
      %v3836 = vor.u32 %v3832, %v3835
      %v3837 = vrot.slane %v3836, 4
      %v3839 = vshll.u32 %v3614, 16
      %v3841 = vrot.slane %v3839, 5
      %v3842 = vsel %vm277, %v3837, %v3841
      %v3843 = vshrl.u32 %v3614, 16
      %v3845 = vrot.slane %v3843, 4
      %v3846 = vor.u32 %v3845, %v3841
      %v3847 = vrot.slane %v3846, 4
      %v3849 = vshll.u32 %v3615, 16
      %v3851 = vrot.slane %v3849, 5
      %v3852 = vsel %vm277, %v3847, %v3851
      %v3854 = vshrl.u32 %v3616, 16
      %v3856 = vrot.slane %v3854, 4
      %v3857 = vshll.u32 %v3616, 16
      %v3859 = vrot.slane %v3857, 5
      %v3860 = vor.u32 %v3856, %v3859
      %v3861 = vrot.slane %v3860, 4
      %v3863 = vshll.u32 %v3617, 16
      %v3865 = vrot.slane %v3863, 5
      %v3866 = vsel %vm277, %v3861, %v3865
      %v3867 = vshrl.u32 %v3617, 16
      %v3869 = vrot.slane %v3867, 4
      %v3870 = vor.u32 %v3869, %v3865
      %v3871 = vrot.slane %v3870, 4
      %v3873 = vshll.u32 %v3618, 16
      %v3875 = vrot.slane %v3873, 5
      %v3876 = vsel %vm277, %v3871, %v3875
      %v3878 = vshrl.u32 %v3619, 16
      %v3880 = vrot.slane %v3878, 4
      %v3881 = vshll.u32 %v3619, 16
      %v3883 = vrot.slane %v3881, 5
      %v3884 = vor.u32 %v3880, %v3883
      %v3885 = vrot.slane %v3884, 4
      %v3887 = vshll.u32 %v3620, 16
      %v3889 = vrot.slane %v3887, 5
      %v3890 = vsel %vm277, %v3885, %v3889
      %v3891 = vshrl.u32 %v3620, 16
      %v3893 = vrot.slane %v3891, 4
      %v3894 = vor.u32 %v3893, %v3889
      %v3895 = vrot.slane %v3894, 4
      %v3897 = vshll.u32 %v3621, 16
      %v3899 = vrot.slane %v3897, 5
      %v3900 = vsel %vm277, %v3895, %v3899
      %v3902 = vshrl.u32 %v3622, 16
      %v3904 = vrot.slane %v3902, 4
      %v3905 = vshll.u32 %v3622, 16
      %v3907 = vrot.slane %v3905, 5
      %v3908 = vor.u32 %v3904, %v3907
      %v3909 = vrot.slane %v3908, 4
      %v3911 = vshll.u32 %v3623, 16
      %v3913 = vrot.slane %v3911, 5
      %v3914 = vsel %vm277, %v3909, %v3913
      %v3915 = vshrl.u32 %v3623, 16
      %v3917 = vrot.slane %v3915, 4
      %v3918 = vor.u32 %v3917, %v3913
      %v3919 = vrot.slane %v3918, 4
      %v3921 = vshll.u32 %v3624, 16
      %v3923 = vrot.slane %v3921, 5
      %v3924 = vsel %vm277, %v3919, %v3923
      %v3926 = vshrl.u32 %v3625, 16
      %v3928 = vrot.slane %v3926, 4
      %v3929 = vshll.u32 %v3625, 16
      %v3931 = vrot.slane %v3929, 5
      %v3932 = vor.u32 %v3928, %v3931
      %v3933 = vrot.slane %v3932, 4
      %v3935 = vshll.u32 %v3626, 16
      %v3937 = vrot.slane %v3935, 5
      %v3938 = vsel %vm277, %v3933, %v3937
      %v3939 = vshrl.u32 %v3626, 16
      %v3941 = vrot.slane %v3939, 4
      %v3942 = vor.u32 %v3941, %v3937
      %v3943 = vrot.slane %v3942, 4
      %v3945 = vshll.u32 %v3627, 16
      %v3947 = vrot.slane %v3945, 5
      %v3948 = vsel %vm277, %v3943, %v3947
      %v3950 = vshrl.u32 %v3628, 16
      %v3952 = vrot.slane %v3950, 4
      %v3953 = vshll.u32 %v3628, 16
      %v3955 = vrot.slane %v3953, 5
      %v3956 = vor.u32 %v3952, %v3955
      %v3957 = vrot.slane %v3956, 4
      %v3959 = vshll.u32 %v3629, 16
      %v3961 = vrot.slane %v3959, 5
      %v3962 = vsel %vm277, %v3957, %v3961
      %v3963 = vshrl.u32 %v3629, 16
      %v3965 = vrot.slane %v3963, 4
      %v3966 = vor.u32 %v3965, %v3961
      %v3967 = vrot.slane %v3966, 4
      %v3969 = vshll.u32 %v3630, 16
      %v3971 = vrot.slane %v3969, 5
      %v3972 = vsel %vm277, %v3967, %v3971
      %v3974 = vshrl.u32 %v3631, 16
      %v3976 = vrot.slane %v3974, 4
      %v3977 = vshll.u32 %v3631, 16
      %v3979 = vrot.slane %v3977, 5
      %v3980 = vor.u32 %v3976, %v3979
      %v3981 = vrot.slane %v3980, 4
      %v3983 = vshll.u32 %v3632, 16
      %v3985 = vrot.slane %v3983, 5
      %v3986 = vsel %vm277, %v3981, %v3985
      %v3987 = vshrl.u32 %v3632, 16
      %v3989 = vrot.slane %v3987, 4
      %v3990 = vor.u32 %v3989, %v3985
      %v3991 = vrot.slane %v3990, 4
      %v3993 = vshll.u32 %v3633, 16
      %v3995 = vrot.slane %v3993, 5
      %v3996 = vsel %vm277, %v3991, %v3995
      %v3998 = vshrl.u32 %v3634, 16
      %v4000 = vrot.slane %v3998, 4
      %v4001 = vshll.u32 %v3634, 16
      %v4003 = vrot.slane %v4001, 5
      %v4004 = vor.u32 %v4000, %v4003
      %v4005 = vrot.slane %v4004, 4
      %v4007 = vshll.u32 %v3635, 16
      %v4009 = vrot.slane %v4007, 5
      %v4010 = vsel %vm277, %v4005, %v4009
      %v4011 = vshrl.u32 %v3635, 16
      %v4013 = vrot.slane %v4011, 4
      %v4014 = vor.u32 %v4013, %v4009
      %v4015 = vrot.slane %v4014, 4
      %v4017 = vshll.u32 %v3636, 16
      %v4019 = vrot.slane %v4017, 5
      %v4020 = vsel %vm277, %v4015, %v4019
      %s4021 = scalar_lea.vmem %s1, 14
      %v4022 = vld [vmem:[%s4021] sm:$0x3]
      %v4023 = vunpack.c.l.b16 %v3650
      %v4024 = vunpack.c.l.b16 %v3660
      %v4025 = vunpack.c.l.b16 %v3674
      %v4026 = vunpack.c.l.b16 %v3684
      %v4027 = vunpack.c.l.b16 %v3698
      %v4028 = vunpack.c.l.b16 %v3708
      %v4029 = vunpack.c.l.b16 %v3722
      %v4030 = vunpack.c.l.b16 %v3732
      %v4031 = vunpack.c.l.b16 %v3746
      %v4032 = vunpack.c.l.b16 %v3756
      %v4033 = vunpack.c.l.b16 %v3770
      %v4034 = vunpack.c.l.b16 %v3780
      %v4035 = vunpack.c.l.b16 %v3794
      %v4036 = vunpack.c.l.b16 %v3804
      %v4037 = vunpack.c.l.b16 %v3818
      %v4038 = vunpack.c.l.b16 %v3828
      %v4039 = vunpack.c.l.b16 %v3842
      %v4040 = vunpack.c.l.b16 %v3852
      %v4041 = vunpack.c.l.b16 %v3866
      %v4042 = vunpack.c.l.b16 %v3876
      %v4043 = vunpack.c.l.b16 %v3890
      %v4044 = vunpack.c.l.b16 %v3900
      %v4045 = vunpack.c.l.b16 %v3914
      %v4046 = vunpack.c.l.b16 %v3924
      %v4047 = vunpack.c.l.b16 %v3938
      %v4048 = vunpack.c.l.b16 %v3948
      %v4049 = vunpack.c.l.b16 %v3962
      %v4050 = vunpack.c.l.b16 %v3972
      %v4051 = vunpack.c.l.b16 %v3986
      %v4052 = vunpack.c.l.b16 %v3996
      %v4053 = vunpack.c.l.b16 %v4010
      %v4054 = vunpack.c.l.b16 %v4020
      %v4055 = vpack.c.b16 %v4024, %v4023
      %v4056 = vpack.c.b16 %v4026, %v4025
      %v4057 = vpack.c.b16 %v4028, %v4027
      %v4058 = vpack.c.b16 %v4030, %v4029
      %v4059 = vpack.c.b16 %v4032, %v4031
      %v4060 = vpack.c.b16 %v4034, %v4033
      %v4061 = vpack.c.b16 %v4036, %v4035
      %v4062 = vpack.c.b16 %v4038, %v4037
      %v4063 = vpack.c.b16 %v4040, %v4039
      %v4064 = vpack.c.b16 %v4042, %v4041
      %v4065 = vpack.c.b16 %v4044, %v4043
      %v4066 = vpack.c.b16 %v4046, %v4045
      %v4067 = vpack.c.b16 %v4048, %v4047
      %v4068 = vpack.c.b16 %v4050, %v4049
      %v4069 = vpack.c.b16 %v4052, %v4051
      %v4070 = vpack.c.b16 %v4054, %v4053
      %v4072 = vsel %vm712, %v4055, 0
      %v4075 = vsel %vm712, %v4056, 0
      %v4078 = vsel %vm712, %v4057, 0
      %v4081 = vsel %vm712, %v4058, 0
      %v4084 = vsel %vm712, %v4059, 0
      %v4087 = vsel %vm712, %v4060, 0
      %v4090 = vsel %vm712, %v4061, 0
      %v4093 = vsel %vm712, %v4062, 0
      %v4096 = vsel %vm712, %v4063, 0
      %v4099 = vsel %vm712, %v4064, 0
      %v4102 = vsel %vm712, %v4065, 0
      %v4105 = vsel %vm712, %v4066, 0
      %v4108 = vsel %vm712, %v4067, 0
      %v4111 = vsel %vm712, %v4068, 0
      %v4114 = vsel %vm712, %v4069, 0
      %v4117 = vsel %vm712, %v4070, 0
      %v4120 = vsel %vm761, %v4022, 0
      %4122 = vmatprep.subr.bf16.mxu0 0
      %4123 = vmatpush1.bf16.msra.mxu0 %v4120
      %4124 = vmatprep.subr.bf16.mxu0 0
      %4125 = vmatpush1.bf16.msra.mxu0 0
      %4126 = vmatprep.subr.bf16.mxu0 0
      %4127 = vmatpush1.bf16.msra.mxu0 0
      %4128 = vmatprep.subr.bf16.mxu0 0
      %4129 = vmatpush1.bf16.msra.mxu0 0
      %4130 = vmatprep.subr.bf16.mxu0 0
      %4131 = vmatpush1.bf16.msra.mxu0 0
      %4132 = vmatprep.subr.bf16.mxu0 0
      %4133 = vmatpush1.bf16.msra.mxu0 0
      %4134 = vmatprep.subr.bf16.mxu0 0
      %4135 = vmatpush1.bf16.msra.mxu0 0
      %4136 = vmatprep.subr.bf16.mxu0 0
      %4137 = vmatpush1.bf16.msra.mxu0 0
      %4138 = vmatprep.subr.bf16.mxu0 0
      %4139 = vmatpush1.bf16.msra.mxu0 0
      %4140 = vmatprep.subr.bf16.mxu0 0
      %4141 = vmatpush1.bf16.msra.mxu0 0
      %4142 = vmatprep.subr.bf16.mxu0 0
      %4143 = vmatpush1.bf16.msra.mxu0 0
      %4144 = vmatprep.subr.bf16.mxu0 0
      %4145 = vmatpush1.bf16.msra.mxu0 0
      %4146 = vmatprep.subr.bf16.mxu0 0
      %4147 = vmatpush1.bf16.msra.mxu0 0
      %4148 = vmatprep.subr.bf16.mxu0 0
      %4149 = vmatpush1.bf16.msra.mxu0 0
      %4150 = vmatprep.subr.bf16.mxu0 0
      %4151 = vmatpush1.bf16.msra.mxu0 0
      %4152 = vmatprep.subr.bf16.mxu0 0
      %4153 = vmatpush1.bf16.msra.mxu0 0
      %4154 = vmatprep.mubr.bf16.mxu0 0
      %4155 = vmatmul.mubr.bf16.gmra.mrb[0].mxu0 %v4072
      %v4156 = vpop.f32.mrb[0].mxu0
      %v4157 = vadd.f32 0.0, %v4156
      %v4158 = vpop.f32.mrb[0].mxu0
      %v4159 = vpop.f32.mrb[0].mxu0
      %v4160 = vadd.f32 0.0, %v4159
      %v4161 = vpop.f32.mrb[0].mxu0
      %4162 = vmatprep.mubr.bf16.mxu0 0
      %4163 = vmatmul.mubr.bf16.gmra.mrb[0].mxu0 %v4075
      %v4164 = vpop.f32.mrb[0].mxu0
      %v4165 = vadd.f32 0.0, %v4164
      %v4166 = vpop.f32.mrb[0].mxu0
      %v4167 = vpop.f32.mrb[0].mxu0
      %v4168 = vadd.f32 0.0, %v4167
      %v4169 = vpop.f32.mrb[0].mxu0
      %4170 = vmatprep.mubr.bf16.mxu0 0
      %4171 = vmatmul.mubr.bf16.gmra.mrb[0].mxu0 %v4078
      %v4172 = vpop.f32.mrb[0].mxu0
      %v4173 = vadd.f32 0.0, %v4172
      %v4174 = vpop.f32.mrb[0].mxu0
      %v4175 = vpop.f32.mrb[0].mxu0
      %v4176 = vadd.f32 0.0, %v4175
      %v4177 = vpop.f32.mrb[0].mxu0
      %4178 = vmatprep.mubr.bf16.mxu0 0
      %4179 = vmatmul.mubr.bf16.gmra.mrb[0].mxu0 %v4081
      %v4180 = vpop.f32.mrb[0].mxu0
      %v4181 = vadd.f32 0.0, %v4180
      %v4182 = vpop.f32.mrb[0].mxu0
      %v4183 = vpop.f32.mrb[0].mxu0
      %v4184 = vadd.f32 0.0, %v4183
      %v4185 = vpop.f32.mrb[0].mxu0
      %4186 = vmatprep.mubr.bf16.mxu0 0
      %4187 = vmatmul.mubr.bf16.gmra.mrb[0].mxu0 %v4084
      %v4188 = vpop.f32.mrb[0].mxu0
      %v4189 = vadd.f32 0.0, %v4188
      %v4190 = vpop.f32.mrb[0].mxu0
      %v4191 = vpop.f32.mrb[0].mxu0
      %v4192 = vadd.f32 0.0, %v4191
      %v4193 = vpop.f32.mrb[0].mxu0
      %4194 = vmatprep.mubr.bf16.mxu0 0
      %4195 = vmatmul.mubr.bf16.gmra.mrb[0].mxu0 %v4087
      %v4196 = vpop.f32.mrb[0].mxu0
      %v4197 = vadd.f32 0.0, %v4196
      %v4198 = vpop.f32.mrb[0].mxu0
      %v4199 = vpop.f32.mrb[0].mxu0
      %v4200 = vadd.f32 0.0, %v4199
      %v4201 = vpop.f32.mrb[0].mxu0
      %4202 = vmatprep.mubr.bf16.mxu0 0
      %4203 = vmatmul.mubr.bf16.gmra.mrb[0].mxu0 %v4090
      %v4204 = vpop.f32.mrb[0].mxu0
      %v4205 = vadd.f32 0.0, %v4204
      %v4206 = vpop.f32.mrb[0].mxu0
      %v4207 = vpop.f32.mrb[0].mxu0
      %v4208 = vadd.f32 0.0, %v4207
      %v4209 = vpop.f32.mrb[0].mxu0
      %4210 = vmatprep.mubr.bf16.mxu0 0
      %4211 = vmatmul.mubr.bf16.gmra.mrb[0].mxu0 %v4093
      %v4212 = vpop.f32.mrb[0].mxu0
      %v4213 = vadd.f32 0.0, %v4212
      %v4214 = vpop.f32.mrb[0].mxu0
      %v4215 = vpop.f32.mrb[0].mxu0
      %v4216 = vadd.f32 0.0, %v4215
      %v4217 = vpop.f32.mrb[0].mxu0
      %4218 = vmatprep.mubr.bf16.mxu0 0
      %4219 = vmatmul.mubr.bf16.gmra.mrb[0].mxu0 %v4096
      %v4220 = vpop.f32.mrb[0].mxu0
      %v4221 = vadd.f32 0.0, %v4220
      %v4222 = vpop.f32.mrb[0].mxu0
      %v4223 = vpop.f32.mrb[0].mxu0
      %v4224 = vadd.f32 0.0, %v4223
      %v4225 = vpop.f32.mrb[0].mxu0
      %4226 = vmatprep.mubr.bf16.mxu0 0
      %4227 = vmatmul.mubr.bf16.gmra.mrb[0].mxu0 %v4099
      %v4228 = vpop.f32.mrb[0].mxu0
      %v4229 = vadd.f32 0.0, %v4228
      %v4230 = vpop.f32.mrb[0].mxu0
      %v4231 = vpop.f32.mrb[0].mxu0
      %v4232 = vadd.f32 0.0, %v4231
      %v4233 = vpop.f32.mrb[0].mxu0
      %4234 = vmatprep.mubr.bf16.mxu0 0
      %4235 = vmatmul.mubr.bf16.gmra.mrb[0].mxu0 %v4102
      %v4236 = vpop.f32.mrb[0].mxu0
      %v4237 = vadd.f32 0.0, %v4236
      %v4238 = vpop.f32.mrb[0].mxu0
      %v4239 = vpop.f32.mrb[0].mxu0
      %v4240 = vadd.f32 0.0, %v4239
      %v4241 = vpop.f32.mrb[0].mxu0
      %4242 = vmatprep.mubr.bf16.mxu0 0
      %4243 = vmatmul.mubr.bf16.gmra.mrb[0].mxu0 %v4105
      %v4244 = vpop.f32.mrb[0].mxu0
      %v4245 = vadd.f32 0.0, %v4244
      %v4246 = vpop.f32.mrb[0].mxu0
      %v4247 = vpop.f32.mrb[0].mxu0
      %v4248 = vadd.f32 0.0, %v4247
      %v4249 = vpop.f32.mrb[0].mxu0
      %4250 = vmatprep.mubr.bf16.mxu0 0
      %4251 = vmatmul.mubr.bf16.gmra.mrb[0].mxu0 %v4108
      %v4252 = vpop.f32.mrb[0].mxu0
      %v4253 = vadd.f32 0.0, %v4252
      %v4254 = vpop.f32.mrb[0].mxu0
      %v4255 = vpop.f32.mrb[0].mxu0
      %v4256 = vadd.f32 0.0, %v4255
      %v4257 = vpop.f32.mrb[0].mxu0
      %4258 = vmatprep.mubr.bf16.mxu0 0
      %4259 = vmatmul.mubr.bf16.gmra.mrb[0].mxu0 %v4111
      %v4260 = vpop.f32.mrb[0].mxu0
      %v4261 = vadd.f32 0.0, %v4260
      %v4262 = vpop.f32.mrb[0].mxu0
      %v4263 = vpop.f32.mrb[0].mxu0
      %v4264 = vadd.f32 0.0, %v4263
      %v4265 = vpop.f32.mrb[0].mxu0
      %4266 = vmatprep.mubr.bf16.mxu0 0
      %4267 = vmatmul.mubr.bf16.gmra.mrb[0].mxu0 %v4114
      %v4268 = vpop.f32.mrb[0].mxu0
      %v4269 = vadd.f32 0.0, %v4268
      %v4270 = vpop.f32.mrb[0].mxu0
      %v4271 = vpop.f32.mrb[0].mxu0
      %v4272 = vadd.f32 0.0, %v4271
      %v4273 = vpop.f32.mrb[0].mxu0
      %4274 = vmatprep.mubr.bf16.mxu0 0
      %4275 = vmatmul.mubr.bf16.gmra.mrb[0].mxu0 %v4117
      %v4276 = vpop.f32.mrb[0].mxu0
      %v4277 = vadd.f32 0.0, %v4276
      %v4278 = vpop.f32.mrb[0].mxu0
      %v4279 = vpop.f32.mrb[0].mxu0
      %v4280 = vadd.f32 0.0, %v4279
      %v4281 = vpop.f32.mrb[0].mxu0
      %4282 = vdwg.mxu0
      %v4283 = vadd.f32 %v3557, %v4157
      %v4284 = vadd.f32 %v3558, %v4160
      %v4285 = vadd.f32 %v3559, %v4165
      %v4286 = vadd.f32 %v3560, %v4168
      %v4287 = vadd.f32 %v3561, %v4173
      %v4288 = vadd.f32 %v3562, %v4176
      %v4289 = vadd.f32 %v3563, %v4181
      %v4290 = vadd.f32 %v3564, %v4184
      %v4291 = vadd.f32 %v3565, %v4189
      %v4292 = vadd.f32 %v3566, %v4192
      %v4293 = vadd.f32 %v3567, %v4197
      %v4294 = vadd.f32 %v3568, %v4200
      %v4295 = vadd.f32 %v3569, %v4205
      %v4296 = vadd.f32 %v3570, %v4208
      %v4297 = vadd.f32 %v3571, %v4213
      %v4298 = vadd.f32 %v3572, %v4216
      %v4299 = vadd.f32 %v3573, %v4221
      %v4300 = vadd.f32 %v3574, %v4224
      %v4301 = vadd.f32 %v3575, %v4229
      %v4302 = vadd.f32 %v3576, %v4232
      %v4303 = vadd.f32 %v3577, %v4237
      %v4304 = vadd.f32 %v3578, %v4240
      %v4305 = vadd.f32 %v3579, %v4245
      %v4306 = vadd.f32 %v3580, %v4248
      %v4307 = vadd.f32 %v3581, %v4253
      %v4308 = vadd.f32 %v3582, %v4256
      %v4309 = vadd.f32 %v3583, %v4261
      %v4310 = vadd.f32 %v3584, %v4264
      %v4311 = vadd.f32 %v3585, %v4269
      %v4312 = vadd.f32 %v3586, %v4272
      %v4313 = vadd.f32 %v3587, %v4277
      %v4314 = vadd.f32 %v3588, %v4280
      %v4315 = vld [vmem:[%s3230] sm:$0xe]
      %v4316 = vld [vmem:[%s3230 + $0xc] sm:$0xe]
      %v4317 = vld [vmem:[%s3230 + $0x18] sm:$0xe]
      %v4318 = vld [vmem:[%s3230 + $0x24] sm:$0xe]
      %v4319 = vld [vmem:[%s3230 + $0x30] sm:$0xe]
      %v4320 = vld [vmem:[%s3230 + $0x3c] sm:$0xe]
      %v4321 = vld [vmem:[%s3230 + $0x48] sm:$0xe]
      %v4322 = vld [vmem:[%s3230 + $0x54] sm:$0xe]
      %v4323 = vld [vmem:[%s3230 + $0x60] sm:$0xe]
      %v4324 = vld [vmem:[%s3230 + $0x6c] sm:$0xe]
      %v4325 = vld [vmem:[%s3230 + $0x78] sm:$0xe]
      %v4326 = vld [vmem:[%s3230 + $0x84] sm:$0xe]
      %v4327 = vld [vmem:[%s3230 + $0x90] sm:$0xe]
      %v4328 = vld [vmem:[%s3230 + $0x9c] sm:$0xe]
      %v4329 = vld [vmem:[%s3230 + $0xa8] sm:$0xe]
      %v4330 = vld [vmem:[%s3230 + $0xb4] sm:$0xe]
      %v4379 = vrot.slane %v4315, 5
      %v4380 = vrot.slane %v4379, 4
      %v4381 = vrot.slane %v3590, 5
      %v4382 = vsel %vm1268, %v4380, %v4381
      %v4383 = vrot.slane %v4381, 4
      %v4384 = vrot.slane %v3591, 5
      %v4385 = vsel %vm1268, %v4383, %v4384
      %v4386 = vrot.slane %v4316, 5
      %v4387 = vrot.slane %v4386, 4
      %v4388 = vrot.slane %v3593, 5
      %v4389 = vsel %vm1268, %v4387, %v4388
      %v4390 = vrot.slane %v4388, 4
      %v4391 = vrot.slane %v3594, 5
      %v4392 = vsel %vm1268, %v4390, %v4391
      %v4393 = vrot.slane %v4317, 5
      %v4394 = vrot.slane %v4393, 4
      %v4395 = vrot.slane %v3596, 5
      %v4396 = vsel %vm1268, %v4394, %v4395
      %v4397 = vrot.slane %v4395, 4
      %v4398 = vrot.slane %v3597, 5
      %v4399 = vsel %vm1268, %v4397, %v4398
      %v4400 = vrot.slane %v4318, 5
      %v4401 = vrot.slane %v4400, 4
      %v4402 = vrot.slane %v3599, 5
      %v4403 = vsel %vm1268, %v4401, %v4402
      %v4404 = vrot.slane %v4402, 4
      %v4405 = vrot.slane %v3600, 5
      %v4406 = vsel %vm1268, %v4404, %v4405
      %v4407 = vrot.slane %v4319, 5
      %v4408 = vrot.slane %v4407, 4
      %v4409 = vrot.slane %v3602, 5
      %v4410 = vsel %vm1268, %v4408, %v4409
      %v4411 = vrot.slane %v4409, 4
      %v4412 = vrot.slane %v3603, 5
      %v4413 = vsel %vm1268, %v4411, %v4412
      %v4414 = vrot.slane %v4320, 5
      %v4415 = vrot.slane %v4414, 4
      %v4416 = vrot.slane %v3605, 5
      %v4417 = vsel %vm1268, %v4415, %v4416
      %v4418 = vrot.slane %v4416, 4
      %v4419 = vrot.slane %v3606, 5
      %v4420 = vsel %vm1268, %v4418, %v4419
      %v4421 = vrot.slane %v4321, 5
      %v4422 = vrot.slane %v4421, 4
      %v4423 = vrot.slane %v3608, 5
      %v4424 = vsel %vm1268, %v4422, %v4423
      %v4425 = vrot.slane %v4423, 4
      %v4426 = vrot.slane %v3609, 5
      %v4427 = vsel %vm1268, %v4425, %v4426
      %v4428 = vrot.slane %v4322, 5
      %v4429 = vrot.slane %v4428, 4
      %v4430 = vrot.slane %v3611, 5
      %v4431 = vsel %vm1268, %v4429, %v4430
      %v4432 = vrot.slane %v4430, 4
      %v4433 = vrot.slane %v3612, 5
      %v4434 = vsel %vm1268, %v4432, %v4433
      %v4435 = vrot.slane %v4323, 5
      %v4436 = vrot.slane %v4435, 4
      %v4437 = vrot.slane %v3614, 5
      %v4438 = vsel %vm1268, %v4436, %v4437
      %v4439 = vrot.slane %v4437, 4
      %v4440 = vrot.slane %v3615, 5
      %v4441 = vsel %vm1268, %v4439, %v4440
      %v4442 = vrot.slane %v4324, 5
      %v4443 = vrot.slane %v4442, 4
      %v4444 = vrot.slane %v3617, 5
      %v4445 = vsel %vm1268, %v4443, %v4444
      %v4446 = vrot.slane %v4444, 4
      %v4447 = vrot.slane %v3618, 5
      %v4448 = vsel %vm1268, %v4446, %v4447
      %v4449 = vrot.slane %v4325, 5
      %v4450 = vrot.slane %v4449, 4
      %v4451 = vrot.slane %v3620, 5
      %v4452 = vsel %vm1268, %v4450, %v4451
      %v4453 = vrot.slane %v4451, 4
      %v4454 = vrot.slane %v3621, 5
      %v4455 = vsel %vm1268, %v4453, %v4454
      %v4456 = vrot.slane %v4326, 5
      %v4457 = vrot.slane %v4456, 4
      %v4458 = vrot.slane %v3623, 5
      %v4459 = vsel %vm1268, %v4457, %v4458
      %v4460 = vrot.slane %v4458, 4
      %v4461 = vrot.slane %v3624, 5
      %v4462 = vsel %vm1268, %v4460, %v4461
      %v4463 = vrot.slane %v4327, 5
      %v4464 = vrot.slane %v4463, 4
      %v4465 = vrot.slane %v3626, 5
      %v4466 = vsel %vm1268, %v4464, %v4465
      %v4467 = vrot.slane %v4465, 4
      %v4468 = vrot.slane %v3627, 5
      %v4469 = vsel %vm1268, %v4467, %v4468
      %v4470 = vrot.slane %v4328, 5
      %v4471 = vrot.slane %v4470, 4
      %v4472 = vrot.slane %v3629, 5
      %v4473 = vsel %vm1268, %v4471, %v4472
      %v4474 = vrot.slane %v4472, 4
      %v4475 = vrot.slane %v3630, 5
      %v4476 = vsel %vm1268, %v4474, %v4475
      %v4477 = vrot.slane %v4329, 5
      %v4478 = vrot.slane %v4477, 4
      %v4479 = vrot.slane %v3632, 5
      %v4480 = vsel %vm1268, %v4478, %v4479
      %v4481 = vrot.slane %v4479, 4
      %v4482 = vrot.slane %v3633, 5
      %v4483 = vsel %vm1268, %v4481, %v4482
      %v4484 = vrot.slane %v4330, 5
      %v4485 = vrot.slane %v4484, 4
      %v4486 = vrot.slane %v3635, 5
      %v4487 = vsel %vm1268, %v4485, %v4486
      %v4488 = vrot.slane %v4486, 4
      %v4489 = vrot.slane %v3636, 5
      %v4490 = vsel %vm1268, %v4488, %v4489
      %s4491 = scalar_lea.vmem %s1, 16
      %v4492 = vld [vmem:[%s4491] sm:$0x3]
      %v4493 = vunpack.c.l.b16 %v4382
      %v4494 = vunpack.c.l.b16 %v4385
      %v4495 = vunpack.c.l.b16 %v4389
      %v4496 = vunpack.c.l.b16 %v4392
      %v4497 = vunpack.c.l.b16 %v4396
      %v4498 = vunpack.c.l.b16 %v4399
      %v4499 = vunpack.c.l.b16 %v4403
      %v4500 = vunpack.c.l.b16 %v4406
      %v4501 = vunpack.c.l.b16 %v4410
      %v4502 = vunpack.c.l.b16 %v4413
      %v4503 = vunpack.c.l.b16 %v4417
      %v4504 = vunpack.c.l.b16 %v4420
      %v4505 = vunpack.c.l.b16 %v4424
      %v4506 = vunpack.c.l.b16 %v4427
      %v4507 = vunpack.c.l.b16 %v4431
      %v4508 = vunpack.c.l.b16 %v4434
      %v4509 = vunpack.c.l.b16 %v4438
      %v4510 = vunpack.c.l.b16 %v4441
      %v4511 = vunpack.c.l.b16 %v4445
      %v4512 = vunpack.c.l.b16 %v4448
      %v4513 = vunpack.c.l.b16 %v4452
      %v4514 = vunpack.c.l.b16 %v4455
      %v4515 = vunpack.c.l.b16 %v4459
      %v4516 = vunpack.c.l.b16 %v4462
      %v4517 = vunpack.c.l.b16 %v4466
      %v4518 = vunpack.c.l.b16 %v4469
      %v4519 = vunpack.c.l.b16 %v4473
      %v4520 = vunpack.c.l.b16 %v4476
      %v4521 = vunpack.c.l.b16 %v4480
      %v4522 = vunpack.c.l.b16 %v4483
      %v4523 = vunpack.c.l.b16 %v4487
      %v4524 = vunpack.c.l.b16 %v4490
      %v4525 = vpack.c.b16 %v4494, %v4493
      %v4526 = vpack.c.b16 %v4496, %v4495
      %v4527 = vpack.c.b16 %v4498, %v4497
      %v4528 = vpack.c.b16 %v4500, %v4499
      %v4529 = vpack.c.b16 %v4502, %v4501
      %v4530 = vpack.c.b16 %v4504, %v4503
      %v4531 = vpack.c.b16 %v4506, %v4505
      %v4532 = vpack.c.b16 %v4508, %v4507
      %v4533 = vpack.c.b16 %v4510, %v4509
      %v4534 = vpack.c.b16 %v4512, %v4511
      %v4535 = vpack.c.b16 %v4514, %v4513
      %v4536 = vpack.c.b16 %v4516, %v4515
      %v4537 = vpack.c.b16 %v4518, %v4517
      %v4538 = vpack.c.b16 %v4520, %v4519
      %v4539 = vpack.c.b16 %v4522, %v4521
      %v4540 = vpack.c.b16 %v4524, %v4523
      %v4542 = vsel %vm712, %v4525, 0
      %v4545 = vsel %vm712, %v4526, 0
      %v4548 = vsel %vm712, %v4527, 0
      %v4551 = vsel %vm712, %v4528, 0
      %v4554 = vsel %vm712, %v4529, 0
      %v4557 = vsel %vm712, %v4530, 0
      %v4560 = vsel %vm712, %v4531, 0
      %v4563 = vsel %vm712, %v4532, 0
      %v4566 = vsel %vm712, %v4533, 0
      %v4569 = vsel %vm712, %v4534, 0
      %v4572 = vsel %vm712, %v4535, 0
      %v4575 = vsel %vm712, %v4536, 0
      %v4578 = vsel %vm712, %v4537, 0
      %v4581 = vsel %vm712, %v4538, 0
      %v4584 = vsel %vm712, %v4539, 0
      %v4587 = vsel %vm712, %v4540, 0
      %v4590 = vsel %vm761, %v4492, 0
      %4592 = vmatprep.subr.bf16.mxu0 0
      %4593 = vmatpush1.bf16.msra.mxu0 %v4590
      %4594 = vmatprep.subr.bf16.mxu0 0
      %4595 = vmatpush1.bf16.msra.mxu0 0
      %4596 = vmatprep.subr.bf16.mxu0 0
      %4597 = vmatpush1.bf16.msra.mxu0 0
      %4598 = vmatprep.subr.bf16.mxu0 0
      %4599 = vmatpush1.bf16.msra.mxu0 0
      %4600 = vmatprep.subr.bf16.mxu0 0
      %4601 = vmatpush1.bf16.msra.mxu0 0
      %4602 = vmatprep.subr.bf16.mxu0 0
      %4603 = vmatpush1.bf16.msra.mxu0 0
      %4604 = vmatprep.subr.bf16.mxu0 0
      %4605 = vmatpush1.bf16.msra.mxu0 0
      %4606 = vmatprep.subr.bf16.mxu0 0
      %4607 = vmatpush1.bf16.msra.mxu0 0
      %4608 = vmatprep.subr.bf16.mxu0 0
      %4609 = vmatpush1.bf16.msra.mxu0 0
      %4610 = vmatprep.subr.bf16.mxu0 0
      %4611 = vmatpush1.bf16.msra.mxu0 0
      %4612 = vmatprep.subr.bf16.mxu0 0
      %4613 = vmatpush1.bf16.msra.mxu0 0
      %4614 = vmatprep.subr.bf16.mxu0 0
      %4615 = vmatpush1.bf16.msra.mxu0 0
      %4616 = vmatprep.subr.bf16.mxu0 0
      %4617 = vmatpush1.bf16.msra.mxu0 0
      %4618 = vmatprep.subr.bf16.mxu0 0
      %4619 = vmatpush1.bf16.msra.mxu0 0
      %4620 = vmatprep.subr.bf16.mxu0 0
      %4621 = vmatpush1.bf16.msra.mxu0 0
      %4622 = vmatprep.subr.bf16.mxu0 0
      %4623 = vmatpush1.bf16.msra.mxu0 0
      %4624 = vmatprep.mubr.bf16.mxu0 0
      %4625 = vmatmul.mubr.bf16.gmra.mrb[0].mxu0 %v4542
      %v4626 = vpop.f32.mrb[0].mxu0
      %v4627 = vadd.f32 0.0, %v4626
      %v4628 = vpop.f32.mrb[0].mxu0
      %v4629 = vpop.f32.mrb[0].mxu0
      %v4630 = vadd.f32 0.0, %v4629
      %v4631 = vpop.f32.mrb[0].mxu0
      %4632 = vmatprep.mubr.bf16.mxu0 0
      %4633 = vmatmul.mubr.bf16.gmra.mrb[0].mxu0 %v4545
      %v4634 = vpop.f32.mrb[0].mxu0
      %v4635 = vadd.f32 0.0, %v4634
      %v4636 = vpop.f32.mrb[0].mxu0
      %v4637 = vpop.f32.mrb[0].mxu0
      %v4638 = vadd.f32 0.0, %v4637
      %v4639 = vpop.f32.mrb[0].mxu0
      %4640 = vmatprep.mubr.bf16.mxu0 0
      %4641 = vmatmul.mubr.bf16.gmra.mrb[0].mxu0 %v4548
      %v4642 = vpop.f32.mrb[0].mxu0
      %v4643 = vadd.f32 0.0, %v4642
      %v4644 = vpop.f32.mrb[0].mxu0
      %v4645 = vpop.f32.mrb[0].mxu0
      %v4646 = vadd.f32 0.0, %v4645
      %v4647 = vpop.f32.mrb[0].mxu0
      %4648 = vmatprep.mubr.bf16.mxu0 0
      %4649 = vmatmul.mubr.bf16.gmra.mrb[0].mxu0 %v4551
      %v4650 = vpop.f32.mrb[0].mxu0
      %v4651 = vadd.f32 0.0, %v4650
      %v4652 = vpop.f32.mrb[0].mxu0
      %v4653 = vpop.f32.mrb[0].mxu0
      %v4654 = vadd.f32 0.0, %v4653
      %v4655 = vpop.f32.mrb[0].mxu0
      %4656 = vmatprep.mubr.bf16.mxu0 0
      %4657 = vmatmul.mubr.bf16.gmra.mrb[0].mxu0 %v4554
      %v4658 = vpop.f32.mrb[0].mxu0
      %v4659 = vadd.f32 0.0, %v4658
      %v4660 = vpop.f32.mrb[0].mxu0
      %v4661 = vpop.f32.mrb[0].mxu0
      %v4662 = vadd.f32 0.0, %v4661
      %v4663 = vpop.f32.mrb[0].mxu0
      %4664 = vmatprep.mubr.bf16.mxu0 0
      %4665 = vmatmul.mubr.bf16.gmra.mrb[0].mxu0 %v4557
      %v4666 = vpop.f32.mrb[0].mxu0
      %v4667 = vadd.f32 0.0, %v4666
      %v4668 = vpop.f32.mrb[0].mxu0
      %v4669 = vpop.f32.mrb[0].mxu0
      %v4670 = vadd.f32 0.0, %v4669
      %v4671 = vpop.f32.mrb[0].mxu0
      %4672 = vmatprep.mubr.bf16.mxu0 0
      %4673 = vmatmul.mubr.bf16.gmra.mrb[0].mxu0 %v4560
      %v4674 = vpop.f32.mrb[0].mxu0
      %v4675 = vadd.f32 0.0, %v4674
      %v4676 = vpop.f32.mrb[0].mxu0
      %v4677 = vpop.f32.mrb[0].mxu0
      %v4678 = vadd.f32 0.0, %v4677
      %v4679 = vpop.f32.mrb[0].mxu0
      %4680 = vmatprep.mubr.bf16.mxu0 0
      %4681 = vmatmul.mubr.bf16.gmra.mrb[0].mxu0 %v4563
      %v4682 = vpop.f32.mrb[0].mxu0
      %v4683 = vadd.f32 0.0, %v4682
      %v4684 = vpop.f32.mrb[0].mxu0
      %v4685 = vpop.f32.mrb[0].mxu0
      %v4686 = vadd.f32 0.0, %v4685
      %v4687 = vpop.f32.mrb[0].mxu0
      %4688 = vmatprep.mubr.bf16.mxu0 0
      %4689 = vmatmul.mubr.bf16.gmra.mrb[0].mxu0 %v4566
      %v4690 = vpop.f32.mrb[0].mxu0
      %v4691 = vadd.f32 0.0, %v4690
      %v4692 = vpop.f32.mrb[0].mxu0
      %v4693 = vpop.f32.mrb[0].mxu0
      %v4694 = vadd.f32 0.0, %v4693
      %v4695 = vpop.f32.mrb[0].mxu0
      %4696 = vmatprep.mubr.bf16.mxu0 0
      %4697 = vmatmul.mubr.bf16.gmra.mrb[0].mxu0 %v4569
      %v4698 = vpop.f32.mrb[0].mxu0
      %v4699 = vadd.f32 0.0, %v4698
      %v4700 = vpop.f32.mrb[0].mxu0
      %v4701 = vpop.f32.mrb[0].mxu0
      %v4702 = vadd.f32 0.0, %v4701
      %v4703 = vpop.f32.mrb[0].mxu0
      %4704 = vmatprep.mubr.bf16.mxu0 0
      %4705 = vmatmul.mubr.bf16.gmra.mrb[0].mxu0 %v4572
      %v4706 = vpop.f32.mrb[0].mxu0
      %v4707 = vadd.f32 0.0, %v4706
      %v4708 = vpop.f32.mrb[0].mxu0
      %v4709 = vpop.f32.mrb[0].mxu0
      %v4710 = vadd.f32 0.0, %v4709
      %v4711 = vpop.f32.mrb[0].mxu0
      %4712 = vmatprep.mubr.bf16.mxu0 0
      %4713 = vmatmul.mubr.bf16.gmra.mrb[0].mxu0 %v4575
      %v4714 = vpop.f32.mrb[0].mxu0
      %v4715 = vadd.f32 0.0, %v4714
      %v4716 = vpop.f32.mrb[0].mxu0
      %v4717 = vpop.f32.mrb[0].mxu0
      %v4718 = vadd.f32 0.0, %v4717
      %v4719 = vpop.f32.mrb[0].mxu0
      %4720 = vmatprep.mubr.bf16.mxu0 0
      %4721 = vmatmul.mubr.bf16.gmra.mrb[0].mxu0 %v4578
      %v4722 = vpop.f32.mrb[0].mxu0
      %v4723 = vadd.f32 0.0, %v4722
      %v4724 = vpop.f32.mrb[0].mxu0
      %v4725 = vpop.f32.mrb[0].mxu0
      %v4726 = vadd.f32 0.0, %v4725
      %v4727 = vpop.f32.mrb[0].mxu0
      %4728 = vmatprep.mubr.bf16.mxu0 0
      %4729 = vmatmul.mubr.bf16.gmra.mrb[0].mxu0 %v4581
      %v4730 = vpop.f32.mrb[0].mxu0
      %v4731 = vadd.f32 0.0, %v4730
      %v4732 = vpop.f32.mrb[0].mxu0
      %v4733 = vpop.f32.mrb[0].mxu0
      %v4734 = vadd.f32 0.0, %v4733
      %v4735 = vpop.f32.mrb[0].mxu0
      %4736 = vmatprep.mubr.bf16.mxu0 0
      %4737 = vmatmul.mubr.bf16.gmra.mrb[0].mxu0 %v4584
      %v4738 = vpop.f32.mrb[0].mxu0
      %v4739 = vadd.f32 0.0, %v4738
      %v4740 = vpop.f32.mrb[0].mxu0
      %v4741 = vpop.f32.mrb[0].mxu0
      %v4742 = vadd.f32 0.0, %v4741
      %v4743 = vpop.f32.mrb[0].mxu0
      %4744 = vmatprep.mubr.bf16.mxu0 0
      %4745 = vmatmul.mubr.bf16.gmra.mrb[0].mxu0 %v4587
      %v4746 = vpop.f32.mrb[0].mxu0
      %v4747 = vadd.f32 0.0, %v4746
      %v4748 = vpop.f32.mrb[0].mxu0
      %v4749 = vpop.f32.mrb[0].mxu0
      %v4750 = vadd.f32 0.0, %v4749
      %v4751 = vpop.f32.mrb[0].mxu0
      %4752 = vdwg.mxu0
      %v4753 = vadd.f32 %v4283, %v4627
      %v4754 = vadd.f32 %v4284, %v4630
      %v4755 = vadd.f32 %v4285, %v4635
      %v4756 = vadd.f32 %v4286, %v4638
      %v4757 = vadd.f32 %v4287, %v4643
      %v4758 = vadd.f32 %v4288, %v4646
      %v4759 = vadd.f32 %v4289, %v4651
      %v4760 = vadd.f32 %v4290, %v4654
      %v4761 = vadd.f32 %v4291, %v4659
      %v4762 = vadd.f32 %v4292, %v4662
      %v4763 = vadd.f32 %v4293, %v4667
      %v4764 = vadd.f32 %v4294, %v4670
      %v4765 = vadd.f32 %v4295, %v4675
      %v4766 = vadd.f32 %v4296, %v4678
      %v4767 = vadd.f32 %v4297, %v4683
      %v4768 = vadd.f32 %v4298, %v4686
      %v4769 = vadd.f32 %v4299, %v4691
      %v4770 = vadd.f32 %v4300, %v4694
      %v4771 = vadd.f32 %v4301, %v4699
      %v4772 = vadd.f32 %v4302, %v4702
      %v4773 = vadd.f32 %v4303, %v4707
      %v4774 = vadd.f32 %v4304, %v4710
      %v4775 = vadd.f32 %v4305, %v4715
      %v4776 = vadd.f32 %v4306, %v4718
      %v4777 = vadd.f32 %v4307, %v4723
      %v4778 = vadd.f32 %v4308, %v4726
      %v4779 = vadd.f32 %v4309, %v4731
      %v4780 = vadd.f32 %v4310, %v4734
      %v4781 = vadd.f32 %v4311, %v4739
      %v4782 = vadd.f32 %v4312, %v4742
      %v4783 = vadd.f32 %v4313, %v4747
      %v4784 = vadd.f32 %v4314, %v4750
      %v4785 = vld [vmem:[%s2] sm:$0x1]
      %v4787 = vlaneseq
      %v4788 = vshrl.u32 %v4787, 7
      %v4789 = vsub.s32 0, %v4788
      %v4790 = vrot.slane %v4785, %v4789
      %v4792 = vadd.f32 %v4753, %v4790
      %v4793 = vadd.f32 %v4754, %v4790
      %v4794 = vadd.f32 %v4755, %v4790
      %v4795 = vadd.f32 %v4756, %v4790
      %v4796 = vadd.f32 %v4757, %v4790
      %v4797 = vadd.f32 %v4758, %v4790
      %v4798 = vadd.f32 %v4759, %v4790
      %v4799 = vadd.f32 %v4760, %v4790
      %v4800 = vadd.f32 %v4761, %v4790
      %v4801 = vadd.f32 %v4762, %v4790
      %v4802 = vadd.f32 %v4763, %v4790
      %v4803 = vadd.f32 %v4764, %v4790
      %v4804 = vadd.f32 %v4765, %v4790
      %v4805 = vadd.f32 %v4766, %v4790
      %v4806 = vadd.f32 %v4767, %v4790
      %v4807 = vadd.f32 %v4768, %v4790
      %v4808 = vadd.f32 %v4769, %v4790
      %v4809 = vadd.f32 %v4770, %v4790
      %v4810 = vadd.f32 %v4771, %v4790
      %v4811 = vadd.f32 %v4772, %v4790
      %v4812 = vadd.f32 %v4773, %v4790
      %v4813 = vadd.f32 %v4774, %v4790
      %v4814 = vadd.f32 %v4775, %v4790
      %v4815 = vadd.f32 %v4776, %v4790
      %v4816 = vadd.f32 %v4777, %v4790
      %v4817 = vadd.f32 %v4778, %v4790
      %v4818 = vadd.f32 %v4779, %v4790
      %v4819 = vadd.f32 %v4780, %v4790
      %v4820 = vadd.f32 %v4781, %v4790
      %v4821 = vadd.f32 %v4782, %v4790
      %v4822 = vadd.f32 %v4783, %v4790
      %v4823 = vadd.f32 %v4784, %v4790
      %v4824 = vld [vmem:[%s3] sm:$0x1]
      %v4826 = vlaneseq
      %v4827 = vshrl.u32 %v4826, 7
      %v4828 = vsub.s32 0, %v4827
      %v4829 = vrot.slane %v4824, %v4828
      %v4831 = vmul.f32 %v4792, %v4829
      %v4832 = vmul.f32 %v4793, %v4829
      %v4833 = vmul.f32 %v4794, %v4829
      %v4834 = vmul.f32 %v4795, %v4829
      %v4835 = vmul.f32 %v4796, %v4829
      %v4836 = vmul.f32 %v4797, %v4829
      %v4837 = vmul.f32 %v4798, %v4829
      %v4838 = vmul.f32 %v4799, %v4829
      %v4839 = vmul.f32 %v4800, %v4829
      %v4840 = vmul.f32 %v4801, %v4829
      %v4841 = vmul.f32 %v4802, %v4829
      %v4842 = vmul.f32 %v4803, %v4829
      %v4843 = vmul.f32 %v4804, %v4829
      %v4844 = vmul.f32 %v4805, %v4829
      %v4845 = vmul.f32 %v4806, %v4829
      %v4846 = vmul.f32 %v4807, %v4829
      %v4847 = vmul.f32 %v4808, %v4829
      %v4848 = vmul.f32 %v4809, %v4829
      %v4849 = vmul.f32 %v4810, %v4829
      %v4850 = vmul.f32 %v4811, %v4829
      %v4851 = vmul.f32 %v4812, %v4829
      %v4852 = vmul.f32 %v4813, %v4829
      %v4853 = vmul.f32 %v4814, %v4829
      %v4854 = vmul.f32 %v4815, %v4829
      %v4855 = vmul.f32 %v4816, %v4829
      %v4856 = vmul.f32 %v4817, %v4829
      %v4857 = vmul.f32 %v4818, %v4829
      %v4858 = vmul.f32 %v4819, %v4829
      %v4859 = vmul.f32 %v4820, %v4829
      %v4860 = vmul.f32 %v4821, %v4829
      %v4861 = vmul.f32 %v4822, %v4829
      %v4862 = vmul.f32 %v4823, %v4829
      %v4863 = vld [vmem:[%s4] sm:$0x1]
      %v4865 = vlaneseq
      %v4866 = vshrl.u32 %v4865, 7
      %v4867 = vsub.s32 0, %v4866
      %v4868 = vrot.slane %v4863, %v4867
      %v4870 = vadd.f32 %v4831, %v4868
      %v4871 = vadd.f32 %v4832, %v4868
      %v4872 = vadd.f32 %v4833, %v4868
      %v4873 = vadd.f32 %v4834, %v4868
      %v4874 = vadd.f32 %v4835, %v4868
      %v4875 = vadd.f32 %v4836, %v4868
      %v4876 = vadd.f32 %v4837, %v4868
      %v4877 = vadd.f32 %v4838, %v4868
      %v4878 = vadd.f32 %v4839, %v4868
      %v4879 = vadd.f32 %v4840, %v4868
      %v4880 = vadd.f32 %v4841, %v4868
      %v4881 = vadd.f32 %v4842, %v4868
      %v4882 = vadd.f32 %v4843, %v4868
      %v4883 = vadd.f32 %v4844, %v4868
      %v4884 = vadd.f32 %v4845, %v4868
      %v4885 = vadd.f32 %v4846, %v4868
      %v4886 = vadd.f32 %v4847, %v4868
      %v4887 = vadd.f32 %v4848, %v4868
      %v4888 = vadd.f32 %v4849, %v4868
      %v4889 = vadd.f32 %v4850, %v4868
      %v4890 = vadd.f32 %v4851, %v4868
      %v4891 = vadd.f32 %v4852, %v4868
      %v4892 = vadd.f32 %v4853, %v4868
      %v4893 = vadd.f32 %v4854, %v4868
      %v4894 = vadd.f32 %v4855, %v4868
      %v4895 = vadd.f32 %v4856, %v4868
      %v4896 = vadd.f32 %v4857, %v4868
      %v4897 = vadd.f32 %v4858, %v4868
      %v4898 = vadd.f32 %v4859, %v4868
      %v4899 = vadd.f32 %v4860, %v4868
      %v4900 = vadd.f32 %v4861, %v4868
      %v4901 = vadd.f32 %v4862, %v4868
      %v4902 = vmax.f32 %v4870, 0.0
      %v4903 = vmax.f32 %v4871, 0.0
      %v4904 = vmax.f32 %v4872, 0.0
      %v4905 = vmax.f32 %v4873, 0.0
      %v4906 = vmax.f32 %v4874, 0.0
      %v4907 = vmax.f32 %v4875, 0.0
      %v4908 = vmax.f32 %v4876, 0.0
      %v4909 = vmax.f32 %v4877, 0.0
      %v4910 = vmax.f32 %v4878, 0.0
      %v4911 = vmax.f32 %v4879, 0.0
      %v4912 = vmax.f32 %v4880, 0.0
      %v4913 = vmax.f32 %v4881, 0.0
      %v4914 = vmax.f32 %v4882, 0.0
      %v4915 = vmax.f32 %v4883, 0.0
      %v4916 = vmax.f32 %v4884, 0.0
      %v4917 = vmax.f32 %v4885, 0.0
      %v4918 = vmax.f32 %v4886, 0.0
      %v4919 = vmax.f32 %v4887, 0.0
      %v4920 = vmax.f32 %v4888, 0.0
      %v4921 = vmax.f32 %v4889, 0.0
      %v4922 = vmax.f32 %v4890, 0.0
      %v4923 = vmax.f32 %v4891, 0.0
      %v4924 = vmax.f32 %v4892, 0.0
      %v4925 = vmax.f32 %v4893, 0.0
      %v4926 = vmax.f32 %v4894, 0.0
      %v4927 = vmax.f32 %v4895, 0.0
      %v4928 = vmax.f32 %v4896, 0.0
      %v4929 = vmax.f32 %v4897, 0.0
      %v4930 = vmax.f32 %v4898, 0.0
      %v4931 = vmax.f32 %v4899, 0.0
      %v4932 = vmax.f32 %v4900, 0.0
      %v4933 = vmax.f32 %v4901, 0.0
      %v4934 = vmax.f32 %v4902, %v4904
      %v4935 = vmax.f32 %v4903, %v4905
      %v4936 = vmax.f32 %v4906, %v4908
      %v4937 = vmax.f32 %v4907, %v4909
      %v4938 = vmax.f32 %v4910, %v4912
      %v4939 = vmax.f32 %v4911, %v4913
      %v4940 = vmax.f32 %v4914, %v4916
      %v4941 = vmax.f32 %v4915, %v4917
      %v4942 = vmax.f32 %v4918, %v4920
      %v4943 = vmax.f32 %v4919, %v4921
      %v4944 = vmax.f32 %v4922, %v4924
      %v4945 = vmax.f32 %v4923, %v4925
      %v4946 = vmax.f32 %v4926, %v4928
      %v4947 = vmax.f32 %v4927, %v4929
      %v4948 = vmax.f32 %v4930, %v4932
      %v4949 = vmax.f32 %v4931, %v4933
      %4950 = vst [vmem:[#allocation2] sm:$0xff] %v4934
      %4951 = vst [vmem:[#allocation2 + $0x8] sm:$0xff] %v4935
      %4952 = vst [vmem:[#allocation2 + $0x10] sm:$0xff] %v4936
      %4953 = vst [vmem:[#allocation2 + $0x18] sm:$0xff] %v4937
      %4954 = vst [vmem:[#allocation2 + $0x20] sm:$0xff] %v4938
      %4955 = vst [vmem:[#allocation2 + $0x28] sm:$0xff] %v4939
      %4956 = vst [vmem:[#allocation2 + $0x30] sm:$0xff] %v4940
      %4957 = vst [vmem:[#allocation2 + $0x38] sm:$0xff] %v4941
      %4958 = vst [vmem:[#allocation2 + $0x40] sm:$0xff] %v4942
      %4959 = vst [vmem:[#allocation2 + $0x48] sm:$0xff] %v4943
      %4960 = vst [vmem:[#allocation2 + $0x50] sm:$0xff] %v4944
      %4961 = vst [vmem:[#allocation2 + $0x58] sm:$0xff] %v4945
      %4962 = vst [vmem:[#allocation2 + $0x60] sm:$0xff] %v4946
      %4963 = vst [vmem:[#allocation2 + $0x68] sm:$0xff] %v4947
      %4964 = vst [vmem:[#allocation2 + $0x70] sm:$0xff] %v4948
      %4965 = vst [vmem:[#allocation2 + $0x78] sm:$0xff] %v4949
      %v4966 = vld [vmem:[#allocation2] ss:$2 sm:$0xff]
      %s4967 = scalar_lea.vmem [#allocation2], 16
      %v4968 = vld [vmem:[%s4967] ss:$2 sm:$0xff]
      %s4969 = scalar_lea.vmem [#allocation2], 32
      %v4970 = vld [vmem:[%s4969] ss:$2 sm:$0xff]
      %s4971 = scalar_lea.vmem [#allocation2], 48
      %v4972 = vld [vmem:[%s4971] ss:$2 sm:$0xff]
      %s4973 = scalar_lea.vmem [#allocation2], 64
      %v4974 = vld [vmem:[%s4973] ss:$2 sm:$0xff]
      %s4975 = scalar_lea.vmem [#allocation2], 80
      %v4976 = vld [vmem:[%s4975] ss:$2 sm:$0xff]
      %s4977 = scalar_lea.vmem [#allocation2], 96
      %v4978 = vld [vmem:[%s4977] ss:$2 sm:$0xff]
      %s4979 = scalar_lea.vmem [#allocation2], 112
      %v4980 = vld [vmem:[%s4979] ss:$2 sm:$0xff]
      %s4981 = scalar_lea.vmem [#allocation2], 1
      %v4982 = vld [vmem:[%s4981] ss:$2 sm:$0xff]
      %s4983 = scalar_lea.vmem [#allocation2], 17
      %v4984 = vld [vmem:[%s4983] ss:$2 sm:$0xff]
      %s4985 = scalar_lea.vmem [#allocation2], 33
      %v4986 = vld [vmem:[%s4985] ss:$2 sm:$0xff]
      %s4987 = scalar_lea.vmem [#allocation2], 49
      %v4988 = vld [vmem:[%s4987] ss:$2 sm:$0xff]
      %s4989 = scalar_lea.vmem [#allocation2], 65
      %v4990 = vld [vmem:[%s4989] ss:$2 sm:$0xff]
      %s4991 = scalar_lea.vmem [#allocation2], 81
      %v4992 = vld [vmem:[%s4991] ss:$2 sm:$0xff]
      %s4993 = scalar_lea.vmem [#allocation2], 97
      %v4994 = vld [vmem:[%s4993] ss:$2 sm:$0xff]
      %s4995 = scalar_lea.vmem [#allocation2], 113
      %v4996 = vld [vmem:[%s4995] ss:$2 sm:$0xff]
      %v4997 = vmax.f32 %v4966, %v4982
      %v4998 = vmax.f32 %v4968, %v4984
      %v4999 = vmax.f32 %v4970, %v4986
      %v5000 = vmax.f32 %v4972, %v4988
      %v5001 = vmax.f32 %v4974, %v4990
      %v5002 = vmax.f32 %v4976, %v4992
      %v5003 = vmax.f32 %v4978, %v4994
      %v5004 = vmax.f32 %v4980, %v4996
      %5005 = vst [vmem:[%s224] sm:$0xff] %v4997
      %5006 = vst [vmem:[%s224 + $0x8] sm:$0xff] %v4998
      %5007 = vst [vmem:[%s224 + $0x10] sm:$0xff] %v4999
      %5008 = vst [vmem:[%s224 + $0x18] sm:$0xff] %v5000
      %5009 = vst [vmem:[%s224 + $0x20] sm:$0xff] %v5001
      %5010 = vst [vmem:[%s224 + $0x28] sm:$0xff] %v5002
      %5011 = vst [vmem:[%s224 + $0x30] sm:$0xff] %v5003
      %5012 = vst [vmem:[%s224 + $0x38] sm:$0xff] %v5004
      %p5013 = scmp.lt.s32.totalorder %s16, 1
      %s5014 = scalar_select %p5013, %s16, 1
      %s5015 = smul.addr %s5014, 8
      %s5016 = smul.addr %s5015, 8
      %s5017 = scalar_lea.vmem %s5, %s5016
      // Predicated region
      $region41: #{model_section_forward.3} parent=39 // pred_check
        %p5018 = pneg %p144
      $region42: #{model_section_forward.3} parent=39 // pred_check_branch
        %5020 = sbr.rel (%p5018) target = $region44
      $region43: #{model_section_forward.3} parent=39 // pred_region
        _
      $region44: #{model_section_forward.3} parent=39 // pred_fallthru
        _
    $region40: #{model_section_forward.3} parent=5 // pred_fallthru
      _
    %p5021 = scmp.le.s32.totalorder 2, %s11
    // Predicated region
    $region45: #{model_section_forward.3} parent=5 // pred_check
      %p5022 = pneg %p5021
    $region46: #{model_section_forward.3} parent=5 // pred_check_branch
      %5024 = sbr.rel (%p5022) target = $region48
    $region47: #{model_section_forward.3} parent=5 // pred_region
      %s5025 = ssub.s32 %s11, 2
      // Predicated region
      $region49: #{model_section_forward.3} parent=47 // pred_check
        %p5026 = pneg %p150
      $region50: #{model_section_forward.3} parent=47 // pred_check_branch
        %5028 = sbr.rel (%p5026) target = $region52
      $region51: #{model_section_forward.3} parent=47 // pred_region
        %p5029 = scmp.lt.s32.totalorder %s17, 1
        %s5030 = scalar_select %p5029, %s17, 1
        %s5031 = smul.addr %s5030, 8
        %s5032 = smul.addr %s5031, 8
        %s5033 = scalar_lea.vmem %s5, %s5032
      $region52: #{model_section_forward.3} parent=47 // pred_fallthru
        _
    $region48: #{model_section_forward.3} parent=5 // pred_fallthru
      _
  $region6: #{model_section_forward.3} parent=0 // loop_footer
    %s15 = sadd.s32 1, %s11
  $region7: #{model_section_forward.3} parent=0 // loop_footer_branch
    %10 = sbr.rel target = $region3
  $region8: #{model_section_forward.3} parent=0 // loop_exit
    _

</llo_original>
